<compile_context>
chip_gen: v7x
topology: tpu7x:2x2x1
jax: 0.10.0
libtpu: 0.0.40
codegen_flags: <defaults>
</compile_context>

<pallas_src>
import jax
import jax.numpy as jnp
from jax.experimental import pallas as pl
from jax.experimental.pallas import tpu as pltpu


def _vmem_limit_bytes():
    cap = 64 * 1024 * 1024                      # safe fallback (v7x per-core VMEM)
    try:
        info = pltpu.get_tpu_info()
        cap = int(getattr(info, "vmem_capacity_bytes", cap)) or cap
    except Exception:
        pass
    return min(int(cap * 3 // 4), 100 * 1024 * 1024)


_VMEM_LIMIT = _vmem_limit_bytes()
_ACT_DTYPE = jnp.bfloat16                       # HBM activation slabs / MXU operands


def _silu(x):
    # x is f32; the reciprocal (approx) runs on the EUP slot next to the exp.
    return x * pl.reciprocal(1.0 + jnp.exp(-x), approx=True)


# --------------------------------------------------------------------------
# cv1: 1x1 conv + BN + SiLU, emitting the two channel halves (a, b) directly.
# TODO(synk): for c < 128 a single lane-dense (M, 2c) output (one dot with
#             [wa|wb]) avoids masked narrow stores; kept split for clarity.
# --------------------------------------------------------------------------
def _cv1_kernel(x_ref, wa_ref, wb_ref, ba_ref, bb_ref, a_ref, b_ref):
    x = x_ref[...]                                              # bf16 (tm, cin)
    ya = jnp.dot(x, wa_ref[...], preferred_element_type=jnp.float32) + ba_ref[...]
    yb = jnp.dot(x, wb_ref[...], preferred_element_type=jnp.float32) + bb_ref[...]
    a_ref[...] = _silu(ya).astype(a_ref.dtype)
    b_ref[...] = _silu(yb).astype(b_ref.dtype)


# --------------------------------------------------------------------------
# cv2: 1x1 conv + BN + SiLU fused with the channel concat (split weights).
# --------------------------------------------------------------------------
def _cv2_kernel(m_ref, b_ref, wt_ref, wb_ref, bias_ref, o_ref):
    y = (jnp.dot(m_ref[...], wt_ref[...], preferred_element_type=jnp.float32)
         + jnp.dot(b_ref[...], wb_ref[...], preferred_element_type=jnp.float32)
         + bias_ref[...])
    o_ref[...] = _silu(y).astype(o_ref.dtype)


def _pick_tile_m(M, target=1024):
    """Row tile for the 1x1 convs: large to amortize per-step overhead."""
    if M <= target:
        return M
    return max(8, (target // 8) * 8)


def cv1_1x1(x2d, wa, wb, ba, bb):
    M, cin = x2d.shape
    c = wa.shape[1]
    tm = _pick_tile_m(M)
    cost = pl.CostEstimate(
        flops=2 * M * cin * 2 * c + 4 * M * 2 * c,
        transcendentals=M * 2 * c,
        bytes_accessed=2 * (M * cin + 2 * M * c + 2 * cin * c) + 4 * 2 * c,
    )
    return pl.pallas_call(
        _cv1_kernel,
        out_shape=(jax.ShapeDtypeStruct((M, c), _ACT_DTYPE),
                   jax.ShapeDtypeStruct((M, c), _ACT_DTYPE)),
        grid=(pl.cdiv(M, tm),),
        in_specs=[
            pl.BlockSpec((tm, cin), lambda i: (i, 0)),
            pl.BlockSpec((cin, c), lambda i: (0, 0)),
            pl.BlockSpec((cin, c), lambda i: (0, 0)),
            pl.BlockSpec((1, c), lambda i: (0, 0)),
            pl.BlockSpec((1, c), lambda i: (0, 0)),
        ],
        out_specs=(pl.BlockSpec((tm, c), lambda i: (i, 0)),
                   pl.BlockSpec((tm, c), lambda i: (i, 0))),
        compiler_params=pltpu.CompilerParams(
            dimension_semantics=("parallel",), vmem_limit_bytes=_VMEM_LIMIT),
        cost_estimate=cost,
    )(x2d, wa, wb, ba, bb)


def cv2_1x1(m2d, b2d, wt, wb, bias):
    M, c = m2d.shape
    cout = wt.shape[1]
    tm = _pick_tile_m(M)
    cost = pl.CostEstimate(
        flops=2 * M * 2 * c * cout + 3 * M * cout,
        transcendentals=M * cout,
        bytes_accessed=2 * (2 * M * c + 2 * c * cout) + 4 * (M * cout + cout),
    )
    return pl.pallas_call(
        _cv2_kernel,
        out_shape=jax.ShapeDtypeStruct((M, cout), jnp.float32),
        grid=(pl.cdiv(M, tm),),
        in_specs=[
            pl.BlockSpec((tm, c), lambda i: (i, 0)),
            pl.BlockSpec((tm, c), lambda i: (i, 0)),
            pl.BlockSpec((c, cout), lambda i: (0, 0)),
            pl.BlockSpec((c, cout), lambda i: (0, 0)),
            pl.BlockSpec((1, cout), lambda i: (0, 0)),
        ],
        out_specs=pl.BlockSpec((tm, cout), lambda i: (i, 0)),
        compiler_params=pltpu.CompilerParams(
            dimension_semantics=("parallel",), vmem_limit_bytes=_VMEM_LIMIT),
        cost_estimate=cost,
    )(m2d, b2d, wt, wb, bias)


# --------------------------------------------------------------------------
# Fused Bottleneck: 3x3 Conv+BN+SiLU -> 3x3 Conv+BN+SiLU -> residual add.
# One kernel invocation per image. A zero-bordered halo scratch + a bf16
# im2col slab turn each 3x3 conv into a single (H*W, 9C) x (9C, C) matmul;
# the intermediate activation never touches HBM.
# --------------------------------------------------------------------------
def _make_bottleneck_kernel(H, W, C):
    HW = H * W
    taps = [(ky, kx) for ky in range(3) for kx in range(3)]

    def im2col(xp_ref, col_ref):
        # 9 shifted views of the zero-padded activation -> one (HW, 9C) bf16 slab.
        for t, (ky, kx) in enumerate(taps):
            patch = xp_ref[pl.ds(ky, H), pl.ds(kx, W), :].reshape(HW, C)
            col_ref[:, pl.ds(t * C, C)] = patch.astype(col_ref.dtype)

    def conv3x3(col_ref, w_ref, b_ref):
        y = jnp.dot(col_ref[...], w_ref[...],
                    preferred_element_type=jnp.float32) + b_ref[...]
        return _silu(y)                                         # f32, stays in VMEM

    def kernel(a_ref, w1_ref, b1_ref, w2_ref, b2_ref, o_ref, xp_ref, col_ref):
        # Zero only the 1-wide halo border (interior is fully overwritten below).
        # Done every step so correctness does not depend on which TensorCore
        # owns a given image.
        zrow = jnp.zeros((1, W + 2, C), xp_ref.dtype)
        zcol = jnp.zeros((H, 1, C), xp_ref.dtype)
        xp_ref[pl.ds(0, 1), :, :] = zrow
        xp_ref[pl.ds(H + 1, 1), :, :] = zrow
        xp_ref[pl.ds(1, H), pl.ds(0, 1), :] = zcol
        xp_ref[pl.ds(1, H), pl.ds(W + 1, 1), :] = zcol

        xp_ref[pl.ds(1, H), pl.ds(1, W), :] = (
            a_ref[...].astype(xp_ref.dtype).reshape(H, W, C))
        im2col(xp_ref, col_ref)
        t1 = conv3x3(col_ref, w1_ref, b1_ref)

        xp_ref[pl.ds(1, H), pl.ds(1, W), :] = (
            t1.reshape(H, W, C).astype(xp_ref.dtype))
        im2col(xp_ref, col_ref)
        y = conv3x3(col_ref, w2_ref, b2_ref) + a_ref[...].astype(jnp.float32)
        o_ref[...] = y.astype(o_ref.dtype)                      # shortcut (c1 == c2)

    return kernel


def bottleneck_3x3(m2d, w1, b1, w2, b2, N, H, W):
    M, C = m2d.shape
    assert M == N * H * W
    kernel = _make_bottleneck_kernel(H, W, C)
    cost = pl.CostEstimate(
        flops=2 * 2 * 9 * M * C * C + 8 * M * C,
        transcendentals=2 * M * C,
        bytes_accessed=2 * (2 * M * C + 2 * 9 * C * C) + 4 * 2 * C,
    )
    # TODO(synk): row-block tile (grid (N, H//TH), 1-row halo) for large H*W*C.
    return pl.pallas_call(
        kernel,
        out_shape=jax.ShapeDtypeStruct((M, C), _ACT_DTYPE),
        grid=(N,),
        in_specs=[
            pl.BlockSpec((H * W, C), lambda n: (n, 0)),
            pl.BlockSpec((9 * C, C), lambda n: (0, 0)),
            pl.BlockSpec((1, C), lambda n: (0, 0)),
            pl.BlockSpec((9 * C, C), lambda n: (0, 0)),
            pl.BlockSpec((1, C), lambda n: (0, 0)),
        ],
        out_specs=pl.BlockSpec((H * W, C), lambda n: (n, 0)),
        scratch_shapes=[
            pltpu.VMEM((H + 2, W + 2, C), jnp.float32),   # zero-bordered halo
            pltpu.VMEM((H * W, 9 * C), _ACT_DTYPE),       # im2col slab
        ],
        compiler_params=pltpu.CompilerParams(
            dimension_semantics=("parallel",), vmem_limit_bytes=_VMEM_LIMIT),
        cost_estimate=cost,
    )(m2d, w1, b1, w2, b2)


# --------------------------------------------------------------------------
# Parameter construction: Conv2d(no bias) + BatchNorm2d(eval) folded.
# 1x1 weights stored (cin, cout) bf16; 3x3 weights stored (9*cin, cout) bf16
# in im2col order (ky, kx, cin). Biases stay f32.
# --------------------------------------------------------------------------
def _fold_conv_bn(key, cin, cout, k):
    kw, k1, k2, k3, k4 = jax.random.split(key, 5)
    w = 0.1 * jax.random.normal(kw, (k, k, cin, cout), jnp.float32)        # HWIO
    gamma = 1.0 + 0.1 * jax.random.normal(k1, (cout,), jnp.float32)
    beta = 0.05 * jax.random.normal(k2, (cout,), jnp.float32)
    mean = 0.05 * jax.random.normal(k3, (cout,), jnp.float32)
    var = 1.0 + 0.1 * jnp.abs(jax.random.normal(k4, (cout,), jnp.float32))
    scale = gamma / jnp.sqrt(var + 1e-5)
    w_f = (w * scale).astype(jnp.bfloat16)                                 # per-Cout
    b_f = (beta - mean * scale).reshape(1, cout)                           # f32
    if k == 1:
        return w_f.reshape(cin, cout), b_f
    return w_f.reshape(k * k * cin, cout), b_f


def init_c2_params(key, c1, c2, n=1, e=0.5):
    c = int(c2 * e)
    keys = jax.random.split(key, 2 + 2 * n)
    w1f, b1f = _fold_conv_bn(keys[0], c1, 2 * c, 1)     # cv1
    w2f, b2f = _fold_conv_bn(keys[1], 2 * c, c2, 1)     # cv2
    params = {
        "cv1_wa": w1f[:, :c], "cv1_wb": w1f[:, c:],
        "cv1_ba": b1f[:, :c], "cv1_bb": b1f[:, c:],
        "cv2_wt": w2f[:c, :], "cv2_wb": w2f[c:, :], "cv2_b": b2f,
        "bottlenecks": [],
    }
    for i in range(n):
        bw1, bb1 = _fold_conv_bn(keys[2 + 2 * i], c, c, 3)
        bw2, bb2 = _fold_conv_bn(keys[3 + 2 * i], c, c, 3)
        params["bottlenecks"].append((bw1, bb1, bw2, bb2))
    return params


# ------------------------------- C2 forward -------------------------------
def c2_forward(x_nchw, params):
    N, C1, H, W = x_nchw.shape
    # TODO(synk): fold the NCHW<->NHWC transposes into the boundary kernels to
    #             save one HBM round trip of the activation on each side.
    x2d = (jnp.transpose(x_nchw, (0, 2, 3, 1))
           .reshape(N * H * W, C1).astype(_ACT_DTYPE))
    a, b = cv1_1x1(x2d, params["cv1_wa"], params["cv1_wb"],
                   params["cv1_ba"], params["cv1_bb"])       # chunk fused into cv1
    m = a
    for (w1, b1, w2, b2) in params["bottlenecks"]:
        m = bottleneck_3x3(m, w1, b1, w2, b2, N, H, W)
    out = cv2_1x1(m, b, params["cv2_wt"], params["cv2_wb"], params["cv2_b"])
    cout = out.shape[1]
    return jnp.transpose(out.reshape(N, H, W, cout), (0, 3, 1, 2))


# ------------------------- pure-JAX reference (check) ----------------------
def _ref_conv(x_nhwc, w, b, k):
    w = w.astype(jnp.float32)
    if k == 1:
        y = jnp.einsum("nhwi,io->nhwo", x_nhwc, w,
                       precision=jax.lax.Precision.HIGHEST)
    else:
        cout = w.shape[1]
        cin = w.shape[0] // 9
        y = jax.lax.conv_general_dilated(
            x_nhwc, w.reshape(3, 3, cin, cout), (1, 1), "SAME",
            dimension_numbers=("NHWC", "HWIO", "NHWC"),
            precision=jax.lax.Precision.HIGHEST)
    y = y + b.reshape(1, 1, 1, -1)
    return y * jax.nn.sigmoid(y)


def c2_reference(x_nchw, params):
    x = jnp.transpose(x_nchw, (0, 2, 3, 1))
    w1 = jnp.concatenate([params["cv1_wa"], params["cv1_wb"]], axis=1)
    b1 = jnp.concatenate([params["cv1_ba"], params["cv1_bb"]], axis=1)
    y = _ref_conv(x, w1, b1, 1)
    c = params["cv1_wa"].shape[1]
    a, b = y[..., :c], y[..., c:]
    m = a
    for (bw1, bb1, bw2, bb2) in params["bottlenecks"]:
        t = _ref_conv(m, bw1, bb1, 3)
        m = m + _ref_conv(t, bw2, bb2, 3)
    z = jnp.concatenate([m, b], axis=-1)
    w2 = jnp.concatenate([params["cv2_wt"], params["cv2_wb"]], axis=0)
    out = _ref_conv(z, w2, params["cv2_b"], 1)
    return jnp.transpose(out, (0, 3, 1, 2))


if __name__ == "__main__":
    key = jax.random.PRNGKey(0)
    kx, kp = jax.random.split(key)

    c1, c2_out, n = 4, 4, 1
    x = jax.random.normal(kx, (2, c1, 16, 16), jnp.float32)   # NCHW, like PyTorch
    params = init_c2_params(kp, c1, c2_out, n=n, e=0.5)

    out = jax.jit(c2_forward)(x, params)
    out = jax.block_until_ready(out)

    assert out.shape == (2, c2_out, 16, 16)
    assert bool(jnp.all(jnp.isfinite(out)))
    ref = c2_reference(x, params)
    assert bool(jnp.allclose(out, ref, atol=2e-2, rtol=2e-2)), float(
        jnp.max(jnp.abs(out - ref)))
    print("KERNEL_OK")
</pallas_src>

<mosaic_0001>
module attributes {stable_mosaic.version = 11 : i64} {
  func.func @_cv1_kernel(%arg0: i32, %arg1: memref<512x4xbf16, #tpu.memory_space<vmem>>, %arg2: memref<4x2xbf16, #tpu.memory_space<vmem>>, %arg3: memref<4x2xbf16, #tpu.memory_space<vmem>>, %arg4: memref<1x2xf32, #tpu.memory_space<vmem>>, %arg5: memref<1x2xf32, #tpu.memory_space<vmem>>, %arg6: memref<512x2xbf16, #tpu.memory_space<vmem>>, %arg7: memref<512x2xbf16, #tpu.memory_space<vmem>>) attributes {dimension_semantics = [#tpu.dimension_semantics<parallel>], iteration_bounds = array<i64: 1>, scalar_prefetch = 0 : i64, scratch_operands = 0 : i64, tpu.core_type = #tpu.core_type<tc>, window_params = [{transform_indices = @transform_0, window_bounds = array<i64: 512, 4>}, {pipeline_mode = #tpu.pipeline_mode<synchronous>, transform_indices = @transform_1, window_bounds = array<i64: 4, 2>}, {pipeline_mode = #tpu.pipeline_mode<synchronous>, transform_indices = @transform_2, window_bounds = array<i64: 4, 2>}, {pipeline_mode = #tpu.pipeline_mode<synchronous>, transform_indices = @transform_3, window_bounds = array<i64: 1, 2>}, {pipeline_mode = #tpu.pipeline_mode<synchronous>, transform_indices = @transform_4, window_bounds = array<i64: 1, 2>}, {transform_indices = @transform_5, window_bounds = array<i64: 512, 2>}, {transform_indices = @transform_6, window_bounds = array<i64: 512, 2>}]} {
    %c0 = arith.constant 0 : index
    %c0_0 = arith.constant 0 : index
    %0 = vector.load %arg1[%c0, %c0_0] : memref<512x4xbf16, #tpu.memory_space<vmem>>, vector<512x4xbf16>
    %c0_1 = arith.constant 0 : index
    %c0_2 = arith.constant 0 : index
    %1 = vector.load %arg2[%c0_1, %c0_2] : memref<4x2xbf16, #tpu.memory_space<vmem>>, vector<4x2xbf16>
    %cst = arith.constant dense<0.000000e+00> : vector<512x2xf32>
    %2 = tpu.matmul %0, %1, %cst {dimension_numbers = #tpu.dot_dimension_numbers<[1], [0], [0], [1], [0, 0, 1, 1], [], []>} : vector<512x4xbf16>, vector<4x2xbf16>, vector<512x2xf32> -> vector<512x2xf32>
    %c0_3 = arith.constant 0 : index
    %c0_4 = arith.constant 0 : index
    %3 = vector.load %arg4[%c0_3, %c0_4] : memref<1x2xf32, #tpu.memory_space<vmem>>, vector<1x2xf32>
    %4 = vector.broadcast %3 : vector<1x2xf32> to vector<512x2xf32>
    %5 = arith.addf %2, %4 : vector<512x2xf32>
    %c0_5 = arith.constant 0 : index
    %c0_6 = arith.constant 0 : index
    %6 = vector.load %arg3[%c0_5, %c0_6] : memref<4x2xbf16, #tpu.memory_space<vmem>>, vector<4x2xbf16>
    %cst_7 = arith.constant dense<0.000000e+00> : vector<512x2xf32>
    %7 = tpu.matmul %0, %6, %cst_7 {dimension_numbers = #tpu.dot_dimension_numbers<[1], [0], [0], [1], [0, 0, 1, 1], [], []>} : vector<512x4xbf16>, vector<4x2xbf16>, vector<512x2xf32> -> vector<512x2xf32>
    %c0_8 = arith.constant 0 : index
    %c0_9 = arith.constant 0 : index
    %8 = vector.load %arg5[%c0_8, %c0_9] : memref<1x2xf32, #tpu.memory_space<vmem>>, vector<1x2xf32>
    %9 = vector.broadcast %8 : vector<1x2xf32> to vector<512x2xf32>
    %10 = arith.addf %7, %9 : vector<512x2xf32>
    %cst_10 = arith.constant 0.000000e+00 : f32
    %11 = vector.broadcast %cst_10 : f32 to vector<512x2xf32>
    %12 = arith.subf %11, %5 : vector<512x2xf32>
    %13 = math.exp %12 : vector<512x2xf32>
    %cst_11 = arith.constant 1.000000e+00 : f32
    %14 = vector.broadcast %cst_11 : f32 to vector<512x2xf32>
    %15 = arith.addf %14, %13 : vector<512x2xf32>
    %16 = tpu.reciprocal %15 {approx = true} : vector<512x2xf32> -> vector<512x2xf32>
    %17 = arith.mulf %5, %16 : vector<512x2xf32>
    %18 = arith.truncf %17 : vector<512x2xf32> to vector<512x2xbf16>
    %c0_12 = arith.constant 0 : index
    %c0_13 = arith.constant 0 : index
    %19 = vector.load %arg6[%c0_12, %c0_13] : memref<512x2xbf16, #tpu.memory_space<vmem>>, vector<512x2xbf16>
    tpu.vector_store %arg6[%c0_12, %c0_13], %18 {strides = array<i32>} : memref<512x2xbf16, #tpu.memory_space<vmem>>, vector<512x2xbf16>,
    %cst_14 = arith.constant 0.000000e+00 : f32
    %20 = vector.broadcast %cst_14 : f32 to vector<512x2xf32>
    %21 = arith.subf %20, %10 : vector<512x2xf32>
    %22 = math.exp %21 : vector<512x2xf32>
    %cst_15 = arith.constant 1.000000e+00 : f32
    %23 = vector.broadcast %cst_15 : f32 to vector<512x2xf32>
    %24 = arith.addf %23, %22 : vector<512x2xf32>
    %25 = tpu.reciprocal %24 {approx = true} : vector<512x2xf32> -> vector<512x2xf32>
    %26 = arith.mulf %10, %25 : vector<512x2xf32>
    %27 = arith.truncf %26 : vector<512x2xf32> to vector<512x2xbf16>
    %c0_16 = arith.constant 0 : index
    %c0_17 = arith.constant 0 : index
    %28 = vector.load %arg7[%c0_16, %c0_17] : memref<512x2xbf16, #tpu.memory_space<vmem>>, vector<512x2xbf16>
    tpu.vector_store %arg7[%c0_16, %c0_17], %27 {strides = array<i32>} : memref<512x2xbf16, #tpu.memory_space<vmem>>, vector<512x2xbf16>,
    return
  }
  func.func @transform_0(%arg0: i32) -> (i32, i32) {
    %c0_i32 = arith.constant 0 : i32
    %c0_i32_0 = arith.constant 0 : i32
    return %arg0, %c0_i32 : i32, i32
  }
  func.func @transform_1(%arg0: i32) -> (i32, i32) {
    %c0_i32 = arith.constant 0 : i32
    %c0_i32_0 = arith.constant 0 : i32
    %c0_i32_1 = arith.constant 0 : i32
    return %c0_i32, %c0_i32_0 : i32, i32
  }
  func.func @transform_2(%arg0: i32) -> (i32, i32) {
    %c0_i32 = arith.constant 0 : i32
    %c0_i32_0 = arith.constant 0 : i32
    %c0_i32_1 = arith.constant 0 : i32
    return %c0_i32, %c0_i32_0 : i32, i32
  }
  func.func @transform_3(%arg0: i32) -> (i32, i32) {
    %c0_i32 = arith.constant 0 : i32
    %c0_i32_0 = arith.constant 0 : i32
    %c0_i32_1 = arith.constant 0 : i32
    return %c0_i32, %c0_i32_0 : i32, i32
  }
  func.func @transform_4(%arg0: i32) -> (i32, i32) {
    %c0_i32 = arith.constant 0 : i32
    %c0_i32_0 = arith.constant 0 : i32
    %c0_i32_1 = arith.constant 0 : i32
    return %c0_i32, %c0_i32_0 : i32, i32
  }
  func.func @transform_5(%arg0: i32) -> (i32, i32) {
    %c0_i32 = arith.constant 0 : i32
    %c0_i32_0 = arith.constant 0 : i32
    return %arg0, %c0_i32 : i32, i32
  }
  func.func @transform_6(%arg0: i32) -> (i32, i32) {
    %c0_i32 = arith.constant 0 : i32
    %c0_i32_0 = arith.constant 0 : i32
    return %arg0, %c0_i32 : i32, i32
  }
}

module attributes {stable_mosaic.version = 11 : i64} {
  func.func @kernel(%arg0: i32, %arg1: memref<256x2xbf16, #tpu.memory_space<vmem>>, %arg2: memref<18x2xbf16, #tpu.memory_space<vmem>>, %arg3: memref<1x2xf32, #tpu.memory_space<vmem>>, %arg4: memref<18x2xbf16, #tpu.memory_space<vmem>>, %arg5: memref<1x2xf32, #tpu.memory_space<vmem>>, %arg6: memref<256x2xbf16, #tpu.memory_space<vmem>>, %arg7: memref<18x18x2xf32, #tpu.memory_space<vmem>>, %arg8: memref<256x18xbf16, #tpu.memory_space<vmem>>) attributes {dimension_semantics = [#tpu.dimension_semantics<parallel>], iteration_bounds = array<i64: 2>, scalar_prefetch = 0 : i64, scratch_operands = 2 : i64, tpu.core_type = #tpu.core_type<tc>, window_params = [{transform_indices = @transform_0, window_bounds = array<i64: 256, 2>}, {pipeline_mode = #tpu.pipeline_mode<synchronous>, transform_indices = @transform_1, window_bounds = array<i64: 18, 2>}, {pipeline_mode = #tpu.pipeline_mode<synchronous>, transform_indices = @transform_2, window_bounds = array<i64: 1, 2>}, {pipeline_mode = #tpu.pipeline_mode<synchronous>, transform_indices = @transform_3, window_bounds = array<i64: 18, 2>}, {pipeline_mode = #tpu.pipeline_mode<synchronous>, transform_indices = @transform_4, window_bounds = array<i64: 1, 2>}, {transform_indices = @transform_5, window_bounds = array<i64: 256, 2>}]} {
    %cst = arith.constant 0.000000e+00 : f32
    %0 = vector.broadcast %cst : f32 to vector<1x18x2xf32>
    %cst_0 = arith.constant 0.000000e+00 : f32
    %1 = vector.broadcast %cst_0 : f32 to vector<16x1x2xf32>
    %c0 = arith.constant 0 : index
    %c0_1 = arith.constant 0 : index
    %c0_2 = arith.constant 0 : index
    %2 = vector.load %arg7[%c0, %c0_1, %c0_2] : memref<18x18x2xf32, #tpu.memory_space<vmem>>, vector<1x18x2xf32>
    tpu.vector_store %arg7[%c0, %c0_1, %c0_2], %0 {strides = array<i32>} : memref<18x18x2xf32, #tpu.memory_space<vmem>>, vector<1x18x2xf32>,
    %c17 = arith.constant 17 : index
    %c0_3 = arith.constant 0 : index
    %c0_4 = arith.constant 0 : index
    %3 = vector.load %arg7[%c17, %c0_3, %c0_4] : memref<18x18x2xf32, #tpu.memory_space<vmem>>, vector<1x18x2xf32>
    tpu.vector_store %arg7[%c17, %c0_3, %c0_4], %0 {strides = array<i32>} : memref<18x18x2xf32, #tpu.memory_space<vmem>>, vector<1x18x2xf32>,
    %c1 = arith.constant 1 : index
    %c0_5 = arith.constant 0 : index
    %c0_6 = arith.constant 0 : index
    %4 = vector.load %arg7[%c1, %c0_5, %c0_6] : memref<18x18x2xf32, #tpu.memory_space<vmem>>, vector<16x1x2xf32>
    tpu.vector_store %arg7[%c1, %c0_5, %c0_6], %1 {strides = array<i32>} : memref<18x18x2xf32, #tpu.memory_space<vmem>>, vector<16x1x2xf32>,
    %c1_7 = arith.constant 1 : index
    %c17_8 = arith.constant 17 : index
    %c0_9 = arith.constant 0 : index
    %5 = vector.load %arg7[%c1_7, %c17_8, %c0_9] : memref<18x18x2xf32, #tpu.memory_space<vmem>>, vector<16x1x2xf32>
    tpu.vector_store %arg7[%c1_7, %c17_8, %c0_9], %1 {strides = array<i32>} : memref<18x18x2xf32, #tpu.memory_space<vmem>>, vector<16x1x2xf32>,
    %c0_10 = arith.constant 0 : index
    %c0_11 = arith.constant 0 : index
    %6 = vector.load %arg1[%c0_10, %c0_11] : memref<256x2xbf16, #tpu.memory_space<vmem>>, vector<256x2xbf16>
    %7 = arith.extf %6 : vector<256x2xbf16> to vector<256x2xf32>
    %8 = vector.shape_cast %7 : vector<256x2xf32> to vector<16x16x2xf32>
    %c1_12 = arith.constant 1 : index
    %c1_13 = arith.constant 1 : index
    %c0_14 = arith.constant 0 : index
    %9 = vector.load %arg7[%c1_12, %c1_13, %c0_14] : memref<18x18x2xf32, #tpu.memory_space<vmem>>, vector<16x16x2xf32>
    tpu.vector_store %arg7[%c1_12, %c1_13, %c0_14], %8 {strides = array<i32>} : memref<18x18x2xf32, #tpu.memory_space<vmem>>, vector<16x16x2xf32>,
    %c0_15 = arith.constant 0 : index
    %c0_16 = arith.constant 0 : index
    %c0_17 = arith.constant 0 : index
    %10 = vector.load %arg7[%c0_15, %c0_16, %c0_17] : memref<18x18x2xf32, #tpu.memory_space<vmem>>, vector<16x16x2xf32>
    %11 = vector.shape_cast %10 : vector<16x16x2xf32> to vector<256x2xf32>
    %12 = arith.truncf %11 : vector<256x2xf32> to vector<256x2xbf16>
    %c0_18 = arith.constant 0 : index
    %c0_19 = arith.constant 0 : index
    %13 = vector.load %arg8[%c0_18, %c0_19] : memref<256x18xbf16, #tpu.memory_space<vmem>>, vector<256x2xbf16>
    tpu.vector_store %arg8[%c0_18, %c0_19], %12 {strides = array<i32>} : memref<256x18xbf16, #tpu.memory_space<vmem>>, vector<256x2xbf16>,
    %c0_20 = arith.constant 0 : index
    %c1_21 = arith.constant 1 : index
    %c0_22 = arith.constant 0 : index
    %14 = vector.load %arg7[%c0_20, %c1_21, %c0_22] : memref<18x18x2xf32, #tpu.memory_space<vmem>>, vector<16x16x2xf32>
    %15 = vector.shape_cast %14 : vector<16x16x2xf32> to vector<256x2xf32>
    %16 = arith.truncf %15 : vector<256x2xf32> to vector<256x2xbf16>
    %c0_23 = arith.constant 0 : index
    %c2 = arith.constant 2 : index
    %17 = vector.load %arg8[%c0_23, %c2] : memref<256x18xbf16, #tpu.memory_space<vmem>>, vector<256x2xbf16>
    tpu.vector_store %arg8[%c0_23, %c2], %16 {strides = array<i32>} : memref<256x18xbf16, #tpu.memory_space<vmem>>, vector<256x2xbf16>,
    %c0_24 = arith.constant 0 : index
    %c2_25 = arith.constant 2 : index
    %c0_26 = arith.constant 0 : index
    %18 = vector.load %arg7[%c0_24, %c2_25, %c0_26] : memref<18x18x2xf32, #tpu.memory_space<vmem>>, vector<16x16x2xf32>
    %19 = vector.shape_cast %18 : vector<16x16x2xf32> to vector<256x2xf32>
    %20 = arith.truncf %19 : vector<256x2xf32> to vector<256x2xbf16>
    %c0_27 = arith.constant 0 : index
    %c4 = arith.constant 4 : index
    %21 = vector.load %arg8[%c0_27, %c4] : memref<256x18xbf16, #tpu.memory_space<vmem>>, vector<256x2xbf16>
    tpu.vector_store %arg8[%c0_27, %c4], %20 {strides = array<i32>} : memref<256x18xbf16, #tpu.memory_space<vmem>>, vector<256x2xbf16>,
    %c1_28 = arith.constant 1 : index
    %c0_29 = arith.constant 0 : index
    %c0_30 = arith.constant 0 : index
    %22 = vector.load %arg7[%c1_28, %c0_29, %c0_30] : memref<18x18x2xf32, #tpu.memory_space<vmem>>, vector<16x16x2xf32>
    %23 = vector.shape_cast %22 : vector<16x16x2xf32> to vector<256x2xf32>
    %24 = arith.truncf %23 : vector<256x2xf32> to vector<256x2xbf16>
    %c0_31 = arith.constant 0 : index
    %c6 = arith.constant 6 : index
    %25 = vector.load %arg8[%c0_31, %c6] : memref<256x18xbf16, #tpu.memory_space<vmem>>, vector<256x2xbf16>
    tpu.vector_store %arg8[%c0_31, %c6], %24 {strides = array<i32>} : memref<256x18xbf16, #tpu.memory_space<vmem>>, vector<256x2xbf16>,
    %c1_32 = arith.constant 1 : index
    %c1_33 = arith.constant 1 : index
    %c0_34 = arith.constant 0 : index
    %26 = vector.load %arg7[%c1_32, %c1_33, %c0_34] : memref<18x18x2xf32, #tpu.memory_space<vmem>>, vector<16x16x2xf32>
    %27 = vector.shape_cast %26 : vector<16x16x2xf32> to vector<256x2xf32>
    %28 = arith.truncf %27 : vector<256x2xf32> to vector<256x2xbf16>
    %c0_35 = arith.constant 0 : index
    %c8 = arith.constant 8 : index
    %29 = vector.load %arg8[%c0_35, %c8] : memref<256x18xbf16, #tpu.memory_space<vmem>>, vector<256x2xbf16>
    tpu.vector_store %arg8[%c0_35, %c8], %28 {strides = array<i32>} : memref<256x18xbf16, #tpu.memory_space<vmem>>, vector<256x2xbf16>,
    %c1_36 = arith.constant 1 : index
    %c2_37 = arith.constant 2 : index
    %c0_38 = arith.constant 0 : index
    %30 = vector.load %arg7[%c1_36, %c2_37, %c0_38] : memref<18x18x2xf32, #tpu.memory_space<vmem>>, vector<16x16x2xf32>
    %31 = vector.shape_cast %30 : vector<16x16x2xf32> to vector<256x2xf32>
    %32 = arith.truncf %31 : vector<256x2xf32> to vector<256x2xbf16>
    %c0_39 = arith.constant 0 : index
    %c10 = arith.constant 10 : index
    %33 = vector.load %arg8[%c0_39, %c10] : memref<256x18xbf16, #tpu.memory_space<vmem>>, vector<256x2xbf16>
    tpu.vector_store %arg8[%c0_39, %c10], %32 {strides = array<i32>} : memref<256x18xbf16, #tpu.memory_space<vmem>>, vector<256x2xbf16>,
    %c2_40 = arith.constant 2 : index
    %c0_41 = arith.constant 0 : index
    %c0_42 = arith.constant 0 : index
    %34 = vector.load %arg7[%c2_40, %c0_41, %c0_42] : memref<18x18x2xf32, #tpu.memory_space<vmem>>, vector<16x16x2xf32>
    %35 = vector.shape_cast %34 : vector<16x16x2xf32> to vector<256x2xf32>
    %36 = arith.truncf %35 : vector<256x2xf32> to vector<256x2xbf16>
    %c0_43 = arith.constant 0 : index
    %c12 = arith.constant 12 : index
    %37 = vector.load %arg8[%c0_43, %c12] : memref<256x18xbf16, #tpu.memory_space<vmem>>, vector<256x2xbf16>
    tpu.vector_store %arg8[%c0_43, %c12], %36 {strides = array<i32>} : memref<256x18xbf16, #tpu.memory_space<vmem>>, vector<256x2xbf16>,
    %c2_44 = arith.constant 2 : index
    %c1_45 = arith.constant 1 : index
    %c0_46 = arith.constant 0 : index
    %38 = vector.load %arg7[%c2_44, %c1_45, %c0_46] : memref<18x18x2xf32, #tpu.memory_space<vmem>>, vector<16x16x2xf32>
    %39 = vector.shape_cast %38 : vector<16x16x2xf32> to vector<256x2xf32>
    %40 = arith.truncf %39 : vector<256x2xf32> to vector<256x2xbf16>
    %c0_47 = arith.constant 0 : index
    %c14 = arith.constant 14 : index
    %41 = vector.load %arg8[%c0_47, %c14] : memref<256x18xbf16, #tpu.memory_space<vmem>>, vector<256x2xbf16>
    tpu.vector_store %arg8[%c0_47, %c14], %40 {strides = array<i32>} : memref<256x18xbf16, #tpu.memory_space<vmem>>, vector<256x2xbf16>,
    %c2_48 = arith.constant 2 : index
    %c2_49 = arith.constant 2 : index
    %c0_50 = arith.constant 0 : index
    %42 = vector.load %arg7[%c2_48, %c2_49, %c0_50] : memref<18x18x2xf32, #tpu.memory_space<vmem>>, vector<16x16x2xf32>
    %43 = vector.shape_cast %42 : vector<16x16x2xf32> to vector<256x2xf32>
    %44 = arith.truncf %43 : vector<256x2xf32> to vector<256x2xbf16>
    %c0_51 = arith.constant 0 : index
    %c16 = arith.constant 16 : index
    %45 = vector.load %arg8[%c0_51, %c16] : memref<256x18xbf16, #tpu.memory_space<vmem>>, vector<256x2xbf16>
    tpu.vector_store %arg8[%c0_51, %c16], %44 {strides = array<i32>} : memref<256x18xbf16, #tpu.memory_space<vmem>>, vector<256x2xbf16>,
    %c0_52 = arith.constant 0 : index
    %c0_53 = arith.constant 0 : index
    %46 = vector.load %arg8[%c0_52, %c0_53] : memref<256x18xbf16, #tpu.memory_space<vmem>>, vector<256x18xbf16>
    %c0_54 = arith.constant 0 : index
    %c0_55 = arith.constant 0 : index
    %47 = vector.load %arg2[%c0_54, %c0_55] : memref<18x2xbf16, #tpu.memory_space<vmem>>, vector<18x2xbf16>
    %cst_56 = arith.constant dense<0.000000e+00> : vector<256x2xf32>
    %48 = tpu.matmul %46, %47, %cst_56 {dimension_numbers = #tpu.dot_dimension_numbers<[1], [0], [0], [1], [0, 0, 1, 1], [], []>} : vector<256x18xbf16>, vector<18x2xbf16>, vector<256x2xf32> -> vector<256x2xf32>
    %c0_57 = arith.constant 0 : index
    %c0_58 = arith.constant 0 : index
    %49 = vector.load %arg3[%c0_57, %c0_58] : memref<1x2xf32, #tpu.memory_space<vmem>>, vector<1x2xf32>
    %50 = vector.broadcast %49 : vector<1x2xf32> to vector<256x2xf32>
    %51 = arith.addf %48, %50 : vector<256x2xf32>
    %cst_59 = arith.constant 0.000000e+00 : f32
    %52 = vector.broadcast %cst_59 : f32 to vector<256x2xf32>
    %53 = arith.subf %52, %51 : vector<256x2xf32>
    %54 = math.exp %53 : vector<256x2xf32>
    %cst_60 = arith.constant 1.000000e+00 : f32
    %55 = vector.broadcast %cst_60 : f32 to vector<256x2xf32>
    %56 = arith.addf %55, %54 : vector<256x2xf32>
    %57 = tpu.reciprocal %56 {approx = true} : vector<256x2xf32> -> vector<256x2xf32>
    %58 = arith.mulf %51, %57 : vector<256x2xf32>
    %59 = vector.shape_cast %58 : vector<256x2xf32> to vector<16x16x2xf32>
    %c1_61 = arith.constant 1 : index
    %c1_62 = arith.constant 1 : index
    %c0_63 = arith.constant 0 : index
    %60 = vector.load %arg7[%c1_61, %c1_62, %c0_63] : memref<18x18x2xf32, #tpu.memory_space<vmem>>, vector<16x16x2xf32>
    tpu.vector_store %arg7[%c1_61, %c1_62, %c0_63], %59 {strides = array<i32>} : memref<18x18x2xf32, #tpu.memory_space<vmem>>, vector<16x16x2xf32>,
    %c0_64 = arith.constant 0 : index
    %c0_65 = arith.constant 0 : index
    %c0_66 = arith.constant 0 : index
    %61 = vector.load %arg7[%c0_64, %c0_65, %c0_66] : memref<18x18x2xf32, #tpu.memory_space<vmem>>, vector<16x16x2xf32>
    %62 = vector.shape_cast %61 : vector<16x16x2xf32> to vector<256x2xf32>
    %63 = arith.truncf %62 : vector<256x2xf32> to vector<256x2xbf16>
    %c0_67 = arith.constant 0 : index
    %c0_68 = arith.constant 0 : index
    %64 = vector.load %arg8[%c0_67, %c0_68] : memref<256x18xbf16, #tpu.memory_space<vmem>>, vector<256x2xbf16>
    tpu.vector_store %arg8[%c0_67, %c0_68], %63 {strides = array<i32>} : memref<256x18xbf16, #tpu.memory_space<vmem>>, vector<256x2xbf16>,
    %c0_69 = arith.constant 0 : index
    %c1_70 = arith.constant 1 : index
    %c0_71 = arith.constant 0 : index
    %65 = vector.load %arg7[%c0_69, %c1_70, %c0_71] : memref<18x18x2xf32, #tpu.memory_space<vmem>>, vector<16x16x2xf32>
    %66 = vector.shape_cast %65 : vector<16x16x2xf32> to vector<256x2xf32>
    %67 = arith.truncf %66 : vector<256x2xf32> to vector<256x2xbf16>
    %c0_72 = arith.constant 0 : index
    %c2_73 = arith.constant 2 : index
    %68 = vector.load %arg8[%c0_72, %c2_73] : memref<256x18xbf16, #tpu.memory_space<vmem>>, vector<256x2xbf16>
    tpu.vector_store %arg8[%c0_72, %c2_73], %67 {strides = array<i32>} : memref<256x18xbf16, #tpu.memory_space<vmem>>, vector<256x2xbf16>,
    %c0_74 = arith.constant 0 : index
    %c2_75 = arith.constant 2 : index
    %c0_76 = arith.constant 0 : index
    %69 = vector.load %arg7[%c0_74, %c2_75, %c0_76] : memref<18x18x2xf32, #tpu.memory_space<vmem>>, vector<16x16x2xf32>
    %70 = vector.shape_cast %69 : vector<16x16x2xf32> to vector<256x2xf32>
    %71 = arith.truncf %70 : vector<256x2xf32> to vector<256x2xbf16>
    %c0_77 = arith.constant 0 : index
    %c4_78 = arith.constant 4 : index
    %72 = vector.load %arg8[%c0_77, %c4_78] : memref<256x18xbf16, #tpu.memory_space<vmem>>, vector<256x2xbf16>
    tpu.vector_store %arg8[%c0_77, %c4_78], %71 {strides = array<i32>} : memref<256x18xbf16, #tpu.memory_space<vmem>>, vector<256x2xbf16>,
    %c1_79 = arith.constant 1 : index
    %c0_80 = arith.constant 0 : index
    %c0_81 = arith.constant 0 : index
    %73 = vector.load %arg7[%c1_79, %c0_80, %c0_81] : memref<18x18x2xf32, #tpu.memory_space<vmem>>, vector<16x16x2xf32>
    %74 = vector.shape_cast %73 : vector<16x16x2xf32> to vector<256x2xf32>
    %75 = arith.truncf %74 : vector<256x2xf32> to vector<256x2xbf16>
    %c0_82 = arith.constant 0 : index
    %c6_83 = arith.constant 6 : index
    %76 = vector.load %arg8[%c0_82, %c6_83] : memref<256x18xbf16, #tpu.memory_space<vmem>>, vector<256x2xbf16>
    tpu.vector_store %arg8[%c0_82, %c6_83], %75 {strides = array<i32>} : memref<256x18xbf16, #tpu.memory_space<vmem>>, vector<256x2xbf16>,
    %c1_84 = arith.constant 1 : index
    %c1_85 = arith.constant 1 : index
    %c0_86 = arith.constant 0 : index
    %77 = vector.load %arg7[%c1_84, %c1_85, %c0_86] : memref<18x18x2xf32, #tpu.memory_space<vmem>>, vector<16x16x2xf32>
    %78 = vector.shape_cast %77 : vector<16x16x2xf32> to vector<256x2xf32>
    %79 = arith.truncf %78 : vector<256x2xf32> to vector<256x2xbf16>
    %c0_87 = arith.constant 0 : index
    %c8_88 = arith.constant 8 : index
    %80 = vector.load %arg8[%c0_87, %c8_88] : memref<256x18xbf16, #tpu.memory_space<vmem>>, vector<256x2xbf16>
    tpu.vector_store %arg8[%c0_87, %c8_88], %79 {strides = array<i32>} : memref<256x18xbf16, #tpu.memory_space<vmem>>, vector<256x2xbf16>,
    %c1_89 = arith.constant 1 : index
    %c2_90 = arith.constant 2 : index
    %c0_91 = arith.constant 0 : index
    %81 = vector.load %arg7[%c1_89, %c2_90, %c0_91] : memref<18x18x2xf32, #tpu.memory_space<vmem>>, vector<16x16x2xf32>
    %82 = vector.shape_cast %81 : vector<16x16x2xf32> to vector<256x2xf32>
    %83 = arith.truncf %82 : vector<256x2xf32> to vector<256x2xbf16>
    %c0_92 = arith.constant 0 : index
    %c10_93 = arith.constant 10 : index
    %84 = vector.load %arg8[%c0_92, %c10_93] : memref<256x18xbf16, #tpu.memory_space<vmem>>, vector<256x2xbf16>
    tpu.vector_store %arg8[%c0_92, %c10_93], %83 {strides = array<i32>} : memref<256x18xbf16, #tpu.memory_space<vmem>>, vector<256x2xbf16>,
    %c2_94 = arith.constant 2 : index
    %c0_95 = arith.constant 0 : index
    %c0_96 = arith.constant 0 : index
    %85 = vector.load %arg7[%c2_94, %c0_95, %c0_96] : memref<18x18x2xf32, #tpu.memory_space<vmem>>, vector<16x16x2xf32>
    %86 = vector.shape_cast %85 : vector<16x16x2xf32> to vector<256x2xf32>
    %87 = arith.truncf %86 : vector<256x2xf32> to vector<256x2xbf16>
    %c0_97 = arith.constant 0 : index
    %c12_98 = arith.constant 12 : index
    %88 = vector.load %arg8[%c0_97, %c12_98] : memref<256x18xbf16, #tpu.memory_space<vmem>>, vector<256x2xbf16>
    tpu.vector_store %arg8[%c0_97, %c12_98], %87 {strides = array<i32>} : memref<256x18xbf16, #tpu.memory_space<vmem>>, vector<256x2xbf16>,
    %c2_99 = arith.constant 2 : index
    %c1_100 = arith.constant 1 : index
    %c0_101 = arith.constant 0 : index
    %89 = vector.load %arg7[%c2_99, %c1_100, %c0_101] : memref<18x18x2xf32, #tpu.memory_space<vmem>>, vector<16x16x2xf32>
    %90 = vector.shape_cast %89 : vector<16x16x2xf32> to vector<256x2xf32>
    %91 = arith.truncf %90 : vector<256x2xf32> to vector<256x2xbf16>
    %c0_102 = arith.constant 0 : index
    %c14_103 = arith.constant 14 : index
    %92 = vector.load %arg8[%c0_102, %c14_103] : memref<256x18xbf16, #tpu.memory_space<vmem>>, vector<256x2xbf16>
    tpu.vector_store %arg8[%c0_102, %c14_103], %91 {strides = array<i32>} : memref<256x18xbf16, #tpu.memory_space<vmem>>, vector<256x2xbf16>,
    %c2_104 = arith.constant 2 : index
    %c2_105 = arith.constant 2 : index
    %c0_106 = arith.constant 0 : index
    %93 = vector.load %arg7[%c2_104, %c2_105, %c0_106] : memref<18x18x2xf32, #tpu.memory_space<vmem>>, vector<16x16x2xf32>
    %94 = vector.shape_cast %93 : vector<16x16x2xf32> to vector<256x2xf32>
    %95 = arith.truncf %94 : vector<256x2xf32> to vector<256x2xbf16>
    %c0_107 = arith.constant 0 : index
    %c16_108 = arith.constant 16 : index
    %96 = vector.load %arg8[%c0_107, %c16_108] : memref<256x18xbf16, #tpu.memory_space<vmem>>, vector<256x2xbf16>
    tpu.vector_store %arg8[%c0_107, %c16_108], %95 {strides = array<i32>} : memref<256x18xbf16, #tpu.memory_space<vmem>>, vector<256x2xbf16>,
    %c0_109 = arith.constant 0 : index
    %c0_110 = arith.constant 0 : index
    %97 = vector.load %arg8[%c0_109, %c0_110] : memref<256x18xbf16, #tpu.memory_space<vmem>>, vector<256x18xbf16>
    %c0_111 = arith.constant 0 : index
    %c0_112 = arith.constant 0 : index
    %98 = vector.load %arg4[%c0_111, %c0_112] : memref<18x2xbf16, #tpu.memory_space<vmem>>, vector<18x2xbf16>
    %cst_113 = arith.constant dense<0.000000e+00> : vector<256x2xf32>
    %99 = tpu.matmul %97, %98, %cst_113 {dimension_numbers = #tpu.dot_dimension_numbers<[1], [0], [0], [1], [0, 0, 1, 1], [], []>} : vector<256x18xbf16>, vector<18x2xbf16>, vector<256x2xf32> -> vector<256x2xf32>
    %c0_114 = arith.constant 0 : index
    %c0_115 = arith.constant 0 : index
    %100 = vector.load %arg5[%c0_114, %c0_115] : memref<1x2xf32, #tpu.memory_space<vmem>>, vector<1x2xf32>
    %101 = vector.broadcast %100 : vector<1x2xf32> to vector<256x2xf32>
    %102 = arith.addf %99, %101 : vector<256x2xf32>
    %cst_116 = arith.constant 0.000000e+00 : f32
    %103 = vector.broadcast %cst_116 : f32 to vector<256x2xf32>
    %104 = arith.subf %103, %102 : vector<256x2xf32>
    %105 = math.exp %104 : vector<256x2xf32>
    %cst_117 = arith.constant 1.000000e+00 : f32
    %106 = vector.broadcast %cst_117 : f32 to vector<256x2xf32>
    %107 = arith.addf %106, %105 : vector<256x2xf32>
    %108 = tpu.reciprocal %107 {approx = true} : vector<256x2xf32> -> vector<256x2xf32>
    %109 = arith.mulf %102, %108 : vector<256x2xf32>
    %c0_118 = arith.constant 0 : index
    %c0_119 = arith.constant 0 : index
    %110 = vector.load %arg1[%c0_118, %c0_119] : memref<256x2xbf16, #tpu.memory_space<vmem>>, vector<256x2xbf16>
    %111 = arith.extf %110 : vector<256x2xbf16> to vector<256x2xf32>
    %112 = arith.addf %109, %111 : vector<256x2xf32>
    %113 = arith.truncf %112 : vector<256x2xf32> to vector<256x2xbf16>
    %c0_120 = arith.constant 0 : index
    %c0_121 = arith.constant 0 : index
    %114 = vector.load %arg6[%c0_120, %c0_121] : memref<256x2xbf16, #tpu.memory_space<vmem>>, vector<256x2xbf16>
    tpu.vector_store %arg6[%c0_120, %c0_121], %113 {strides = array<i32>} : memref<256x2xbf16, #tpu.memory_space<vmem>>, vector<256x2xbf16>,
    return
  }
  func.func @transform_0(%arg0: i32) -> (i32, i32) {
    %c0_i32 = arith.constant 0 : i32
    %c0_i32_0 = arith.constant 0 : i32
    return %arg0, %c0_i32 : i32, i32
  }
  func.func @transform_1(%arg0: i32) -> (i32, i32) {
    %c0_i32 = arith.constant 0 : i32
    %c0_i32_0 = arith.constant 0 : i32
    %c0_i32_1 = arith.constant 0 : i32
    return %c0_i32, %c0_i32_0 : i32, i32
  }
  func.func @transform_2(%arg0: i32) -> (i32, i32) {
    %c0_i32 = arith.constant 0 : i32
    %c0_i32_0 = arith.constant 0 : i32
    %c0_i32_1 = arith.constant 0 : i32
    return %c0_i32, %c0_i32_0 : i32, i32
  }
  func.func @transform_3(%arg0: i32) -> (i32, i32) {
    %c0_i32 = arith.constant 0 : i32
    %c0_i32_0 = arith.constant 0 : i32
    %c0_i32_1 = arith.constant 0 : i32
    return %c0_i32, %c0_i32_0 : i32, i32
  }
  func.func @transform_4(%arg0: i32) -> (i32, i32) {
    %c0_i32 = arith.constant 0 : i32
    %c0_i32_0 = arith.constant 0 : i32
    %c0_i32_1 = arith.constant 0 : i32
    return %c0_i32, %c0_i32_0 : i32, i32
  }
  func.func @transform_5(%arg0: i32) -> (i32, i32) {
    %c0_i32 = arith.constant 0 : i32
    %c0_i32_0 = arith.constant 0 : i32
    return %arg0, %c0_i32 : i32, i32
  }
}

module attributes {stable_mosaic.version = 11 : i64} {
  func.func @_cv2_kernel(%arg0: i32, %arg1: memref<512x2xbf16, #tpu.memory_space<vmem>>, %arg2: memref<512x2xbf16, #tpu.memory_space<vmem>>, %arg3: memref<2x4xbf16, #tpu.memory_space<vmem>>, %arg4: memref<2x4xbf16, #tpu.memory_space<vmem>>, %arg5: memref<1x4xf32, #tpu.memory_space<vmem>>, %arg6: memref<512x4xf32, #tpu.memory_space<vmem>>) attributes {dimension_semantics = [#tpu.dimension_semantics<parallel>], iteration_bounds = array<i64: 1>, scalar_prefetch = 0 : i64, scratch_operands = 0 : i64, tpu.core_type = #tpu.core_type<tc>, window_params = [{transform_indices = @transform_0, window_bounds = array<i64: 512, 2>}, {transform_indices = @transform_1, window_bounds = array<i64: 512, 2>}, {pipeline_mode = #tpu.pipeline_mode<synchronous>, transform_indices = @transform_2, window_bounds = array<i64: 2, 4>}, {pipeline_mode = #tpu.pipeline_mode<synchronous>, transform_indices = @transform_3, window_bounds = array<i64: 2, 4>}, {pipeline_mode = #tpu.pipeline_mode<synchronous>, transform_indices = @transform_4, window_bounds = array<i64: 1, 4>}, {transform_indices = @transform_5, window_bounds = array<i64: 512, 4>}]} {
    %c0 = arith.constant 0 : index
    %c0_0 = arith.constant 0 : index
    %0 = vector.load %arg1[%c0, %c0_0] : memref<512x2xbf16, #tpu.memory_space<vmem>>, vector<512x2xbf16>
    %c0_1 = arith.constant 0 : index
    %c0_2 = arith.constant 0 : index
    %1 = vector.load %arg3[%c0_1, %c0_2] : memref<2x4xbf16, #tpu.memory_space<vmem>>, vector<2x4xbf16>
    %cst = arith.constant dense<0.000000e+00> : vector<512x4xf32>
    %2 = tpu.matmul %0, %1, %cst {dimension_numbers = #tpu.dot_dimension_numbers<[1], [0], [0], [1], [0, 0, 1, 1], [], []>} : vector<512x2xbf16>, vector<2x4xbf16>, vector<512x4xf32> -> vector<512x4xf32>
    %c0_3 = arith.constant 0 : index
    %c0_4 = arith.constant 0 : index
    %3 = vector.load %arg2[%c0_3, %c0_4] : memref<512x2xbf16, #tpu.memory_space<vmem>>, vector<512x2xbf16>
    %c0_5 = arith.constant 0 : index
    %c0_6 = arith.constant 0 : index
    %4 = vector.load %arg4[%c0_5, %c0_6] : memref<2x4xbf16, #tpu.memory_space<vmem>>, vector<2x4xbf16>
    %cst_7 = arith.constant dense<0.000000e+00> : vector<512x4xf32>
    %5 = tpu.matmul %3, %4, %cst_7 {dimension_numbers = #tpu.dot_dimension_numbers<[1], [0], [0], [1], [0, 0, 1, 1], [], []>} : vector<512x2xbf16>, vector<2x4xbf16>, vector<512x4xf32> -> vector<512x4xf32>
    %6 = arith.addf %2, %5 : vector<512x4xf32>
    %c0_8 = arith.constant 0 : index
    %c0_9 = arith.constant 0 : index
    %7 = vector.load %arg5[%c0_8, %c0_9] : memref<1x4xf32, #tpu.memory_space<vmem>>, vector<1x4xf32>
    %8 = vector.broadcast %7 : vector<1x4xf32> to vector<512x4xf32>
    %9 = arith.addf %6, %8 : vector<512x4xf32>
    %cst_10 = arith.constant 0.000000e+00 : f32
    %10 = vector.broadcast %cst_10 : f32 to vector<512x4xf32>
    %11 = arith.subf %10, %9 : vector<512x4xf32>
    %12 = math.exp %11 : vector<512x4xf32>
    %cst_11 = arith.constant 1.000000e+00 : f32
    %13 = vector.broadcast %cst_11 : f32 to vector<512x4xf32>
    %14 = arith.addf %13, %12 : vector<512x4xf32>
    %15 = tpu.reciprocal %14 {approx = true} : vector<512x4xf32> -> vector<512x4xf32>
    %16 = arith.mulf %9, %15 : vector<512x4xf32>
    %c0_12 = arith.constant 0 : index
    %c0_13 = arith.constant 0 : index
    %17 = vector.load %arg6[%c0_12, %c0_13] : memref<512x4xf32, #tpu.memory_space<vmem>>, vector<512x4xf32>
    tpu.vector_store %arg6[%c0_12, %c0_13], %16 {strides = array<i32>} : memref<512x4xf32, #tpu.memory_space<vmem>>, vector<512x4xf32>,
    return
  }
  func.func @transform_0(%arg0: i32) -> (i32, i32) {
    %c0_i32 = arith.constant 0 : i32
    %c0_i32_0 = arith.constant 0 : i32
    return %arg0, %c0_i32 : i32, i32
  }
  func.func @transform_1(%arg0: i32) -> (i32, i32) {
    %c0_i32 = arith.constant 0 : i32
    %c0_i32_0 = arith.constant 0 : i32
    return %arg0, %c0_i32 : i32, i32
  }
  func.func @transform_2(%arg0: i32) -> (i32, i32) {
    %c0_i32 = arith.constant 0 : i32
    %c0_i32_0 = arith.constant 0 : i32
    %c0_i32_1 = arith.constant 0 : i32
    return %c0_i32, %c0_i32_0 : i32, i32
  }
  func.func @transform_3(%arg0: i32) -> (i32, i32) {
    %c0_i32 = arith.constant 0 : i32
    %c0_i32_0 = arith.constant 0 : i32
    %c0_i32_1 = arith.constant 0 : i32
    return %c0_i32, %c0_i32_0 : i32, i32
  }
  func.func @transform_4(%arg0: i32) -> (i32, i32) {
    %c0_i32 = arith.constant 0 : i32
    %c0_i32_0 = arith.constant 0 : i32
    %c0_i32_1 = arith.constant 0 : i32
    return %c0_i32, %c0_i32_0 : i32, i32
  }
  func.func @transform_5(%arg0: i32) -> (i32, i32) {
    %c0_i32 = arith.constant 0 : i32
    %c0_i32_0 = arith.constant 0 : i32
    return %arg0, %c0_i32 : i32, i32
  }
}

</mosaic_0001>

<llo_original>
// kernel: c2_forward.3
$region0: #{c2_forward.3}
  #allocation0 [shape = 'u32[]', space=smem, size = 0x4, offset = 0x4, fixed_abs, tag = 'smem constant byte address 0x4 - core index']
  #allocation1 [shape = 'u32[144,128]{1,0:T(1,128)}', space=vmem, size = 0x12000, scoped, tag = 'internal scratch']
  %s0 = inlined_call_operand.vmem [shape: bf16[512,4], index: 0, kind: input, shape index: {}]
  %s1 = inlined_call_operand.vmem [shape: bf16[4,2], index: 1, kind: input, shape index: {}]
  %s2 = inlined_call_operand.vmem [shape: bf16[4,2], index: 2, kind: input, shape index: {}]
  %s3 = inlined_call_operand.vmem [shape: f32[1,2], index: 3, kind: input, shape index: {}]
  %s4 = inlined_call_operand.vmem [shape: f32[1,2], index: 4, kind: input, shape index: {}]
  %s5 = inlined_call_operand.vmem [shape: bf16[512,2], index: 5, kind: output, shape index: {0}]
  %s6 = inlined_call_operand.vmem [shape: bf16[512,2], index: 6, kind: output, shape index: {1}]
  %7 = xla_tuple %s5, %s6
  %s8 = sld [smem:[#allocation0]]
  $region38: #{c2_forward.3} parent=0
    _
  %s10 = ssub.s32 1, %s8
  %s11 = scalar_select 0, %s10, %s8
  // Predicated region
  $region2: #{c2_forward.3} parent=0 // pred_check
    _
  $region3: #{c2_forward.3} parent=0 // pred_check_branch
    %13 = sbr.rel (0) target = $region5
  $region4: #{c2_forward.3} parent=0 // pred_region
    _
  $region5: #{c2_forward.3} parent=0 // pred_fallthru
    _
  // Predicated region
  $region6: #{c2_forward.3} parent=0 // pred_check
    _
  $region7: #{c2_forward.3} parent=0 // pred_check_branch
    %15 = sbr.rel (0) target = $region9
  $region8: #{c2_forward.3} parent=0 // pred_region
    _
  $region9: #{c2_forward.3} parent=0 // pred_fallthru
    _
  // Predicated region
  $region10: #{c2_forward.3} parent=0 // pred_check
    _
  $region11: #{c2_forward.3} parent=0 // pred_check_branch
    %17 = sbr.rel (0) target = $region13
  $region12: #{c2_forward.3} parent=0 // pred_region
    _
  $region13: #{c2_forward.3} parent=0 // pred_fallthru
    _
  // Predicated region
  $region14: #{c2_forward.3} parent=0 // pred_check
    _
  $region15: #{c2_forward.3} parent=0 // pred_check_branch
    %19 = sbr.rel (0) target = $region17
  $region16: #{c2_forward.3} parent=0 // pred_region
    _
  $region17: #{c2_forward.3} parent=0 // pred_fallthru
    _
  // Predicated region
  $region18: #{c2_forward.3} parent=0 // pred_check
    _
  $region19: #{c2_forward.3} parent=0 // pred_check_branch
    %21 = sbr.rel (0) target = $region21
  $region20: #{c2_forward.3} parent=0 // pred_region
    _
  $region21: #{c2_forward.3} parent=0 // pred_fallthru
    _
  %v23 = vld [vmem:[%s0] sm:$0xf]
  %v24 = vld [vmem:[%s0 + $0x4] sm:$0xf]
  %v25 = vld [vmem:[%s0 + $0x8] sm:$0xf]
  %v26 = vld [vmem:[%s0 + $0xc] sm:$0xf]
  %v27 = vld [vmem:[%s0 + $0x10] sm:$0xf]
  %v28 = vld [vmem:[%s0 + $0x14] sm:$0xf]
  %v29 = vld [vmem:[%s0 + $0x18] sm:$0xf]
  %v30 = vld [vmem:[%s0 + $0x1c] sm:$0xf]
  %v31 = vld [vmem:[%s0 + $0x20] sm:$0xf]
  %v32 = vld [vmem:[%s0 + $0x24] sm:$0xf]
  %v33 = vld [vmem:[%s0 + $0x28] sm:$0xf]
  %v34 = vld [vmem:[%s0 + $0x2c] sm:$0xf]
  %v35 = vld [vmem:[%s0 + $0x30] sm:$0xf]
  %v36 = vld [vmem:[%s0 + $0x34] sm:$0xf]
  %v37 = vld [vmem:[%s0 + $0x38] sm:$0xf]
  %v38 = vld [vmem:[%s0 + $0x3c] sm:$0xf]
  %v39 = vld [vmem:[%s0 + $0x40] sm:$0xf]
  %v40 = vld [vmem:[%s0 + $0x44] sm:$0xf]
  %v41 = vld [vmem:[%s0 + $0x48] sm:$0xf]
  %v42 = vld [vmem:[%s0 + $0x4c] sm:$0xf]
  %v43 = vld [vmem:[%s0 + $0x50] sm:$0xf]
  %v44 = vld [vmem:[%s0 + $0x54] sm:$0xf]
  %v45 = vld [vmem:[%s0 + $0x58] sm:$0xf]
  %v46 = vld [vmem:[%s0 + $0x5c] sm:$0xf]
  %v47 = vld [vmem:[%s0 + $0x60] sm:$0xf]
  %v48 = vld [vmem:[%s0 + $0x64] sm:$0xf]
  %v49 = vld [vmem:[%s0 + $0x68] sm:$0xf]
  %v50 = vld [vmem:[%s0 + $0x6c] sm:$0xf]
  %v51 = vld [vmem:[%s0 + $0x70] sm:$0xf]
  %v52 = vld [vmem:[%s0 + $0x74] sm:$0xf]
  %v53 = vld [vmem:[%s0 + $0x78] sm:$0xf]
  %v54 = vld [vmem:[%s0 + $0x7c] sm:$0xf]
  %v55 = vld [vmem:[%s0 + $0x80] sm:$0xf]
  %v56 = vld [vmem:[%s0 + $0x84] sm:$0xf]
  %v57 = vld [vmem:[%s0 + $0x88] sm:$0xf]
  %v58 = vld [vmem:[%s0 + $0x8c] sm:$0xf]
  %v59 = vld [vmem:[%s0 + $0x90] sm:$0xf]
  %v60 = vld [vmem:[%s0 + $0x94] sm:$0xf]
  %v61 = vld [vmem:[%s0 + $0x98] sm:$0xf]
  %v62 = vld [vmem:[%s0 + $0x9c] sm:$0xf]
  %v63 = vld [vmem:[%s0 + $0xa0] sm:$0xf]
  %v64 = vld [vmem:[%s0 + $0xa4] sm:$0xf]
  %v65 = vld [vmem:[%s0 + $0xa8] sm:$0xf]
  %v66 = vld [vmem:[%s0 + $0xac] sm:$0xf]
  %v67 = vld [vmem:[%s0 + $0xb0] sm:$0xf]
  %v68 = vld [vmem:[%s0 + $0xb4] sm:$0xf]
  %v69 = vld [vmem:[%s0 + $0xb8] sm:$0xf]
  %v70 = vld [vmem:[%s0 + $0xbc] sm:$0xf]
  %v71 = vld [vmem:[%s0 + $0xc0] sm:$0xf]
  %v72 = vld [vmem:[%s0 + $0xc4] sm:$0xf]
  %v73 = vld [vmem:[%s0 + $0xc8] sm:$0xf]
  %v74 = vld [vmem:[%s0 + $0xcc] sm:$0xf]
  %v75 = vld [vmem:[%s0 + $0xd0] sm:$0xf]
  %v76 = vld [vmem:[%s0 + $0xd4] sm:$0xf]
  %v77 = vld [vmem:[%s0 + $0xd8] sm:$0xf]
  %v78 = vld [vmem:[%s0 + $0xdc] sm:$0xf]
  %v79 = vld [vmem:[%s0 + $0xe0] sm:$0xf]
  %v80 = vld [vmem:[%s0 + $0xe4] sm:$0xf]
  %v81 = vld [vmem:[%s0 + $0xe8] sm:$0xf]
  %v82 = vld [vmem:[%s0 + $0xec] sm:$0xf]
  %v83 = vld [vmem:[%s0 + $0xf0] sm:$0xf]
  %v84 = vld [vmem:[%s0 + $0xf4] sm:$0xf]
  %v85 = vld [vmem:[%s0 + $0xf8] sm:$0xf]
  %v86 = vld [vmem:[%s0 + $0xfc] sm:$0xf]
  %v87 = vld [vmem:[%s1] sm:$0x3]
  %v88 = vld [vmem:[%s3] sm:$0x1]
  %v90 = vlaneseq
  %v91 = vshrl.u32 %v90, 7
  %v92 = vsub.s32 0, %v91
  %v93 = vrot.slane %v88, %v92
  %v159 = vunpack.c.l.b16 %v23
  %v160 = vunpack.c.l.b16 %v24
  %v161 = vunpack.c.l.b16 %v25
  %v162 = vunpack.c.l.b16 %v26
  %v163 = vunpack.c.l.b16 %v27
  %v164 = vunpack.c.l.b16 %v28
  %v165 = vunpack.c.l.b16 %v29
  %v166 = vunpack.c.l.b16 %v30
  %v167 = vunpack.c.l.b16 %v31
  %v168 = vunpack.c.l.b16 %v32
  %v169 = vunpack.c.l.b16 %v33
  %v170 = vunpack.c.l.b16 %v34
  %v171 = vunpack.c.l.b16 %v35
  %v172 = vunpack.c.l.b16 %v36
  %v173 = vunpack.c.l.b16 %v37
  %v174 = vunpack.c.l.b16 %v38
  %v175 = vunpack.c.l.b16 %v39
  %v176 = vunpack.c.l.b16 %v40
  %v177 = vunpack.c.l.b16 %v41
  %v178 = vunpack.c.l.b16 %v42
  %v179 = vunpack.c.l.b16 %v43
  %v180 = vunpack.c.l.b16 %v44
  %v181 = vunpack.c.l.b16 %v45
  %v182 = vunpack.c.l.b16 %v46
  %v183 = vunpack.c.l.b16 %v47
  %v184 = vunpack.c.l.b16 %v48
  %v185 = vunpack.c.l.b16 %v49
  %v186 = vunpack.c.l.b16 %v50
  %v187 = vunpack.c.l.b16 %v51
  %v188 = vunpack.c.l.b16 %v52
  %v189 = vunpack.c.l.b16 %v53
  %v190 = vunpack.c.l.b16 %v54
  %v191 = vunpack.c.l.b16 %v55
  %v192 = vunpack.c.l.b16 %v56
  %v193 = vunpack.c.l.b16 %v57
  %v194 = vunpack.c.l.b16 %v58
  %v195 = vunpack.c.l.b16 %v59
  %v196 = vunpack.c.l.b16 %v60
  %v197 = vunpack.c.l.b16 %v61
  %v198 = vunpack.c.l.b16 %v62
  %v199 = vunpack.c.l.b16 %v63
  %v200 = vunpack.c.l.b16 %v64
  %v201 = vunpack.c.l.b16 %v65
  %v202 = vunpack.c.l.b16 %v66
  %v203 = vunpack.c.l.b16 %v67
  %v204 = vunpack.c.l.b16 %v68
  %v205 = vunpack.c.l.b16 %v69
  %v206 = vunpack.c.l.b16 %v70
  %v207 = vunpack.c.l.b16 %v71
  %v208 = vunpack.c.l.b16 %v72
  %v209 = vunpack.c.l.b16 %v73
  %v210 = vunpack.c.l.b16 %v74
  %v211 = vunpack.c.l.b16 %v75
  %v212 = vunpack.c.l.b16 %v76
  %v213 = vunpack.c.l.b16 %v77
  %v214 = vunpack.c.l.b16 %v78
  %v215 = vunpack.c.l.b16 %v79
  %v216 = vunpack.c.l.b16 %v80
  %v217 = vunpack.c.l.b16 %v81
  %v218 = vunpack.c.l.b16 %v82
  %v219 = vunpack.c.l.b16 %v83
  %v220 = vunpack.c.l.b16 %v84
  %v221 = vunpack.c.l.b16 %v85
  %v222 = vunpack.c.l.b16 %v86
  %v223 = vpack.c.b16 %v160, %v159
  %v224 = vpack.c.b16 %v162, %v161
  %v225 = vpack.c.b16 %v164, %v163
  %v226 = vpack.c.b16 %v166, %v165
  %v227 = vpack.c.b16 %v168, %v167
  %v228 = vpack.c.b16 %v170, %v169
  %v229 = vpack.c.b16 %v172, %v171
  %v230 = vpack.c.b16 %v174, %v173
  %v231 = vpack.c.b16 %v176, %v175
  %v232 = vpack.c.b16 %v178, %v177
  %v233 = vpack.c.b16 %v180, %v179
  %v234 = vpack.c.b16 %v182, %v181
  %v235 = vpack.c.b16 %v184, %v183
  %v236 = vpack.c.b16 %v186, %v185
  %v237 = vpack.c.b16 %v188, %v187
  %v238 = vpack.c.b16 %v190, %v189
  %v239 = vpack.c.b16 %v192, %v191
  %v240 = vpack.c.b16 %v194, %v193
  %v241 = vpack.c.b16 %v196, %v195
  %v242 = vpack.c.b16 %v198, %v197
  %v243 = vpack.c.b16 %v200, %v199
  %v244 = vpack.c.b16 %v202, %v201
  %v245 = vpack.c.b16 %v204, %v203
  %v246 = vpack.c.b16 %v206, %v205
  %v247 = vpack.c.b16 %v208, %v207
  %v248 = vpack.c.b16 %v210, %v209
  %v249 = vpack.c.b16 %v212, %v211
  %v250 = vpack.c.b16 %v214, %v213
  %v251 = vpack.c.b16 %v216, %v215
  %v252 = vpack.c.b16 %v218, %v217
  %v253 = vpack.c.b16 %v220, %v219
  %v254 = vpack.c.b16 %v222, %v221
  %vm255 = vcmask 31744
  %v257 = vsel %vm255, %v223, 0
  %v260 = vsel %vm255, %v224, 0
  %v263 = vsel %vm255, %v225, 0
  %v266 = vsel %vm255, %v226, 0
  %v269 = vsel %vm255, %v227, 0
  %v272 = vsel %vm255, %v228, 0
  %v275 = vsel %vm255, %v229, 0
  %v278 = vsel %vm255, %v230, 0
  %v281 = vsel %vm255, %v231, 0
  %v284 = vsel %vm255, %v232, 0
  %v287 = vsel %vm255, %v233, 0
  %v290 = vsel %vm255, %v234, 0
  %v293 = vsel %vm255, %v235, 0
  %v296 = vsel %vm255, %v236, 0
  %v299 = vsel %vm255, %v237, 0
  %v302 = vsel %vm255, %v238, 0
  %v305 = vsel %vm255, %v239, 0
  %v308 = vsel %vm255, %v240, 0
  %v311 = vsel %vm255, %v241, 0
  %v314 = vsel %vm255, %v242, 0
  %v317 = vsel %vm255, %v243, 0
  %v320 = vsel %vm255, %v244, 0
  %v323 = vsel %vm255, %v245, 0
  %v326 = vsel %vm255, %v246, 0
  %v329 = vsel %vm255, %v247, 0
  %v332 = vsel %vm255, %v248, 0
  %v335 = vsel %vm255, %v249, 0
  %v338 = vsel %vm255, %v250, 0
  %v341 = vsel %vm255, %v251, 0
  %v344 = vsel %vm255, %v252, 0
  %v347 = vsel %vm255, %v253, 0
  %v350 = vsel %vm255, %v254, 0
  %vm352 = vcmask 1041408
  %v354 = vsel %vm352, %v87, 0
  %356 = vmatprep.subr.bf16.mxu0 0
  %357 = vmatpush1.bf16.msra.mxu0 %v354
  %358 = vmatprep.subr.bf16.mxu0 0
  %359 = vmatpush1.bf16.msra.mxu0 0
  %360 = vmatprep.subr.bf16.mxu0 0
  %361 = vmatpush1.bf16.msra.mxu0 0
  %362 = vmatprep.subr.bf16.mxu0 0
  %363 = vmatpush1.bf16.msra.mxu0 0
  %364 = vmatprep.subr.bf16.mxu0 0
  %365 = vmatpush1.bf16.msra.mxu0 0
  %366 = vmatprep.subr.bf16.mxu0 0
  %367 = vmatpush1.bf16.msra.mxu0 0
  %368 = vmatprep.subr.bf16.mxu0 0
  %369 = vmatpush1.bf16.msra.mxu0 0
  %370 = vmatprep.subr.bf16.mxu0 0
  %371 = vmatpush1.bf16.msra.mxu0 0
  %372 = vmatprep.subr.bf16.mxu0 0
  %373 = vmatpush1.bf16.msra.mxu0 0
  %374 = vmatprep.subr.bf16.mxu0 0
  %375 = vmatpush1.bf16.msra.mxu0 0
  %376 = vmatprep.subr.bf16.mxu0 0
  %377 = vmatpush1.bf16.msra.mxu0 0
  %378 = vmatprep.subr.bf16.mxu0 0
  %379 = vmatpush1.bf16.msra.mxu0 0
  %380 = vmatprep.subr.bf16.mxu0 0
  %381 = vmatpush1.bf16.msra.mxu0 0
  %382 = vmatprep.subr.bf16.mxu0 0
  %383 = vmatpush1.bf16.msra.mxu0 0
  %384 = vmatprep.subr.bf16.mxu0 0
  %385 = vmatpush1.bf16.msra.mxu0 0
  %386 = vmatprep.subr.bf16.mxu0 0
  %387 = vmatpush1.bf16.msra.mxu0 0
  %388 = vmatprep.mubr.bf16.mxu0 0
  %389 = vmatmul.mubr.bf16.gmra.mrb[0].mxu0 %v257
  %v390 = vpop.f32.mrb[0].mxu0
  %v391 = vadd.f32 %v93, %v390
  %v392 = vpop.f32.mrb[0].mxu0
  %v393 = vpop.f32.mrb[0].mxu0
  %v394 = vadd.f32 %v93, %v393
  %v395 = vpop.f32.mrb[0].mxu0
  %396 = vmatprep.mubr.bf16.mxu0 0
  %397 = vmatmul.mubr.bf16.gmra.mrb[0].mxu0 %v260
  %v398 = vpop.f32.mrb[0].mxu0
  %v399 = vadd.f32 %v93, %v398
  %v400 = vpop.f32.mrb[0].mxu0
  %v401 = vpop.f32.mrb[0].mxu0
  %v402 = vadd.f32 %v93, %v401
  %v403 = vpop.f32.mrb[0].mxu0
  %404 = vmatprep.mubr.bf16.mxu0 0
  %405 = vmatmul.mubr.bf16.gmra.mrb[0].mxu0 %v263
  %v406 = vpop.f32.mrb[0].mxu0
  %v407 = vadd.f32 %v93, %v406
  %v408 = vpop.f32.mrb[0].mxu0
  %v409 = vpop.f32.mrb[0].mxu0
  %v410 = vadd.f32 %v93, %v409
  %v411 = vpop.f32.mrb[0].mxu0
  %412 = vmatprep.mubr.bf16.mxu0 0
  %413 = vmatmul.mubr.bf16.gmra.mrb[0].mxu0 %v266
  %v414 = vpop.f32.mrb[0].mxu0
  %v415 = vadd.f32 %v93, %v414
  %v416 = vpop.f32.mrb[0].mxu0
  %v417 = vpop.f32.mrb[0].mxu0
  %v418 = vadd.f32 %v93, %v417
  %v419 = vpop.f32.mrb[0].mxu0
  %420 = vmatprep.mubr.bf16.mxu0 0
  %421 = vmatmul.mubr.bf16.gmra.mrb[0].mxu0 %v269
  %v422 = vpop.f32.mrb[0].mxu0
  %v423 = vadd.f32 %v93, %v422
  %v424 = vpop.f32.mrb[0].mxu0
  %v425 = vpop.f32.mrb[0].mxu0
  %v426 = vadd.f32 %v93, %v425
  %v427 = vpop.f32.mrb[0].mxu0
  %428 = vmatprep.mubr.bf16.mxu0 0
  %429 = vmatmul.mubr.bf16.gmra.mrb[0].mxu0 %v272
  %v430 = vpop.f32.mrb[0].mxu0
  %v431 = vadd.f32 %v93, %v430
  %v432 = vpop.f32.mrb[0].mxu0
  %v433 = vpop.f32.mrb[0].mxu0
  %v434 = vadd.f32 %v93, %v433
  %v435 = vpop.f32.mrb[0].mxu0
  %436 = vmatprep.mubr.bf16.mxu0 0
  %437 = vmatmul.mubr.bf16.gmra.mrb[0].mxu0 %v275
  %v438 = vpop.f32.mrb[0].mxu0
  %v439 = vadd.f32 %v93, %v438
  %v440 = vpop.f32.mrb[0].mxu0
  %v441 = vpop.f32.mrb[0].mxu0
  %v442 = vadd.f32 %v93, %v441
  %v443 = vpop.f32.mrb[0].mxu0
  %444 = vmatprep.mubr.bf16.mxu0 0
  %445 = vmatmul.mubr.bf16.gmra.mrb[0].mxu0 %v278
  %v446 = vpop.f32.mrb[0].mxu0
  %v447 = vadd.f32 %v93, %v446
  %v448 = vpop.f32.mrb[0].mxu0
  %v449 = vpop.f32.mrb[0].mxu0
  %v450 = vadd.f32 %v93, %v449
  %v451 = vpop.f32.mrb[0].mxu0
  %452 = vmatprep.mubr.bf16.mxu0 0
  %453 = vmatmul.mubr.bf16.gmra.mrb[0].mxu0 %v281
  %v454 = vpop.f32.mrb[0].mxu0
  %v455 = vadd.f32 %v93, %v454
  %v456 = vpop.f32.mrb[0].mxu0
  %v457 = vpop.f32.mrb[0].mxu0
  %v458 = vadd.f32 %v93, %v457
  %v459 = vpop.f32.mrb[0].mxu0
  %460 = vmatprep.mubr.bf16.mxu0 0
  %461 = vmatmul.mubr.bf16.gmra.mrb[0].mxu0 %v284
  %v462 = vpop.f32.mrb[0].mxu0
  %v463 = vadd.f32 %v93, %v462
  %v464 = vpop.f32.mrb[0].mxu0
  %v465 = vpop.f32.mrb[0].mxu0
  %v466 = vadd.f32 %v93, %v465
  %v467 = vpop.f32.mrb[0].mxu0
  %468 = vmatprep.mubr.bf16.mxu0 0
  %469 = vmatmul.mubr.bf16.gmra.mrb[0].mxu0 %v287
  %v470 = vpop.f32.mrb[0].mxu0
  %v471 = vadd.f32 %v93, %v470
  %v472 = vpop.f32.mrb[0].mxu0
  %v473 = vpop.f32.mrb[0].mxu0
  %v474 = vadd.f32 %v93, %v473
  %v475 = vpop.f32.mrb[0].mxu0
  %476 = vmatprep.mubr.bf16.mxu0 0
  %477 = vmatmul.mubr.bf16.gmra.mrb[0].mxu0 %v290
  %v478 = vpop.f32.mrb[0].mxu0
  %v479 = vadd.f32 %v93, %v478
  %v480 = vpop.f32.mrb[0].mxu0
  %v481 = vpop.f32.mrb[0].mxu0
  %v482 = vadd.f32 %v93, %v481
  %v483 = vpop.f32.mrb[0].mxu0
  %484 = vmatprep.mubr.bf16.mxu0 0
  %485 = vmatmul.mubr.bf16.gmra.mrb[0].mxu0 %v293
  %v486 = vpop.f32.mrb[0].mxu0
  %v487 = vadd.f32 %v93, %v486
  %v488 = vpop.f32.mrb[0].mxu0
  %v489 = vpop.f32.mrb[0].mxu0
  %v490 = vadd.f32 %v93, %v489
  %v491 = vpop.f32.mrb[0].mxu0
  %492 = vmatprep.mubr.bf16.mxu0 0
  %493 = vmatmul.mubr.bf16.gmra.mrb[0].mxu0 %v296
  %v494 = vpop.f32.mrb[0].mxu0
  %v495 = vadd.f32 %v93, %v494
  %v496 = vpop.f32.mrb[0].mxu0
  %v497 = vpop.f32.mrb[0].mxu0
  %v498 = vadd.f32 %v93, %v497
  %v499 = vpop.f32.mrb[0].mxu0
  %500 = vmatprep.mubr.bf16.mxu0 0
  %501 = vmatmul.mubr.bf16.gmra.mrb[0].mxu0 %v299
  %v502 = vpop.f32.mrb[0].mxu0
  %v503 = vadd.f32 %v93, %v502
  %v504 = vpop.f32.mrb[0].mxu0
  %v505 = vpop.f32.mrb[0].mxu0
  %v506 = vadd.f32 %v93, %v505
  %v507 = vpop.f32.mrb[0].mxu0
  %508 = vmatprep.mubr.bf16.mxu0 0
  %509 = vmatmul.mubr.bf16.gmra.mrb[0].mxu0 %v302
  %v510 = vpop.f32.mrb[0].mxu0
  %v511 = vadd.f32 %v93, %v510
  %v512 = vpop.f32.mrb[0].mxu0
  %v513 = vpop.f32.mrb[0].mxu0
  %v514 = vadd.f32 %v93, %v513
  %v515 = vpop.f32.mrb[0].mxu0
  %516 = vmatprep.mubr.bf16.mxu0 0
  %517 = vmatmul.mubr.bf16.gmra.mrb[0].mxu0 %v305
  %v518 = vpop.f32.mrb[0].mxu0
  %v519 = vadd.f32 %v93, %v518
  %v520 = vpop.f32.mrb[0].mxu0
  %v521 = vpop.f32.mrb[0].mxu0
  %v522 = vadd.f32 %v93, %v521
  %v523 = vpop.f32.mrb[0].mxu0
  %524 = vmatprep.mubr.bf16.mxu0 0
  %525 = vmatmul.mubr.bf16.gmra.mrb[0].mxu0 %v308
  %v526 = vpop.f32.mrb[0].mxu0
  %v527 = vadd.f32 %v93, %v526
  %v528 = vpop.f32.mrb[0].mxu0
  %v529 = vpop.f32.mrb[0].mxu0
  %v530 = vadd.f32 %v93, %v529
  %v531 = vpop.f32.mrb[0].mxu0
  %532 = vmatprep.mubr.bf16.mxu0 0
  %533 = vmatmul.mubr.bf16.gmra.mrb[0].mxu0 %v311
  %v534 = vpop.f32.mrb[0].mxu0
  %v535 = vadd.f32 %v93, %v534
  %v536 = vpop.f32.mrb[0].mxu0
  %v537 = vpop.f32.mrb[0].mxu0
  %v538 = vadd.f32 %v93, %v537
  %v539 = vpop.f32.mrb[0].mxu0
  %540 = vmatprep.mubr.bf16.mxu0 0
  %541 = vmatmul.mubr.bf16.gmra.mrb[0].mxu0 %v314
  %v542 = vpop.f32.mrb[0].mxu0
  %v543 = vadd.f32 %v93, %v542
  %v544 = vpop.f32.mrb[0].mxu0
  %v545 = vpop.f32.mrb[0].mxu0
  %v546 = vadd.f32 %v93, %v545
  %v547 = vpop.f32.mrb[0].mxu0
  %548 = vmatprep.mubr.bf16.mxu0 0
  %549 = vmatmul.mubr.bf16.gmra.mrb[0].mxu0 %v317
  %v550 = vpop.f32.mrb[0].mxu0
  %v551 = vadd.f32 %v93, %v550
  %v552 = vpop.f32.mrb[0].mxu0
  %v553 = vpop.f32.mrb[0].mxu0
  %v554 = vadd.f32 %v93, %v553
  %v555 = vpop.f32.mrb[0].mxu0
  %556 = vmatprep.mubr.bf16.mxu0 0
  %557 = vmatmul.mubr.bf16.gmra.mrb[0].mxu0 %v320
  %v558 = vpop.f32.mrb[0].mxu0
  %v559 = vadd.f32 %v93, %v558
  %v560 = vpop.f32.mrb[0].mxu0
  %v561 = vpop.f32.mrb[0].mxu0
  %v562 = vadd.f32 %v93, %v561
  %v563 = vpop.f32.mrb[0].mxu0
  %564 = vmatprep.mubr.bf16.mxu0 0
  %565 = vmatmul.mubr.bf16.gmra.mrb[0].mxu0 %v323
  %v566 = vpop.f32.mrb[0].mxu0
  %v567 = vadd.f32 %v93, %v566
  %v568 = vpop.f32.mrb[0].mxu0
  %v569 = vpop.f32.mrb[0].mxu0
  %v570 = vadd.f32 %v93, %v569
  %v571 = vpop.f32.mrb[0].mxu0
  %572 = vmatprep.mubr.bf16.mxu0 0
  %573 = vmatmul.mubr.bf16.gmra.mrb[0].mxu0 %v326
  %v574 = vpop.f32.mrb[0].mxu0
  %v575 = vadd.f32 %v93, %v574
  %v576 = vpop.f32.mrb[0].mxu0
  %v577 = vpop.f32.mrb[0].mxu0
  %v578 = vadd.f32 %v93, %v577
  %v579 = vpop.f32.mrb[0].mxu0
  %580 = vmatprep.mubr.bf16.mxu0 0
  %581 = vmatmul.mubr.bf16.gmra.mrb[0].mxu0 %v329
  %v582 = vpop.f32.mrb[0].mxu0
  %v583 = vadd.f32 %v93, %v582
  %v584 = vpop.f32.mrb[0].mxu0
  %v585 = vpop.f32.mrb[0].mxu0
  %v586 = vadd.f32 %v93, %v585
  %v587 = vpop.f32.mrb[0].mxu0
  %588 = vmatprep.mubr.bf16.mxu0 0
  %589 = vmatmul.mubr.bf16.gmra.mrb[0].mxu0 %v332
  %v590 = vpop.f32.mrb[0].mxu0
  %v591 = vadd.f32 %v93, %v590
  %v592 = vpop.f32.mrb[0].mxu0
  %v593 = vpop.f32.mrb[0].mxu0
  %v594 = vadd.f32 %v93, %v593
  %v595 = vpop.f32.mrb[0].mxu0
  %596 = vmatprep.mubr.bf16.mxu0 0
  %597 = vmatmul.mubr.bf16.gmra.mrb[0].mxu0 %v335
  %v598 = vpop.f32.mrb[0].mxu0
  %v599 = vadd.f32 %v93, %v598
  %v600 = vpop.f32.mrb[0].mxu0
  %v601 = vpop.f32.mrb[0].mxu0
  %v602 = vadd.f32 %v93, %v601
  %v603 = vpop.f32.mrb[0].mxu0
  %604 = vmatprep.mubr.bf16.mxu0 0
  %605 = vmatmul.mubr.bf16.gmra.mrb[0].mxu0 %v338
  %v606 = vpop.f32.mrb[0].mxu0
  %v607 = vadd.f32 %v93, %v606
  %v608 = vpop.f32.mrb[0].mxu0
  %v609 = vpop.f32.mrb[0].mxu0
  %v610 = vadd.f32 %v93, %v609
  %v611 = vpop.f32.mrb[0].mxu0
  %612 = vmatprep.mubr.bf16.mxu0 0
  %613 = vmatmul.mubr.bf16.gmra.mrb[0].mxu0 %v341
  %v614 = vpop.f32.mrb[0].mxu0
  %v615 = vadd.f32 %v93, %v614
  %v616 = vpop.f32.mrb[0].mxu0
  %v617 = vpop.f32.mrb[0].mxu0
  %v618 = vadd.f32 %v93, %v617
  %v619 = vpop.f32.mrb[0].mxu0
  %620 = vmatprep.mubr.bf16.mxu0 0
  %621 = vmatmul.mubr.bf16.gmra.mrb[0].mxu0 %v344
  %v622 = vpop.f32.mrb[0].mxu0
  %v623 = vadd.f32 %v93, %v622
  %v624 = vpop.f32.mrb[0].mxu0
  %v625 = vpop.f32.mrb[0].mxu0
  %v626 = vadd.f32 %v93, %v625
  %v627 = vpop.f32.mrb[0].mxu0
  %628 = vmatprep.mubr.bf16.mxu0 0
  %629 = vmatmul.mubr.bf16.gmra.mrb[0].mxu0 %v347
  %v630 = vpop.f32.mrb[0].mxu0
  %v631 = vadd.f32 %v93, %v630
  %v632 = vpop.f32.mrb[0].mxu0
  %v633 = vpop.f32.mrb[0].mxu0
  %v634 = vadd.f32 %v93, %v633
  %v635 = vpop.f32.mrb[0].mxu0
  %636 = vmatprep.mubr.bf16.mxu0 0
  %637 = vmatmul.mubr.bf16.gmra.mrb[0].mxu0 %v350
  %v638 = vpop.f32.mrb[0].mxu0
  %v639 = vadd.f32 %v93, %v638
  %v640 = vpop.f32.mrb[0].mxu0
  %v641 = vpop.f32.mrb[0].mxu0
  %v642 = vadd.f32 %v93, %v641
  %v643 = vpop.f32.mrb[0].mxu0
  %644 = vdwg.mxu0
  %v645 = vld [vmem:[%s2] sm:$0x3]
  %v646 = vld [vmem:[%s4] sm:$0x1]
  %v648 = vlaneseq
  %v649 = vshrl.u32 %v648, 7
  %v650 = vsub.s32 0, %v649
  %v651 = vrot.slane %v646, %v650
  %v654 = vsel %vm352, %v645, 0
  %656 = vmatprep.subr.bf16.mxu0 0
  %657 = vmatpush1.bf16.msra.mxu0 %v654
  %658 = vmatprep.subr.bf16.mxu0 0
  %659 = vmatpush1.bf16.msra.mxu0 0
  %660 = vmatprep.subr.bf16.mxu0 0
  %661 = vmatpush1.bf16.msra.mxu0 0
  %662 = vmatprep.subr.bf16.mxu0 0
  %663 = vmatpush1.bf16.msra.mxu0 0
  %664 = vmatprep.subr.bf16.mxu0 0
  %665 = vmatpush1.bf16.msra.mxu0 0
  %666 = vmatprep.subr.bf16.mxu0 0
  %667 = vmatpush1.bf16.msra.mxu0 0
  %668 = vmatprep.subr.bf16.mxu0 0
  %669 = vmatpush1.bf16.msra.mxu0 0
  %670 = vmatprep.subr.bf16.mxu0 0
  %671 = vmatpush1.bf16.msra.mxu0 0
  %672 = vmatprep.subr.bf16.mxu0 0
  %673 = vmatpush1.bf16.msra.mxu0 0
  %674 = vmatprep.subr.bf16.mxu0 0
  %675 = vmatpush1.bf16.msra.mxu0 0
  %676 = vmatprep.subr.bf16.mxu0 0
  %677 = vmatpush1.bf16.msra.mxu0 0
  %678 = vmatprep.subr.bf16.mxu0 0
  %679 = vmatpush1.bf16.msra.mxu0 0
  %680 = vmatprep.subr.bf16.mxu0 0
  %681 = vmatpush1.bf16.msra.mxu0 0
  %682 = vmatprep.subr.bf16.mxu0 0
  %683 = vmatpush1.bf16.msra.mxu0 0
  %684 = vmatprep.subr.bf16.mxu0 0
  %685 = vmatpush1.bf16.msra.mxu0 0
  %686 = vmatprep.subr.bf16.mxu0 0
  %687 = vmatpush1.bf16.msra.mxu0 0
  %688 = vmatprep.mubr.bf16.mxu0 0
  %689 = vmatmul.mubr.bf16.gmra.mrb[0].mxu0 %v257
  %v690 = vpop.f32.mrb[0].mxu0
  %v691 = vadd.f32 %v651, %v690
  %v692 = vpop.f32.mrb[0].mxu0
  %v693 = vpop.f32.mrb[0].mxu0
  %v694 = vadd.f32 %v651, %v693
  %v695 = vpop.f32.mrb[0].mxu0
  %696 = vmatprep.mubr.bf16.mxu0 0
  %697 = vmatmul.mubr.bf16.gmra.mrb[0].mxu0 %v260
  %v698 = vpop.f32.mrb[0].mxu0
  %v699 = vadd.f32 %v651, %v698
  %v700 = vpop.f32.mrb[0].mxu0
  %v701 = vpop.f32.mrb[0].mxu0
  %v702 = vadd.f32 %v651, %v701
  %v703 = vpop.f32.mrb[0].mxu0
  %704 = vmatprep.mubr.bf16.mxu0 0
  %705 = vmatmul.mubr.bf16.gmra.mrb[0].mxu0 %v263
  %v706 = vpop.f32.mrb[0].mxu0
  %v707 = vadd.f32 %v651, %v706
  %v708 = vpop.f32.mrb[0].mxu0
  %v709 = vpop.f32.mrb[0].mxu0
  %v710 = vadd.f32 %v651, %v709
  %v711 = vpop.f32.mrb[0].mxu0
  %712 = vmatprep.mubr.bf16.mxu0 0
  %713 = vmatmul.mubr.bf16.gmra.mrb[0].mxu0 %v266
  %v714 = vpop.f32.mrb[0].mxu0
  %v715 = vadd.f32 %v651, %v714
  %v716 = vpop.f32.mrb[0].mxu0
  %v717 = vpop.f32.mrb[0].mxu0
  %v718 = vadd.f32 %v651, %v717
  %v719 = vpop.f32.mrb[0].mxu0
  %720 = vmatprep.mubr.bf16.mxu0 0
  %721 = vmatmul.mubr.bf16.gmra.mrb[0].mxu0 %v269
  %v722 = vpop.f32.mrb[0].mxu0
  %v723 = vadd.f32 %v651, %v722
  %v724 = vpop.f32.mrb[0].mxu0
  %v725 = vpop.f32.mrb[0].mxu0
  %v726 = vadd.f32 %v651, %v725
  %v727 = vpop.f32.mrb[0].mxu0
  %728 = vmatprep.mubr.bf16.mxu0 0
  %729 = vmatmul.mubr.bf16.gmra.mrb[0].mxu0 %v272
  %v730 = vpop.f32.mrb[0].mxu0
  %v731 = vadd.f32 %v651, %v730
  %v732 = vpop.f32.mrb[0].mxu0
  %v733 = vpop.f32.mrb[0].mxu0
  %v734 = vadd.f32 %v651, %v733
  %v735 = vpop.f32.mrb[0].mxu0
  %736 = vmatprep.mubr.bf16.mxu0 0
  %737 = vmatmul.mubr.bf16.gmra.mrb[0].mxu0 %v275
  %v738 = vpop.f32.mrb[0].mxu0
  %v739 = vadd.f32 %v651, %v738
  %v740 = vpop.f32.mrb[0].mxu0
  %v741 = vpop.f32.mrb[0].mxu0
  %v742 = vadd.f32 %v651, %v741
  %v743 = vpop.f32.mrb[0].mxu0
  %744 = vmatprep.mubr.bf16.mxu0 0
  %745 = vmatmul.mubr.bf16.gmra.mrb[0].mxu0 %v278
  %v746 = vpop.f32.mrb[0].mxu0
  %v747 = vadd.f32 %v651, %v746
  %v748 = vpop.f32.mrb[0].mxu0
  %v749 = vpop.f32.mrb[0].mxu0
  %v750 = vadd.f32 %v651, %v749
  %v751 = vpop.f32.mrb[0].mxu0
  %752 = vmatprep.mubr.bf16.mxu0 0
  %753 = vmatmul.mubr.bf16.gmra.mrb[0].mxu0 %v281
  %v754 = vpop.f32.mrb[0].mxu0
  %v755 = vadd.f32 %v651, %v754
  %v756 = vpop.f32.mrb[0].mxu0
  %v757 = vpop.f32.mrb[0].mxu0
  %v758 = vadd.f32 %v651, %v757
  %v759 = vpop.f32.mrb[0].mxu0
  %760 = vmatprep.mubr.bf16.mxu0 0
  %761 = vmatmul.mubr.bf16.gmra.mrb[0].mxu0 %v284
  %v762 = vpop.f32.mrb[0].mxu0
  %v763 = vadd.f32 %v651, %v762
  %v764 = vpop.f32.mrb[0].mxu0
  %v765 = vpop.f32.mrb[0].mxu0
  %v766 = vadd.f32 %v651, %v765
  %v767 = vpop.f32.mrb[0].mxu0
  %768 = vmatprep.mubr.bf16.mxu0 0
  %769 = vmatmul.mubr.bf16.gmra.mrb[0].mxu0 %v287
  %v770 = vpop.f32.mrb[0].mxu0
  %v771 = vadd.f32 %v651, %v770
  %v772 = vpop.f32.mrb[0].mxu0
  %v773 = vpop.f32.mrb[0].mxu0
  %v774 = vadd.f32 %v651, %v773
  %v775 = vpop.f32.mrb[0].mxu0
  %776 = vmatprep.mubr.bf16.mxu0 0
  %777 = vmatmul.mubr.bf16.gmra.mrb[0].mxu0 %v290
  %v778 = vpop.f32.mrb[0].mxu0
  %v779 = vadd.f32 %v651, %v778
  %v780 = vpop.f32.mrb[0].mxu0
  %v781 = vpop.f32.mrb[0].mxu0
  %v782 = vadd.f32 %v651, %v781
  %v783 = vpop.f32.mrb[0].mxu0
  %784 = vmatprep.mubr.bf16.mxu0 0
  %785 = vmatmul.mubr.bf16.gmra.mrb[0].mxu0 %v293
  %v786 = vpop.f32.mrb[0].mxu0
  %v787 = vadd.f32 %v651, %v786
  %v788 = vpop.f32.mrb[0].mxu0
  %v789 = vpop.f32.mrb[0].mxu0
  %v790 = vadd.f32 %v651, %v789
  %v791 = vpop.f32.mrb[0].mxu0
  %792 = vmatprep.mubr.bf16.mxu0 0
  %793 = vmatmul.mubr.bf16.gmra.mrb[0].mxu0 %v296
  %v794 = vpop.f32.mrb[0].mxu0
  %v795 = vadd.f32 %v651, %v794
  %v796 = vpop.f32.mrb[0].mxu0
  %v797 = vpop.f32.mrb[0].mxu0
  %v798 = vadd.f32 %v651, %v797
  %v799 = vpop.f32.mrb[0].mxu0
  %800 = vmatprep.mubr.bf16.mxu0 0
  %801 = vmatmul.mubr.bf16.gmra.mrb[0].mxu0 %v299
  %v802 = vpop.f32.mrb[0].mxu0
  %v803 = vadd.f32 %v651, %v802
  %v804 = vpop.f32.mrb[0].mxu0
  %v805 = vpop.f32.mrb[0].mxu0
  %v806 = vadd.f32 %v651, %v805
  %v807 = vpop.f32.mrb[0].mxu0
  %808 = vmatprep.mubr.bf16.mxu0 0
  %809 = vmatmul.mubr.bf16.gmra.mrb[0].mxu0 %v302
  %v810 = vpop.f32.mrb[0].mxu0
  %v811 = vadd.f32 %v651, %v810
  %v812 = vpop.f32.mrb[0].mxu0
  %v813 = vpop.f32.mrb[0].mxu0
  %v814 = vadd.f32 %v651, %v813
  %v815 = vpop.f32.mrb[0].mxu0
  %816 = vmatprep.mubr.bf16.mxu0 0
  %817 = vmatmul.mubr.bf16.gmra.mrb[0].mxu0 %v305
  %v818 = vpop.f32.mrb[0].mxu0
  %v819 = vadd.f32 %v651, %v818
  %v820 = vpop.f32.mrb[0].mxu0
  %v821 = vpop.f32.mrb[0].mxu0
  %v822 = vadd.f32 %v651, %v821
  %v823 = vpop.f32.mrb[0].mxu0
  %824 = vmatprep.mubr.bf16.mxu0 0
  %825 = vmatmul.mubr.bf16.gmra.mrb[0].mxu0 %v308
  %v826 = vpop.f32.mrb[0].mxu0
  %v827 = vadd.f32 %v651, %v826
  %v828 = vpop.f32.mrb[0].mxu0
  %v829 = vpop.f32.mrb[0].mxu0
  %v830 = vadd.f32 %v651, %v829
  %v831 = vpop.f32.mrb[0].mxu0
  %832 = vmatprep.mubr.bf16.mxu0 0
  %833 = vmatmul.mubr.bf16.gmra.mrb[0].mxu0 %v311
  %v834 = vpop.f32.mrb[0].mxu0
  %v835 = vadd.f32 %v651, %v834
  %v836 = vpop.f32.mrb[0].mxu0
  %v837 = vpop.f32.mrb[0].mxu0
  %v838 = vadd.f32 %v651, %v837
  %v839 = vpop.f32.mrb[0].mxu0
  %840 = vmatprep.mubr.bf16.mxu0 0
  %841 = vmatmul.mubr.bf16.gmra.mrb[0].mxu0 %v314
  %v842 = vpop.f32.mrb[0].mxu0
  %v843 = vadd.f32 %v651, %v842
  %v844 = vpop.f32.mrb[0].mxu0
  %v845 = vpop.f32.mrb[0].mxu0
  %v846 = vadd.f32 %v651, %v845
  %v847 = vpop.f32.mrb[0].mxu0
  %848 = vmatprep.mubr.bf16.mxu0 0
  %849 = vmatmul.mubr.bf16.gmra.mrb[0].mxu0 %v317
  %v850 = vpop.f32.mrb[0].mxu0
  %v851 = vadd.f32 %v651, %v850
  %v852 = vpop.f32.mrb[0].mxu0
  %v853 = vpop.f32.mrb[0].mxu0
  %v854 = vadd.f32 %v651, %v853
  %v855 = vpop.f32.mrb[0].mxu0
  %856 = vmatprep.mubr.bf16.mxu0 0
  %857 = vmatmul.mubr.bf16.gmra.mrb[0].mxu0 %v320
  %v858 = vpop.f32.mrb[0].mxu0
  %v859 = vadd.f32 %v651, %v858
  %v860 = vpop.f32.mrb[0].mxu0
  %v861 = vpop.f32.mrb[0].mxu0
  %v862 = vadd.f32 %v651, %v861
  %v863 = vpop.f32.mrb[0].mxu0
  %864 = vmatprep.mubr.bf16.mxu0 0
  %865 = vmatmul.mubr.bf16.gmra.mrb[0].mxu0 %v323
  %v866 = vpop.f32.mrb[0].mxu0
  %v867 = vadd.f32 %v651, %v866
  %v868 = vpop.f32.mrb[0].mxu0
  %v869 = vpop.f32.mrb[0].mxu0
  %v870 = vadd.f32 %v651, %v869
  %v871 = vpop.f32.mrb[0].mxu0
  %872 = vmatprep.mubr.bf16.mxu0 0
  %873 = vmatmul.mubr.bf16.gmra.mrb[0].mxu0 %v326
  %v874 = vpop.f32.mrb[0].mxu0
  %v875 = vadd.f32 %v651, %v874
  %v876 = vpop.f32.mrb[0].mxu0
  %v877 = vpop.f32.mrb[0].mxu0
  %v878 = vadd.f32 %v651, %v877
  %v879 = vpop.f32.mrb[0].mxu0
  %880 = vmatprep.mubr.bf16.mxu0 0
  %881 = vmatmul.mubr.bf16.gmra.mrb[0].mxu0 %v329
  %v882 = vpop.f32.mrb[0].mxu0
  %v883 = vadd.f32 %v651, %v882
  %v884 = vpop.f32.mrb[0].mxu0
  %v885 = vpop.f32.mrb[0].mxu0
  %v886 = vadd.f32 %v651, %v885
  %v887 = vpop.f32.mrb[0].mxu0
  %888 = vmatprep.mubr.bf16.mxu0 0
  %889 = vmatmul.mubr.bf16.gmra.mrb[0].mxu0 %v332
  %v890 = vpop.f32.mrb[0].mxu0
  %v891 = vadd.f32 %v651, %v890
  %v892 = vpop.f32.mrb[0].mxu0
  %v893 = vpop.f32.mrb[0].mxu0
  %v894 = vadd.f32 %v651, %v893
  %v895 = vpop.f32.mrb[0].mxu0
  %896 = vmatprep.mubr.bf16.mxu0 0
  %897 = vmatmul.mubr.bf16.gmra.mrb[0].mxu0 %v335
  %v898 = vpop.f32.mrb[0].mxu0
  %v899 = vadd.f32 %v651, %v898
  %v900 = vpop.f32.mrb[0].mxu0
  %v901 = vpop.f32.mrb[0].mxu0
  %v902 = vadd.f32 %v651, %v901
  %v903 = vpop.f32.mrb[0].mxu0
  %904 = vmatprep.mubr.bf16.mxu0 0
  %905 = vmatmul.mubr.bf16.gmra.mrb[0].mxu0 %v338
  %v906 = vpop.f32.mrb[0].mxu0
  %v907 = vadd.f32 %v651, %v906
  %v908 = vpop.f32.mrb[0].mxu0
  %v909 = vpop.f32.mrb[0].mxu0
  %v910 = vadd.f32 %v651, %v909
  %v911 = vpop.f32.mrb[0].mxu0
  %912 = vmatprep.mubr.bf16.mxu0 0
  %913 = vmatmul.mubr.bf16.gmra.mrb[0].mxu0 %v341
  %v914 = vpop.f32.mrb[0].mxu0
  %v915 = vadd.f32 %v651, %v914
  %v916 = vpop.f32.mrb[0].mxu0
  %v917 = vpop.f32.mrb[0].mxu0
  %v918 = vadd.f32 %v651, %v917
  %v919 = vpop.f32.mrb[0].mxu0
  %920 = vmatprep.mubr.bf16.mxu0 0
  %921 = vmatmul.mubr.bf16.gmra.mrb[0].mxu0 %v344
  %v922 = vpop.f32.mrb[0].mxu0
  %v923 = vadd.f32 %v651, %v922
  %v924 = vpop.f32.mrb[0].mxu0
  %v925 = vpop.f32.mrb[0].mxu0
  %v926 = vadd.f32 %v651, %v925
  %v927 = vpop.f32.mrb[0].mxu0
  %928 = vmatprep.mubr.bf16.mxu0 0
  %929 = vmatmul.mubr.bf16.gmra.mrb[0].mxu0 %v347
  %v930 = vpop.f32.mrb[0].mxu0
  %v931 = vadd.f32 %v651, %v930
  %v932 = vpop.f32.mrb[0].mxu0
  %v933 = vpop.f32.mrb[0].mxu0
  %v934 = vadd.f32 %v651, %v933
  %v935 = vpop.f32.mrb[0].mxu0
  %936 = vmatprep.mubr.bf16.mxu0 0
  %937 = vmatmul.mubr.bf16.gmra.mrb[0].mxu0 %v350
  %v938 = vpop.f32.mrb[0].mxu0
  %v939 = vadd.f32 %v651, %v938
  %v940 = vpop.f32.mrb[0].mxu0
  %v941 = vpop.f32.mrb[0].mxu0
  %v942 = vadd.f32 %v651, %v941
  %v943 = vpop.f32.mrb[0].mxu0
  %944 = vdwg.mxu0
  %v945 = vsub.f32 0.0, %v391
  %v946 = vsub.f32 0.0, %v394
  %v947 = vsub.f32 0.0, %v399
  %v948 = vsub.f32 0.0, %v402
  %v949 = vsub.f32 0.0, %v407
  %v950 = vsub.f32 0.0, %v410
  %v951 = vsub.f32 0.0, %v415
  %v952 = vsub.f32 0.0, %v418
  %v953 = vsub.f32 0.0, %v423
  %v954 = vsub.f32 0.0, %v426
  %v955 = vsub.f32 0.0, %v431
  %v956 = vsub.f32 0.0, %v434
  %v957 = vsub.f32 0.0, %v439
  %v958 = vsub.f32 0.0, %v442
  %v959 = vsub.f32 0.0, %v447
  %v960 = vsub.f32 0.0, %v450
  %v961 = vsub.f32 0.0, %v455
  %v962 = vsub.f32 0.0, %v458
  %v963 = vsub.f32 0.0, %v463
  %v964 = vsub.f32 0.0, %v466
  %v965 = vsub.f32 0.0, %v471
  %v966 = vsub.f32 0.0, %v474
  %v967 = vsub.f32 0.0, %v479
  %v968 = vsub.f32 0.0, %v482
  %v969 = vsub.f32 0.0, %v487
  %v970 = vsub.f32 0.0, %v490
  %v971 = vsub.f32 0.0, %v495
  %v972 = vsub.f32 0.0, %v498
  %v973 = vsub.f32 0.0, %v503
  %v974 = vsub.f32 0.0, %v506
  %v975 = vsub.f32 0.0, %v511
  %v976 = vsub.f32 0.0, %v514
  %v977 = vsub.f32 0.0, %v519
  %v978 = vsub.f32 0.0, %v522
  %v979 = vsub.f32 0.0, %v527
  %v980 = vsub.f32 0.0, %v530
  %v981 = vsub.f32 0.0, %v535
  %v982 = vsub.f32 0.0, %v538
  %v983 = vsub.f32 0.0, %v543
  %v984 = vsub.f32 0.0, %v546
  %v985 = vsub.f32 0.0, %v551
  %v986 = vsub.f32 0.0, %v554
  %v987 = vsub.f32 0.0, %v559
  %v988 = vsub.f32 0.0, %v562
  %v989 = vsub.f32 0.0, %v567
  %v990 = vsub.f32 0.0, %v570
  %v991 = vsub.f32 0.0, %v575
  %v992 = vsub.f32 0.0, %v578
  %v993 = vsub.f32 0.0, %v583
  %v994 = vsub.f32 0.0, %v586
  %v995 = vsub.f32 0.0, %v591
  %v996 = vsub.f32 0.0, %v594
  %v997 = vsub.f32 0.0, %v599
  %v998 = vsub.f32 0.0, %v602
  %v999 = vsub.f32 0.0, %v607
  %v1000 = vsub.f32 0.0, %v610
  %v1001 = vsub.f32 0.0, %v615
  %v1002 = vsub.f32 0.0, %v618
  %v1003 = vsub.f32 0.0, %v623
  %v1004 = vsub.f32 0.0, %v626
  %v1005 = vsub.f32 0.0, %v631
  %v1006 = vsub.f32 0.0, %v634
  %v1007 = vsub.f32 0.0, %v639
  %v1008 = vsub.f32 0.0, %v642
  %v1009 = vmul.f32 %v945, 1.442695
  %v1010 = vpow.pop %v1009
  %v1011 = vmul.f32 %v946, 1.442695
  %v1012 = vpow.pop %v1011
  %v1013 = vmul.f32 %v947, 1.442695
  %v1014 = vpow.pop %v1013
  %v1015 = vmul.f32 %v948, 1.442695
  %v1016 = vpow.pop %v1015
  %v1017 = vmul.f32 %v949, 1.442695
  %v1018 = vpow.pop %v1017
  %v1019 = vmul.f32 %v950, 1.442695
  %v1020 = vpow.pop %v1019
  %v1021 = vmul.f32 %v951, 1.442695
  %v1022 = vpow.pop %v1021
  %v1023 = vmul.f32 %v952, 1.442695
  %v1024 = vpow.pop %v1023
  %v1025 = vmul.f32 %v953, 1.442695
  %v1026 = vpow.pop %v1025
  %v1027 = vmul.f32 %v954, 1.442695
  %v1028 = vpow.pop %v1027
  %v1029 = vmul.f32 %v955, 1.442695
  %v1030 = vpow.pop %v1029
  %v1031 = vmul.f32 %v956, 1.442695
  %v1032 = vpow.pop %v1031
  %v1033 = vmul.f32 %v957, 1.442695
  %v1034 = vpow.pop %v1033
  %v1035 = vmul.f32 %v958, 1.442695
  %v1036 = vpow.pop %v1035
  %v1037 = vmul.f32 %v959, 1.442695
  %v1038 = vpow.pop %v1037
  %v1039 = vmul.f32 %v960, 1.442695
  %v1040 = vpow.pop %v1039
  %v1041 = vmul.f32 %v961, 1.442695
  %v1042 = vpow.pop %v1041
  %v1043 = vmul.f32 %v962, 1.442695
  %v1044 = vpow.pop %v1043
  %v1045 = vmul.f32 %v963, 1.442695
  %v1046 = vpow.pop %v1045
  %v1047 = vmul.f32 %v964, 1.442695
  %v1048 = vpow.pop %v1047
  %v1049 = vmul.f32 %v965, 1.442695
  %v1050 = vpow.pop %v1049
  %v1051 = vmul.f32 %v966, 1.442695
  %v1052 = vpow.pop %v1051
  %v1053 = vmul.f32 %v967, 1.442695
  %v1054 = vpow.pop %v1053
  %v1055 = vmul.f32 %v968, 1.442695
  %v1056 = vpow.pop %v1055
  %v1057 = vmul.f32 %v969, 1.442695
  %v1058 = vpow.pop %v1057
  %v1059 = vmul.f32 %v970, 1.442695
  %v1060 = vpow.pop %v1059
  %v1061 = vmul.f32 %v971, 1.442695
  %v1062 = vpow.pop %v1061
  %v1063 = vmul.f32 %v972, 1.442695
  %v1064 = vpow.pop %v1063
  %v1065 = vmul.f32 %v973, 1.442695
  %v1066 = vpow.pop %v1065
  %v1067 = vmul.f32 %v974, 1.442695
  %v1068 = vpow.pop %v1067
  %v1069 = vmul.f32 %v975, 1.442695
  %v1070 = vpow.pop %v1069
  %v1071 = vmul.f32 %v976, 1.442695
  %v1072 = vpow.pop %v1071
  %v1073 = vmul.f32 %v977, 1.442695
  %v1074 = vpow.pop %v1073
  %v1075 = vmul.f32 %v978, 1.442695
  %v1076 = vpow.pop %v1075
  %v1077 = vmul.f32 %v979, 1.442695
  %v1078 = vpow.pop %v1077
  %v1079 = vmul.f32 %v980, 1.442695
  %v1080 = vpow.pop %v1079
  %v1081 = vmul.f32 %v981, 1.442695
  %v1082 = vpow.pop %v1081
  %v1083 = vmul.f32 %v982, 1.442695
  %v1084 = vpow.pop %v1083
  %v1085 = vmul.f32 %v983, 1.442695
  %v1086 = vpow.pop %v1085
  %v1087 = vmul.f32 %v984, 1.442695
  %v1088 = vpow.pop %v1087
  %v1089 = vmul.f32 %v985, 1.442695
  %v1090 = vpow.pop %v1089
  %v1091 = vmul.f32 %v986, 1.442695
  %v1092 = vpow.pop %v1091
  %v1093 = vmul.f32 %v987, 1.442695
  %v1094 = vpow.pop %v1093
  %v1095 = vmul.f32 %v988, 1.442695
  %v1096 = vpow.pop %v1095
  %v1097 = vmul.f32 %v989, 1.442695
  %v1098 = vpow.pop %v1097
  %v1099 = vmul.f32 %v990, 1.442695
  %v1100 = vpow.pop %v1099
  %v1101 = vmul.f32 %v991, 1.442695
  %v1102 = vpow.pop %v1101
  %v1103 = vmul.f32 %v992, 1.442695
  %v1104 = vpow.pop %v1103
  %v1105 = vmul.f32 %v993, 1.442695
  %v1106 = vpow.pop %v1105
  %v1107 = vmul.f32 %v994, 1.442695
  %v1108 = vpow.pop %v1107
  %v1109 = vmul.f32 %v995, 1.442695
  %v1110 = vpow.pop %v1109
  %v1111 = vmul.f32 %v996, 1.442695
  %v1112 = vpow.pop %v1111
  %v1113 = vmul.f32 %v997, 1.442695
  %v1114 = vpow.pop %v1113
  %v1115 = vmul.f32 %v998, 1.442695
  %v1116 = vpow.pop %v1115
  %v1117 = vmul.f32 %v999, 1.442695
  %v1118 = vpow.pop %v1117
  %v1119 = vmul.f32 %v1000, 1.442695
  %v1120 = vpow.pop %v1119
  %v1121 = vmul.f32 %v1001, 1.442695
  %v1122 = vpow.pop %v1121
  %v1123 = vmul.f32 %v1002, 1.442695
  %v1124 = vpow.pop %v1123
  %v1125 = vmul.f32 %v1003, 1.442695
  %v1126 = vpow.pop %v1125
  %v1127 = vmul.f32 %v1004, 1.442695
  %v1128 = vpow.pop %v1127
  %v1129 = vmul.f32 %v1005, 1.442695
  %v1130 = vpow.pop %v1129
  %v1131 = vmul.f32 %v1006, 1.442695
  %v1132 = vpow.pop %v1131
  %v1133 = vmul.f32 %v1007, 1.442695
  %v1134 = vpow.pop %v1133
  %v1135 = vmul.f32 %v1008, 1.442695
  %v1136 = vpow.pop %v1135
  %v1137 = vadd.f32 %v1010, 1.0
  %v1138 = vadd.f32 %v1012, 1.0
  %v1139 = vadd.f32 %v1014, 1.0
  %v1140 = vadd.f32 %v1016, 1.0
  %v1141 = vadd.f32 %v1018, 1.0
  %v1142 = vadd.f32 %v1020, 1.0
  %v1143 = vadd.f32 %v1022, 1.0
  %v1144 = vadd.f32 %v1024, 1.0
  %v1145 = vadd.f32 %v1026, 1.0
  %v1146 = vadd.f32 %v1028, 1.0
  %v1147 = vadd.f32 %v1030, 1.0
  %v1148 = vadd.f32 %v1032, 1.0
  %v1149 = vadd.f32 %v1034, 1.0
  %v1150 = vadd.f32 %v1036, 1.0
  %v1151 = vadd.f32 %v1038, 1.0
  %v1152 = vadd.f32 %v1040, 1.0
  %v1153 = vadd.f32 %v1042, 1.0
  %v1154 = vadd.f32 %v1044, 1.0
  %v1155 = vadd.f32 %v1046, 1.0
  %v1156 = vadd.f32 %v1048, 1.0
  %v1157 = vadd.f32 %v1050, 1.0
  %v1158 = vadd.f32 %v1052, 1.0
  %v1159 = vadd.f32 %v1054, 1.0
  %v1160 = vadd.f32 %v1056, 1.0
  %v1161 = vadd.f32 %v1058, 1.0
  %v1162 = vadd.f32 %v1060, 1.0
  %v1163 = vadd.f32 %v1062, 1.0
  %v1164 = vadd.f32 %v1064, 1.0
  %v1165 = vadd.f32 %v1066, 1.0
  %v1166 = vadd.f32 %v1068, 1.0
  %v1167 = vadd.f32 %v1070, 1.0
  %v1168 = vadd.f32 %v1072, 1.0
  %v1169 = vadd.f32 %v1074, 1.0
  %v1170 = vadd.f32 %v1076, 1.0
  %v1171 = vadd.f32 %v1078, 1.0
  %v1172 = vadd.f32 %v1080, 1.0
  %v1173 = vadd.f32 %v1082, 1.0
  %v1174 = vadd.f32 %v1084, 1.0
  %v1175 = vadd.f32 %v1086, 1.0
  %v1176 = vadd.f32 %v1088, 1.0
  %v1177 = vadd.f32 %v1090, 1.0
  %v1178 = vadd.f32 %v1092, 1.0
  %v1179 = vadd.f32 %v1094, 1.0
  %v1180 = vadd.f32 %v1096, 1.0
  %v1181 = vadd.f32 %v1098, 1.0
  %v1182 = vadd.f32 %v1100, 1.0
  %v1183 = vadd.f32 %v1102, 1.0
  %v1184 = vadd.f32 %v1104, 1.0
  %v1185 = vadd.f32 %v1106, 1.0
  %v1186 = vadd.f32 %v1108, 1.0
  %v1187 = vadd.f32 %v1110, 1.0
  %v1188 = vadd.f32 %v1112, 1.0
  %v1189 = vadd.f32 %v1114, 1.0
  %v1190 = vadd.f32 %v1116, 1.0
  %v1191 = vadd.f32 %v1118, 1.0
  %v1192 = vadd.f32 %v1120, 1.0
  %v1193 = vadd.f32 %v1122, 1.0
  %v1194 = vadd.f32 %v1124, 1.0
  %v1195 = vadd.f32 %v1126, 1.0
  %v1196 = vadd.f32 %v1128, 1.0
  %v1197 = vadd.f32 %v1130, 1.0
  %v1198 = vadd.f32 %v1132, 1.0
  %v1199 = vadd.f32 %v1134, 1.0
  %v1200 = vadd.f32 %v1136, 1.0
  %v1201 = vrcp.pop %v1137
  %v1202 = vrcp.pop %v1138
  %v1203 = vrcp.pop %v1139
  %v1204 = vrcp.pop %v1140
  %v1205 = vrcp.pop %v1141
  %v1206 = vrcp.pop %v1142
  %v1207 = vrcp.pop %v1143
  %v1208 = vrcp.pop %v1144
  %v1209 = vrcp.pop %v1145
  %v1210 = vrcp.pop %v1146
  %v1211 = vrcp.pop %v1147
  %v1212 = vrcp.pop %v1148
  %v1213 = vrcp.pop %v1149
  %v1214 = vrcp.pop %v1150
  %v1215 = vrcp.pop %v1151
  %v1216 = vrcp.pop %v1152
  %v1217 = vrcp.pop %v1153
  %v1218 = vrcp.pop %v1154
  %v1219 = vrcp.pop %v1155
  %v1220 = vrcp.pop %v1156
  %v1221 = vrcp.pop %v1157
  %v1222 = vrcp.pop %v1158
  %v1223 = vrcp.pop %v1159
  %v1224 = vrcp.pop %v1160
  %v1225 = vrcp.pop %v1161
  %v1226 = vrcp.pop %v1162
  %v1227 = vrcp.pop %v1163
  %v1228 = vrcp.pop %v1164
  %v1229 = vrcp.pop %v1165
  %v1230 = vrcp.pop %v1166
  %v1231 = vrcp.pop %v1167
  %v1232 = vrcp.pop %v1168
  %v1233 = vrcp.pop %v1169
  %v1234 = vrcp.pop %v1170
  %v1235 = vrcp.pop %v1171
  %v1236 = vrcp.pop %v1172
  %v1237 = vrcp.pop %v1173
  %v1238 = vrcp.pop %v1174
  %v1239 = vrcp.pop %v1175
  %v1240 = vrcp.pop %v1176
  %v1241 = vrcp.pop %v1177
  %v1242 = vrcp.pop %v1178
  %v1243 = vrcp.pop %v1179
  %v1244 = vrcp.pop %v1180
  %v1245 = vrcp.pop %v1181
  %v1246 = vrcp.pop %v1182
  %v1247 = vrcp.pop %v1183
  %v1248 = vrcp.pop %v1184
  %v1249 = vrcp.pop %v1185
  %v1250 = vrcp.pop %v1186
  %v1251 = vrcp.pop %v1187
  %v1252 = vrcp.pop %v1188
  %v1253 = vrcp.pop %v1189
  %v1254 = vrcp.pop %v1190
  %v1255 = vrcp.pop %v1191
  %v1256 = vrcp.pop %v1192
  %v1257 = vrcp.pop %v1193
  %v1258 = vrcp.pop %v1194
  %v1259 = vrcp.pop %v1195
  %v1260 = vrcp.pop %v1196
  %v1261 = vrcp.pop %v1197
  %v1262 = vrcp.pop %v1198
  %v1263 = vrcp.pop %v1199
  %v1264 = vrcp.pop %v1200
  %v1265 = vmul.f32 %v391, %v1201
  %v1266 = vmul.f32 %v394, %v1202
  %v1267 = vmul.f32 %v399, %v1203
  %v1268 = vmul.f32 %v402, %v1204
  %v1269 = vmul.f32 %v407, %v1205
  %v1270 = vmul.f32 %v410, %v1206
  %v1271 = vmul.f32 %v415, %v1207
  %v1272 = vmul.f32 %v418, %v1208
  %v1273 = vmul.f32 %v423, %v1209
  %v1274 = vmul.f32 %v426, %v1210
  %v1275 = vmul.f32 %v431, %v1211
  %v1276 = vmul.f32 %v434, %v1212
  %v1277 = vmul.f32 %v439, %v1213
  %v1278 = vmul.f32 %v442, %v1214
  %v1279 = vmul.f32 %v447, %v1215
  %v1280 = vmul.f32 %v450, %v1216
  %v1281 = vmul.f32 %v455, %v1217
  %v1282 = vmul.f32 %v458, %v1218
  %v1283 = vmul.f32 %v463, %v1219
  %v1284 = vmul.f32 %v466, %v1220
  %v1285 = vmul.f32 %v471, %v1221
  %v1286 = vmul.f32 %v474, %v1222
  %v1287 = vmul.f32 %v479, %v1223
  %v1288 = vmul.f32 %v482, %v1224
  %v1289 = vmul.f32 %v487, %v1225
  %v1290 = vmul.f32 %v490, %v1226
  %v1291 = vmul.f32 %v495, %v1227
  %v1292 = vmul.f32 %v498, %v1228
  %v1293 = vmul.f32 %v503, %v1229
  %v1294 = vmul.f32 %v506, %v1230
  %v1295 = vmul.f32 %v511, %v1231
  %v1296 = vmul.f32 %v514, %v1232
  %v1297 = vmul.f32 %v519, %v1233
  %v1298 = vmul.f32 %v522, %v1234
  %v1299 = vmul.f32 %v527, %v1235
  %v1300 = vmul.f32 %v530, %v1236
  %v1301 = vmul.f32 %v535, %v1237
  %v1302 = vmul.f32 %v538, %v1238
  %v1303 = vmul.f32 %v543, %v1239
  %v1304 = vmul.f32 %v546, %v1240
  %v1305 = vmul.f32 %v551, %v1241
  %v1306 = vmul.f32 %v554, %v1242
  %v1307 = vmul.f32 %v559, %v1243
  %v1308 = vmul.f32 %v562, %v1244
  %v1309 = vmul.f32 %v567, %v1245
  %v1310 = vmul.f32 %v570, %v1246
  %v1311 = vmul.f32 %v575, %v1247
  %v1312 = vmul.f32 %v578, %v1248
  %v1313 = vmul.f32 %v583, %v1249
  %v1314 = vmul.f32 %v586, %v1250
  %v1315 = vmul.f32 %v591, %v1251
  %v1316 = vmul.f32 %v594, %v1252
  %v1317 = vmul.f32 %v599, %v1253
  %v1318 = vmul.f32 %v602, %v1254
  %v1319 = vmul.f32 %v607, %v1255
  %v1320 = vmul.f32 %v610, %v1256
  %v1321 = vmul.f32 %v615, %v1257
  %v1322 = vmul.f32 %v618, %v1258
  %v1323 = vmul.f32 %v623, %v1259
  %v1324 = vmul.f32 %v626, %v1260
  %v1325 = vmul.f32 %v631, %v1261
  %v1326 = vmul.f32 %v634, %v1262
  %v1327 = vmul.f32 %v639, %v1263
  %v1328 = vmul.f32 %v642, %v1264
  %v1329 = vpack.c.bf16 %v1266, %v1265
  %v1330 = vpack.c.bf16 %v1268, %v1267
  %v1331 = vpack.c.bf16 %v1270, %v1269
  %v1332 = vpack.c.bf16 %v1272, %v1271
  %v1333 = vpack.c.bf16 %v1274, %v1273
  %v1334 = vpack.c.bf16 %v1276, %v1275
  %v1335 = vpack.c.bf16 %v1278, %v1277
  %v1336 = vpack.c.bf16 %v1280, %v1279
  %v1337 = vpack.c.bf16 %v1282, %v1281
  %v1338 = vpack.c.bf16 %v1284, %v1283
  %v1339 = vpack.c.bf16 %v1286, %v1285
  %v1340 = vpack.c.bf16 %v1288, %v1287
  %v1341 = vpack.c.bf16 %v1290, %v1289
  %v1342 = vpack.c.bf16 %v1292, %v1291
  %v1343 = vpack.c.bf16 %v1294, %v1293
  %v1344 = vpack.c.bf16 %v1296, %v1295
  %v1345 = vpack.c.bf16 %v1298, %v1297
  %v1346 = vpack.c.bf16 %v1300, %v1299
  %v1347 = vpack.c.bf16 %v1302, %v1301
  %v1348 = vpack.c.bf16 %v1304, %v1303
  %v1349 = vpack.c.bf16 %v1306, %v1305
  %v1350 = vpack.c.bf16 %v1308, %v1307
  %v1351 = vpack.c.bf16 %v1310, %v1309
  %v1352 = vpack.c.bf16 %v1312, %v1311
  %v1353 = vpack.c.bf16 %v1314, %v1313
  %v1354 = vpack.c.bf16 %v1316, %v1315
  %v1355 = vpack.c.bf16 %v1318, %v1317
  %v1356 = vpack.c.bf16 %v1320, %v1319
  %v1357 = vpack.c.bf16 %v1322, %v1321
  %v1358 = vpack.c.bf16 %v1324, %v1323
  %v1359 = vpack.c.bf16 %v1326, %v1325
  %v1360 = vpack.c.bf16 %v1328, %v1327
  %v1393 = vunpack.c.l.b16 %v1329
  %v1394 = vunpack.c.h.b16 %v1329
  %v1395 = vunpack.c.l.b16 %v1330
  %v1396 = vunpack.c.h.b16 %v1330
  %v1397 = vunpack.c.l.b16 %v1331
  %v1398 = vunpack.c.h.b16 %v1331
  %v1399 = vunpack.c.l.b16 %v1332
  %v1400 = vunpack.c.h.b16 %v1332
  %v1401 = vunpack.c.l.b16 %v1333
  %v1402 = vunpack.c.h.b16 %v1333
  %v1403 = vunpack.c.l.b16 %v1334
  %v1404 = vunpack.c.h.b16 %v1334
  %v1405 = vunpack.c.l.b16 %v1335
  %v1406 = vunpack.c.h.b16 %v1335
  %v1407 = vunpack.c.l.b16 %v1336
  %v1408 = vunpack.c.h.b16 %v1336
  %v1409 = vunpack.c.l.b16 %v1337
  %v1410 = vunpack.c.h.b16 %v1337
  %v1411 = vunpack.c.l.b16 %v1338
  %v1412 = vunpack.c.h.b16 %v1338
  %v1413 = vunpack.c.l.b16 %v1339
  %v1414 = vunpack.c.h.b16 %v1339
  %v1415 = vunpack.c.l.b16 %v1340
  %v1416 = vunpack.c.h.b16 %v1340
  %v1417 = vunpack.c.l.b16 %v1341
  %v1418 = vunpack.c.h.b16 %v1341
  %v1419 = vunpack.c.l.b16 %v1342
  %v1420 = vunpack.c.h.b16 %v1342
  %v1421 = vunpack.c.l.b16 %v1343
  %v1422 = vunpack.c.h.b16 %v1343
  %v1423 = vunpack.c.l.b16 %v1344
  %v1424 = vunpack.c.h.b16 %v1344
  %v1425 = vunpack.c.l.b16 %v1345
  %v1426 = vunpack.c.h.b16 %v1345
  %v1427 = vunpack.c.l.b16 %v1346
  %v1428 = vunpack.c.h.b16 %v1346
  %v1429 = vunpack.c.l.b16 %v1347
  %v1430 = vunpack.c.h.b16 %v1347
  %v1431 = vunpack.c.l.b16 %v1348
  %v1432 = vunpack.c.h.b16 %v1348
  %v1433 = vunpack.c.l.b16 %v1349
  %v1434 = vunpack.c.h.b16 %v1349
  %v1435 = vunpack.c.l.b16 %v1350
  %v1436 = vunpack.c.h.b16 %v1350
  %v1437 = vunpack.c.l.b16 %v1351
  %v1438 = vunpack.c.h.b16 %v1351
  %v1439 = vunpack.c.l.b16 %v1352
  %v1440 = vunpack.c.h.b16 %v1352
  %v1441 = vunpack.c.l.b16 %v1353
  %v1442 = vunpack.c.h.b16 %v1353
  %v1443 = vunpack.c.l.b16 %v1354
  %v1444 = vunpack.c.h.b16 %v1354
  %v1445 = vunpack.c.l.b16 %v1355
  %v1446 = vunpack.c.h.b16 %v1355
  %v1447 = vunpack.c.l.b16 %v1356
  %v1448 = vunpack.c.h.b16 %v1356
  %v1449 = vunpack.c.l.b16 %v1357
  %v1450 = vunpack.c.h.b16 %v1357
  %v1451 = vunpack.c.l.b16 %v1358
  %v1452 = vunpack.c.h.b16 %v1358
  %v1453 = vunpack.c.l.b16 %v1359
  %v1454 = vunpack.c.h.b16 %v1359
  %v1455 = vunpack.c.l.b16 %v1360
  %v1456 = vunpack.c.h.b16 %v1360
  %v1457 = vpack.c.b16 %v1393, %v1393
  %v1458 = vpack.c.b16 %v1394, %v1394
  %v1459 = vpack.c.b16 %v1395, %v1395
  %v1460 = vpack.c.b16 %v1396, %v1396
  %v1461 = vpack.c.b16 %v1397, %v1397
  %v1462 = vpack.c.b16 %v1398, %v1398
  %v1463 = vpack.c.b16 %v1399, %v1399
  %v1464 = vpack.c.b16 %v1400, %v1400
  %v1465 = vpack.c.b16 %v1401, %v1401
  %v1466 = vpack.c.b16 %v1402, %v1402
  %v1467 = vpack.c.b16 %v1403, %v1403
  %v1468 = vpack.c.b16 %v1404, %v1404
  %v1469 = vpack.c.b16 %v1405, %v1405
  %v1470 = vpack.c.b16 %v1406, %v1406
  %v1471 = vpack.c.b16 %v1407, %v1407
  %v1472 = vpack.c.b16 %v1408, %v1408
  %v1473 = vpack.c.b16 %v1409, %v1409
  %v1474 = vpack.c.b16 %v1410, %v1410
  %v1475 = vpack.c.b16 %v1411, %v1411
  %v1476 = vpack.c.b16 %v1412, %v1412
  %v1477 = vpack.c.b16 %v1413, %v1413
  %v1478 = vpack.c.b16 %v1414, %v1414
  %v1479 = vpack.c.b16 %v1415, %v1415
  %v1480 = vpack.c.b16 %v1416, %v1416
  %v1481 = vpack.c.b16 %v1417, %v1417
  %v1482 = vpack.c.b16 %v1418, %v1418
  %v1483 = vpack.c.b16 %v1419, %v1419
  %v1484 = vpack.c.b16 %v1420, %v1420
  %v1485 = vpack.c.b16 %v1421, %v1421
  %v1486 = vpack.c.b16 %v1422, %v1422
  %v1487 = vpack.c.b16 %v1423, %v1423
  %v1488 = vpack.c.b16 %v1424, %v1424
  %v1489 = vpack.c.b16 %v1425, %v1425
  %v1490 = vpack.c.b16 %v1426, %v1426
  %v1491 = vpack.c.b16 %v1427, %v1427
  %v1492 = vpack.c.b16 %v1428, %v1428
  %v1493 = vpack.c.b16 %v1429, %v1429
  %v1494 = vpack.c.b16 %v1430, %v1430
  %v1495 = vpack.c.b16 %v1431, %v1431
  %v1496 = vpack.c.b16 %v1432, %v1432
  %v1497 = vpack.c.b16 %v1433, %v1433
  %v1498 = vpack.c.b16 %v1434, %v1434
  %v1499 = vpack.c.b16 %v1435, %v1435
  %v1500 = vpack.c.b16 %v1436, %v1436
  %v1501 = vpack.c.b16 %v1437, %v1437
  %v1502 = vpack.c.b16 %v1438, %v1438
  %v1503 = vpack.c.b16 %v1439, %v1439
  %v1504 = vpack.c.b16 %v1440, %v1440
  %v1505 = vpack.c.b16 %v1441, %v1441
  %v1506 = vpack.c.b16 %v1442, %v1442
  %v1507 = vpack.c.b16 %v1443, %v1443
  %v1508 = vpack.c.b16 %v1444, %v1444
  %v1509 = vpack.c.b16 %v1445, %v1445
  %v1510 = vpack.c.b16 %v1446, %v1446
  %v1511 = vpack.c.b16 %v1447, %v1447
  %v1512 = vpack.c.b16 %v1448, %v1448
  %v1513 = vpack.c.b16 %v1449, %v1449
  %v1514 = vpack.c.b16 %v1450, %v1450
  %v1515 = vpack.c.b16 %v1451, %v1451
  %v1516 = vpack.c.b16 %v1452, %v1452
  %v1517 = vpack.c.b16 %v1453, %v1453
  %v1518 = vpack.c.b16 %v1454, %v1454
  %v1519 = vpack.c.b16 %v1455, %v1455
  %v1520 = vpack.c.b16 %v1456, %v1456
  %vm1585 = vcmask 11264
  %1586 = vst.msk [vmem:[%s5] sm:$0xf] %vm1585, %v1457
  %1587 = vst.msk [vmem:[%s5 + $0x4] sm:$0xf] %vm1585, %v1458
  %1588 = vst.msk [vmem:[%s5 + $0x8] sm:$0xf] %vm1585, %v1459
  %1589 = vst.msk [vmem:[%s5 + $0xc] sm:$0xf] %vm1585, %v1460
  %1590 = vst.msk [vmem:[%s5 + $0x10] sm:$0xf] %vm1585, %v1461
  %1591 = vst.msk [vmem:[%s5 + $0x14] sm:$0xf] %vm1585, %v1462
  %1592 = vst.msk [vmem:[%s5 + $0x18] sm:$0xf] %vm1585, %v1463
  %1593 = vst.msk [vmem:[%s5 + $0x1c] sm:$0xf] %vm1585, %v1464
  %1594 = vst.msk [vmem:[%s5 + $0x20] sm:$0xf] %vm1585, %v1465
  %1595 = vst.msk [vmem:[%s5 + $0x24] sm:$0xf] %vm1585, %v1466
  %1596 = vst.msk [vmem:[%s5 + $0x28] sm:$0xf] %vm1585, %v1467
  %1597 = vst.msk [vmem:[%s5 + $0x2c] sm:$0xf] %vm1585, %v1468
  %1598 = vst.msk [vmem:[%s5 + $0x30] sm:$0xf] %vm1585, %v1469
  %1599 = vst.msk [vmem:[%s5 + $0x34] sm:$0xf] %vm1585, %v1470
  %1600 = vst.msk [vmem:[%s5 + $0x38] sm:$0xf] %vm1585, %v1471
  %1601 = vst.msk [vmem:[%s5 + $0x3c] sm:$0xf] %vm1585, %v1472
  %1602 = vst.msk [vmem:[%s5 + $0x40] sm:$0xf] %vm1585, %v1473
  %1603 = vst.msk [vmem:[%s5 + $0x44] sm:$0xf] %vm1585, %v1474
  %1604 = vst.msk [vmem:[%s5 + $0x48] sm:$0xf] %vm1585, %v1475
  %1605 = vst.msk [vmem:[%s5 + $0x4c] sm:$0xf] %vm1585, %v1476
  %1606 = vst.msk [vmem:[%s5 + $0x50] sm:$0xf] %vm1585, %v1477
  %1607 = vst.msk [vmem:[%s5 + $0x54] sm:$0xf] %vm1585, %v1478
  %1608 = vst.msk [vmem:[%s5 + $0x58] sm:$0xf] %vm1585, %v1479
  %1609 = vst.msk [vmem:[%s5 + $0x5c] sm:$0xf] %vm1585, %v1480
  %1610 = vst.msk [vmem:[%s5 + $0x60] sm:$0xf] %vm1585, %v1481
  %1611 = vst.msk [vmem:[%s5 + $0x64] sm:$0xf] %vm1585, %v1482
  %1612 = vst.msk [vmem:[%s5 + $0x68] sm:$0xf] %vm1585, %v1483
  %1613 = vst.msk [vmem:[%s5 + $0x6c] sm:$0xf] %vm1585, %v1484
  %1614 = vst.msk [vmem:[%s5 + $0x70] sm:$0xf] %vm1585, %v1485
  %1615 = vst.msk [vmem:[%s5 + $0x74] sm:$0xf] %vm1585, %v1486
  %1616 = vst.msk [vmem:[%s5 + $0x78] sm:$0xf] %vm1585, %v1487
  %1617 = vst.msk [vmem:[%s5 + $0x7c] sm:$0xf] %vm1585, %v1488
  %1618 = vst.msk [vmem:[%s5 + $0x80] sm:$0xf] %vm1585, %v1489
  %1619 = vst.msk [vmem:[%s5 + $0x84] sm:$0xf] %vm1585, %v1490
  %1620 = vst.msk [vmem:[%s5 + $0x88] sm:$0xf] %vm1585, %v1491
  %1621 = vst.msk [vmem:[%s5 + $0x8c] sm:$0xf] %vm1585, %v1492
  %1622 = vst.msk [vmem:[%s5 + $0x90] sm:$0xf] %vm1585, %v1493
  %1623 = vst.msk [vmem:[%s5 + $0x94] sm:$0xf] %vm1585, %v1494
  %1624 = vst.msk [vmem:[%s5 + $0x98] sm:$0xf] %vm1585, %v1495
  %1625 = vst.msk [vmem:[%s5 + $0x9c] sm:$0xf] %vm1585, %v1496
  %1626 = vst.msk [vmem:[%s5 + $0xa0] sm:$0xf] %vm1585, %v1497
  %1627 = vst.msk [vmem:[%s5 + $0xa4] sm:$0xf] %vm1585, %v1498
  %1628 = vst.msk [vmem:[%s5 + $0xa8] sm:$0xf] %vm1585, %v1499
  %1629 = vst.msk [vmem:[%s5 + $0xac] sm:$0xf] %vm1585, %v1500
  %1630 = vst.msk [vmem:[%s5 + $0xb0] sm:$0xf] %vm1585, %v1501
  %1631 = vst.msk [vmem:[%s5 + $0xb4] sm:$0xf] %vm1585, %v1502
  %1632 = vst.msk [vmem:[%s5 + $0xb8] sm:$0xf] %vm1585, %v1503
  %1633 = vst.msk [vmem:[%s5 + $0xbc] sm:$0xf] %vm1585, %v1504
  %1634 = vst.msk [vmem:[%s5 + $0xc0] sm:$0xf] %vm1585, %v1505
  %1635 = vst.msk [vmem:[%s5 + $0xc4] sm:$0xf] %vm1585, %v1506
  %1636 = vst.msk [vmem:[%s5 + $0xc8] sm:$0xf] %vm1585, %v1507
  %1637 = vst.msk [vmem:[%s5 + $0xcc] sm:$0xf] %vm1585, %v1508
  %1638 = vst.msk [vmem:[%s5 + $0xd0] sm:$0xf] %vm1585, %v1509
  %1639 = vst.msk [vmem:[%s5 + $0xd4] sm:$0xf] %vm1585, %v1510
  %1640 = vst.msk [vmem:[%s5 + $0xd8] sm:$0xf] %vm1585, %v1511
  %1641 = vst.msk [vmem:[%s5 + $0xdc] sm:$0xf] %vm1585, %v1512
  %1642 = vst.msk [vmem:[%s5 + $0xe0] sm:$0xf] %vm1585, %v1513
  %1643 = vst.msk [vmem:[%s5 + $0xe4] sm:$0xf] %vm1585, %v1514
  %1644 = vst.msk [vmem:[%s5 + $0xe8] sm:$0xf] %vm1585, %v1515
  %1645 = vst.msk [vmem:[%s5 + $0xec] sm:$0xf] %vm1585, %v1516
  %1646 = vst.msk [vmem:[%s5 + $0xf0] sm:$0xf] %vm1585, %v1517
  %1647 = vst.msk [vmem:[%s5 + $0xf4] sm:$0xf] %vm1585, %v1518
  %1648 = vst.msk [vmem:[%s5 + $0xf8] sm:$0xf] %vm1585, %v1519
  %1649 = vst.msk [vmem:[%s5 + $0xfc] sm:$0xf] %vm1585, %v1520
  %v1650 = vsub.f32 0.0, %v691
  %v1651 = vsub.f32 0.0, %v694
  %v1652 = vsub.f32 0.0, %v699
  %v1653 = vsub.f32 0.0, %v702
  %v1654 = vsub.f32 0.0, %v707
  %v1655 = vsub.f32 0.0, %v710
  %v1656 = vsub.f32 0.0, %v715
  %v1657 = vsub.f32 0.0, %v718
  %v1658 = vsub.f32 0.0, %v723
  %v1659 = vsub.f32 0.0, %v726
  %v1660 = vsub.f32 0.0, %v731
  %v1661 = vsub.f32 0.0, %v734
  %v1662 = vsub.f32 0.0, %v739
  %v1663 = vsub.f32 0.0, %v742
  %v1664 = vsub.f32 0.0, %v747
  %v1665 = vsub.f32 0.0, %v750
  %v1666 = vsub.f32 0.0, %v755
  %v1667 = vsub.f32 0.0, %v758
  %v1668 = vsub.f32 0.0, %v763
  %v1669 = vsub.f32 0.0, %v766
  %v1670 = vsub.f32 0.0, %v771
  %v1671 = vsub.f32 0.0, %v774
  %v1672 = vsub.f32 0.0, %v779
  %v1673 = vsub.f32 0.0, %v782
  %v1674 = vsub.f32 0.0, %v787
  %v1675 = vsub.f32 0.0, %v790
  %v1676 = vsub.f32 0.0, %v795
  %v1677 = vsub.f32 0.0, %v798
  %v1678 = vsub.f32 0.0, %v803
  %v1679 = vsub.f32 0.0, %v806
  %v1680 = vsub.f32 0.0, %v811
  %v1681 = vsub.f32 0.0, %v814
  %v1682 = vsub.f32 0.0, %v819
  %v1683 = vsub.f32 0.0, %v822
  %v1684 = vsub.f32 0.0, %v827
  %v1685 = vsub.f32 0.0, %v830
  %v1686 = vsub.f32 0.0, %v835
  %v1687 = vsub.f32 0.0, %v838
  %v1688 = vsub.f32 0.0, %v843
  %v1689 = vsub.f32 0.0, %v846
  %v1690 = vsub.f32 0.0, %v851
  %v1691 = vsub.f32 0.0, %v854
  %v1692 = vsub.f32 0.0, %v859
  %v1693 = vsub.f32 0.0, %v862
  %v1694 = vsub.f32 0.0, %v867
  %v1695 = vsub.f32 0.0, %v870
  %v1696 = vsub.f32 0.0, %v875
  %v1697 = vsub.f32 0.0, %v878
  %v1698 = vsub.f32 0.0, %v883
  %v1699 = vsub.f32 0.0, %v886
  %v1700 = vsub.f32 0.0, %v891
  %v1701 = vsub.f32 0.0, %v894
  %v1702 = vsub.f32 0.0, %v899
  %v1703 = vsub.f32 0.0, %v902
  %v1704 = vsub.f32 0.0, %v907
  %v1705 = vsub.f32 0.0, %v910
  %v1706 = vsub.f32 0.0, %v915
  %v1707 = vsub.f32 0.0, %v918
  %v1708 = vsub.f32 0.0, %v923
  %v1709 = vsub.f32 0.0, %v926
  %v1710 = vsub.f32 0.0, %v931
  %v1711 = vsub.f32 0.0, %v934
  %v1712 = vsub.f32 0.0, %v939
  %v1713 = vsub.f32 0.0, %v942
  %v1714 = vmul.f32 %v1650, 1.442695
  %v1715 = vpow.pop %v1714
  %v1716 = vmul.f32 %v1651, 1.442695
  %v1717 = vpow.pop %v1716
  %v1718 = vmul.f32 %v1652, 1.442695
  %v1719 = vpow.pop %v1718
  %v1720 = vmul.f32 %v1653, 1.442695
  %v1721 = vpow.pop %v1720
  %v1722 = vmul.f32 %v1654, 1.442695
  %v1723 = vpow.pop %v1722
  %v1724 = vmul.f32 %v1655, 1.442695
  %v1725 = vpow.pop %v1724
  %v1726 = vmul.f32 %v1656, 1.442695
  %v1727 = vpow.pop %v1726
  %v1728 = vmul.f32 %v1657, 1.442695
  %v1729 = vpow.pop %v1728
  %v1730 = vmul.f32 %v1658, 1.442695
  %v1731 = vpow.pop %v1730
  %v1732 = vmul.f32 %v1659, 1.442695
  %v1733 = vpow.pop %v1732
  %v1734 = vmul.f32 %v1660, 1.442695
  %v1735 = vpow.pop %v1734
  %v1736 = vmul.f32 %v1661, 1.442695
  %v1737 = vpow.pop %v1736
  %v1738 = vmul.f32 %v1662, 1.442695
  %v1739 = vpow.pop %v1738
  %v1740 = vmul.f32 %v1663, 1.442695
  %v1741 = vpow.pop %v1740
  %v1742 = vmul.f32 %v1664, 1.442695
  %v1743 = vpow.pop %v1742
  %v1744 = vmul.f32 %v1665, 1.442695
  %v1745 = vpow.pop %v1744
  %v1746 = vmul.f32 %v1666, 1.442695
  %v1747 = vpow.pop %v1746
  %v1748 = vmul.f32 %v1667, 1.442695
  %v1749 = vpow.pop %v1748
  %v1750 = vmul.f32 %v1668, 1.442695
  %v1751 = vpow.pop %v1750
  %v1752 = vmul.f32 %v1669, 1.442695
  %v1753 = vpow.pop %v1752
  %v1754 = vmul.f32 %v1670, 1.442695
  %v1755 = vpow.pop %v1754
  %v1756 = vmul.f32 %v1671, 1.442695
  %v1757 = vpow.pop %v1756
  %v1758 = vmul.f32 %v1672, 1.442695
  %v1759 = vpow.pop %v1758
  %v1760 = vmul.f32 %v1673, 1.442695
  %v1761 = vpow.pop %v1760
  %v1762 = vmul.f32 %v1674, 1.442695
  %v1763 = vpow.pop %v1762
  %v1764 = vmul.f32 %v1675, 1.442695
  %v1765 = vpow.pop %v1764
  %v1766 = vmul.f32 %v1676, 1.442695
  %v1767 = vpow.pop %v1766
  %v1768 = vmul.f32 %v1677, 1.442695
  %v1769 = vpow.pop %v1768
  %v1770 = vmul.f32 %v1678, 1.442695
  %v1771 = vpow.pop %v1770
  %v1772 = vmul.f32 %v1679, 1.442695
  %v1773 = vpow.pop %v1772
  %v1774 = vmul.f32 %v1680, 1.442695
  %v1775 = vpow.pop %v1774
  %v1776 = vmul.f32 %v1681, 1.442695
  %v1777 = vpow.pop %v1776
  %v1778 = vmul.f32 %v1682, 1.442695
  %v1779 = vpow.pop %v1778
  %v1780 = vmul.f32 %v1683, 1.442695
  %v1781 = vpow.pop %v1780
  %v1782 = vmul.f32 %v1684, 1.442695
  %v1783 = vpow.pop %v1782
  %v1784 = vmul.f32 %v1685, 1.442695
  %v1785 = vpow.pop %v1784
  %v1786 = vmul.f32 %v1686, 1.442695
  %v1787 = vpow.pop %v1786
  %v1788 = vmul.f32 %v1687, 1.442695
  %v1789 = vpow.pop %v1788
  %v1790 = vmul.f32 %v1688, 1.442695
  %v1791 = vpow.pop %v1790
  %v1792 = vmul.f32 %v1689, 1.442695
  %v1793 = vpow.pop %v1792
  %v1794 = vmul.f32 %v1690, 1.442695
  %v1795 = vpow.pop %v1794
  %v1796 = vmul.f32 %v1691, 1.442695
  %v1797 = vpow.pop %v1796
  %v1798 = vmul.f32 %v1692, 1.442695
  %v1799 = vpow.pop %v1798
  %v1800 = vmul.f32 %v1693, 1.442695
  %v1801 = vpow.pop %v1800
  %v1802 = vmul.f32 %v1694, 1.442695
  %v1803 = vpow.pop %v1802
  %v1804 = vmul.f32 %v1695, 1.442695
  %v1805 = vpow.pop %v1804
  %v1806 = vmul.f32 %v1696, 1.442695
  %v1807 = vpow.pop %v1806
  %v1808 = vmul.f32 %v1697, 1.442695
  %v1809 = vpow.pop %v1808
  %v1810 = vmul.f32 %v1698, 1.442695
  %v1811 = vpow.pop %v1810
  %v1812 = vmul.f32 %v1699, 1.442695
  %v1813 = vpow.pop %v1812
  %v1814 = vmul.f32 %v1700, 1.442695
  %v1815 = vpow.pop %v1814
  %v1816 = vmul.f32 %v1701, 1.442695
  %v1817 = vpow.pop %v1816
  %v1818 = vmul.f32 %v1702, 1.442695
  %v1819 = vpow.pop %v1818
  %v1820 = vmul.f32 %v1703, 1.442695
  %v1821 = vpow.pop %v1820
  %v1822 = vmul.f32 %v1704, 1.442695
  %v1823 = vpow.pop %v1822
  %v1824 = vmul.f32 %v1705, 1.442695
  %v1825 = vpow.pop %v1824
  %v1826 = vmul.f32 %v1706, 1.442695
  %v1827 = vpow.pop %v1826
  %v1828 = vmul.f32 %v1707, 1.442695
  %v1829 = vpow.pop %v1828
  %v1830 = vmul.f32 %v1708, 1.442695
  %v1831 = vpow.pop %v1830
  %v1832 = vmul.f32 %v1709, 1.442695
  %v1833 = vpow.pop %v1832
  %v1834 = vmul.f32 %v1710, 1.442695
  %v1835 = vpow.pop %v1834
  %v1836 = vmul.f32 %v1711, 1.442695
  %v1837 = vpow.pop %v1836
  %v1838 = vmul.f32 %v1712, 1.442695
  %v1839 = vpow.pop %v1838
  %v1840 = vmul.f32 %v1713, 1.442695
  %v1841 = vpow.pop %v1840
  %v1842 = vadd.f32 %v1715, 1.0
  %v1843 = vadd.f32 %v1717, 1.0
  %v1844 = vadd.f32 %v1719, 1.0
  %v1845 = vadd.f32 %v1721, 1.0
  %v1846 = vadd.f32 %v1723, 1.0
  %v1847 = vadd.f32 %v1725, 1.0
  %v1848 = vadd.f32 %v1727, 1.0
  %v1849 = vadd.f32 %v1729, 1.0
  %v1850 = vadd.f32 %v1731, 1.0
  %v1851 = vadd.f32 %v1733, 1.0
  %v1852 = vadd.f32 %v1735, 1.0
  %v1853 = vadd.f32 %v1737, 1.0
  %v1854 = vadd.f32 %v1739, 1.0
  %v1855 = vadd.f32 %v1741, 1.0
  %v1856 = vadd.f32 %v1743, 1.0
  %v1857 = vadd.f32 %v1745, 1.0
  %v1858 = vadd.f32 %v1747, 1.0
  %v1859 = vadd.f32 %v1749, 1.0
  %v1860 = vadd.f32 %v1751, 1.0
  %v1861 = vadd.f32 %v1753, 1.0
  %v1862 = vadd.f32 %v1755, 1.0
  %v1863 = vadd.f32 %v1757, 1.0
  %v1864 = vadd.f32 %v1759, 1.0
  %v1865 = vadd.f32 %v1761, 1.0
  %v1866 = vadd.f32 %v1763, 1.0
  %v1867 = vadd.f32 %v1765, 1.0
  %v1868 = vadd.f32 %v1767, 1.0
  %v1869 = vadd.f32 %v1769, 1.0
  %v1870 = vadd.f32 %v1771, 1.0
  %v1871 = vadd.f32 %v1773, 1.0
  %v1872 = vadd.f32 %v1775, 1.0
  %v1873 = vadd.f32 %v1777, 1.0
  %v1874 = vadd.f32 %v1779, 1.0
  %v1875 = vadd.f32 %v1781, 1.0
  %v1876 = vadd.f32 %v1783, 1.0
  %v1877 = vadd.f32 %v1785, 1.0
  %v1878 = vadd.f32 %v1787, 1.0
  %v1879 = vadd.f32 %v1789, 1.0
  %v1880 = vadd.f32 %v1791, 1.0
  %v1881 = vadd.f32 %v1793, 1.0
  %v1882 = vadd.f32 %v1795, 1.0
  %v1883 = vadd.f32 %v1797, 1.0
  %v1884 = vadd.f32 %v1799, 1.0
  %v1885 = vadd.f32 %v1801, 1.0
  %v1886 = vadd.f32 %v1803, 1.0
  %v1887 = vadd.f32 %v1805, 1.0
  %v1888 = vadd.f32 %v1807, 1.0
  %v1889 = vadd.f32 %v1809, 1.0
  %v1890 = vadd.f32 %v1811, 1.0
  %v1891 = vadd.f32 %v1813, 1.0
  %v1892 = vadd.f32 %v1815, 1.0
  %v1893 = vadd.f32 %v1817, 1.0
  %v1894 = vadd.f32 %v1819, 1.0
  %v1895 = vadd.f32 %v1821, 1.0
  %v1896 = vadd.f32 %v1823, 1.0
  %v1897 = vadd.f32 %v1825, 1.0
  %v1898 = vadd.f32 %v1827, 1.0
  %v1899 = vadd.f32 %v1829, 1.0
  %v1900 = vadd.f32 %v1831, 1.0
  %v1901 = vadd.f32 %v1833, 1.0
  %v1902 = vadd.f32 %v1835, 1.0
  %v1903 = vadd.f32 %v1837, 1.0
  %v1904 = vadd.f32 %v1839, 1.0
  %v1905 = vadd.f32 %v1841, 1.0
  %v1906 = vrcp.pop %v1842
  %v1907 = vrcp.pop %v1843
  %v1908 = vrcp.pop %v1844
  %v1909 = vrcp.pop %v1845
  %v1910 = vrcp.pop %v1846
  %v1911 = vrcp.pop %v1847
  %v1912 = vrcp.pop %v1848
  %v1913 = vrcp.pop %v1849
  %v1914 = vrcp.pop %v1850
  %v1915 = vrcp.pop %v1851
  %v1916 = vrcp.pop %v1852
  %v1917 = vrcp.pop %v1853
  %v1918 = vrcp.pop %v1854
  %v1919 = vrcp.pop %v1855
  %v1920 = vrcp.pop %v1856
  %v1921 = vrcp.pop %v1857
  %v1922 = vrcp.pop %v1858
  %v1923 = vrcp.pop %v1859
  %v1924 = vrcp.pop %v1860
  %v1925 = vrcp.pop %v1861
  %v1926 = vrcp.pop %v1862
  %v1927 = vrcp.pop %v1863
  %v1928 = vrcp.pop %v1864
  %v1929 = vrcp.pop %v1865
  %v1930 = vrcp.pop %v1866
  %v1931 = vrcp.pop %v1867
  %v1932 = vrcp.pop %v1868
  %v1933 = vrcp.pop %v1869
  %v1934 = vrcp.pop %v1870
  %v1935 = vrcp.pop %v1871
  %v1936 = vrcp.pop %v1872
  %v1937 = vrcp.pop %v1873
  %v1938 = vrcp.pop %v1874
  %v1939 = vrcp.pop %v1875
  %v1940 = vrcp.pop %v1876
  %v1941 = vrcp.pop %v1877
  %v1942 = vrcp.pop %v1878
  %v1943 = vrcp.pop %v1879
  %v1944 = vrcp.pop %v1880
  %v1945 = vrcp.pop %v1881
  %v1946 = vrcp.pop %v1882
  %v1947 = vrcp.pop %v1883
  %v1948 = vrcp.pop %v1884
  %v1949 = vrcp.pop %v1885
  %v1950 = vrcp.pop %v1886
  %v1951 = vrcp.pop %v1887
  %v1952 = vrcp.pop %v1888
  %v1953 = vrcp.pop %v1889
  %v1954 = vrcp.pop %v1890
  %v1955 = vrcp.pop %v1891
  %v1956 = vrcp.pop %v1892
  %v1957 = vrcp.pop %v1893
  %v1958 = vrcp.pop %v1894
  %v1959 = vrcp.pop %v1895
  %v1960 = vrcp.pop %v1896
  %v1961 = vrcp.pop %v1897
  %v1962 = vrcp.pop %v1898
  %v1963 = vrcp.pop %v1899
  %v1964 = vrcp.pop %v1900
  %v1965 = vrcp.pop %v1901
  %v1966 = vrcp.pop %v1902
  %v1967 = vrcp.pop %v1903
  %v1968 = vrcp.pop %v1904
  %v1969 = vrcp.pop %v1905
  %v1970 = vmul.f32 %v691, %v1906
  %v1971 = vmul.f32 %v694, %v1907
  %v1972 = vmul.f32 %v699, %v1908
  %v1973 = vmul.f32 %v702, %v1909
  %v1974 = vmul.f32 %v707, %v1910
  %v1975 = vmul.f32 %v710, %v1911
  %v1976 = vmul.f32 %v715, %v1912
  %v1977 = vmul.f32 %v718, %v1913
  %v1978 = vmul.f32 %v723, %v1914
  %v1979 = vmul.f32 %v726, %v1915
  %v1980 = vmul.f32 %v731, %v1916
  %v1981 = vmul.f32 %v734, %v1917
  %v1982 = vmul.f32 %v739, %v1918
  %v1983 = vmul.f32 %v742, %v1919
  %v1984 = vmul.f32 %v747, %v1920
  %v1985 = vmul.f32 %v750, %v1921
  %v1986 = vmul.f32 %v755, %v1922
  %v1987 = vmul.f32 %v758, %v1923
  %v1988 = vmul.f32 %v763, %v1924
  %v1989 = vmul.f32 %v766, %v1925
  %v1990 = vmul.f32 %v771, %v1926
  %v1991 = vmul.f32 %v774, %v1927
  %v1992 = vmul.f32 %v779, %v1928
  %v1993 = vmul.f32 %v782, %v1929
  %v1994 = vmul.f32 %v787, %v1930
  %v1995 = vmul.f32 %v790, %v1931
  %v1996 = vmul.f32 %v795, %v1932
  %v1997 = vmul.f32 %v798, %v1933
  %v1998 = vmul.f32 %v803, %v1934
  %v1999 = vmul.f32 %v806, %v1935
  %v2000 = vmul.f32 %v811, %v1936
  %v2001 = vmul.f32 %v814, %v1937
  %v2002 = vmul.f32 %v819, %v1938
  %v2003 = vmul.f32 %v822, %v1939
  %v2004 = vmul.f32 %v827, %v1940
  %v2005 = vmul.f32 %v830, %v1941
  %v2006 = vmul.f32 %v835, %v1942
  %v2007 = vmul.f32 %v838, %v1943
  %v2008 = vmul.f32 %v843, %v1944
  %v2009 = vmul.f32 %v846, %v1945
  %v2010 = vmul.f32 %v851, %v1946
  %v2011 = vmul.f32 %v854, %v1947
  %v2012 = vmul.f32 %v859, %v1948
  %v2013 = vmul.f32 %v862, %v1949
  %v2014 = vmul.f32 %v867, %v1950
  %v2015 = vmul.f32 %v870, %v1951
  %v2016 = vmul.f32 %v875, %v1952
  %v2017 = vmul.f32 %v878, %v1953
  %v2018 = vmul.f32 %v883, %v1954
  %v2019 = vmul.f32 %v886, %v1955
  %v2020 = vmul.f32 %v891, %v1956
  %v2021 = vmul.f32 %v894, %v1957
  %v2022 = vmul.f32 %v899, %v1958
  %v2023 = vmul.f32 %v902, %v1959
  %v2024 = vmul.f32 %v907, %v1960
  %v2025 = vmul.f32 %v910, %v1961
  %v2026 = vmul.f32 %v915, %v1962
  %v2027 = vmul.f32 %v918, %v1963
  %v2028 = vmul.f32 %v923, %v1964
  %v2029 = vmul.f32 %v926, %v1965
  %v2030 = vmul.f32 %v931, %v1966
  %v2031 = vmul.f32 %v934, %v1967
  %v2032 = vmul.f32 %v939, %v1968
  %v2033 = vmul.f32 %v942, %v1969
  %v2034 = vpack.c.bf16 %v1971, %v1970
  %v2035 = vpack.c.bf16 %v1973, %v1972
  %v2036 = vpack.c.bf16 %v1975, %v1974
  %v2037 = vpack.c.bf16 %v1977, %v1976
  %v2038 = vpack.c.bf16 %v1979, %v1978
  %v2039 = vpack.c.bf16 %v1981, %v1980
  %v2040 = vpack.c.bf16 %v1983, %v1982
  %v2041 = vpack.c.bf16 %v1985, %v1984
  %v2042 = vpack.c.bf16 %v1987, %v1986
  %v2043 = vpack.c.bf16 %v1989, %v1988
  %v2044 = vpack.c.bf16 %v1991, %v1990
  %v2045 = vpack.c.bf16 %v1993, %v1992
  %v2046 = vpack.c.bf16 %v1995, %v1994
  %v2047 = vpack.c.bf16 %v1997, %v1996
  %v2048 = vpack.c.bf16 %v1999, %v1998
  %v2049 = vpack.c.bf16 %v2001, %v2000
  %v2050 = vpack.c.bf16 %v2003, %v2002
  %v2051 = vpack.c.bf16 %v2005, %v2004
  %v2052 = vpack.c.bf16 %v2007, %v2006
  %v2053 = vpack.c.bf16 %v2009, %v2008
  %v2054 = vpack.c.bf16 %v2011, %v2010
  %v2055 = vpack.c.bf16 %v2013, %v2012
  %v2056 = vpack.c.bf16 %v2015, %v2014
  %v2057 = vpack.c.bf16 %v2017, %v2016
  %v2058 = vpack.c.bf16 %v2019, %v2018
  %v2059 = vpack.c.bf16 %v2021, %v2020
  %v2060 = vpack.c.bf16 %v2023, %v2022
  %v2061 = vpack.c.bf16 %v2025, %v2024
  %v2062 = vpack.c.bf16 %v2027, %v2026
  %v2063 = vpack.c.bf16 %v2029, %v2028
  %v2064 = vpack.c.bf16 %v2031, %v2030
  %v2065 = vpack.c.bf16 %v2033, %v2032
  %v2098 = vunpack.c.l.b16 %v2034
  %v2099 = vunpack.c.h.b16 %v2034
  %v2100 = vunpack.c.l.b16 %v2035
  %v2101 = vunpack.c.h.b16 %v2035
  %v2102 = vunpack.c.l.b16 %v2036
  %v2103 = vunpack.c.h.b16 %v2036
  %v2104 = vunpack.c.l.b16 %v2037
  %v2105 = vunpack.c.h.b16 %v2037
  %v2106 = vunpack.c.l.b16 %v2038
  %v2107 = vunpack.c.h.b16 %v2038
  %v2108 = vunpack.c.l.b16 %v2039
  %v2109 = vunpack.c.h.b16 %v2039
  %v2110 = vunpack.c.l.b16 %v2040
  %v2111 = vunpack.c.h.b16 %v2040
  %v2112 = vunpack.c.l.b16 %v2041
  %v2113 = vunpack.c.h.b16 %v2041
  %v2114 = vunpack.c.l.b16 %v2042
  %v2115 = vunpack.c.h.b16 %v2042
  %v2116 = vunpack.c.l.b16 %v2043
  %v2117 = vunpack.c.h.b16 %v2043
  %v2118 = vunpack.c.l.b16 %v2044
  %v2119 = vunpack.c.h.b16 %v2044
  %v2120 = vunpack.c.l.b16 %v2045
  %v2121 = vunpack.c.h.b16 %v2045
  %v2122 = vunpack.c.l.b16 %v2046
  %v2123 = vunpack.c.h.b16 %v2046
  %v2124 = vunpack.c.l.b16 %v2047
  %v2125 = vunpack.c.h.b16 %v2047
  %v2126 = vunpack.c.l.b16 %v2048
  %v2127 = vunpack.c.h.b16 %v2048
  %v2128 = vunpack.c.l.b16 %v2049
  %v2129 = vunpack.c.h.b16 %v2049
  %v2130 = vunpack.c.l.b16 %v2050
  %v2131 = vunpack.c.h.b16 %v2050
  %v2132 = vunpack.c.l.b16 %v2051
  %v2133 = vunpack.c.h.b16 %v2051
  %v2134 = vunpack.c.l.b16 %v2052
  %v2135 = vunpack.c.h.b16 %v2052
  %v2136 = vunpack.c.l.b16 %v2053
  %v2137 = vunpack.c.h.b16 %v2053
  %v2138 = vunpack.c.l.b16 %v2054
  %v2139 = vunpack.c.h.b16 %v2054
  %v2140 = vunpack.c.l.b16 %v2055
  %v2141 = vunpack.c.h.b16 %v2055
  %v2142 = vunpack.c.l.b16 %v2056
  %v2143 = vunpack.c.h.b16 %v2056
  %v2144 = vunpack.c.l.b16 %v2057
  %v2145 = vunpack.c.h.b16 %v2057
  %v2146 = vunpack.c.l.b16 %v2058
  %v2147 = vunpack.c.h.b16 %v2058
  %v2148 = vunpack.c.l.b16 %v2059
  %v2149 = vunpack.c.h.b16 %v2059
  %v2150 = vunpack.c.l.b16 %v2060
  %v2151 = vunpack.c.h.b16 %v2060
  %v2152 = vunpack.c.l.b16 %v2061
  %v2153 = vunpack.c.h.b16 %v2061
  %v2154 = vunpack.c.l.b16 %v2062
  %v2155 = vunpack.c.h.b16 %v2062
  %v2156 = vunpack.c.l.b16 %v2063
  %v2157 = vunpack.c.h.b16 %v2063
  %v2158 = vunpack.c.l.b16 %v2064
  %v2159 = vunpack.c.h.b16 %v2064
  %v2160 = vunpack.c.l.b16 %v2065
  %v2161 = vunpack.c.h.b16 %v2065
  %v2162 = vpack.c.b16 %v2098, %v2098
  %v2163 = vpack.c.b16 %v2099, %v2099
  %v2164 = vpack.c.b16 %v2100, %v2100
  %v2165 = vpack.c.b16 %v2101, %v2101
  %v2166 = vpack.c.b16 %v2102, %v2102
  %v2167 = vpack.c.b16 %v2103, %v2103
  %v2168 = vpack.c.b16 %v2104, %v2104
  %v2169 = vpack.c.b16 %v2105, %v2105
  %v2170 = vpack.c.b16 %v2106, %v2106
  %v2171 = vpack.c.b16 %v2107, %v2107
  %v2172 = vpack.c.b16 %v2108, %v2108
  %v2173 = vpack.c.b16 %v2109, %v2109
  %v2174 = vpack.c.b16 %v2110, %v2110
  %v2175 = vpack.c.b16 %v2111, %v2111
  %v2176 = vpack.c.b16 %v2112, %v2112
  %v2177 = vpack.c.b16 %v2113, %v2113
  %v2178 = vpack.c.b16 %v2114, %v2114
  %v2179 = vpack.c.b16 %v2115, %v2115
  %v2180 = vpack.c.b16 %v2116, %v2116
  %v2181 = vpack.c.b16 %v2117, %v2117
  %v2182 = vpack.c.b16 %v2118, %v2118
  %v2183 = vpack.c.b16 %v2119, %v2119
  %v2184 = vpack.c.b16 %v2120, %v2120
  %v2185 = vpack.c.b16 %v2121, %v2121
  %v2186 = vpack.c.b16 %v2122, %v2122
  %v2187 = vpack.c.b16 %v2123, %v2123
  %v2188 = vpack.c.b16 %v2124, %v2124
  %v2189 = vpack.c.b16 %v2125, %v2125
  %v2190 = vpack.c.b16 %v2126, %v2126
  %v2191 = vpack.c.b16 %v2127, %v2127
  %v2192 = vpack.c.b16 %v2128, %v2128
  %v2193 = vpack.c.b16 %v2129, %v2129
  %v2194 = vpack.c.b16 %v2130, %v2130
  %v2195 = vpack.c.b16 %v2131, %v2131
  %v2196 = vpack.c.b16 %v2132, %v2132
  %v2197 = vpack.c.b16 %v2133, %v2133
  %v2198 = vpack.c.b16 %v2134, %v2134
  %v2199 = vpack.c.b16 %v2135, %v2135
  %v2200 = vpack.c.b16 %v2136, %v2136
  %v2201 = vpack.c.b16 %v2137, %v2137
  %v2202 = vpack.c.b16 %v2138, %v2138
  %v2203 = vpack.c.b16 %v2139, %v2139
  %v2204 = vpack.c.b16 %v2140, %v2140
  %v2205 = vpack.c.b16 %v2141, %v2141
  %v2206 = vpack.c.b16 %v2142, %v2142
  %v2207 = vpack.c.b16 %v2143, %v2143
  %v2208 = vpack.c.b16 %v2144, %v2144
  %v2209 = vpack.c.b16 %v2145, %v2145
  %v2210 = vpack.c.b16 %v2146, %v2146
  %v2211 = vpack.c.b16 %v2147, %v2147
  %v2212 = vpack.c.b16 %v2148, %v2148
  %v2213 = vpack.c.b16 %v2149, %v2149
  %v2214 = vpack.c.b16 %v2150, %v2150
  %v2215 = vpack.c.b16 %v2151, %v2151
  %v2216 = vpack.c.b16 %v2152, %v2152
  %v2217 = vpack.c.b16 %v2153, %v2153
  %v2218 = vpack.c.b16 %v2154, %v2154
  %v2219 = vpack.c.b16 %v2155, %v2155
  %v2220 = vpack.c.b16 %v2156, %v2156
  %v2221 = vpack.c.b16 %v2157, %v2157
  %v2222 = vpack.c.b16 %v2158, %v2158
  %v2223 = vpack.c.b16 %v2159, %v2159
  %v2224 = vpack.c.b16 %v2160, %v2160
  %v2225 = vpack.c.b16 %v2161, %v2161
  %2290 = vst.msk [vmem:[%s6] sm:$0xf] %vm1585, %v2162
  %2291 = vst.msk [vmem:[%s6 + $0x4] sm:$0xf] %vm1585, %v2163
  %2292 = vst.msk [vmem:[%s6 + $0x8] sm:$0xf] %vm1585, %v2164
  %2293 = vst.msk [vmem:[%s6 + $0xc] sm:$0xf] %vm1585, %v2165
  %2294 = vst.msk [vmem:[%s6 + $0x10] sm:$0xf] %vm1585, %v2166
  %2295 = vst.msk [vmem:[%s6 + $0x14] sm:$0xf] %vm1585, %v2167
  %2296 = vst.msk [vmem:[%s6 + $0x18] sm:$0xf] %vm1585, %v2168
  %2297 = vst.msk [vmem:[%s6 + $0x1c] sm:$0xf] %vm1585, %v2169
  %2298 = vst.msk [vmem:[%s6 + $0x20] sm:$0xf] %vm1585, %v2170
  %2299 = vst.msk [vmem:[%s6 + $0x24] sm:$0xf] %vm1585, %v2171
  %2300 = vst.msk [vmem:[%s6 + $0x28] sm:$0xf] %vm1585, %v2172
  %2301 = vst.msk [vmem:[%s6 + $0x2c] sm:$0xf] %vm1585, %v2173
  %2302 = vst.msk [vmem:[%s6 + $0x30] sm:$0xf] %vm1585, %v2174
  %2303 = vst.msk [vmem:[%s6 + $0x34] sm:$0xf] %vm1585, %v2175
  %2304 = vst.msk [vmem:[%s6 + $0x38] sm:$0xf] %vm1585, %v2176
  %2305 = vst.msk [vmem:[%s6 + $0x3c] sm:$0xf] %vm1585, %v2177
  %2306 = vst.msk [vmem:[%s6 + $0x40] sm:$0xf] %vm1585, %v2178
  %2307 = vst.msk [vmem:[%s6 + $0x44] sm:$0xf] %vm1585, %v2179
  %2308 = vst.msk [vmem:[%s6 + $0x48] sm:$0xf] %vm1585, %v2180
  %2309 = vst.msk [vmem:[%s6 + $0x4c] sm:$0xf] %vm1585, %v2181
  %2310 = vst.msk [vmem:[%s6 + $0x50] sm:$0xf] %vm1585, %v2182
  %2311 = vst.msk [vmem:[%s6 + $0x54] sm:$0xf] %vm1585, %v2183
  %2312 = vst.msk [vmem:[%s6 + $0x58] sm:$0xf] %vm1585, %v2184
  %2313 = vst.msk [vmem:[%s6 + $0x5c] sm:$0xf] %vm1585, %v2185
  %2314 = vst.msk [vmem:[%s6 + $0x60] sm:$0xf] %vm1585, %v2186
  %2315 = vst.msk [vmem:[%s6 + $0x64] sm:$0xf] %vm1585, %v2187
  %2316 = vst.msk [vmem:[%s6 + $0x68] sm:$0xf] %vm1585, %v2188
  %2317 = vst.msk [vmem:[%s6 + $0x6c] sm:$0xf] %vm1585, %v2189
  %2318 = vst.msk [vmem:[%s6 + $0x70] sm:$0xf] %vm1585, %v2190
  %2319 = vst.msk [vmem:[%s6 + $0x74] sm:$0xf] %vm1585, %v2191
  %2320 = vst.msk [vmem:[%s6 + $0x78] sm:$0xf] %vm1585, %v2192
  %2321 = vst.msk [vmem:[%s6 + $0x7c] sm:$0xf] %vm1585, %v2193
  %2322 = vst.msk [vmem:[%s6 + $0x80] sm:$0xf] %vm1585, %v2194
  %2323 = vst.msk [vmem:[%s6 + $0x84] sm:$0xf] %vm1585, %v2195
  %2324 = vst.msk [vmem:[%s6 + $0x88] sm:$0xf] %vm1585, %v2196
  %2325 = vst.msk [vmem:[%s6 + $0x8c] sm:$0xf] %vm1585, %v2197
  %2326 = vst.msk [vmem:[%s6 + $0x90] sm:$0xf] %vm1585, %v2198
  %2327 = vst.msk [vmem:[%s6 + $0x94] sm:$0xf] %vm1585, %v2199
  %2328 = vst.msk [vmem:[%s6 + $0x98] sm:$0xf] %vm1585, %v2200
  %2329 = vst.msk [vmem:[%s6 + $0x9c] sm:$0xf] %vm1585, %v2201
  %2330 = vst.msk [vmem:[%s6 + $0xa0] sm:$0xf] %vm1585, %v2202
  %2331 = vst.msk [vmem:[%s6 + $0xa4] sm:$0xf] %vm1585, %v2203
  %2332 = vst.msk [vmem:[%s6 + $0xa8] sm:$0xf] %vm1585, %v2204
  %2333 = vst.msk [vmem:[%s6 + $0xac] sm:$0xf] %vm1585, %v2205
  %2334 = vst.msk [vmem:[%s6 + $0xb0] sm:$0xf] %vm1585, %v2206
  %2335 = vst.msk [vmem:[%s6 + $0xb4] sm:$0xf] %vm1585, %v2207
  %2336 = vst.msk [vmem:[%s6 + $0xb8] sm:$0xf] %vm1585, %v2208
  %2337 = vst.msk [vmem:[%s6 + $0xbc] sm:$0xf] %vm1585, %v2209
  %2338 = vst.msk [vmem:[%s6 + $0xc0] sm:$0xf] %vm1585, %v2210
  %2339 = vst.msk [vmem:[%s6 + $0xc4] sm:$0xf] %vm1585, %v2211
  %2340 = vst.msk [vmem:[%s6 + $0xc8] sm:$0xf] %vm1585, %v2212
  %2341 = vst.msk [vmem:[%s6 + $0xcc] sm:$0xf] %vm1585, %v2213
  %2342 = vst.msk [vmem:[%s6 + $0xd0] sm:$0xf] %vm1585, %v2214
  %2343 = vst.msk [vmem:[%s6 + $0xd4] sm:$0xf] %vm1585, %v2215
  %2344 = vst.msk [vmem:[%s6 + $0xd8] sm:$0xf] %vm1585, %v2216
  %2345 = vst.msk [vmem:[%s6 + $0xdc] sm:$0xf] %vm1585, %v2217
  %2346 = vst.msk [vmem:[%s6 + $0xe0] sm:$0xf] %vm1585, %v2218
  %2347 = vst.msk [vmem:[%s6 + $0xe4] sm:$0xf] %vm1585, %v2219
  %2348 = vst.msk [vmem:[%s6 + $0xe8] sm:$0xf] %vm1585, %v2220
  %2349 = vst.msk [vmem:[%s6 + $0xec] sm:$0xf] %vm1585, %v2221
  %2350 = vst.msk [vmem:[%s6 + $0xf0] sm:$0xf] %vm1585, %v2222
  %2351 = vst.msk [vmem:[%s6 + $0xf4] sm:$0xf] %vm1585, %v2223
  %2352 = vst.msk [vmem:[%s6 + $0xf8] sm:$0xf] %vm1585, %v2224
  %2353 = vst.msk [vmem:[%s6 + $0xfc] sm:$0xf] %vm1585, %v2225
  // Predicated region
  $region22: #{c2_forward.3} parent=0 // pred_check
    _
  $region23: #{c2_forward.3} parent=0 // pred_check_branch
    %2355 = sbr.rel (0) target = $region25
  $region24: #{c2_forward.3} parent=0 // pred_region
    _
  $region25: #{c2_forward.3} parent=0 // pred_fallthru
    _
  // Predicated region
  $region26: #{c2_forward.3} parent=0 // pred_check
    _
  $region27: #{c2_forward.3} parent=0 // pred_check_branch
    %2357 = sbr.rel (0) target = $region29
  $region28: #{c2_forward.3} parent=0 // pred_region
    _
  $region29: #{c2_forward.3} parent=0 // pred_fallthru
    _
  // Predicated region
  $region30: #{c2_forward.3} parent=0 // pred_check
    _
  $region31: #{c2_forward.3} parent=0 // pred_check_branch
    %2359 = sbr.rel (0) target = $region33
  $region32: #{c2_forward.3} parent=0 // pred_region
    _
  $region33: #{c2_forward.3} parent=0 // pred_fallthru
    _
  // Predicated region
  $region34: #{c2_forward.3} parent=0 // pred_check
    _
  $region35: #{c2_forward.3} parent=0 // pred_check_branch
    %2361 = sbr.rel (0) target = $region37
  $region36: #{c2_forward.3} parent=0 // pred_region
    _
  $region37: #{c2_forward.3} parent=0 // pred_fallthru
    _

// kernel: c2_forward.5
$region0: #{c2_forward.5}
  #allocation0 [shape = 'u32[]', space=smem, size = 0x4, offset = 0x4, fixed_abs, tag = 'smem constant byte address 0x4 - core index']
  #allocation1 [shape = 'u32[144,128]{1,0:T(1,128)}', space=vmem, size = 0x12000, scoped, tag = 'internal scratch']
  %s0 = inlined_call_operand.vmem [shape: bf16[512,2], index: 0, kind: input, shape index: {}]
  %s1 = inlined_call_operand.vmem [shape: bf16[512,2], index: 1, kind: input, shape index: {}]
  %s2 = inlined_call_operand.vmem [shape: bf16[2,4], index: 2, kind: input, shape index: {}]
  %s3 = inlined_call_operand.vmem [shape: bf16[2,4], index: 3, kind: input, shape index: {}]
  %s4 = inlined_call_operand.vmem [shape: f32[1,4], index: 4, kind: input, shape index: {}]
  %s5 = inlined_call_operand.vmem [shape: f32[512,4], index: 5, kind: output, shape index: {}]
  %s6 = sld [smem:[#allocation0]]
  $region30: #{c2_forward.5} parent=0
    _
  %s8 = ssub.s32 1, %s6
  %s9 = scalar_select 0, %s8, %s6
  // Predicated region
  $region2: #{c2_forward.5} parent=0 // pred_check
    _
  $region3: #{c2_forward.5} parent=0 // pred_check_branch
    %11 = sbr.rel (0) target = $region5
  $region4: #{c2_forward.5} parent=0 // pred_region
    _
  $region5: #{c2_forward.5} parent=0 // pred_fallthru
    _
  // Predicated region
  $region6: #{c2_forward.5} parent=0 // pred_check
    _
  $region7: #{c2_forward.5} parent=0 // pred_check_branch
    %13 = sbr.rel (0) target = $region9
  $region8: #{c2_forward.5} parent=0 // pred_region
    _
  $region9: #{c2_forward.5} parent=0 // pred_fallthru
    _
  // Predicated region
  $region10: #{c2_forward.5} parent=0 // pred_check
    _
  $region11: #{c2_forward.5} parent=0 // pred_check_branch
    %15 = sbr.rel (0) target = $region13
  $region12: #{c2_forward.5} parent=0 // pred_region
    _
  $region13: #{c2_forward.5} parent=0 // pred_fallthru
    _
  // Predicated region
  $region14: #{c2_forward.5} parent=0 // pred_check
    _
  $region15: #{c2_forward.5} parent=0 // pred_check_branch
    %17 = sbr.rel (0) target = $region17
  $region16: #{c2_forward.5} parent=0 // pred_region
    _
  $region17: #{c2_forward.5} parent=0 // pred_fallthru
    _
  // Predicated region
  $region18: #{c2_forward.5} parent=0 // pred_check
    _
  $region19: #{c2_forward.5} parent=0 // pred_check_branch
    %19 = sbr.rel (0) target = $region21
  $region20: #{c2_forward.5} parent=0 // pred_region
    _
  $region21: #{c2_forward.5} parent=0 // pred_fallthru
    _
  %v21 = vld [vmem:[%s0] sm:$0xf]
  %v22 = vld [vmem:[%s0 + $0x4] sm:$0xf]
  %v23 = vld [vmem:[%s0 + $0x8] sm:$0xf]
  %v24 = vld [vmem:[%s0 + $0xc] sm:$0xf]
  %v25 = vld [vmem:[%s0 + $0x10] sm:$0xf]
  %v26 = vld [vmem:[%s0 + $0x14] sm:$0xf]
  %v27 = vld [vmem:[%s0 + $0x18] sm:$0xf]
  %v28 = vld [vmem:[%s0 + $0x1c] sm:$0xf]
  %v29 = vld [vmem:[%s0 + $0x20] sm:$0xf]
  %v30 = vld [vmem:[%s0 + $0x24] sm:$0xf]
  %v31 = vld [vmem:[%s0 + $0x28] sm:$0xf]
  %v32 = vld [vmem:[%s0 + $0x2c] sm:$0xf]
  %v33 = vld [vmem:[%s0 + $0x30] sm:$0xf]
  %v34 = vld [vmem:[%s0 + $0x34] sm:$0xf]
  %v35 = vld [vmem:[%s0 + $0x38] sm:$0xf]
  %v36 = vld [vmem:[%s0 + $0x3c] sm:$0xf]
  %v37 = vld [vmem:[%s0 + $0x40] sm:$0xf]
  %v38 = vld [vmem:[%s0 + $0x44] sm:$0xf]
  %v39 = vld [vmem:[%s0 + $0x48] sm:$0xf]
  %v40 = vld [vmem:[%s0 + $0x4c] sm:$0xf]
  %v41 = vld [vmem:[%s0 + $0x50] sm:$0xf]
  %v42 = vld [vmem:[%s0 + $0x54] sm:$0xf]
  %v43 = vld [vmem:[%s0 + $0x58] sm:$0xf]
  %v44 = vld [vmem:[%s0 + $0x5c] sm:$0xf]
  %v45 = vld [vmem:[%s0 + $0x60] sm:$0xf]
  %v46 = vld [vmem:[%s0 + $0x64] sm:$0xf]
  %v47 = vld [vmem:[%s0 + $0x68] sm:$0xf]
  %v48 = vld [vmem:[%s0 + $0x6c] sm:$0xf]
  %v49 = vld [vmem:[%s0 + $0x70] sm:$0xf]
  %v50 = vld [vmem:[%s0 + $0x74] sm:$0xf]
  %v51 = vld [vmem:[%s0 + $0x78] sm:$0xf]
  %v52 = vld [vmem:[%s0 + $0x7c] sm:$0xf]
  %v53 = vld [vmem:[%s0 + $0x80] sm:$0xf]
  %v54 = vld [vmem:[%s0 + $0x84] sm:$0xf]
  %v55 = vld [vmem:[%s0 + $0x88] sm:$0xf]
  %v56 = vld [vmem:[%s0 + $0x8c] sm:$0xf]
  %v57 = vld [vmem:[%s0 + $0x90] sm:$0xf]
  %v58 = vld [vmem:[%s0 + $0x94] sm:$0xf]
  %v59 = vld [vmem:[%s0 + $0x98] sm:$0xf]
  %v60 = vld [vmem:[%s0 + $0x9c] sm:$0xf]
  %v61 = vld [vmem:[%s0 + $0xa0] sm:$0xf]
  %v62 = vld [vmem:[%s0 + $0xa4] sm:$0xf]
  %v63 = vld [vmem:[%s0 + $0xa8] sm:$0xf]
  %v64 = vld [vmem:[%s0 + $0xac] sm:$0xf]
  %v65 = vld [vmem:[%s0 + $0xb0] sm:$0xf]
  %v66 = vld [vmem:[%s0 + $0xb4] sm:$0xf]
  %v67 = vld [vmem:[%s0 + $0xb8] sm:$0xf]
  %v68 = vld [vmem:[%s0 + $0xbc] sm:$0xf]
  %v69 = vld [vmem:[%s0 + $0xc0] sm:$0xf]
  %v70 = vld [vmem:[%s0 + $0xc4] sm:$0xf]
  %v71 = vld [vmem:[%s0 + $0xc8] sm:$0xf]
  %v72 = vld [vmem:[%s0 + $0xcc] sm:$0xf]
  %v73 = vld [vmem:[%s0 + $0xd0] sm:$0xf]
  %v74 = vld [vmem:[%s0 + $0xd4] sm:$0xf]
  %v75 = vld [vmem:[%s0 + $0xd8] sm:$0xf]
  %v76 = vld [vmem:[%s0 + $0xdc] sm:$0xf]
  %v77 = vld [vmem:[%s0 + $0xe0] sm:$0xf]
  %v78 = vld [vmem:[%s0 + $0xe4] sm:$0xf]
  %v79 = vld [vmem:[%s0 + $0xe8] sm:$0xf]
  %v80 = vld [vmem:[%s0 + $0xec] sm:$0xf]
  %v81 = vld [vmem:[%s0 + $0xf0] sm:$0xf]
  %v82 = vld [vmem:[%s0 + $0xf4] sm:$0xf]
  %v83 = vld [vmem:[%s0 + $0xf8] sm:$0xf]
  %v84 = vld [vmem:[%s0 + $0xfc] sm:$0xf]
  %v85 = vld [vmem:[%s2] sm:$0x1]
  %v86 = vld [vmem:[%s1] sm:$0xf]
  %v87 = vld [vmem:[%s1 + $0x4] sm:$0xf]
  %v88 = vld [vmem:[%s1 + $0x8] sm:$0xf]
  %v89 = vld [vmem:[%s1 + $0xc] sm:$0xf]
  %v90 = vld [vmem:[%s1 + $0x10] sm:$0xf]
  %v91 = vld [vmem:[%s1 + $0x14] sm:$0xf]
  %v92 = vld [vmem:[%s1 + $0x18] sm:$0xf]
  %v93 = vld [vmem:[%s1 + $0x1c] sm:$0xf]
  %v94 = vld [vmem:[%s1 + $0x20] sm:$0xf]
  %v95 = vld [vmem:[%s1 + $0x24] sm:$0xf]
  %v96 = vld [vmem:[%s1 + $0x28] sm:$0xf]
  %v97 = vld [vmem:[%s1 + $0x2c] sm:$0xf]
  %v98 = vld [vmem:[%s1 + $0x30] sm:$0xf]
  %v99 = vld [vmem:[%s1 + $0x34] sm:$0xf]
  %v100 = vld [vmem:[%s1 + $0x38] sm:$0xf]
  %v101 = vld [vmem:[%s1 + $0x3c] sm:$0xf]
  %v102 = vld [vmem:[%s1 + $0x40] sm:$0xf]
  %v103 = vld [vmem:[%s1 + $0x44] sm:$0xf]
  %v104 = vld [vmem:[%s1 + $0x48] sm:$0xf]
  %v105 = vld [vmem:[%s1 + $0x4c] sm:$0xf]
  %v106 = vld [vmem:[%s1 + $0x50] sm:$0xf]
  %v107 = vld [vmem:[%s1 + $0x54] sm:$0xf]
  %v108 = vld [vmem:[%s1 + $0x58] sm:$0xf]
  %v109 = vld [vmem:[%s1 + $0x5c] sm:$0xf]
  %v110 = vld [vmem:[%s1 + $0x60] sm:$0xf]
  %v111 = vld [vmem:[%s1 + $0x64] sm:$0xf]
  %v112 = vld [vmem:[%s1 + $0x68] sm:$0xf]
  %v113 = vld [vmem:[%s1 + $0x6c] sm:$0xf]
  %v114 = vld [vmem:[%s1 + $0x70] sm:$0xf]
  %v115 = vld [vmem:[%s1 + $0x74] sm:$0xf]
  %v116 = vld [vmem:[%s1 + $0x78] sm:$0xf]
  %v117 = vld [vmem:[%s1 + $0x7c] sm:$0xf]
  %v118 = vld [vmem:[%s1 + $0x80] sm:$0xf]
  %v119 = vld [vmem:[%s1 + $0x84] sm:$0xf]
  %v120 = vld [vmem:[%s1 + $0x88] sm:$0xf]
  %v121 = vld [vmem:[%s1 + $0x8c] sm:$0xf]
  %v122 = vld [vmem:[%s1 + $0x90] sm:$0xf]
  %v123 = vld [vmem:[%s1 + $0x94] sm:$0xf]
  %v124 = vld [vmem:[%s1 + $0x98] sm:$0xf]
  %v125 = vld [vmem:[%s1 + $0x9c] sm:$0xf]
  %v126 = vld [vmem:[%s1 + $0xa0] sm:$0xf]
  %v127 = vld [vmem:[%s1 + $0xa4] sm:$0xf]
  %v128 = vld [vmem:[%s1 + $0xa8] sm:$0xf]
  %v129 = vld [vmem:[%s1 + $0xac] sm:$0xf]
  %v130 = vld [vmem:[%s1 + $0xb0] sm:$0xf]
  %v131 = vld [vmem:[%s1 + $0xb4] sm:$0xf]
  %v132 = vld [vmem:[%s1 + $0xb8] sm:$0xf]
  %v133 = vld [vmem:[%s1 + $0xbc] sm:$0xf]
  %v134 = vld [vmem:[%s1 + $0xc0] sm:$0xf]
  %v135 = vld [vmem:[%s1 + $0xc4] sm:$0xf]
  %v136 = vld [vmem:[%s1 + $0xc8] sm:$0xf]
  %v137 = vld [vmem:[%s1 + $0xcc] sm:$0xf]
  %v138 = vld [vmem:[%s1 + $0xd0] sm:$0xf]
  %v139 = vld [vmem:[%s1 + $0xd4] sm:$0xf]
  %v140 = vld [vmem:[%s1 + $0xd8] sm:$0xf]
  %v141 = vld [vmem:[%s1 + $0xdc] sm:$0xf]
  %v142 = vld [vmem:[%s1 + $0xe0] sm:$0xf]
  %v143 = vld [vmem:[%s1 + $0xe4] sm:$0xf]
  %v144 = vld [vmem:[%s1 + $0xe8] sm:$0xf]
  %v145 = vld [vmem:[%s1 + $0xec] sm:$0xf]
  %v146 = vld [vmem:[%s1 + $0xf0] sm:$0xf]
  %v147 = vld [vmem:[%s1 + $0xf4] sm:$0xf]
  %v148 = vld [vmem:[%s1 + $0xf8] sm:$0xf]
  %v149 = vld [vmem:[%s1 + $0xfc] sm:$0xf]
  %v150 = vld [vmem:[%s3] sm:$0x1]
  %v215 = vunpack.c.l.b16 %v86
  %v216 = vunpack.c.l.b16 %v87
  %v217 = vunpack.c.l.b16 %v88
  %v218 = vunpack.c.l.b16 %v89
  %v219 = vunpack.c.l.b16 %v90
  %v220 = vunpack.c.l.b16 %v91
  %v221 = vunpack.c.l.b16 %v92
  %v222 = vunpack.c.l.b16 %v93
  %v223 = vunpack.c.l.b16 %v94
  %v224 = vunpack.c.l.b16 %v95
  %v225 = vunpack.c.l.b16 %v96
  %v226 = vunpack.c.l.b16 %v97
  %v227 = vunpack.c.l.b16 %v98
  %v228 = vunpack.c.l.b16 %v99
  %v229 = vunpack.c.l.b16 %v100
  %v230 = vunpack.c.l.b16 %v101
  %v231 = vunpack.c.l.b16 %v102
  %v232 = vunpack.c.l.b16 %v103
  %v233 = vunpack.c.l.b16 %v104
  %v234 = vunpack.c.l.b16 %v105
  %v235 = vunpack.c.l.b16 %v106
  %v236 = vunpack.c.l.b16 %v107
  %v237 = vunpack.c.l.b16 %v108
  %v238 = vunpack.c.l.b16 %v109
  %v239 = vunpack.c.l.b16 %v110
  %v240 = vunpack.c.l.b16 %v111
  %v241 = vunpack.c.l.b16 %v112
  %v242 = vunpack.c.l.b16 %v113
  %v243 = vunpack.c.l.b16 %v114
  %v244 = vunpack.c.l.b16 %v115
  %v245 = vunpack.c.l.b16 %v116
  %v246 = vunpack.c.l.b16 %v117
  %v247 = vunpack.c.l.b16 %v118
  %v248 = vunpack.c.l.b16 %v119
  %v249 = vunpack.c.l.b16 %v120
  %v250 = vunpack.c.l.b16 %v121
  %v251 = vunpack.c.l.b16 %v122
  %v252 = vunpack.c.l.b16 %v123
  %v253 = vunpack.c.l.b16 %v124
  %v254 = vunpack.c.l.b16 %v125
  %v255 = vunpack.c.l.b16 %v126
  %v256 = vunpack.c.l.b16 %v127
  %v257 = vunpack.c.l.b16 %v128
  %v258 = vunpack.c.l.b16 %v129
  %v259 = vunpack.c.l.b16 %v130
  %v260 = vunpack.c.l.b16 %v131
  %v261 = vunpack.c.l.b16 %v132
  %v262 = vunpack.c.l.b16 %v133
  %v263 = vunpack.c.l.b16 %v134
  %v264 = vunpack.c.l.b16 %v135
  %v265 = vunpack.c.l.b16 %v136
  %v266 = vunpack.c.l.b16 %v137
  %v267 = vunpack.c.l.b16 %v138
  %v268 = vunpack.c.l.b16 %v139
  %v269 = vunpack.c.l.b16 %v140
  %v270 = vunpack.c.l.b16 %v141
  %v271 = vunpack.c.l.b16 %v142
  %v272 = vunpack.c.l.b16 %v143
  %v273 = vunpack.c.l.b16 %v144
  %v274 = vunpack.c.l.b16 %v145
  %v275 = vunpack.c.l.b16 %v146
  %v276 = vunpack.c.l.b16 %v147
  %v277 = vunpack.c.l.b16 %v148
  %v278 = vunpack.c.l.b16 %v149
  %v279 = vpack.c.b16 %v216, %v215
  %v280 = vpack.c.b16 %v218, %v217
  %v281 = vpack.c.b16 %v220, %v219
  %v282 = vpack.c.b16 %v222, %v221
  %v283 = vpack.c.b16 %v224, %v223
  %v284 = vpack.c.b16 %v226, %v225
  %v285 = vpack.c.b16 %v228, %v227
  %v286 = vpack.c.b16 %v230, %v229
  %v287 = vpack.c.b16 %v232, %v231
  %v288 = vpack.c.b16 %v234, %v233
  %v289 = vpack.c.b16 %v236, %v235
  %v290 = vpack.c.b16 %v238, %v237
  %v291 = vpack.c.b16 %v240, %v239
  %v292 = vpack.c.b16 %v242, %v241
  %v293 = vpack.c.b16 %v244, %v243
  %v294 = vpack.c.b16 %v246, %v245
  %v295 = vpack.c.b16 %v248, %v247
  %v296 = vpack.c.b16 %v250, %v249
  %v297 = vpack.c.b16 %v252, %v251
  %v298 = vpack.c.b16 %v254, %v253
  %v299 = vpack.c.b16 %v256, %v255
  %v300 = vpack.c.b16 %v258, %v257
  %v301 = vpack.c.b16 %v260, %v259
  %v302 = vpack.c.b16 %v262, %v261
  %v303 = vpack.c.b16 %v264, %v263
  %v304 = vpack.c.b16 %v266, %v265
  %v305 = vpack.c.b16 %v268, %v267
  %v306 = vpack.c.b16 %v270, %v269
  %v307 = vpack.c.b16 %v272, %v271
  %v308 = vpack.c.b16 %v274, %v273
  %v309 = vpack.c.b16 %v276, %v275
  %v310 = vpack.c.b16 %v278, %v277
  %vm311 = vcmask 15360
  %v313 = vsel %vm311, %v279, 0
  %v316 = vsel %vm311, %v280, 0
  %v319 = vsel %vm311, %v281, 0
  %v322 = vsel %vm311, %v282, 0
  %v325 = vsel %vm311, %v283, 0
  %v328 = vsel %vm311, %v284, 0
  %v331 = vsel %vm311, %v285, 0
  %v334 = vsel %vm311, %v286, 0
  %v337 = vsel %vm311, %v287, 0
  %v340 = vsel %vm311, %v288, 0
  %v343 = vsel %vm311, %v289, 0
  %v346 = vsel %vm311, %v290, 0
  %v349 = vsel %vm311, %v291, 0
  %v352 = vsel %vm311, %v292, 0
  %v355 = vsel %vm311, %v293, 0
  %v358 = vsel %vm311, %v294, 0
  %v361 = vsel %vm311, %v295, 0
  %v364 = vsel %vm311, %v296, 0
  %v367 = vsel %vm311, %v297, 0
  %v370 = vsel %vm311, %v298, 0
  %v373 = vsel %vm311, %v299, 0
  %v376 = vsel %vm311, %v300, 0
  %v379 = vsel %vm311, %v301, 0
  %v382 = vsel %vm311, %v302, 0
  %v385 = vsel %vm311, %v303, 0
  %v388 = vsel %vm311, %v304, 0
  %v391 = vsel %vm311, %v305, 0
  %v394 = vsel %vm311, %v306, 0
  %v397 = vsel %vm311, %v307, 0
  %v400 = vsel %vm311, %v308, 0
  %v403 = vsel %vm311, %v309, 0
  %v406 = vsel %vm311, %v310, 0
  %vm408 = vcmask 1040384
  %v410 = vsel %vm408, %v150, 0
  %412 = vmatprep.subr.bf16.mxu0 0
  %413 = vmatpush1.bf16.msra.mxu0 %v410
  %414 = vmatprep.subr.bf16.mxu0 0
  %415 = vmatpush1.bf16.msra.mxu0 0
  %416 = vmatprep.subr.bf16.mxu0 0
  %417 = vmatpush1.bf16.msra.mxu0 0
  %418 = vmatprep.subr.bf16.mxu0 0
  %419 = vmatpush1.bf16.msra.mxu0 0
  %420 = vmatprep.subr.bf16.mxu0 0
  %421 = vmatpush1.bf16.msra.mxu0 0
  %422 = vmatprep.subr.bf16.mxu0 0
  %423 = vmatpush1.bf16.msra.mxu0 0
  %424 = vmatprep.subr.bf16.mxu0 0
  %425 = vmatpush1.bf16.msra.mxu0 0
  %426 = vmatprep.subr.bf16.mxu0 0
  %427 = vmatpush1.bf16.msra.mxu0 0
  %428 = vmatprep.subr.bf16.mxu0 0
  %429 = vmatpush1.bf16.msra.mxu0 0
  %430 = vmatprep.subr.bf16.mxu0 0
  %431 = vmatpush1.bf16.msra.mxu0 0
  %432 = vmatprep.subr.bf16.mxu0 0
  %433 = vmatpush1.bf16.msra.mxu0 0
  %434 = vmatprep.subr.bf16.mxu0 0
  %435 = vmatpush1.bf16.msra.mxu0 0
  %436 = vmatprep.subr.bf16.mxu0 0
  %437 = vmatpush1.bf16.msra.mxu0 0
  %438 = vmatprep.subr.bf16.mxu0 0
  %439 = vmatpush1.bf16.msra.mxu0 0
  %440 = vmatprep.subr.bf16.mxu0 0
  %441 = vmatpush1.bf16.msra.mxu0 0
  %442 = vmatprep.subr.bf16.mxu0 0
  %443 = vmatpush1.bf16.msra.mxu0 0
  %444 = vmatprep.mubr.bf16.mxu0 0
  %445 = vmatmul.mubr.bf16.gmra.mrb[0].mxu0 %v313
  %v446 = vpop.f32.mrb[0].mxu0
  %v447 = vadd.f32 0.0, %v446
  %v448 = vpop.f32.mrb[0].mxu0
  %v449 = vpop.f32.mrb[0].mxu0
  %v450 = vadd.f32 0.0, %v449
  %v451 = vpop.f32.mrb[0].mxu0
  %452 = vmatprep.mubr.bf16.mxu0 0
  %453 = vmatmul.mubr.bf16.gmra.mrb[0].mxu0 %v316
  %v454 = vpop.f32.mrb[0].mxu0
  %v455 = vadd.f32 0.0, %v454
  %v456 = vpop.f32.mrb[0].mxu0
  %v457 = vpop.f32.mrb[0].mxu0
  %v458 = vadd.f32 0.0, %v457
  %v459 = vpop.f32.mrb[0].mxu0
  %460 = vmatprep.mubr.bf16.mxu0 0
  %461 = vmatmul.mubr.bf16.gmra.mrb[0].mxu0 %v319
  %v462 = vpop.f32.mrb[0].mxu0
  %v463 = vadd.f32 0.0, %v462
  %v464 = vpop.f32.mrb[0].mxu0
  %v465 = vpop.f32.mrb[0].mxu0
  %v466 = vadd.f32 0.0, %v465
  %v467 = vpop.f32.mrb[0].mxu0
  %468 = vmatprep.mubr.bf16.mxu0 0
  %469 = vmatmul.mubr.bf16.gmra.mrb[0].mxu0 %v322
  %v470 = vpop.f32.mrb[0].mxu0
  %v471 = vadd.f32 0.0, %v470
  %v472 = vpop.f32.mrb[0].mxu0
  %v473 = vpop.f32.mrb[0].mxu0
  %v474 = vadd.f32 0.0, %v473
  %v475 = vpop.f32.mrb[0].mxu0
  %476 = vmatprep.mubr.bf16.mxu0 0
  %477 = vmatmul.mubr.bf16.gmra.mrb[0].mxu0 %v325
  %v478 = vpop.f32.mrb[0].mxu0
  %v479 = vadd.f32 0.0, %v478
  %v480 = vpop.f32.mrb[0].mxu0
  %v481 = vpop.f32.mrb[0].mxu0
  %v482 = vadd.f32 0.0, %v481
  %v483 = vpop.f32.mrb[0].mxu0
  %484 = vmatprep.mubr.bf16.mxu0 0
  %485 = vmatmul.mubr.bf16.gmra.mrb[0].mxu0 %v328
  %v486 = vpop.f32.mrb[0].mxu0
  %v487 = vadd.f32 0.0, %v486
  %v488 = vpop.f32.mrb[0].mxu0
  %v489 = vpop.f32.mrb[0].mxu0
  %v490 = vadd.f32 0.0, %v489
  %v491 = vpop.f32.mrb[0].mxu0
  %492 = vmatprep.mubr.bf16.mxu0 0
  %493 = vmatmul.mubr.bf16.gmra.mrb[0].mxu0 %v331
  %v494 = vpop.f32.mrb[0].mxu0
  %v495 = vadd.f32 0.0, %v494
  %v496 = vpop.f32.mrb[0].mxu0
  %v497 = vpop.f32.mrb[0].mxu0
  %v498 = vadd.f32 0.0, %v497
  %v499 = vpop.f32.mrb[0].mxu0
  %500 = vmatprep.mubr.bf16.mxu0 0
  %501 = vmatmul.mubr.bf16.gmra.mrb[0].mxu0 %v334
  %v502 = vpop.f32.mrb[0].mxu0
  %v503 = vadd.f32 0.0, %v502
  %v504 = vpop.f32.mrb[0].mxu0
  %v505 = vpop.f32.mrb[0].mxu0
  %v506 = vadd.f32 0.0, %v505
  %v507 = vpop.f32.mrb[0].mxu0
  %508 = vmatprep.mubr.bf16.mxu0 0
  %509 = vmatmul.mubr.bf16.gmra.mrb[0].mxu0 %v337
  %v510 = vpop.f32.mrb[0].mxu0
  %v511 = vadd.f32 0.0, %v510
  %v512 = vpop.f32.mrb[0].mxu0
  %v513 = vpop.f32.mrb[0].mxu0
  %v514 = vadd.f32 0.0, %v513
  %v515 = vpop.f32.mrb[0].mxu0
  %516 = vmatprep.mubr.bf16.mxu0 0
  %517 = vmatmul.mubr.bf16.gmra.mrb[0].mxu0 %v340
  %v518 = vpop.f32.mrb[0].mxu0
  %v519 = vadd.f32 0.0, %v518
  %v520 = vpop.f32.mrb[0].mxu0
  %v521 = vpop.f32.mrb[0].mxu0
  %v522 = vadd.f32 0.0, %v521
  %v523 = vpop.f32.mrb[0].mxu0
  %524 = vmatprep.mubr.bf16.mxu0 0
  %525 = vmatmul.mubr.bf16.gmra.mrb[0].mxu0 %v343
  %v526 = vpop.f32.mrb[0].mxu0
  %v527 = vadd.f32 0.0, %v526
  %v528 = vpop.f32.mrb[0].mxu0
  %v529 = vpop.f32.mrb[0].mxu0
  %v530 = vadd.f32 0.0, %v529
  %v531 = vpop.f32.mrb[0].mxu0
  %532 = vmatprep.mubr.bf16.mxu0 0
  %533 = vmatmul.mubr.bf16.gmra.mrb[0].mxu0 %v346
  %v534 = vpop.f32.mrb[0].mxu0
  %v535 = vadd.f32 0.0, %v534
  %v536 = vpop.f32.mrb[0].mxu0
  %v537 = vpop.f32.mrb[0].mxu0
  %v538 = vadd.f32 0.0, %v537
  %v539 = vpop.f32.mrb[0].mxu0
  %540 = vmatprep.mubr.bf16.mxu0 0
  %541 = vmatmul.mubr.bf16.gmra.mrb[0].mxu0 %v349
  %v542 = vpop.f32.mrb[0].mxu0
  %v543 = vadd.f32 0.0, %v542
  %v544 = vpop.f32.mrb[0].mxu0
  %v545 = vpop.f32.mrb[0].mxu0
  %v546 = vadd.f32 0.0, %v545
  %v547 = vpop.f32.mrb[0].mxu0
  %548 = vmatprep.mubr.bf16.mxu0 0
  %549 = vmatmul.mubr.bf16.gmra.mrb[0].mxu0 %v352
  %v550 = vpop.f32.mrb[0].mxu0
  %v551 = vadd.f32 0.0, %v550
  %v552 = vpop.f32.mrb[0].mxu0
  %v553 = vpop.f32.mrb[0].mxu0
  %v554 = vadd.f32 0.0, %v553
  %v555 = vpop.f32.mrb[0].mxu0
  %556 = vmatprep.mubr.bf16.mxu0 0
  %557 = vmatmul.mubr.bf16.gmra.mrb[0].mxu0 %v355
  %v558 = vpop.f32.mrb[0].mxu0
  %v559 = vadd.f32 0.0, %v558
  %v560 = vpop.f32.mrb[0].mxu0
  %v561 = vpop.f32.mrb[0].mxu0
  %v562 = vadd.f32 0.0, %v561
  %v563 = vpop.f32.mrb[0].mxu0
  %564 = vmatprep.mubr.bf16.mxu0 0
  %565 = vmatmul.mubr.bf16.gmra.mrb[0].mxu0 %v358
  %v566 = vpop.f32.mrb[0].mxu0
  %v567 = vadd.f32 0.0, %v566
  %v568 = vpop.f32.mrb[0].mxu0
  %v569 = vpop.f32.mrb[0].mxu0
  %v570 = vadd.f32 0.0, %v569
  %v571 = vpop.f32.mrb[0].mxu0
  %572 = vmatprep.mubr.bf16.mxu0 0
  %573 = vmatmul.mubr.bf16.gmra.mrb[0].mxu0 %v361
  %v574 = vpop.f32.mrb[0].mxu0
  %v575 = vadd.f32 0.0, %v574
  %v576 = vpop.f32.mrb[0].mxu0
  %v577 = vpop.f32.mrb[0].mxu0
  %v578 = vadd.f32 0.0, %v577
  %v579 = vpop.f32.mrb[0].mxu0
  %580 = vmatprep.mubr.bf16.mxu0 0
  %581 = vmatmul.mubr.bf16.gmra.mrb[0].mxu0 %v364
  %v582 = vpop.f32.mrb[0].mxu0
  %v583 = vadd.f32 0.0, %v582
  %v584 = vpop.f32.mrb[0].mxu0
  %v585 = vpop.f32.mrb[0].mxu0
  %v586 = vadd.f32 0.0, %v585
  %v587 = vpop.f32.mrb[0].mxu0
  %588 = vmatprep.mubr.bf16.mxu0 0
  %589 = vmatmul.mubr.bf16.gmra.mrb[0].mxu0 %v367
  %v590 = vpop.f32.mrb[0].mxu0
  %v591 = vadd.f32 0.0, %v590
  %v592 = vpop.f32.mrb[0].mxu0
  %v593 = vpop.f32.mrb[0].mxu0
  %v594 = vadd.f32 0.0, %v593
  %v595 = vpop.f32.mrb[0].mxu0
  %596 = vmatprep.mubr.bf16.mxu0 0
  %597 = vmatmul.mubr.bf16.gmra.mrb[0].mxu0 %v370
  %v598 = vpop.f32.mrb[0].mxu0
  %v599 = vadd.f32 0.0, %v598
  %v600 = vpop.f32.mrb[0].mxu0
  %v601 = vpop.f32.mrb[0].mxu0
  %v602 = vadd.f32 0.0, %v601
  %v603 = vpop.f32.mrb[0].mxu0
  %604 = vmatprep.mubr.bf16.mxu0 0
  %605 = vmatmul.mubr.bf16.gmra.mrb[0].mxu0 %v373
  %v606 = vpop.f32.mrb[0].mxu0
  %v607 = vadd.f32 0.0, %v606
  %v608 = vpop.f32.mrb[0].mxu0
  %v609 = vpop.f32.mrb[0].mxu0
  %v610 = vadd.f32 0.0, %v609
  %v611 = vpop.f32.mrb[0].mxu0
  %612 = vmatprep.mubr.bf16.mxu0 0
  %613 = vmatmul.mubr.bf16.gmra.mrb[0].mxu0 %v376
  %v614 = vpop.f32.mrb[0].mxu0
  %v615 = vadd.f32 0.0, %v614
  %v616 = vpop.f32.mrb[0].mxu0
  %v617 = vpop.f32.mrb[0].mxu0
  %v618 = vadd.f32 0.0, %v617
  %v619 = vpop.f32.mrb[0].mxu0
  %620 = vmatprep.mubr.bf16.mxu0 0
  %621 = vmatmul.mubr.bf16.gmra.mrb[0].mxu0 %v379
  %v622 = vpop.f32.mrb[0].mxu0
  %v623 = vadd.f32 0.0, %v622
  %v624 = vpop.f32.mrb[0].mxu0
  %v625 = vpop.f32.mrb[0].mxu0
  %v626 = vadd.f32 0.0, %v625
  %v627 = vpop.f32.mrb[0].mxu0
  %628 = vmatprep.mubr.bf16.mxu0 0
  %629 = vmatmul.mubr.bf16.gmra.mrb[0].mxu0 %v382
  %v630 = vpop.f32.mrb[0].mxu0
  %v631 = vadd.f32 0.0, %v630
  %v632 = vpop.f32.mrb[0].mxu0
  %v633 = vpop.f32.mrb[0].mxu0
  %v634 = vadd.f32 0.0, %v633
  %v635 = vpop.f32.mrb[0].mxu0
  %636 = vmatprep.mubr.bf16.mxu0 0
  %637 = vmatmul.mubr.bf16.gmra.mrb[0].mxu0 %v385
  %v638 = vpop.f32.mrb[0].mxu0
  %v639 = vadd.f32 0.0, %v638
  %v640 = vpop.f32.mrb[0].mxu0
  %v641 = vpop.f32.mrb[0].mxu0
  %v642 = vadd.f32 0.0, %v641
  %v643 = vpop.f32.mrb[0].mxu0
  %644 = vmatprep.mubr.bf16.mxu0 0
  %645 = vmatmul.mubr.bf16.gmra.mrb[0].mxu0 %v388
  %v646 = vpop.f32.mrb[0].mxu0
  %v647 = vadd.f32 0.0, %v646
  %v648 = vpop.f32.mrb[0].mxu0
  %v649 = vpop.f32.mrb[0].mxu0
  %v650 = vadd.f32 0.0, %v649
  %v651 = vpop.f32.mrb[0].mxu0
  %652 = vmatprep.mubr.bf16.mxu0 0
  %653 = vmatmul.mubr.bf16.gmra.mrb[0].mxu0 %v391
  %v654 = vpop.f32.mrb[0].mxu0
  %v655 = vadd.f32 0.0, %v654
  %v656 = vpop.f32.mrb[0].mxu0
  %v657 = vpop.f32.mrb[0].mxu0
  %v658 = vadd.f32 0.0, %v657
  %v659 = vpop.f32.mrb[0].mxu0
  %660 = vmatprep.mubr.bf16.mxu0 0
  %661 = vmatmul.mubr.bf16.gmra.mrb[0].mxu0 %v394
  %v662 = vpop.f32.mrb[0].mxu0
  %v663 = vadd.f32 0.0, %v662
  %v664 = vpop.f32.mrb[0].mxu0
  %v665 = vpop.f32.mrb[0].mxu0
  %v666 = vadd.f32 0.0, %v665
  %v667 = vpop.f32.mrb[0].mxu0
  %668 = vmatprep.mubr.bf16.mxu0 0
  %669 = vmatmul.mubr.bf16.gmra.mrb[0].mxu0 %v397
  %v670 = vpop.f32.mrb[0].mxu0
  %v671 = vadd.f32 0.0, %v670
  %v672 = vpop.f32.mrb[0].mxu0
  %v673 = vpop.f32.mrb[0].mxu0
  %v674 = vadd.f32 0.0, %v673
  %v675 = vpop.f32.mrb[0].mxu0
  %676 = vmatprep.mubr.bf16.mxu0 0
  %677 = vmatmul.mubr.bf16.gmra.mrb[0].mxu0 %v400
  %v678 = vpop.f32.mrb[0].mxu0
  %v679 = vadd.f32 0.0, %v678
  %v680 = vpop.f32.mrb[0].mxu0
  %v681 = vpop.f32.mrb[0].mxu0
  %v682 = vadd.f32 0.0, %v681
  %v683 = vpop.f32.mrb[0].mxu0
  %684 = vmatprep.mubr.bf16.mxu0 0
  %685 = vmatmul.mubr.bf16.gmra.mrb[0].mxu0 %v403
  %v686 = vpop.f32.mrb[0].mxu0
  %v687 = vadd.f32 0.0, %v686
  %v688 = vpop.f32.mrb[0].mxu0
  %v689 = vpop.f32.mrb[0].mxu0
  %v690 = vadd.f32 0.0, %v689
  %v691 = vpop.f32.mrb[0].mxu0
  %692 = vmatprep.mubr.bf16.mxu0 0
  %693 = vmatmul.mubr.bf16.gmra.mrb[0].mxu0 %v406
  %v694 = vpop.f32.mrb[0].mxu0
  %v695 = vadd.f32 0.0, %v694
  %v696 = vpop.f32.mrb[0].mxu0
  %v697 = vpop.f32.mrb[0].mxu0
  %v698 = vadd.f32 0.0, %v697
  %v699 = vpop.f32.mrb[0].mxu0
  %700 = vdwg.mxu0
  %v765 = vunpack.c.l.b16 %v21
  %v766 = vunpack.c.l.b16 %v22
  %v767 = vunpack.c.l.b16 %v23
  %v768 = vunpack.c.l.b16 %v24
  %v769 = vunpack.c.l.b16 %v25
  %v770 = vunpack.c.l.b16 %v26
  %v771 = vunpack.c.l.b16 %v27
  %v772 = vunpack.c.l.b16 %v28
  %v773 = vunpack.c.l.b16 %v29
  %v774 = vunpack.c.l.b16 %v30
  %v775 = vunpack.c.l.b16 %v31
  %v776 = vunpack.c.l.b16 %v32
  %v777 = vunpack.c.l.b16 %v33
  %v778 = vunpack.c.l.b16 %v34
  %v779 = vunpack.c.l.b16 %v35
  %v780 = vunpack.c.l.b16 %v36
  %v781 = vunpack.c.l.b16 %v37
  %v782 = vunpack.c.l.b16 %v38
  %v783 = vunpack.c.l.b16 %v39
  %v784 = vunpack.c.l.b16 %v40
  %v785 = vunpack.c.l.b16 %v41
  %v786 = vunpack.c.l.b16 %v42
  %v787 = vunpack.c.l.b16 %v43
  %v788 = vunpack.c.l.b16 %v44
  %v789 = vunpack.c.l.b16 %v45
  %v790 = vunpack.c.l.b16 %v46
  %v791 = vunpack.c.l.b16 %v47
  %v792 = vunpack.c.l.b16 %v48
  %v793 = vunpack.c.l.b16 %v49
  %v794 = vunpack.c.l.b16 %v50
  %v795 = vunpack.c.l.b16 %v51
  %v796 = vunpack.c.l.b16 %v52
  %v797 = vunpack.c.l.b16 %v53
  %v798 = vunpack.c.l.b16 %v54
  %v799 = vunpack.c.l.b16 %v55
  %v800 = vunpack.c.l.b16 %v56
  %v801 = vunpack.c.l.b16 %v57
  %v802 = vunpack.c.l.b16 %v58
  %v803 = vunpack.c.l.b16 %v59
  %v804 = vunpack.c.l.b16 %v60
  %v805 = vunpack.c.l.b16 %v61
  %v806 = vunpack.c.l.b16 %v62
  %v807 = vunpack.c.l.b16 %v63
  %v808 = vunpack.c.l.b16 %v64
  %v809 = vunpack.c.l.b16 %v65
  %v810 = vunpack.c.l.b16 %v66
  %v811 = vunpack.c.l.b16 %v67
  %v812 = vunpack.c.l.b16 %v68
  %v813 = vunpack.c.l.b16 %v69
  %v814 = vunpack.c.l.b16 %v70
  %v815 = vunpack.c.l.b16 %v71
  %v816 = vunpack.c.l.b16 %v72
  %v817 = vunpack.c.l.b16 %v73
  %v818 = vunpack.c.l.b16 %v74
  %v819 = vunpack.c.l.b16 %v75
  %v820 = vunpack.c.l.b16 %v76
  %v821 = vunpack.c.l.b16 %v77
  %v822 = vunpack.c.l.b16 %v78
  %v823 = vunpack.c.l.b16 %v79
  %v824 = vunpack.c.l.b16 %v80
  %v825 = vunpack.c.l.b16 %v81
  %v826 = vunpack.c.l.b16 %v82
  %v827 = vunpack.c.l.b16 %v83
  %v828 = vunpack.c.l.b16 %v84
  %v829 = vpack.c.b16 %v766, %v765
  %v830 = vpack.c.b16 %v768, %v767
  %v831 = vpack.c.b16 %v770, %v769
  %v832 = vpack.c.b16 %v772, %v771
  %v833 = vpack.c.b16 %v774, %v773
  %v834 = vpack.c.b16 %v776, %v775
  %v835 = vpack.c.b16 %v778, %v777
  %v836 = vpack.c.b16 %v780, %v779
  %v837 = vpack.c.b16 %v782, %v781
  %v838 = vpack.c.b16 %v784, %v783
  %v839 = vpack.c.b16 %v786, %v785
  %v840 = vpack.c.b16 %v788, %v787
  %v841 = vpack.c.b16 %v790, %v789
  %v842 = vpack.c.b16 %v792, %v791
  %v843 = vpack.c.b16 %v794, %v793
  %v844 = vpack.c.b16 %v796, %v795
  %v845 = vpack.c.b16 %v798, %v797
  %v846 = vpack.c.b16 %v800, %v799
  %v847 = vpack.c.b16 %v802, %v801
  %v848 = vpack.c.b16 %v804, %v803
  %v849 = vpack.c.b16 %v806, %v805
  %v850 = vpack.c.b16 %v808, %v807
  %v851 = vpack.c.b16 %v810, %v809
  %v852 = vpack.c.b16 %v812, %v811
  %v853 = vpack.c.b16 %v814, %v813
  %v854 = vpack.c.b16 %v816, %v815
  %v855 = vpack.c.b16 %v818, %v817
  %v856 = vpack.c.b16 %v820, %v819
  %v857 = vpack.c.b16 %v822, %v821
  %v858 = vpack.c.b16 %v824, %v823
  %v859 = vpack.c.b16 %v826, %v825
  %v860 = vpack.c.b16 %v828, %v827
  %v862 = vsel %vm311, %v829, 0
  %v865 = vsel %vm311, %v830, 0
  %v868 = vsel %vm311, %v831, 0
  %v871 = vsel %vm311, %v832, 0
  %v874 = vsel %vm311, %v833, 0
  %v877 = vsel %vm311, %v834, 0
  %v880 = vsel %vm311, %v835, 0
  %v883 = vsel %vm311, %v836, 0
  %v886 = vsel %vm311, %v837, 0
  %v889 = vsel %vm311, %v838, 0
  %v892 = vsel %vm311, %v839, 0
  %v895 = vsel %vm311, %v840, 0
  %v898 = vsel %vm311, %v841, 0
  %v901 = vsel %vm311, %v842, 0
  %v904 = vsel %vm311, %v843, 0
  %v907 = vsel %vm311, %v844, 0
  %v910 = vsel %vm311, %v845, 0
  %v913 = vsel %vm311, %v846, 0
  %v916 = vsel %vm311, %v847, 0
  %v919 = vsel %vm311, %v848, 0
  %v922 = vsel %vm311, %v849, 0
  %v925 = vsel %vm311, %v850, 0
  %v928 = vsel %vm311, %v851, 0
  %v931 = vsel %vm311, %v852, 0
  %v934 = vsel %vm311, %v853, 0
  %v937 = vsel %vm311, %v854, 0
  %v940 = vsel %vm311, %v855, 0
  %v943 = vsel %vm311, %v856, 0
  %v946 = vsel %vm311, %v857, 0
  %v949 = vsel %vm311, %v858, 0
  %v952 = vsel %vm311, %v859, 0
  %v955 = vsel %vm311, %v860, 0
  %v958 = vsel %vm408, %v85, 0
  %960 = vmatprep.subr.bf16.mxu0 0
  %961 = vmatpush1.bf16.msra.mxu0 %v958
  %962 = vmatprep.subr.bf16.mxu0 0
  %963 = vmatpush1.bf16.msra.mxu0 0
  %964 = vmatprep.subr.bf16.mxu0 0
  %965 = vmatpush1.bf16.msra.mxu0 0
  %966 = vmatprep.subr.bf16.mxu0 0
  %967 = vmatpush1.bf16.msra.mxu0 0
  %968 = vmatprep.subr.bf16.mxu0 0
  %969 = vmatpush1.bf16.msra.mxu0 0
  %970 = vmatprep.subr.bf16.mxu0 0
  %971 = vmatpush1.bf16.msra.mxu0 0
  %972 = vmatprep.subr.bf16.mxu0 0
  %973 = vmatpush1.bf16.msra.mxu0 0
  %974 = vmatprep.subr.bf16.mxu0 0
  %975 = vmatpush1.bf16.msra.mxu0 0
  %976 = vmatprep.subr.bf16.mxu0 0
  %977 = vmatpush1.bf16.msra.mxu0 0
  %978 = vmatprep.subr.bf16.mxu0 0
  %979 = vmatpush1.bf16.msra.mxu0 0
  %980 = vmatprep.subr.bf16.mxu0 0
  %981 = vmatpush1.bf16.msra.mxu0 0
  %982 = vmatprep.subr.bf16.mxu0 0
  %983 = vmatpush1.bf16.msra.mxu0 0
  %984 = vmatprep.subr.bf16.mxu0 0
  %985 = vmatpush1.bf16.msra.mxu0 0
  %986 = vmatprep.subr.bf16.mxu0 0
  %987 = vmatpush1.bf16.msra.mxu0 0
  %988 = vmatprep.subr.bf16.mxu0 0
  %989 = vmatpush1.bf16.msra.mxu0 0
  %990 = vmatprep.subr.bf16.mxu0 0
  %991 = vmatpush1.bf16.msra.mxu0 0
  %992 = vmatprep.mubr.bf16.mxu0 0
  %993 = vmatmul.mubr.bf16.gmra.mrb[0].mxu0 %v862
  %v994 = vpop.f32.mrb[0].mxu0
  %v995 = vadd.f32 %v447, %v994
  %v996 = vpop.f32.mrb[0].mxu0
  %v997 = vpop.f32.mrb[0].mxu0
  %v998 = vadd.f32 %v450, %v997
  %v999 = vpop.f32.mrb[0].mxu0
  %1000 = vmatprep.mubr.bf16.mxu0 0
  %1001 = vmatmul.mubr.bf16.gmra.mrb[0].mxu0 %v865
  %v1002 = vpop.f32.mrb[0].mxu0
  %v1003 = vadd.f32 %v455, %v1002
  %v1004 = vpop.f32.mrb[0].mxu0
  %v1005 = vpop.f32.mrb[0].mxu0
  %v1006 = vadd.f32 %v458, %v1005
  %v1007 = vpop.f32.mrb[0].mxu0
  %1008 = vmatprep.mubr.bf16.mxu0 0
  %1009 = vmatmul.mubr.bf16.gmra.mrb[0].mxu0 %v868
  %v1010 = vpop.f32.mrb[0].mxu0
  %v1011 = vadd.f32 %v463, %v1010
  %v1012 = vpop.f32.mrb[0].mxu0
  %v1013 = vpop.f32.mrb[0].mxu0
  %v1014 = vadd.f32 %v466, %v1013
  %v1015 = vpop.f32.mrb[0].mxu0
  %1016 = vmatprep.mubr.bf16.mxu0 0
  %1017 = vmatmul.mubr.bf16.gmra.mrb[0].mxu0 %v871
  %v1018 = vpop.f32.mrb[0].mxu0
  %v1019 = vadd.f32 %v471, %v1018
  %v1020 = vpop.f32.mrb[0].mxu0
  %v1021 = vpop.f32.mrb[0].mxu0
  %v1022 = vadd.f32 %v474, %v1021
  %v1023 = vpop.f32.mrb[0].mxu0
  %1024 = vmatprep.mubr.bf16.mxu0 0
  %1025 = vmatmul.mubr.bf16.gmra.mrb[0].mxu0 %v874
  %v1026 = vpop.f32.mrb[0].mxu0
  %v1027 = vadd.f32 %v479, %v1026
  %v1028 = vpop.f32.mrb[0].mxu0
  %v1029 = vpop.f32.mrb[0].mxu0
  %v1030 = vadd.f32 %v482, %v1029
  %v1031 = vpop.f32.mrb[0].mxu0
  %1032 = vmatprep.mubr.bf16.mxu0 0
  %1033 = vmatmul.mubr.bf16.gmra.mrb[0].mxu0 %v877
  %v1034 = vpop.f32.mrb[0].mxu0
  %v1035 = vadd.f32 %v487, %v1034
  %v1036 = vpop.f32.mrb[0].mxu0
  %v1037 = vpop.f32.mrb[0].mxu0
  %v1038 = vadd.f32 %v490, %v1037
  %v1039 = vpop.f32.mrb[0].mxu0
  %1040 = vmatprep.mubr.bf16.mxu0 0
  %1041 = vmatmul.mubr.bf16.gmra.mrb[0].mxu0 %v880
  %v1042 = vpop.f32.mrb[0].mxu0
  %v1043 = vadd.f32 %v495, %v1042
  %v1044 = vpop.f32.mrb[0].mxu0
  %v1045 = vpop.f32.mrb[0].mxu0
  %v1046 = vadd.f32 %v498, %v1045
  %v1047 = vpop.f32.mrb[0].mxu0
  %1048 = vmatprep.mubr.bf16.mxu0 0
  %1049 = vmatmul.mubr.bf16.gmra.mrb[0].mxu0 %v883
  %v1050 = vpop.f32.mrb[0].mxu0
  %v1051 = vadd.f32 %v503, %v1050
  %v1052 = vpop.f32.mrb[0].mxu0
  %v1053 = vpop.f32.mrb[0].mxu0
  %v1054 = vadd.f32 %v506, %v1053
  %v1055 = vpop.f32.mrb[0].mxu0
  %1056 = vmatprep.mubr.bf16.mxu0 0
  %1057 = vmatmul.mubr.bf16.gmra.mrb[0].mxu0 %v886
  %v1058 = vpop.f32.mrb[0].mxu0
  %v1059 = vadd.f32 %v511, %v1058
  %v1060 = vpop.f32.mrb[0].mxu0
  %v1061 = vpop.f32.mrb[0].mxu0
  %v1062 = vadd.f32 %v514, %v1061
  %v1063 = vpop.f32.mrb[0].mxu0
  %1064 = vmatprep.mubr.bf16.mxu0 0
  %1065 = vmatmul.mubr.bf16.gmra.mrb[0].mxu0 %v889
  %v1066 = vpop.f32.mrb[0].mxu0
  %v1067 = vadd.f32 %v519, %v1066
  %v1068 = vpop.f32.mrb[0].mxu0
  %v1069 = vpop.f32.mrb[0].mxu0
  %v1070 = vadd.f32 %v522, %v1069
  %v1071 = vpop.f32.mrb[0].mxu0
  %1072 = vmatprep.mubr.bf16.mxu0 0
  %1073 = vmatmul.mubr.bf16.gmra.mrb[0].mxu0 %v892
  %v1074 = vpop.f32.mrb[0].mxu0
  %v1075 = vadd.f32 %v527, %v1074
  %v1076 = vpop.f32.mrb[0].mxu0
  %v1077 = vpop.f32.mrb[0].mxu0
  %v1078 = vadd.f32 %v530, %v1077
  %v1079 = vpop.f32.mrb[0].mxu0
  %1080 = vmatprep.mubr.bf16.mxu0 0
  %1081 = vmatmul.mubr.bf16.gmra.mrb[0].mxu0 %v895
  %v1082 = vpop.f32.mrb[0].mxu0
  %v1083 = vadd.f32 %v535, %v1082
  %v1084 = vpop.f32.mrb[0].mxu0
  %v1085 = vpop.f32.mrb[0].mxu0
  %v1086 = vadd.f32 %v538, %v1085
  %v1087 = vpop.f32.mrb[0].mxu0
  %1088 = vmatprep.mubr.bf16.mxu0 0
  %1089 = vmatmul.mubr.bf16.gmra.mrb[0].mxu0 %v898
  %v1090 = vpop.f32.mrb[0].mxu0
  %v1091 = vadd.f32 %v543, %v1090
  %v1092 = vpop.f32.mrb[0].mxu0
  %v1093 = vpop.f32.mrb[0].mxu0
  %v1094 = vadd.f32 %v546, %v1093
  %v1095 = vpop.f32.mrb[0].mxu0
  %1096 = vmatprep.mubr.bf16.mxu0 0
  %1097 = vmatmul.mubr.bf16.gmra.mrb[0].mxu0 %v901
  %v1098 = vpop.f32.mrb[0].mxu0
  %v1099 = vadd.f32 %v551, %v1098
  %v1100 = vpop.f32.mrb[0].mxu0
  %v1101 = vpop.f32.mrb[0].mxu0
  %v1102 = vadd.f32 %v554, %v1101
  %v1103 = vpop.f32.mrb[0].mxu0
  %1104 = vmatprep.mubr.bf16.mxu0 0
  %1105 = vmatmul.mubr.bf16.gmra.mrb[0].mxu0 %v904
  %v1106 = vpop.f32.mrb[0].mxu0
  %v1107 = vadd.f32 %v559, %v1106
  %v1108 = vpop.f32.mrb[0].mxu0
  %v1109 = vpop.f32.mrb[0].mxu0
  %v1110 = vadd.f32 %v562, %v1109
  %v1111 = vpop.f32.mrb[0].mxu0
  %1112 = vmatprep.mubr.bf16.mxu0 0
  %1113 = vmatmul.mubr.bf16.gmra.mrb[0].mxu0 %v907
  %v1114 = vpop.f32.mrb[0].mxu0
  %v1115 = vadd.f32 %v567, %v1114
  %v1116 = vpop.f32.mrb[0].mxu0
  %v1117 = vpop.f32.mrb[0].mxu0
  %v1118 = vadd.f32 %v570, %v1117
  %v1119 = vpop.f32.mrb[0].mxu0
  %1120 = vmatprep.mubr.bf16.mxu0 0
  %1121 = vmatmul.mubr.bf16.gmra.mrb[0].mxu0 %v910
  %v1122 = vpop.f32.mrb[0].mxu0
  %v1123 = vadd.f32 %v575, %v1122
  %v1124 = vpop.f32.mrb[0].mxu0
  %v1125 = vpop.f32.mrb[0].mxu0
  %v1126 = vadd.f32 %v578, %v1125
  %v1127 = vpop.f32.mrb[0].mxu0
  %1128 = vmatprep.mubr.bf16.mxu0 0
  %1129 = vmatmul.mubr.bf16.gmra.mrb[0].mxu0 %v913
  %v1130 = vpop.f32.mrb[0].mxu0
  %v1131 = vadd.f32 %v583, %v1130
  %v1132 = vpop.f32.mrb[0].mxu0
  %v1133 = vpop.f32.mrb[0].mxu0
  %v1134 = vadd.f32 %v586, %v1133
  %v1135 = vpop.f32.mrb[0].mxu0
  %1136 = vmatprep.mubr.bf16.mxu0 0
  %1137 = vmatmul.mubr.bf16.gmra.mrb[0].mxu0 %v916
  %v1138 = vpop.f32.mrb[0].mxu0
  %v1139 = vadd.f32 %v591, %v1138
  %v1140 = vpop.f32.mrb[0].mxu0
  %v1141 = vpop.f32.mrb[0].mxu0
  %v1142 = vadd.f32 %v594, %v1141
  %v1143 = vpop.f32.mrb[0].mxu0
  %1144 = vmatprep.mubr.bf16.mxu0 0
  %1145 = vmatmul.mubr.bf16.gmra.mrb[0].mxu0 %v919
  %v1146 = vpop.f32.mrb[0].mxu0
  %v1147 = vadd.f32 %v599, %v1146
  %v1148 = vpop.f32.mrb[0].mxu0
  %v1149 = vpop.f32.mrb[0].mxu0
  %v1150 = vadd.f32 %v602, %v1149
  %v1151 = vpop.f32.mrb[0].mxu0
  %1152 = vmatprep.mubr.bf16.mxu0 0
  %1153 = vmatmul.mubr.bf16.gmra.mrb[0].mxu0 %v922
  %v1154 = vpop.f32.mrb[0].mxu0
  %v1155 = vadd.f32 %v607, %v1154
  %v1156 = vpop.f32.mrb[0].mxu0
  %v1157 = vpop.f32.mrb[0].mxu0
  %v1158 = vadd.f32 %v610, %v1157
  %v1159 = vpop.f32.mrb[0].mxu0
  %1160 = vmatprep.mubr.bf16.mxu0 0
  %1161 = vmatmul.mubr.bf16.gmra.mrb[0].mxu0 %v925
  %v1162 = vpop.f32.mrb[0].mxu0
  %v1163 = vadd.f32 %v615, %v1162
  %v1164 = vpop.f32.mrb[0].mxu0
  %v1165 = vpop.f32.mrb[0].mxu0
  %v1166 = vadd.f32 %v618, %v1165
  %v1167 = vpop.f32.mrb[0].mxu0
  %1168 = vmatprep.mubr.bf16.mxu0 0
  %1169 = vmatmul.mubr.bf16.gmra.mrb[0].mxu0 %v928
  %v1170 = vpop.f32.mrb[0].mxu0
  %v1171 = vadd.f32 %v623, %v1170
  %v1172 = vpop.f32.mrb[0].mxu0
  %v1173 = vpop.f32.mrb[0].mxu0
  %v1174 = vadd.f32 %v626, %v1173
  %v1175 = vpop.f32.mrb[0].mxu0
  %1176 = vmatprep.mubr.bf16.mxu0 0
  %1177 = vmatmul.mubr.bf16.gmra.mrb[0].mxu0 %v931
  %v1178 = vpop.f32.mrb[0].mxu0
  %v1179 = vadd.f32 %v631, %v1178
  %v1180 = vpop.f32.mrb[0].mxu0
  %v1181 = vpop.f32.mrb[0].mxu0
  %v1182 = vadd.f32 %v634, %v1181
  %v1183 = vpop.f32.mrb[0].mxu0
  %1184 = vmatprep.mubr.bf16.mxu0 0
  %1185 = vmatmul.mubr.bf16.gmra.mrb[0].mxu0 %v934
  %v1186 = vpop.f32.mrb[0].mxu0
  %v1187 = vadd.f32 %v639, %v1186
  %v1188 = vpop.f32.mrb[0].mxu0
  %v1189 = vpop.f32.mrb[0].mxu0
  %v1190 = vadd.f32 %v642, %v1189
  %v1191 = vpop.f32.mrb[0].mxu0
  %1192 = vmatprep.mubr.bf16.mxu0 0
  %1193 = vmatmul.mubr.bf16.gmra.mrb[0].mxu0 %v937
  %v1194 = vpop.f32.mrb[0].mxu0
  %v1195 = vadd.f32 %v647, %v1194
  %v1196 = vpop.f32.mrb[0].mxu0
  %v1197 = vpop.f32.mrb[0].mxu0
  %v1198 = vadd.f32 %v650, %v1197
  %v1199 = vpop.f32.mrb[0].mxu0
  %1200 = vmatprep.mubr.bf16.mxu0 0
  %1201 = vmatmul.mubr.bf16.gmra.mrb[0].mxu0 %v940
  %v1202 = vpop.f32.mrb[0].mxu0
  %v1203 = vadd.f32 %v655, %v1202
  %v1204 = vpop.f32.mrb[0].mxu0
  %v1205 = vpop.f32.mrb[0].mxu0
  %v1206 = vadd.f32 %v658, %v1205
  %v1207 = vpop.f32.mrb[0].mxu0
  %1208 = vmatprep.mubr.bf16.mxu0 0
  %1209 = vmatmul.mubr.bf16.gmra.mrb[0].mxu0 %v943
  %v1210 = vpop.f32.mrb[0].mxu0
  %v1211 = vadd.f32 %v663, %v1210
  %v1212 = vpop.f32.mrb[0].mxu0
  %v1213 = vpop.f32.mrb[0].mxu0
  %v1214 = vadd.f32 %v666, %v1213
  %v1215 = vpop.f32.mrb[0].mxu0
  %1216 = vmatprep.mubr.bf16.mxu0 0
  %1217 = vmatmul.mubr.bf16.gmra.mrb[0].mxu0 %v946
  %v1218 = vpop.f32.mrb[0].mxu0
  %v1219 = vadd.f32 %v671, %v1218
  %v1220 = vpop.f32.mrb[0].mxu0
  %v1221 = vpop.f32.mrb[0].mxu0
  %v1222 = vadd.f32 %v674, %v1221
  %v1223 = vpop.f32.mrb[0].mxu0
  %1224 = vmatprep.mubr.bf16.mxu0 0
  %1225 = vmatmul.mubr.bf16.gmra.mrb[0].mxu0 %v949
  %v1226 = vpop.f32.mrb[0].mxu0
  %v1227 = vadd.f32 %v679, %v1226
  %v1228 = vpop.f32.mrb[0].mxu0
  %v1229 = vpop.f32.mrb[0].mxu0
  %v1230 = vadd.f32 %v682, %v1229
  %v1231 = vpop.f32.mrb[0].mxu0
  %1232 = vmatprep.mubr.bf16.mxu0 0
  %1233 = vmatmul.mubr.bf16.gmra.mrb[0].mxu0 %v952
  %v1234 = vpop.f32.mrb[0].mxu0
  %v1235 = vadd.f32 %v687, %v1234
  %v1236 = vpop.f32.mrb[0].mxu0
  %v1237 = vpop.f32.mrb[0].mxu0
  %v1238 = vadd.f32 %v690, %v1237
  %v1239 = vpop.f32.mrb[0].mxu0
  %1240 = vmatprep.mubr.bf16.mxu0 0
  %1241 = vmatmul.mubr.bf16.gmra.mrb[0].mxu0 %v955
  %v1242 = vpop.f32.mrb[0].mxu0
  %v1243 = vadd.f32 %v695, %v1242
  %v1244 = vpop.f32.mrb[0].mxu0
  %v1245 = vpop.f32.mrb[0].mxu0
  %v1246 = vadd.f32 %v698, %v1245
  %v1247 = vpop.f32.mrb[0].mxu0
  %1248 = vdwg.mxu0
  %v1249 = vld [vmem:[%s4] sm:$0x1]
  %v1251 = vlaneseq
  %v1252 = vshrl.u32 %v1251, 7
  %v1253 = vsub.s32 0, %v1252
  %v1254 = vrot.slane %v1249, %v1253
  %v1256 = vadd.f32 %v995, %v1254
  %v1257 = vadd.f32 %v998, %v1254
  %v1258 = vadd.f32 %v1003, %v1254
  %v1259 = vadd.f32 %v1006, %v1254
  %v1260 = vadd.f32 %v1011, %v1254
  %v1261 = vadd.f32 %v1014, %v1254
  %v1262 = vadd.f32 %v1019, %v1254
  %v1263 = vadd.f32 %v1022, %v1254
  %v1264 = vadd.f32 %v1027, %v1254
  %v1265 = vadd.f32 %v1030, %v1254
  %v1266 = vadd.f32 %v1035, %v1254
  %v1267 = vadd.f32 %v1038, %v1254
  %v1268 = vadd.f32 %v1043, %v1254
  %v1269 = vadd.f32 %v1046, %v1254
  %v1270 = vadd.f32 %v1051, %v1254
  %v1271 = vadd.f32 %v1054, %v1254
  %v1272 = vadd.f32 %v1059, %v1254
  %v1273 = vadd.f32 %v1062, %v1254
  %v1274 = vadd.f32 %v1067, %v1254
  %v1275 = vadd.f32 %v1070, %v1254
  %v1276 = vadd.f32 %v1075, %v1254
  %v1277 = vadd.f32 %v1078, %v1254
  %v1278 = vadd.f32 %v1083, %v1254
  %v1279 = vadd.f32 %v1086, %v1254
  %v1280 = vadd.f32 %v1091, %v1254
  %v1281 = vadd.f32 %v1094, %v1254
  %v1282 = vadd.f32 %v1099, %v1254
  %v1283 = vadd.f32 %v1102, %v1254
  %v1284 = vadd.f32 %v1107, %v1254
  %v1285 = vadd.f32 %v1110, %v1254
  %v1286 = vadd.f32 %v1115, %v1254
  %v1287 = vadd.f32 %v1118, %v1254
  %v1288 = vadd.f32 %v1123, %v1254
  %v1289 = vadd.f32 %v1126, %v1254
  %v1290 = vadd.f32 %v1131, %v1254
  %v1291 = vadd.f32 %v1134, %v1254
  %v1292 = vadd.f32 %v1139, %v1254
  %v1293 = vadd.f32 %v1142, %v1254
  %v1294 = vadd.f32 %v1147, %v1254
  %v1295 = vadd.f32 %v1150, %v1254
  %v1296 = vadd.f32 %v1155, %v1254
  %v1297 = vadd.f32 %v1158, %v1254
  %v1298 = vadd.f32 %v1163, %v1254
  %v1299 = vadd.f32 %v1166, %v1254
  %v1300 = vadd.f32 %v1171, %v1254
  %v1301 = vadd.f32 %v1174, %v1254
  %v1302 = vadd.f32 %v1179, %v1254
  %v1303 = vadd.f32 %v1182, %v1254
  %v1304 = vadd.f32 %v1187, %v1254
  %v1305 = vadd.f32 %v1190, %v1254
  %v1306 = vadd.f32 %v1195, %v1254
  %v1307 = vadd.f32 %v1198, %v1254
  %v1308 = vadd.f32 %v1203, %v1254
  %v1309 = vadd.f32 %v1206, %v1254
  %v1310 = vadd.f32 %v1211, %v1254
  %v1311 = vadd.f32 %v1214, %v1254
  %v1312 = vadd.f32 %v1219, %v1254
  %v1313 = vadd.f32 %v1222, %v1254
  %v1314 = vadd.f32 %v1227, %v1254
  %v1315 = vadd.f32 %v1230, %v1254
  %v1316 = vadd.f32 %v1235, %v1254
  %v1317 = vadd.f32 %v1238, %v1254
  %v1318 = vadd.f32 %v1243, %v1254
  %v1319 = vadd.f32 %v1246, %v1254
  %v1320 = vsub.f32 0.0, %v1256
  %v1321 = vsub.f32 0.0, %v1257
  %v1322 = vsub.f32 0.0, %v1258
  %v1323 = vsub.f32 0.0, %v1259
  %v1324 = vsub.f32 0.0, %v1260
  %v1325 = vsub.f32 0.0, %v1261
  %v1326 = vsub.f32 0.0, %v1262
  %v1327 = vsub.f32 0.0, %v1263
  %v1328 = vsub.f32 0.0, %v1264
  %v1329 = vsub.f32 0.0, %v1265
  %v1330 = vsub.f32 0.0, %v1266
  %v1331 = vsub.f32 0.0, %v1267
  %v1332 = vsub.f32 0.0, %v1268
  %v1333 = vsub.f32 0.0, %v1269
  %v1334 = vsub.f32 0.0, %v1270
  %v1335 = vsub.f32 0.0, %v1271
  %v1336 = vsub.f32 0.0, %v1272
  %v1337 = vsub.f32 0.0, %v1273
  %v1338 = vsub.f32 0.0, %v1274
  %v1339 = vsub.f32 0.0, %v1275
  %v1340 = vsub.f32 0.0, %v1276
  %v1341 = vsub.f32 0.0, %v1277
  %v1342 = vsub.f32 0.0, %v1278
  %v1343 = vsub.f32 0.0, %v1279
  %v1344 = vsub.f32 0.0, %v1280
  %v1345 = vsub.f32 0.0, %v1281
  %v1346 = vsub.f32 0.0, %v1282
  %v1347 = vsub.f32 0.0, %v1283
  %v1348 = vsub.f32 0.0, %v1284
  %v1349 = vsub.f32 0.0, %v1285
  %v1350 = vsub.f32 0.0, %v1286
  %v1351 = vsub.f32 0.0, %v1287
  %v1352 = vsub.f32 0.0, %v1288
  %v1353 = vsub.f32 0.0, %v1289
  %v1354 = vsub.f32 0.0, %v1290
  %v1355 = vsub.f32 0.0, %v1291
  %v1356 = vsub.f32 0.0, %v1292
  %v1357 = vsub.f32 0.0, %v1293
  %v1358 = vsub.f32 0.0, %v1294
  %v1359 = vsub.f32 0.0, %v1295
  %v1360 = vsub.f32 0.0, %v1296
  %v1361 = vsub.f32 0.0, %v1297
  %v1362 = vsub.f32 0.0, %v1298
  %v1363 = vsub.f32 0.0, %v1299
  %v1364 = vsub.f32 0.0, %v1300
  %v1365 = vsub.f32 0.0, %v1301
  %v1366 = vsub.f32 0.0, %v1302
  %v1367 = vsub.f32 0.0, %v1303
  %v1368 = vsub.f32 0.0, %v1304
  %v1369 = vsub.f32 0.0, %v1305
  %v1370 = vsub.f32 0.0, %v1306
  %v1371 = vsub.f32 0.0, %v1307
  %v1372 = vsub.f32 0.0, %v1308
  %v1373 = vsub.f32 0.0, %v1309
  %v1374 = vsub.f32 0.0, %v1310
  %v1375 = vsub.f32 0.0, %v1311
  %v1376 = vsub.f32 0.0, %v1312
  %v1377 = vsub.f32 0.0, %v1313
  %v1378 = vsub.f32 0.0, %v1314
  %v1379 = vsub.f32 0.0, %v1315
  %v1380 = vsub.f32 0.0, %v1316
  %v1381 = vsub.f32 0.0, %v1317
  %v1382 = vsub.f32 0.0, %v1318
  %v1383 = vsub.f32 0.0, %v1319
  %v1384 = vmul.f32 %v1320, 1.442695
  %v1385 = vpow.pop %v1384
  %v1386 = vmul.f32 %v1321, 1.442695
  %v1387 = vpow.pop %v1386
  %v1388 = vmul.f32 %v1322, 1.442695
  %v1389 = vpow.pop %v1388
  %v1390 = vmul.f32 %v1323, 1.442695
  %v1391 = vpow.pop %v1390
  %v1392 = vmul.f32 %v1324, 1.442695
  %v1393 = vpow.pop %v1392
  %v1394 = vmul.f32 %v1325, 1.442695
  %v1395 = vpow.pop %v1394
  %v1396 = vmul.f32 %v1326, 1.442695
  %v1397 = vpow.pop %v1396
  %v1398 = vmul.f32 %v1327, 1.442695
  %v1399 = vpow.pop %v1398
  %v1400 = vmul.f32 %v1328, 1.442695
  %v1401 = vpow.pop %v1400
  %v1402 = vmul.f32 %v1329, 1.442695
  %v1403 = vpow.pop %v1402
  %v1404 = vmul.f32 %v1330, 1.442695
  %v1405 = vpow.pop %v1404
  %v1406 = vmul.f32 %v1331, 1.442695
  %v1407 = vpow.pop %v1406
  %v1408 = vmul.f32 %v1332, 1.442695
  %v1409 = vpow.pop %v1408
  %v1410 = vmul.f32 %v1333, 1.442695
  %v1411 = vpow.pop %v1410
  %v1412 = vmul.f32 %v1334, 1.442695
  %v1413 = vpow.pop %v1412
  %v1414 = vmul.f32 %v1335, 1.442695
  %v1415 = vpow.pop %v1414
  %v1416 = vmul.f32 %v1336, 1.442695
  %v1417 = vpow.pop %v1416
  %v1418 = vmul.f32 %v1337, 1.442695
  %v1419 = vpow.pop %v1418
  %v1420 = vmul.f32 %v1338, 1.442695
  %v1421 = vpow.pop %v1420
  %v1422 = vmul.f32 %v1339, 1.442695
  %v1423 = vpow.pop %v1422
  %v1424 = vmul.f32 %v1340, 1.442695
  %v1425 = vpow.pop %v1424
  %v1426 = vmul.f32 %v1341, 1.442695
  %v1427 = vpow.pop %v1426
  %v1428 = vmul.f32 %v1342, 1.442695
  %v1429 = vpow.pop %v1428
  %v1430 = vmul.f32 %v1343, 1.442695
  %v1431 = vpow.pop %v1430
  %v1432 = vmul.f32 %v1344, 1.442695
  %v1433 = vpow.pop %v1432
  %v1434 = vmul.f32 %v1345, 1.442695
  %v1435 = vpow.pop %v1434
  %v1436 = vmul.f32 %v1346, 1.442695
  %v1437 = vpow.pop %v1436
  %v1438 = vmul.f32 %v1347, 1.442695
  %v1439 = vpow.pop %v1438
  %v1440 = vmul.f32 %v1348, 1.442695
  %v1441 = vpow.pop %v1440
  %v1442 = vmul.f32 %v1349, 1.442695
  %v1443 = vpow.pop %v1442
  %v1444 = vmul.f32 %v1350, 1.442695
  %v1445 = vpow.pop %v1444
  %v1446 = vmul.f32 %v1351, 1.442695
  %v1447 = vpow.pop %v1446
  %v1448 = vmul.f32 %v1352, 1.442695
  %v1449 = vpow.pop %v1448
  %v1450 = vmul.f32 %v1353, 1.442695
  %v1451 = vpow.pop %v1450
  %v1452 = vmul.f32 %v1354, 1.442695
  %v1453 = vpow.pop %v1452
  %v1454 = vmul.f32 %v1355, 1.442695
  %v1455 = vpow.pop %v1454
  %v1456 = vmul.f32 %v1356, 1.442695
  %v1457 = vpow.pop %v1456
  %v1458 = vmul.f32 %v1357, 1.442695
  %v1459 = vpow.pop %v1458
  %v1460 = vmul.f32 %v1358, 1.442695
  %v1461 = vpow.pop %v1460
  %v1462 = vmul.f32 %v1359, 1.442695
  %v1463 = vpow.pop %v1462
  %v1464 = vmul.f32 %v1360, 1.442695
  %v1465 = vpow.pop %v1464
  %v1466 = vmul.f32 %v1361, 1.442695
  %v1467 = vpow.pop %v1466
  %v1468 = vmul.f32 %v1362, 1.442695
  %v1469 = vpow.pop %v1468
  %v1470 = vmul.f32 %v1363, 1.442695
  %v1471 = vpow.pop %v1470
  %v1472 = vmul.f32 %v1364, 1.442695
  %v1473 = vpow.pop %v1472
  %v1474 = vmul.f32 %v1365, 1.442695
  %v1475 = vpow.pop %v1474
  %v1476 = vmul.f32 %v1366, 1.442695
  %v1477 = vpow.pop %v1476
  %v1478 = vmul.f32 %v1367, 1.442695
  %v1479 = vpow.pop %v1478
  %v1480 = vmul.f32 %v1368, 1.442695
  %v1481 = vpow.pop %v1480
  %v1482 = vmul.f32 %v1369, 1.442695
  %v1483 = vpow.pop %v1482
  %v1484 = vmul.f32 %v1370, 1.442695
  %v1485 = vpow.pop %v1484
  %v1486 = vmul.f32 %v1371, 1.442695
  %v1487 = vpow.pop %v1486
  %v1488 = vmul.f32 %v1372, 1.442695
  %v1489 = vpow.pop %v1488
  %v1490 = vmul.f32 %v1373, 1.442695
  %v1491 = vpow.pop %v1490
  %v1492 = vmul.f32 %v1374, 1.442695
  %v1493 = vpow.pop %v1492
  %v1494 = vmul.f32 %v1375, 1.442695
  %v1495 = vpow.pop %v1494
  %v1496 = vmul.f32 %v1376, 1.442695
  %v1497 = vpow.pop %v1496
  %v1498 = vmul.f32 %v1377, 1.442695
  %v1499 = vpow.pop %v1498
  %v1500 = vmul.f32 %v1378, 1.442695
  %v1501 = vpow.pop %v1500
  %v1502 = vmul.f32 %v1379, 1.442695
  %v1503 = vpow.pop %v1502
  %v1504 = vmul.f32 %v1380, 1.442695
  %v1505 = vpow.pop %v1504
  %v1506 = vmul.f32 %v1381, 1.442695
  %v1507 = vpow.pop %v1506
  %v1508 = vmul.f32 %v1382, 1.442695
  %v1509 = vpow.pop %v1508
  %v1510 = vmul.f32 %v1383, 1.442695
  %v1511 = vpow.pop %v1510
  %v1512 = vadd.f32 %v1385, 1.0
  %v1513 = vadd.f32 %v1387, 1.0
  %v1514 = vadd.f32 %v1389, 1.0
  %v1515 = vadd.f32 %v1391, 1.0
  %v1516 = vadd.f32 %v1393, 1.0
  %v1517 = vadd.f32 %v1395, 1.0
  %v1518 = vadd.f32 %v1397, 1.0
  %v1519 = vadd.f32 %v1399, 1.0
  %v1520 = vadd.f32 %v1401, 1.0
  %v1521 = vadd.f32 %v1403, 1.0
  %v1522 = vadd.f32 %v1405, 1.0
  %v1523 = vadd.f32 %v1407, 1.0
  %v1524 = vadd.f32 %v1409, 1.0
  %v1525 = vadd.f32 %v1411, 1.0
  %v1526 = vadd.f32 %v1413, 1.0
  %v1527 = vadd.f32 %v1415, 1.0
  %v1528 = vadd.f32 %v1417, 1.0
  %v1529 = vadd.f32 %v1419, 1.0
  %v1530 = vadd.f32 %v1421, 1.0
  %v1531 = vadd.f32 %v1423, 1.0
  %v1532 = vadd.f32 %v1425, 1.0
  %v1533 = vadd.f32 %v1427, 1.0
  %v1534 = vadd.f32 %v1429, 1.0
  %v1535 = vadd.f32 %v1431, 1.0
  %v1536 = vadd.f32 %v1433, 1.0
  %v1537 = vadd.f32 %v1435, 1.0
  %v1538 = vadd.f32 %v1437, 1.0
  %v1539 = vadd.f32 %v1439, 1.0
  %v1540 = vadd.f32 %v1441, 1.0
  %v1541 = vadd.f32 %v1443, 1.0
  %v1542 = vadd.f32 %v1445, 1.0
  %v1543 = vadd.f32 %v1447, 1.0
  %v1544 = vadd.f32 %v1449, 1.0
  %v1545 = vadd.f32 %v1451, 1.0
  %v1546 = vadd.f32 %v1453, 1.0
  %v1547 = vadd.f32 %v1455, 1.0
  %v1548 = vadd.f32 %v1457, 1.0
  %v1549 = vadd.f32 %v1459, 1.0
  %v1550 = vadd.f32 %v1461, 1.0
  %v1551 = vadd.f32 %v1463, 1.0
  %v1552 = vadd.f32 %v1465, 1.0
  %v1553 = vadd.f32 %v1467, 1.0
  %v1554 = vadd.f32 %v1469, 1.0
  %v1555 = vadd.f32 %v1471, 1.0
  %v1556 = vadd.f32 %v1473, 1.0
  %v1557 = vadd.f32 %v1475, 1.0
  %v1558 = vadd.f32 %v1477, 1.0
  %v1559 = vadd.f32 %v1479, 1.0
  %v1560 = vadd.f32 %v1481, 1.0
  %v1561 = vadd.f32 %v1483, 1.0
  %v1562 = vadd.f32 %v1485, 1.0
  %v1563 = vadd.f32 %v1487, 1.0
  %v1564 = vadd.f32 %v1489, 1.0
  %v1565 = vadd.f32 %v1491, 1.0
  %v1566 = vadd.f32 %v1493, 1.0
  %v1567 = vadd.f32 %v1495, 1.0
  %v1568 = vadd.f32 %v1497, 1.0
  %v1569 = vadd.f32 %v1499, 1.0
  %v1570 = vadd.f32 %v1501, 1.0
  %v1571 = vadd.f32 %v1503, 1.0
  %v1572 = vadd.f32 %v1505, 1.0
  %v1573 = vadd.f32 %v1507, 1.0
  %v1574 = vadd.f32 %v1509, 1.0
  %v1575 = vadd.f32 %v1511, 1.0
  %v1576 = vrcp.pop %v1512
  %v1577 = vrcp.pop %v1513
  %v1578 = vrcp.pop %v1514
  %v1579 = vrcp.pop %v1515
  %v1580 = vrcp.pop %v1516
  %v1581 = vrcp.pop %v1517
  %v1582 = vrcp.pop %v1518
  %v1583 = vrcp.pop %v1519
  %v1584 = vrcp.pop %v1520
  %v1585 = vrcp.pop %v1521
  %v1586 = vrcp.pop %v1522
  %v1587 = vrcp.pop %v1523
  %v1588 = vrcp.pop %v1524
  %v1589 = vrcp.pop %v1525
  %v1590 = vrcp.pop %v1526
  %v1591 = vrcp.pop %v1527
  %v1592 = vrcp.pop %v1528
  %v1593 = vrcp.pop %v1529
  %v1594 = vrcp.pop %v1530
  %v1595 = vrcp.pop %v1531
  %v1596 = vrcp.pop %v1532
  %v1597 = vrcp.pop %v1533
  %v1598 = vrcp.pop %v1534
  %v1599 = vrcp.pop %v1535
  %v1600 = vrcp.pop %v1536
  %v1601 = vrcp.pop %v1537
  %v1602 = vrcp.pop %v1538
  %v1603 = vrcp.pop %v1539
  %v1604 = vrcp.pop %v1540
  %v1605 = vrcp.pop %v1541
  %v1606 = vrcp.pop %v1542
  %v1607 = vrcp.pop %v1543
  %v1608 = vrcp.pop %v1544
  %v1609 = vrcp.pop %v1545
  %v1610 = vrcp.pop %v1546
  %v1611 = vrcp.pop %v1547
  %v1612 = vrcp.pop %v1548
  %v1613 = vrcp.pop %v1549
  %v1614 = vrcp.pop %v1550
  %v1615 = vrcp.pop %v1551
  %v1616 = vrcp.pop %v1552
  %v1617 = vrcp.pop %v1553
  %v1618 = vrcp.pop %v1554
  %v1619 = vrcp.pop %v1555
  %v1620 = vrcp.pop %v1556
  %v1621 = vrcp.pop %v1557
  %v1622 = vrcp.pop %v1558
  %v1623 = vrcp.pop %v1559
  %v1624 = vrcp.pop %v1560
  %v1625 = vrcp.pop %v1561
  %v1626 = vrcp.pop %v1562
  %v1627 = vrcp.pop %v1563
  %v1628 = vrcp.pop %v1564
  %v1629 = vrcp.pop %v1565
  %v1630 = vrcp.pop %v1566
  %v1631 = vrcp.pop %v1567
  %v1632 = vrcp.pop %v1568
  %v1633 = vrcp.pop %v1569
  %v1634 = vrcp.pop %v1570
  %v1635 = vrcp.pop %v1571
  %v1636 = vrcp.pop %v1572
  %v1637 = vrcp.pop %v1573
  %v1638 = vrcp.pop %v1574
  %v1639 = vrcp.pop %v1575
  %v1640 = vmul.f32 %v1256, %v1576
  %v1641 = vmul.f32 %v1257, %v1577
  %v1642 = vmul.f32 %v1258, %v1578
  %v1643 = vmul.f32 %v1259, %v1579
  %v1644 = vmul.f32 %v1260, %v1580
  %v1645 = vmul.f32 %v1261, %v1581
  %v1646 = vmul.f32 %v1262, %v1582
  %v1647 = vmul.f32 %v1263, %v1583
  %v1648 = vmul.f32 %v1264, %v1584
  %v1649 = vmul.f32 %v1265, %v1585
  %v1650 = vmul.f32 %v1266, %v1586
  %v1651 = vmul.f32 %v1267, %v1587
  %v1652 = vmul.f32 %v1268, %v1588
  %v1653 = vmul.f32 %v1269, %v1589
  %v1654 = vmul.f32 %v1270, %v1590
  %v1655 = vmul.f32 %v1271, %v1591
  %v1656 = vmul.f32 %v1272, %v1592
  %v1657 = vmul.f32 %v1273, %v1593
  %v1658 = vmul.f32 %v1274, %v1594
  %v1659 = vmul.f32 %v1275, %v1595
  %v1660 = vmul.f32 %v1276, %v1596
  %v1661 = vmul.f32 %v1277, %v1597
  %v1662 = vmul.f32 %v1278, %v1598
  %v1663 = vmul.f32 %v1279, %v1599
  %v1664 = vmul.f32 %v1280, %v1600
  %v1665 = vmul.f32 %v1281, %v1601
  %v1666 = vmul.f32 %v1282, %v1602
  %v1667 = vmul.f32 %v1283, %v1603
  %v1668 = vmul.f32 %v1284, %v1604
  %v1669 = vmul.f32 %v1285, %v1605
  %v1670 = vmul.f32 %v1286, %v1606
  %v1671 = vmul.f32 %v1287, %v1607
  %v1672 = vmul.f32 %v1288, %v1608
  %v1673 = vmul.f32 %v1289, %v1609
  %v1674 = vmul.f32 %v1290, %v1610
  %v1675 = vmul.f32 %v1291, %v1611
  %v1676 = vmul.f32 %v1292, %v1612
  %v1677 = vmul.f32 %v1293, %v1613
  %v1678 = vmul.f32 %v1294, %v1614
  %v1679 = vmul.f32 %v1295, %v1615
  %v1680 = vmul.f32 %v1296, %v1616
  %v1681 = vmul.f32 %v1297, %v1617
  %v1682 = vmul.f32 %v1298, %v1618
  %v1683 = vmul.f32 %v1299, %v1619
  %v1684 = vmul.f32 %v1300, %v1620
  %v1685 = vmul.f32 %v1301, %v1621
  %v1686 = vmul.f32 %v1302, %v1622
  %v1687 = vmul.f32 %v1303, %v1623
  %v1688 = vmul.f32 %v1304, %v1624
  %v1689 = vmul.f32 %v1305, %v1625
  %v1690 = vmul.f32 %v1306, %v1626
  %v1691 = vmul.f32 %v1307, %v1627
  %v1692 = vmul.f32 %v1308, %v1628
  %v1693 = vmul.f32 %v1309, %v1629
  %v1694 = vmul.f32 %v1310, %v1630
  %v1695 = vmul.f32 %v1311, %v1631
  %v1696 = vmul.f32 %v1312, %v1632
  %v1697 = vmul.f32 %v1313, %v1633
  %v1698 = vmul.f32 %v1314, %v1634
  %v1699 = vmul.f32 %v1315, %v1635
  %v1700 = vmul.f32 %v1316, %v1636
  %v1701 = vmul.f32 %v1317, %v1637
  %v1702 = vmul.f32 %v1318, %v1638
  %v1703 = vmul.f32 %v1319, %v1639
  %vm1704 = vcmask 31744
  %1705 = vst.msk [vmem:[%s5] sm:$0xff] %vm1704, %v1640
  %1706 = vst.msk [vmem:[%s5 + $0x8] sm:$0xff] %vm1704, %v1641
  %1707 = vst.msk [vmem:[%s5 + $0x10] sm:$0xff] %vm1704, %v1642
  %1708 = vst.msk [vmem:[%s5 + $0x18] sm:$0xff] %vm1704, %v1643
  %1709 = vst.msk [vmem:[%s5 + $0x20] sm:$0xff] %vm1704, %v1644
  %1710 = vst.msk [vmem:[%s5 + $0x28] sm:$0xff] %vm1704, %v1645
  %1711 = vst.msk [vmem:[%s5 + $0x30] sm:$0xff] %vm1704, %v1646
  %1712 = vst.msk [vmem:[%s5 + $0x38] sm:$0xff] %vm1704, %v1647
  %1713 = vst.msk [vmem:[%s5 + $0x40] sm:$0xff] %vm1704, %v1648
  %1714 = vst.msk [vmem:[%s5 + $0x48] sm:$0xff] %vm1704, %v1649
  %1715 = vst.msk [vmem:[%s5 + $0x50] sm:$0xff] %vm1704, %v1650
  %1716 = vst.msk [vmem:[%s5 + $0x58] sm:$0xff] %vm1704, %v1651
  %1717 = vst.msk [vmem:[%s5 + $0x60] sm:$0xff] %vm1704, %v1652
  %1718 = vst.msk [vmem:[%s5 + $0x68] sm:$0xff] %vm1704, %v1653
  %1719 = vst.msk [vmem:[%s5 + $0x70] sm:$0xff] %vm1704, %v1654
  %1720 = vst.msk [vmem:[%s5 + $0x78] sm:$0xff] %vm1704, %v1655
  %1721 = vst.msk [vmem:[%s5 + $0x80] sm:$0xff] %vm1704, %v1656
  %1722 = vst.msk [vmem:[%s5 + $0x88] sm:$0xff] %vm1704, %v1657
  %1723 = vst.msk [vmem:[%s5 + $0x90] sm:$0xff] %vm1704, %v1658
  %1724 = vst.msk [vmem:[%s5 + $0x98] sm:$0xff] %vm1704, %v1659
  %1725 = vst.msk [vmem:[%s5 + $0xa0] sm:$0xff] %vm1704, %v1660
  %1726 = vst.msk [vmem:[%s5 + $0xa8] sm:$0xff] %vm1704, %v1661
  %1727 = vst.msk [vmem:[%s5 + $0xb0] sm:$0xff] %vm1704, %v1662
  %1728 = vst.msk [vmem:[%s5 + $0xb8] sm:$0xff] %vm1704, %v1663
  %1729 = vst.msk [vmem:[%s5 + $0xc0] sm:$0xff] %vm1704, %v1664
  %1730 = vst.msk [vmem:[%s5 + $0xc8] sm:$0xff] %vm1704, %v1665
  %1731 = vst.msk [vmem:[%s5 + $0xd0] sm:$0xff] %vm1704, %v1666
  %1732 = vst.msk [vmem:[%s5 + $0xd8] sm:$0xff] %vm1704, %v1667
  %1733 = vst.msk [vmem:[%s5 + $0xe0] sm:$0xff] %vm1704, %v1668
  %1734 = vst.msk [vmem:[%s5 + $0xe8] sm:$0xff] %vm1704, %v1669
  %1735 = vst.msk [vmem:[%s5 + $0xf0] sm:$0xff] %vm1704, %v1670
  %1736 = vst.msk [vmem:[%s5 + $0xf8] sm:$0xff] %vm1704, %v1671
  %1737 = vst.msk [vmem:[%s5 + $0x100] sm:$0xff] %vm1704, %v1672
  %1738 = vst.msk [vmem:[%s5 + $0x108] sm:$0xff] %vm1704, %v1673
  %1739 = vst.msk [vmem:[%s5 + $0x110] sm:$0xff] %vm1704, %v1674
  %1740 = vst.msk [vmem:[%s5 + $0x118] sm:$0xff] %vm1704, %v1675
  %1741 = vst.msk [vmem:[%s5 + $0x120] sm:$0xff] %vm1704, %v1676
  %1742 = vst.msk [vmem:[%s5 + $0x128] sm:$0xff] %vm1704, %v1677
  %1743 = vst.msk [vmem:[%s5 + $0x130] sm:$0xff] %vm1704, %v1678
  %1744 = vst.msk [vmem:[%s5 + $0x138] sm:$0xff] %vm1704, %v1679
  %1745 = vst.msk [vmem:[%s5 + $0x140] sm:$0xff] %vm1704, %v1680
  %1746 = vst.msk [vmem:[%s5 + $0x148] sm:$0xff] %vm1704, %v1681
  %1747 = vst.msk [vmem:[%s5 + $0x150] sm:$0xff] %vm1704, %v1682
  %1748 = vst.msk [vmem:[%s5 + $0x158] sm:$0xff] %vm1704, %v1683
  %1749 = vst.msk [vmem:[%s5 + $0x160] sm:$0xff] %vm1704, %v1684
  %1750 = vst.msk [vmem:[%s5 + $0x168] sm:$0xff] %vm1704, %v1685
  %1751 = vst.msk [vmem:[%s5 + $0x170] sm:$0xff] %vm1704, %v1686
  %1752 = vst.msk [vmem:[%s5 + $0x178] sm:$0xff] %vm1704, %v1687
  %1753 = vst.msk [vmem:[%s5 + $0x180] sm:$0xff] %vm1704, %v1688
  %1754 = vst.msk [vmem:[%s5 + $0x188] sm:$0xff] %vm1704, %v1689
  %1755 = vst.msk [vmem:[%s5 + $0x190] sm:$0xff] %vm1704, %v1690
  %1756 = vst.msk [vmem:[%s5 + $0x198] sm:$0xff] %vm1704, %v1691
  %1757 = vst.msk [vmem:[%s5 + $0x1a0] sm:$0xff] %vm1704, %v1692
  %1758 = vst.msk [vmem:[%s5 + $0x1a8] sm:$0xff] %vm1704, %v1693
  %1759 = vst.msk [vmem:[%s5 + $0x1b0] sm:$0xff] %vm1704, %v1694
  %1760 = vst.msk [vmem:[%s5 + $0x1b8] sm:$0xff] %vm1704, %v1695
  %1761 = vst.msk [vmem:[%s5 + $0x1c0] sm:$0xff] %vm1704, %v1696
  %1762 = vst.msk [vmem:[%s5 + $0x1c8] sm:$0xff] %vm1704, %v1697
  %1763 = vst.msk [vmem:[%s5 + $0x1d0] sm:$0xff] %vm1704, %v1698
  %1764 = vst.msk [vmem:[%s5 + $0x1d8] sm:$0xff] %vm1704, %v1699
  %1765 = vst.msk [vmem:[%s5 + $0x1e0] sm:$0xff] %vm1704, %v1700
  %1766 = vst.msk [vmem:[%s5 + $0x1e8] sm:$0xff] %vm1704, %v1701
  %1767 = vst.msk [vmem:[%s5 + $0x1f0] sm:$0xff] %vm1704, %v1702
  %1768 = vst.msk [vmem:[%s5 + $0x1f8] sm:$0xff] %vm1704, %v1703
  // Predicated region
  $region22: #{c2_forward.5} parent=0 // pred_check
    _
  $region23: #{c2_forward.5} parent=0 // pred_check_branch
    %1770 = sbr.rel (0) target = $region25
  $region24: #{c2_forward.5} parent=0 // pred_region
    _
  $region25: #{c2_forward.5} parent=0 // pred_fallthru
    _
  // Predicated region
  $region26: #{c2_forward.5} parent=0 // pred_check
    _
  $region27: #{c2_forward.5} parent=0 // pred_check_branch
    %1772 = sbr.rel (0) target = $region29
  $region28: #{c2_forward.5} parent=0 // pred_region
    _
  $region29: #{c2_forward.5} parent=0 // pred_fallthru
    _

// kernel: c2_forward.4
$region0: #{c2_forward.4}
  #allocation0 [shape = 'u32[]', space=smem, size = 0x4, offset = 0x4, fixed_abs, tag = 'smem constant byte address 0x4 - core index']
  #allocation1 [shape = 'u32[144,128]{1,0:T(1,128)}', space=vmem, size = 0x12000, scoped, tag = 'internal scratch']
  #allocation2 [shape = 'f32[18,18,2]{2,1,0:T(8,128)}', space=vmem, size = 0x36000, scoped, tag = 'scratch operand']
  #allocation3 [shape = 'bf16[256,18]{1,0:T(16,128)(2,1)}', space=vmem, size = 0x10000, scoped, tag = 'scratch operand']
  %s0 = inlined_call_operand.vmem [shape: bf16[512,2], index: 0, kind: input, shape index: {}]
  %s1 = inlined_call_operand.vmem [shape: bf16[18,2], index: 1, kind: input, shape index: {}]
  %s2 = inlined_call_operand.vmem [shape: f32[1,2], index: 2, kind: input, shape index: {}]
  %s3 = inlined_call_operand.vmem [shape: bf16[18,2], index: 3, kind: input, shape index: {}]
  %s4 = inlined_call_operand.vmem [shape: f32[1,2], index: 4, kind: input, shape index: {}]
  %s5 = inlined_call_operand.vmem [shape: bf16[512,2], index: 5, kind: output, shape index: {}]
  %s6 = sld [smem:[#allocation0]]
  $region53: #{c2_forward.4} parent=0
    _
  %s8 = ssub.s32 1, %s6
  %s9 = scalar_select 0, %s8, %s6
  loop: start=0, step=1, limit=4
  $region2: #{c2_forward.4} parent=0 // loop_pre_header
    _
  $region3: #{c2_forward.4} parent=0 // loop_header
    %s11 = sphi 0, %s15
    %p12 = scmp.ge.s32.totalorder %s11, 4
    %s21 = sphi 0, %s23
    %s24 = sphi 0, %s21
    %s25 = sphi 0, %s24
    %s41 = sphi 0, %s25
    %s45 = sphi 0, %s45
    %s47 = sphi 0, %s45
    %s48 = sphi 0, %s47
    %s62 = sphi 0, %s48
    %s66 = sphi 0, %s66
    %s68 = sphi 0, %s66
    %s69 = sphi 0, %s68
    %s83 = sphi 0, %s69
    %s87 = sphi 0, %s87
    %s89 = sphi 0, %s87
    %s90 = sphi 0, %s89
    %s104 = sphi 0, %s90
    %s108 = sphi 0, %s108
    %s110 = sphi 0, %s108
    %s111 = sphi 0, %s110
    %s125 = sphi 0, %s111
    %s131 = sphi 0, %s133
    %s134 = sphi 0, %s131
    %s135 = sphi 0, %s134
    %s151 = sphi 0, %s135
  $region4: #{c2_forward.4} parent=0 // loop_header_branch
    %14 = sbr.rel (%p12) target = $region8
  $region5: #{c2_forward.4} parent=0 // loop_body
    %s16 = ssub.s32 %s11, 1
    %s17 = ssub.s32 %s11, 2
    %s18 = sadd.s32 %s11, 1
    %s19 = ssub.s32 %s11, %s18
    %p20 = scmp.eq.s32.totalorder %s19, 0
    %s22 = sadd.s32 %s21, 1
    %s23 = scalar_select %p20, %s21, %s22
    %p26 = pneg %p20
    %p27 = scmp.eq.s32.totalorder %s11, 1
    %p28 = por %p26, %p27
    %p29 = scmp.ne.s32.totalorder %s21, %s24
    %p30 = scmp.eq.s32.totalorder %s11, 0
    %p31 = por %p29, %p30
    %p32 = scmp.ne.s32.totalorder %s21, %s24
    %p33 = scmp.eq.s32.totalorder %s16, 1
    %p34 = por %p32, %p33
    %p35 = scmp.ne.s32.totalorder %s24, %s25
    %p36 = scmp.eq.s32.totalorder %s16, 0
    %p37 = por %p35, %p36
    %p38 = scmp.ne.s32.totalorder %s24, %s25
    %p39 = scmp.eq.s32.totalorder %s17, 1
    %p40 = por %p38, %p39
    %p42 = scmp.ne.s32.totalorder %s25, %s41
    %p43 = scmp.eq.s32.totalorder %s17, 0
    %p44 = por %p42, %p43
    %s46 = sadd.s32 %s45, 1
    %p49 = scmp.eq.s32.totalorder %s11, 1
    %p50 = scmp.ne.s32.totalorder %s45, %s47
    %p51 = scmp.eq.s32.totalorder %s11, 0
    %p52 = por %p50, %p51
    %p53 = scmp.ne.s32.totalorder %s45, %s47
    %p54 = scmp.eq.s32.totalorder %s16, 1
    %p55 = por %p53, %p54
    %p56 = scmp.ne.s32.totalorder %s47, %s48
    %p57 = scmp.eq.s32.totalorder %s16, 0
    %p58 = por %p56, %p57
    %p59 = scmp.ne.s32.totalorder %s47, %s48
    %p60 = scmp.eq.s32.totalorder %s17, 1
    %p61 = por %p59, %p60
    %p63 = scmp.ne.s32.totalorder %s48, %s62
    %p64 = scmp.eq.s32.totalorder %s17, 0
    %p65 = por %p63, %p64
    %s67 = sadd.s32 %s66, 1
    %p70 = scmp.eq.s32.totalorder %s11, 1
    %p71 = scmp.ne.s32.totalorder %s66, %s68
    %p72 = scmp.eq.s32.totalorder %s11, 0
    %p73 = por %p71, %p72
    %p74 = scmp.ne.s32.totalorder %s66, %s68
    %p75 = scmp.eq.s32.totalorder %s16, 1
    %p76 = por %p74, %p75
    %p77 = scmp.ne.s32.totalorder %s68, %s69
    %p78 = scmp.eq.s32.totalorder %s16, 0
    %p79 = por %p77, %p78
    %p80 = scmp.ne.s32.totalorder %s68, %s69
    %p81 = scmp.eq.s32.totalorder %s17, 1
    %p82 = por %p80, %p81
    %p84 = scmp.ne.s32.totalorder %s69, %s83
    %p85 = scmp.eq.s32.totalorder %s17, 0
    %p86 = por %p84, %p85
    %s88 = sadd.s32 %s87, 1
    %p91 = scmp.eq.s32.totalorder %s11, 1
    %p92 = scmp.ne.s32.totalorder %s87, %s89
    %p93 = scmp.eq.s32.totalorder %s11, 0
    %p94 = por %p92, %p93
    %p95 = scmp.ne.s32.totalorder %s87, %s89
    %p96 = scmp.eq.s32.totalorder %s16, 1
    %p97 = por %p95, %p96
    %p98 = scmp.ne.s32.totalorder %s89, %s90
    %p99 = scmp.eq.s32.totalorder %s16, 0
    %p100 = por %p98, %p99
    %p101 = scmp.ne.s32.totalorder %s89, %s90
    %p102 = scmp.eq.s32.totalorder %s17, 1
    %p103 = por %p101, %p102
    %p105 = scmp.ne.s32.totalorder %s90, %s104
    %p106 = scmp.eq.s32.totalorder %s17, 0
    %p107 = por %p105, %p106
    %s109 = sadd.s32 %s108, 1
    %p112 = scmp.eq.s32.totalorder %s11, 1
    %p113 = scmp.ne.s32.totalorder %s108, %s110
    %p114 = scmp.eq.s32.totalorder %s11, 0
    %p115 = por %p113, %p114
    %p116 = scmp.ne.s32.totalorder %s108, %s110
    %p117 = scmp.eq.s32.totalorder %s16, 1
    %p118 = por %p116, %p117
    %p119 = scmp.ne.s32.totalorder %s110, %s111
    %p120 = scmp.eq.s32.totalorder %s16, 0
    %p121 = por %p119, %p120
    %p122 = scmp.ne.s32.totalorder %s110, %s111
    %p123 = scmp.eq.s32.totalorder %s17, 1
    %p124 = por %p122, %p123
    %p126 = scmp.ne.s32.totalorder %s111, %s125
    %p127 = scmp.eq.s32.totalorder %s17, 0
    %p128 = por %p126, %p127
    %s129 = ssub.s32 %s11, %s18
    %p130 = scmp.eq.s32.totalorder %s129, 0
    %s132 = sadd.s32 %s131, 1
    %s133 = scalar_select %p130, %s131, %s132
    %p136 = pneg %p130
    %p137 = scmp.eq.s32.totalorder %s11, 1
    %p138 = por %p136, %p137
    %p139 = scmp.ne.s32.totalorder %s131, %s134
    %p140 = scmp.eq.s32.totalorder %s11, 0
    %p141 = por %p139, %p140
    %p142 = scmp.ne.s32.totalorder %s131, %s134
    %p143 = scmp.eq.s32.totalorder %s16, 1
    %p144 = por %p142, %p143
    %p145 = scmp.ne.s32.totalorder %s134, %s135
    %p146 = scmp.eq.s32.totalorder %s16, 0
    %p147 = por %p145, %p146
    %p148 = scmp.ne.s32.totalorder %s134, %s135
    %p149 = scmp.eq.s32.totalorder %s17, 1
    %p150 = por %p148, %p149
    %p152 = scmp.ne.s32.totalorder %s135, %s151
    %p153 = scmp.eq.s32.totalorder %s17, 0
    %p154 = por %p152, %p153
    %p155 = scmp.le.s32.totalorder 1, %s11
    %p156 = scmp.lt.s32.totalorder %s11, 3
    %p157 = pnand %p155, %p156
    %p158 = pneg %p157
    // Predicated region
    $region9: #{c2_forward.4} parent=5 // pred_check
      _
    $region10: #{c2_forward.4} parent=5 // pred_check_branch
      %160 = sbr.rel (%p157) target = $region12
    $region11: #{c2_forward.4} parent=5 // pred_region
      %s161 = ssub.s32 %s11, 1
      // Predicated region
      $region13: #{c2_forward.4} parent=11 // pred_check
        %p162 = pneg %p58
      $region14: #{c2_forward.4} parent=11 // pred_check_branch
        %164 = sbr.rel (%p162) target = $region16
      $region15: #{c2_forward.4} parent=11 // pred_region
        _
      $region16: #{c2_forward.4} parent=11 // pred_fallthru
        _
      // Predicated region
      $region17: #{c2_forward.4} parent=11 // pred_check
        %p165 = pneg %p79
      $region18: #{c2_forward.4} parent=11 // pred_check_branch
        %167 = sbr.rel (%p165) target = $region20
      $region19: #{c2_forward.4} parent=11 // pred_region
        _
      $region20: #{c2_forward.4} parent=11 // pred_fallthru
        _
      // Predicated region
      $region21: #{c2_forward.4} parent=11 // pred_check
        %p168 = pneg %p100
      $region22: #{c2_forward.4} parent=11 // pred_check_branch
        %170 = sbr.rel (%p168) target = $region24
      $region23: #{c2_forward.4} parent=11 // pred_region
        _
      $region24: #{c2_forward.4} parent=11 // pred_fallthru
        _
      // Predicated region
      $region25: #{c2_forward.4} parent=11 // pred_check
        %p171 = pneg %p121
      $region26: #{c2_forward.4} parent=11 // pred_check_branch
        %173 = sbr.rel (%p171) target = $region28
      $region27: #{c2_forward.4} parent=11 // pred_region
        _
      $region28: #{c2_forward.4} parent=11 // pred_fallthru
        _
    $region12: #{c2_forward.4} parent=5 // pred_fallthru
      _
    %p174 = scmp.lt.s32.totalorder %s11, 2
    // Predicated region
    $region29: #{c2_forward.4} parent=5 // pred_check
      %p175 = pneg %p174
    $region30: #{c2_forward.4} parent=5 // pred_check_branch
      %177 = sbr.rel (%p175) target = $region32
    $region31: #{c2_forward.4} parent=5 // pred_region
      // Predicated region
      $region33: #{c2_forward.4} parent=31 // pred_check
        %p178 = pneg %p31
      $region34: #{c2_forward.4} parent=31 // pred_check_branch
        %180 = sbr.rel (%p178) target = $region36
      $region35: #{c2_forward.4} parent=31 // pred_region
        %s181 = smul.u32 32, %s11
        %p182 = scmp.lt.s32.totalorder %s181, 63
        %s183 = scalar_select %p182, %s181, 63
        %s184 = smul.addr %s183, 4
        %s185 = scalar_lea.vmem %s0, %s184
        %s186 = smul.u32 32, %s11
      $region36: #{c2_forward.4} parent=31 // pred_fallthru
        _
    $region32: #{c2_forward.4} parent=5 // pred_fallthru
      _
    %p187 = scmp.le.s32.totalorder 1, %s11
    %p188 = scmp.lt.s32.totalorder %s11, 3
    %p189 = pnand %p187, %p188
    %p190 = pneg %p189
    // Predicated region
    $region37: #{c2_forward.4} parent=5 // pred_check
      _
    $region38: #{c2_forward.4} parent=5 // pred_check_branch
      %192 = sbr.rel (%p189) target = $region40
    $region39: #{c2_forward.4} parent=5 // pred_region
      %s193 = ssub.s32 %s11, 1
      %s194 = smul.u32 32, %s16
      %p195 = scmp.lt.s32.totalorder %s194, 63
      %s196 = scalar_select %p195, %s194, 63
      %s197 = smul.addr %s196, 4
      %s198 = scalar_lea.vmem %s0, %s197
      %p199 = pneg %p37
      %p200 = pneg %p34
      %p201 = pneg %p58
      %p202 = pneg %p55
      %p203 = pneg %p79
      %p204 = pneg %p76
      %p205 = pneg %p100
      %p206 = pneg %p97
      %p207 = pneg %p121
      %p208 = pneg %p118
      %p209 = pneg %p147
      %p210 = pneg %p144
      %s211 = smul.u32 32, %s16
      %p212 = scmp.lt.s32.totalorder %s211, 63
      %s213 = scalar_select %p212, %s211, 63
      %s214 = smul.addr %s213, 4
      %s215 = scalar_lea.vmem %s5, %s214
      %s216 = smul.u32 32, %s16
      %p217 = scmp.lt.s32.totalorder %s216, 63
      %s218 = scalar_select %p217, %s216, 63
      %s219 = smul.addr %s218, 4
      %s220 = scalar_lea.vmem %s0, %s219
      %s221 = smul.u32 32, %s16
      %s222 = smul.u32 32, %s16
      %p223 = scmp.lt.s32.totalorder %s222, 63
      %s224 = scalar_select %p223, %s222, 63
      %s225 = smul.addr %s224, 4
      %s226 = scalar_lea.vmem %s5, %s225
      %s227 = smul.u32 32, %s16
      %vm229 = vcmask 15360
      %230 = vst.msk [vmem:[#allocation2] sm:$0xff] %vm229, 0.0
      %231 = vst.msk [vmem:[#allocation2 + $0x8] sm:$0xff] %vm229, 0.0
      %vm232 = vcmask 9216
      %233 = vst.msk [vmem:[#allocation2 + $0x10] sm:$0x3] %vm232, 0.0
      %s234 = scalar_lea.vmem [#allocation2], 408
      %235 = vst.msk [vmem:[%s234] sm:$0xff] %vm229, 0.0
      %236 = vst.msk [vmem:[%s234 + $0x8] sm:$0xff] %vm229, 0.0
      %237 = vst.msk [vmem:[%s234 + $0x10] sm:$0x3] %vm232, 0.0
      %s238 = scalar_lea.vmem [#allocation2], 24
      %vm239 = vcmask 8192
      %240 = vst.msk [vmem:[%s238] sm:$0x1] %vm239, 0.0
      %241 = vst.msk [vmem:[%s238 + $0x18] sm:$0x1] %vm239, 0.0
      %242 = vst.msk [vmem:[%s238 + $0x30] sm:$0x1] %vm239, 0.0
      %243 = vst.msk [vmem:[%s238 + $0x48] sm:$0x1] %vm239, 0.0
      %244 = vst.msk [vmem:[%s238 + $0x60] sm:$0x1] %vm239, 0.0
      %245 = vst.msk [vmem:[%s238 + $0x78] sm:$0x1] %vm239, 0.0
      %246 = vst.msk [vmem:[%s238 + $0x90] sm:$0x1] %vm239, 0.0
      %247 = vst.msk [vmem:[%s238 + $0xa8] sm:$0x1] %vm239, 0.0
      %248 = vst.msk [vmem:[%s238 + $0xc0] sm:$0x1] %vm239, 0.0
      %249 = vst.msk [vmem:[%s238 + $0xd8] sm:$0x1] %vm239, 0.0
      %250 = vst.msk [vmem:[%s238 + $0xf0] sm:$0x1] %vm239, 0.0
      %251 = vst.msk [vmem:[%s238 + $0x108] sm:$0x1] %vm239, 0.0
      %252 = vst.msk [vmem:[%s238 + $0x120] sm:$0x1] %vm239, 0.0
      %253 = vst.msk [vmem:[%s238 + $0x138] sm:$0x1] %vm239, 0.0
      %254 = vst.msk [vmem:[%s238 + $0x150] sm:$0x1] %vm239, 0.0
      %255 = vst.msk [vmem:[%s238 + $0x168] sm:$0x1] %vm239, 0.0
      %256 = vst.msk [vmem:[%s238 + $0x11] sm:$0x1] %vm239, 0.0
      %257 = vst.msk [vmem:[%s238 + $0x29] sm:$0x1] %vm239, 0.0
      %258 = vst.msk [vmem:[%s238 + $0x41] sm:$0x1] %vm239, 0.0
      %259 = vst.msk [vmem:[%s238 + $0x59] sm:$0x1] %vm239, 0.0
      %260 = vst.msk [vmem:[%s238 + $0x71] sm:$0x1] %vm239, 0.0
      %261 = vst.msk [vmem:[%s238 + $0x89] sm:$0x1] %vm239, 0.0
      %262 = vst.msk [vmem:[%s238 + $0xa1] sm:$0x1] %vm239, 0.0
      %263 = vst.msk [vmem:[%s238 + $0xb9] sm:$0x1] %vm239, 0.0
      %264 = vst.msk [vmem:[%s238 + $0xd1] sm:$0x1] %vm239, 0.0
      %265 = vst.msk [vmem:[%s238 + $0xe9] sm:$0x1] %vm239, 0.0
      %266 = vst.msk [vmem:[%s238 + $0x101] sm:$0x1] %vm239, 0.0
      %267 = vst.msk [vmem:[%s238 + $0x119] sm:$0x1] %vm239, 0.0
      %268 = vst.msk [vmem:[%s238 + $0x131] sm:$0x1] %vm239, 0.0
      %269 = vst.msk [vmem:[%s238 + $0x149] sm:$0x1] %vm239, 0.0
      %270 = vst.msk [vmem:[%s238 + $0x161] sm:$0x1] %vm239, 0.0
      %271 = vst.msk [vmem:[%s238 + $0x179] sm:$0x1] %vm239, 0.0
      %v272 = vld [vmem:[%s220] sm:$0xf]
      %v273 = vld [vmem:[%s220 + $0x4] sm:$0xf]
      %v274 = vld [vmem:[%s220 + $0x8] sm:$0xf]
      %v275 = vld [vmem:[%s220 + $0xc] sm:$0xf]
      %v276 = vld [vmem:[%s220 + $0x10] sm:$0xf]
      %v277 = vld [vmem:[%s220 + $0x14] sm:$0xf]
      %v278 = vld [vmem:[%s220 + $0x18] sm:$0xf]
      %v279 = vld [vmem:[%s220 + $0x1c] sm:$0xf]
      %v280 = vld [vmem:[%s220 + $0x20] sm:$0xf]
      %v281 = vld [vmem:[%s220 + $0x24] sm:$0xf]
      %v282 = vld [vmem:[%s220 + $0x28] sm:$0xf]
      %v283 = vld [vmem:[%s220 + $0x2c] sm:$0xf]
      %v284 = vld [vmem:[%s220 + $0x30] sm:$0xf]
      %v285 = vld [vmem:[%s220 + $0x34] sm:$0xf]
      %v286 = vld [vmem:[%s220 + $0x38] sm:$0xf]
      %v287 = vld [vmem:[%s220 + $0x3c] sm:$0xf]
      %v288 = vld [vmem:[%s220 + $0x40] sm:$0xf]
      %v289 = vld [vmem:[%s220 + $0x44] sm:$0xf]
      %v290 = vld [vmem:[%s220 + $0x48] sm:$0xf]
      %v291 = vld [vmem:[%s220 + $0x4c] sm:$0xf]
      %v292 = vld [vmem:[%s220 + $0x50] sm:$0xf]
      %v293 = vld [vmem:[%s220 + $0x54] sm:$0xf]
      %v294 = vld [vmem:[%s220 + $0x58] sm:$0xf]
      %v295 = vld [vmem:[%s220 + $0x5c] sm:$0xf]
      %v296 = vld [vmem:[%s220 + $0x60] sm:$0xf]
      %v297 = vld [vmem:[%s220 + $0x64] sm:$0xf]
      %v298 = vld [vmem:[%s220 + $0x68] sm:$0xf]
      %v299 = vld [vmem:[%s220 + $0x6c] sm:$0xf]
      %v300 = vld [vmem:[%s220 + $0x70] sm:$0xf]
      %v301 = vld [vmem:[%s220 + $0x74] sm:$0xf]
      %v302 = vld [vmem:[%s220 + $0x78] sm:$0xf]
      %v303 = vld [vmem:[%s220 + $0x7c] sm:$0xf]
      %v304 = vunpack.c.l.bf16 %v272
      %v305 = vunpack.c.l.bf16 %v273
      %v306 = vunpack.c.l.bf16 %v274
      %v307 = vunpack.c.l.bf16 %v275
      %v308 = vunpack.c.l.bf16 %v276
      %v309 = vunpack.c.l.bf16 %v277
      %v310 = vunpack.c.l.bf16 %v278
      %v311 = vunpack.c.l.bf16 %v279
      %v312 = vunpack.c.l.bf16 %v280
      %v313 = vunpack.c.l.bf16 %v281
      %v314 = vunpack.c.l.bf16 %v282
      %v315 = vunpack.c.l.bf16 %v283
      %v316 = vunpack.c.l.bf16 %v284
      %v317 = vunpack.c.l.bf16 %v285
      %v318 = vunpack.c.l.bf16 %v286
      %v319 = vunpack.c.l.bf16 %v287
      %v320 = vunpack.c.l.bf16 %v288
      %v321 = vunpack.c.l.bf16 %v289
      %v322 = vunpack.c.l.bf16 %v290
      %v323 = vunpack.c.l.bf16 %v291
      %v324 = vunpack.c.l.bf16 %v292
      %v325 = vunpack.c.l.bf16 %v293
      %v326 = vunpack.c.l.bf16 %v294
      %v327 = vunpack.c.l.bf16 %v295
      %v328 = vunpack.c.l.bf16 %v296
      %v329 = vunpack.c.l.bf16 %v297
      %v330 = vunpack.c.l.bf16 %v298
      %v331 = vunpack.c.l.bf16 %v299
      %v332 = vunpack.c.l.bf16 %v300
      %v333 = vunpack.c.l.bf16 %v301
      %v334 = vunpack.c.l.bf16 %v302
      %v335 = vunpack.c.l.bf16 %v303
      %336 = vst.msk [vmem:[%s238 + $0x1] sm:$0xff] %vm229, %v304
      %337 = vst.msk [vmem:[%s238 + $0x9] sm:$0xff] %vm229, %v305
      %338 = vst.msk [vmem:[%s238 + $0x19] sm:$0xff] %vm229, %v306
      %339 = vst.msk [vmem:[%s238 + $0x21] sm:$0xff] %vm229, %v307
      %340 = vst.msk [vmem:[%s238 + $0x31] sm:$0xff] %vm229, %v308
      %341 = vst.msk [vmem:[%s238 + $0x39] sm:$0xff] %vm229, %v309
      %342 = vst.msk [vmem:[%s238 + $0x49] sm:$0xff] %vm229, %v310
      %343 = vst.msk [vmem:[%s238 + $0x51] sm:$0xff] %vm229, %v311
      %344 = vst.msk [vmem:[%s238 + $0x61] sm:$0xff] %vm229, %v312
      %345 = vst.msk [vmem:[%s238 + $0x69] sm:$0xff] %vm229, %v313
      %346 = vst.msk [vmem:[%s238 + $0x79] sm:$0xff] %vm229, %v314
      %347 = vst.msk [vmem:[%s238 + $0x81] sm:$0xff] %vm229, %v315
      %348 = vst.msk [vmem:[%s238 + $0x91] sm:$0xff] %vm229, %v316
      %349 = vst.msk [vmem:[%s238 + $0x99] sm:$0xff] %vm229, %v317
      %350 = vst.msk [vmem:[%s238 + $0xa9] sm:$0xff] %vm229, %v318
      %351 = vst.msk [vmem:[%s238 + $0xb1] sm:$0xff] %vm229, %v319
      %352 = vst.msk [vmem:[%s238 + $0xc1] sm:$0xff] %vm229, %v320
      %353 = vst.msk [vmem:[%s238 + $0xc9] sm:$0xff] %vm229, %v321
      %354 = vst.msk [vmem:[%s238 + $0xd9] sm:$0xff] %vm229, %v322
      %355 = vst.msk [vmem:[%s238 + $0xe1] sm:$0xff] %vm229, %v323
      %356 = vst.msk [vmem:[%s238 + $0xf1] sm:$0xff] %vm229, %v324
      %357 = vst.msk [vmem:[%s238 + $0xf9] sm:$0xff] %vm229, %v325
      %358 = vst.msk [vmem:[%s238 + $0x109] sm:$0xff] %vm229, %v326
      %359 = vst.msk [vmem:[%s238 + $0x111] sm:$0xff] %vm229, %v327
      %360 = vst.msk [vmem:[%s238 + $0x121] sm:$0xff] %vm229, %v328
      %361 = vst.msk [vmem:[%s238 + $0x129] sm:$0xff] %vm229, %v329
      %362 = vst.msk [vmem:[%s238 + $0x139] sm:$0xff] %vm229, %v330
      %363 = vst.msk [vmem:[%s238 + $0x141] sm:$0xff] %vm229, %v331
      %364 = vst.msk [vmem:[%s238 + $0x151] sm:$0xff] %vm229, %v332
      %365 = vst.msk [vmem:[%s238 + $0x159] sm:$0xff] %vm229, %v333
      %366 = vst.msk [vmem:[%s238 + $0x169] sm:$0xff] %vm229, %v334
      %367 = vst.msk [vmem:[%s238 + $0x171] sm:$0xff] %vm229, %v335
      %v368 = vld [vmem:[#allocation2] sm:$0xff]
      %v369 = vld [vmem:[#allocation2 + $0x8] sm:$0xff]
      %v370 = vld [vmem:[#allocation2 + $0x18] sm:$0xff]
      %v371 = vld [vmem:[#allocation2 + $0x20] sm:$0xff]
      %v372 = vld [vmem:[#allocation2 + $0x30] sm:$0xff]
      %v373 = vld [vmem:[#allocation2 + $0x38] sm:$0xff]
      %v374 = vld [vmem:[#allocation2 + $0x48] sm:$0xff]
      %v375 = vld [vmem:[#allocation2 + $0x50] sm:$0xff]
      %v376 = vld [vmem:[#allocation2 + $0x60] sm:$0xff]
      %v377 = vld [vmem:[#allocation2 + $0x68] sm:$0xff]
      %v378 = vld [vmem:[#allocation2 + $0x78] sm:$0xff]
      %v379 = vld [vmem:[#allocation2 + $0x80] sm:$0xff]
      %v380 = vld [vmem:[#allocation2 + $0x90] sm:$0xff]
      %v381 = vld [vmem:[#allocation2 + $0x98] sm:$0xff]
      %v382 = vld [vmem:[#allocation2 + $0xa8] sm:$0xff]
      %v383 = vld [vmem:[#allocation2 + $0xb0] sm:$0xff]
      %v384 = vld [vmem:[#allocation2 + $0xc0] sm:$0xff]
      %v385 = vld [vmem:[#allocation2 + $0xc8] sm:$0xff]
      %v386 = vld [vmem:[#allocation2 + $0xd8] sm:$0xff]
      %v387 = vld [vmem:[#allocation2 + $0xe0] sm:$0xff]
      %v388 = vld [vmem:[#allocation2 + $0xf0] sm:$0xff]
      %v389 = vld [vmem:[#allocation2 + $0xf8] sm:$0xff]
      %v390 = vld [vmem:[#allocation2 + $0x108] sm:$0xff]
      %v391 = vld [vmem:[#allocation2 + $0x110] sm:$0xff]
      %v392 = vld [vmem:[#allocation2 + $0x120] sm:$0xff]
      %v393 = vld [vmem:[#allocation2 + $0x128] sm:$0xff]
      %v394 = vld [vmem:[#allocation2 + $0x138] sm:$0xff]
      %v395 = vld [vmem:[#allocation2 + $0x140] sm:$0xff]
      %v396 = vld [vmem:[#allocation2 + $0x150] sm:$0xff]
      %v397 = vld [vmem:[#allocation2 + $0x158] sm:$0xff]
      %v398 = vld [vmem:[#allocation2 + $0x168] sm:$0xff]
      %v399 = vld [vmem:[#allocation2 + $0x170] sm:$0xff]
      %v400 = vpack.c.bf16 %v369, %v368
      %v401 = vpack.c.bf16 %v371, %v370
      %v402 = vpack.c.bf16 %v373, %v372
      %v403 = vpack.c.bf16 %v375, %v374
      %v404 = vpack.c.bf16 %v377, %v376
      %v405 = vpack.c.bf16 %v379, %v378
      %v406 = vpack.c.bf16 %v381, %v380
      %v407 = vpack.c.bf16 %v383, %v382
      %v408 = vpack.c.bf16 %v385, %v384
      %v409 = vpack.c.bf16 %v387, %v386
      %v410 = vpack.c.bf16 %v389, %v388
      %v411 = vpack.c.bf16 %v391, %v390
      %v412 = vpack.c.bf16 %v393, %v392
      %v413 = vpack.c.bf16 %v395, %v394
      %v414 = vpack.c.bf16 %v397, %v396
      %v415 = vpack.c.bf16 %v399, %v398
      %416 = vst.msk [vmem:[#allocation3] sm:$0xff] %vm229, %v400
      %417 = vst.msk [vmem:[#allocation3 + $0x8] sm:$0xff] %vm229, %v401
      %418 = vst.msk [vmem:[#allocation3 + $0x10] sm:$0xff] %vm229, %v402
      %419 = vst.msk [vmem:[#allocation3 + $0x18] sm:$0xff] %vm229, %v403
      %420 = vst.msk [vmem:[#allocation3 + $0x20] sm:$0xff] %vm229, %v404
      %421 = vst.msk [vmem:[#allocation3 + $0x28] sm:$0xff] %vm229, %v405
      %422 = vst.msk [vmem:[#allocation3 + $0x30] sm:$0xff] %vm229, %v406
      %423 = vst.msk [vmem:[#allocation3 + $0x38] sm:$0xff] %vm229, %v407
      %424 = vst.msk [vmem:[#allocation3 + $0x40] sm:$0xff] %vm229, %v408
      %425 = vst.msk [vmem:[#allocation3 + $0x48] sm:$0xff] %vm229, %v409
      %426 = vst.msk [vmem:[#allocation3 + $0x50] sm:$0xff] %vm229, %v410
      %427 = vst.msk [vmem:[#allocation3 + $0x58] sm:$0xff] %vm229, %v411
      %428 = vst.msk [vmem:[#allocation3 + $0x60] sm:$0xff] %vm229, %v412
      %429 = vst.msk [vmem:[#allocation3 + $0x68] sm:$0xff] %vm229, %v413
      %430 = vst.msk [vmem:[#allocation3 + $0x70] sm:$0xff] %vm229, %v414
      %431 = vst.msk [vmem:[#allocation3 + $0x78] sm:$0xff] %vm229, %v415
      %v432 = vld [vmem:[#allocation2 + $0x1] sm:$0xff]
      %v433 = vld [vmem:[#allocation2 + $0x9] sm:$0xff]
      %v434 = vld [vmem:[#allocation2 + $0x19] sm:$0xff]
      %v435 = vld [vmem:[#allocation2 + $0x21] sm:$0xff]
      %v436 = vld [vmem:[#allocation2 + $0x31] sm:$0xff]
      %v437 = vld [vmem:[#allocation2 + $0x39] sm:$0xff]
      %v438 = vld [vmem:[#allocation2 + $0x49] sm:$0xff]
      %v439 = vld [vmem:[#allocation2 + $0x51] sm:$0xff]
      %v440 = vld [vmem:[#allocation2 + $0x61] sm:$0xff]
      %v441 = vld [vmem:[#allocation2 + $0x69] sm:$0xff]
      %v442 = vld [vmem:[#allocation2 + $0x79] sm:$0xff]
      %v443 = vld [vmem:[#allocation2 + $0x81] sm:$0xff]
      %v444 = vld [vmem:[#allocation2 + $0x91] sm:$0xff]
      %v445 = vld [vmem:[#allocation2 + $0x99] sm:$0xff]
      %v446 = vld [vmem:[#allocation2 + $0xa9] sm:$0xff]
      %v447 = vld [vmem:[#allocation2 + $0xb1] sm:$0xff]
      %v448 = vld [vmem:[#allocation2 + $0xc1] sm:$0xff]
      %v449 = vld [vmem:[#allocation2 + $0xc9] sm:$0xff]
      %v450 = vld [vmem:[#allocation2 + $0xd9] sm:$0xff]
      %v451 = vld [vmem:[#allocation2 + $0xe1] sm:$0xff]
      %v452 = vld [vmem:[#allocation2 + $0xf1] sm:$0xff]
      %v453 = vld [vmem:[#allocation2 + $0xf9] sm:$0xff]
      %v454 = vld [vmem:[#allocation2 + $0x109] sm:$0xff]
      %v455 = vld [vmem:[#allocation2 + $0x111] sm:$0xff]
      %v456 = vld [vmem:[#allocation2 + $0x121] sm:$0xff]
      %v457 = vld [vmem:[#allocation2 + $0x129] sm:$0xff]
      %v458 = vld [vmem:[#allocation2 + $0x139] sm:$0xff]
      %v459 = vld [vmem:[#allocation2 + $0x141] sm:$0xff]
      %v460 = vld [vmem:[#allocation2 + $0x151] sm:$0xff]
      %v461 = vld [vmem:[#allocation2 + $0x159] sm:$0xff]
      %v462 = vld [vmem:[#allocation2 + $0x169] sm:$0xff]
      %v463 = vld [vmem:[#allocation2 + $0x171] sm:$0xff]
      %v464 = vpack.c.bf16 %v433, %v432
      %v465 = vpack.c.bf16 %v435, %v434
      %v466 = vpack.c.bf16 %v437, %v436
      %v467 = vpack.c.bf16 %v439, %v438
      %v468 = vpack.c.bf16 %v441, %v440
      %v469 = vpack.c.bf16 %v443, %v442
      %v470 = vpack.c.bf16 %v445, %v444
      %v471 = vpack.c.bf16 %v447, %v446
      %v472 = vpack.c.bf16 %v449, %v448
      %v473 = vpack.c.bf16 %v451, %v450
      %v474 = vpack.c.bf16 %v453, %v452
      %v475 = vpack.c.bf16 %v455, %v454
      %v476 = vpack.c.bf16 %v457, %v456
      %v477 = vpack.c.bf16 %v459, %v458
      %v478 = vpack.c.bf16 %v461, %v460
      %v479 = vpack.c.bf16 %v463, %v462
      %496 = vrot.lane.b32.xlu0 %v464, 2
      %v497 = vpop.permute.xlu0 %496
      %498 = vrot.lane.b32.xlu0 %v465, 2
      %v499 = vpop.permute.xlu0 %498
      %500 = vrot.lane.b32.xlu0 %v466, 2
      %v501 = vpop.permute.xlu0 %500
      %502 = vrot.lane.b32.xlu0 %v467, 2
      %v503 = vpop.permute.xlu0 %502
      %504 = vrot.lane.b32.xlu0 %v468, 2
      %v505 = vpop.permute.xlu0 %504
      %506 = vrot.lane.b32.xlu0 %v469, 2
      %v507 = vpop.permute.xlu0 %506
      %508 = vrot.lane.b32.xlu0 %v470, 2
      %v509 = vpop.permute.xlu0 %508
      %510 = vrot.lane.b32.xlu0 %v471, 2
      %v511 = vpop.permute.xlu0 %510
      %512 = vrot.lane.b32.xlu0 %v472, 2
      %v513 = vpop.permute.xlu0 %512
      %514 = vrot.lane.b32.xlu0 %v473, 2
      %v515 = vpop.permute.xlu0 %514
      %516 = vrot.lane.b32.xlu0 %v474, 2
      %v517 = vpop.permute.xlu0 %516
      %518 = vrot.lane.b32.xlu0 %v475, 2
      %v519 = vpop.permute.xlu0 %518
      %520 = vrot.lane.b32.xlu0 %v476, 2
      %v521 = vpop.permute.xlu0 %520
      %522 = vrot.lane.b32.xlu0 %v477, 2
      %v523 = vpop.permute.xlu0 %522
      %524 = vrot.lane.b32.xlu0 %v478, 2
      %v525 = vpop.permute.xlu0 %524
      %526 = vrot.lane.b32.xlu0 %v479, 2
      %v527 = vpop.permute.xlu0 %526
      %vm544 = vcmask 31760
      %545 = vst.msk [vmem:[#allocation3] sm:$0xff] %vm544, %v497
      %546 = vst.msk [vmem:[#allocation3 + $0x8] sm:$0xff] %vm544, %v499
      %547 = vst.msk [vmem:[#allocation3 + $0x10] sm:$0xff] %vm544, %v501
      %548 = vst.msk [vmem:[#allocation3 + $0x18] sm:$0xff] %vm544, %v503
      %549 = vst.msk [vmem:[#allocation3 + $0x20] sm:$0xff] %vm544, %v505
      %550 = vst.msk [vmem:[#allocation3 + $0x28] sm:$0xff] %vm544, %v507
      %551 = vst.msk [vmem:[#allocation3 + $0x30] sm:$0xff] %vm544, %v509
      %552 = vst.msk [vmem:[#allocation3 + $0x38] sm:$0xff] %vm544, %v511
      %553 = vst.msk [vmem:[#allocation3 + $0x40] sm:$0xff] %vm544, %v513
      %554 = vst.msk [vmem:[#allocation3 + $0x48] sm:$0xff] %vm544, %v515
      %555 = vst.msk [vmem:[#allocation3 + $0x50] sm:$0xff] %vm544, %v517
      %556 = vst.msk [vmem:[#allocation3 + $0x58] sm:$0xff] %vm544, %v519
      %557 = vst.msk [vmem:[#allocation3 + $0x60] sm:$0xff] %vm544, %v521
      %558 = vst.msk [vmem:[#allocation3 + $0x68] sm:$0xff] %vm544, %v523
      %559 = vst.msk [vmem:[#allocation3 + $0x70] sm:$0xff] %vm544, %v525
      %560 = vst.msk [vmem:[#allocation3 + $0x78] sm:$0xff] %vm544, %v527
      %v561 = vld [vmem:[#allocation2 + $0x2] sm:$0xff]
      %v562 = vld [vmem:[#allocation2 + $0xa] sm:$0xff]
      %v563 = vld [vmem:[#allocation2 + $0x1a] sm:$0xff]
      %v564 = vld [vmem:[#allocation2 + $0x22] sm:$0xff]
      %v565 = vld [vmem:[#allocation2 + $0x32] sm:$0xff]
      %v566 = vld [vmem:[#allocation2 + $0x3a] sm:$0xff]
      %v567 = vld [vmem:[#allocation2 + $0x4a] sm:$0xff]
      %v568 = vld [vmem:[#allocation2 + $0x52] sm:$0xff]
      %v569 = vld [vmem:[#allocation2 + $0x62] sm:$0xff]
      %v570 = vld [vmem:[#allocation2 + $0x6a] sm:$0xff]
      %v571 = vld [vmem:[#allocation2 + $0x7a] sm:$0xff]
      %v572 = vld [vmem:[#allocation2 + $0x82] sm:$0xff]
      %v573 = vld [vmem:[#allocation2 + $0x92] sm:$0xff]
      %v574 = vld [vmem:[#allocation2 + $0x9a] sm:$0xff]
      %v575 = vld [vmem:[#allocation2 + $0xaa] sm:$0xff]
      %v576 = vld [vmem:[#allocation2 + $0xb2] sm:$0xff]
      %v577 = vld [vmem:[#allocation2 + $0xc2] sm:$0xff]
      %v578 = vld [vmem:[#allocation2 + $0xca] sm:$0xff]
      %v579 = vld [vmem:[#allocation2 + $0xda] sm:$0xff]
      %v580 = vld [vmem:[#allocation2 + $0xe2] sm:$0xff]
      %v581 = vld [vmem:[#allocation2 + $0xf2] sm:$0xff]
      %v582 = vld [vmem:[#allocation2 + $0xfa] sm:$0xff]
      %v583 = vld [vmem:[#allocation2 + $0x10a] sm:$0xff]
      %v584 = vld [vmem:[#allocation2 + $0x112] sm:$0xff]
      %v585 = vld [vmem:[#allocation2 + $0x122] sm:$0xff]
      %v586 = vld [vmem:[#allocation2 + $0x12a] sm:$0xff]
      %v587 = vld [vmem:[#allocation2 + $0x13a] sm:$0xff]
      %v588 = vld [vmem:[#allocation2 + $0x142] sm:$0xff]
      %v589 = vld [vmem:[#allocation2 + $0x152] sm:$0xff]
      %v590 = vld [vmem:[#allocation2 + $0x15a] sm:$0xff]
      %v591 = vld [vmem:[#allocation2 + $0x16a] sm:$0xff]
      %v592 = vld [vmem:[#allocation2 + $0x172] sm:$0xff]
      %v593 = vpack.c.bf16 %v562, %v561
      %v594 = vpack.c.bf16 %v564, %v563
      %v595 = vpack.c.bf16 %v566, %v565
      %v596 = vpack.c.bf16 %v568, %v567
      %v597 = vpack.c.bf16 %v570, %v569
      %v598 = vpack.c.bf16 %v572, %v571
      %v599 = vpack.c.bf16 %v574, %v573
      %v600 = vpack.c.bf16 %v576, %v575
      %v601 = vpack.c.bf16 %v578, %v577
      %v602 = vpack.c.bf16 %v580, %v579
      %v603 = vpack.c.bf16 %v582, %v581
      %v604 = vpack.c.bf16 %v584, %v583
      %v605 = vpack.c.bf16 %v586, %v585
      %v606 = vpack.c.bf16 %v588, %v587
      %v607 = vpack.c.bf16 %v590, %v589
      %v608 = vpack.c.bf16 %v592, %v591
      %625 = vrot.lane.b32.xlu0 %v593, 4
      %v626 = vpop.permute.xlu0 %625
      %627 = vrot.lane.b32.xlu0 %v594, 4
      %v628 = vpop.permute.xlu0 %627
      %629 = vrot.lane.b32.xlu0 %v595, 4
      %v630 = vpop.permute.xlu0 %629
      %631 = vrot.lane.b32.xlu0 %v596, 4
      %v632 = vpop.permute.xlu0 %631
      %633 = vrot.lane.b32.xlu0 %v597, 4
      %v634 = vpop.permute.xlu0 %633
      %635 = vrot.lane.b32.xlu0 %v598, 4
      %v636 = vpop.permute.xlu0 %635
      %637 = vrot.lane.b32.xlu0 %v599, 4
      %v638 = vpop.permute.xlu0 %637
      %639 = vrot.lane.b32.xlu0 %v600, 4
      %v640 = vpop.permute.xlu0 %639
      %641 = vrot.lane.b32.xlu0 %v601, 4
      %v642 = vpop.permute.xlu0 %641
      %643 = vrot.lane.b32.xlu0 %v602, 4
      %v644 = vpop.permute.xlu0 %643
      %645 = vrot.lane.b32.xlu0 %v603, 4
      %v646 = vpop.permute.xlu0 %645
      %647 = vrot.lane.b32.xlu0 %v604, 4
      %v648 = vpop.permute.xlu0 %647
      %649 = vrot.lane.b32.xlu0 %v605, 4
      %v650 = vpop.permute.xlu0 %649
      %651 = vrot.lane.b32.xlu0 %v606, 4
      %v652 = vpop.permute.xlu0 %651
      %653 = vrot.lane.b32.xlu0 %v607, 4
      %v654 = vpop.permute.xlu0 %653
      %655 = vrot.lane.b32.xlu0 %v608, 4
      %v656 = vpop.permute.xlu0 %655
      %vm673 = vcmask 48160
      %674 = vst.msk [vmem:[#allocation3] sm:$0xff] %vm673, %v626
      %675 = vst.msk [vmem:[#allocation3 + $0x8] sm:$0xff] %vm673, %v628
      %676 = vst.msk [vmem:[#allocation3 + $0x10] sm:$0xff] %vm673, %v630
      %677 = vst.msk [vmem:[#allocation3 + $0x18] sm:$0xff] %vm673, %v632
      %678 = vst.msk [vmem:[#allocation3 + $0x20] sm:$0xff] %vm673, %v634
      %679 = vst.msk [vmem:[#allocation3 + $0x28] sm:$0xff] %vm673, %v636
      %680 = vst.msk [vmem:[#allocation3 + $0x30] sm:$0xff] %vm673, %v638
      %681 = vst.msk [vmem:[#allocation3 + $0x38] sm:$0xff] %vm673, %v640
      %682 = vst.msk [vmem:[#allocation3 + $0x40] sm:$0xff] %vm673, %v642
      %683 = vst.msk [vmem:[#allocation3 + $0x48] sm:$0xff] %vm673, %v644
      %684 = vst.msk [vmem:[#allocation3 + $0x50] sm:$0xff] %vm673, %v646
      %685 = vst.msk [vmem:[#allocation3 + $0x58] sm:$0xff] %vm673, %v648
      %686 = vst.msk [vmem:[#allocation3 + $0x60] sm:$0xff] %vm673, %v650
      %687 = vst.msk [vmem:[#allocation3 + $0x68] sm:$0xff] %vm673, %v652
      %688 = vst.msk [vmem:[#allocation3 + $0x70] sm:$0xff] %vm673, %v654
      %689 = vst.msk [vmem:[#allocation3 + $0x78] sm:$0xff] %vm673, %v656
      %v690 = vld [vmem:[%s238] sm:$0xff]
      %v691 = vld [vmem:[%s238 + $0x8] sm:$0xff]
      %v692 = vld [vmem:[%s238 + $0x18] sm:$0xff]
      %v693 = vld [vmem:[%s238 + $0x20] sm:$0xff]
      %v694 = vld [vmem:[%s238 + $0x30] sm:$0xff]
      %v695 = vld [vmem:[%s238 + $0x38] sm:$0xff]
      %v696 = vld [vmem:[%s238 + $0x48] sm:$0xff]
      %v697 = vld [vmem:[%s238 + $0x50] sm:$0xff]
      %v698 = vld [vmem:[%s238 + $0x60] sm:$0xff]
      %v699 = vld [vmem:[%s238 + $0x68] sm:$0xff]
      %v700 = vld [vmem:[%s238 + $0x78] sm:$0xff]
      %v701 = vld [vmem:[%s238 + $0x80] sm:$0xff]
      %v702 = vld [vmem:[%s238 + $0x90] sm:$0xff]
      %v703 = vld [vmem:[%s238 + $0x98] sm:$0xff]
      %v704 = vld [vmem:[%s238 + $0xa8] sm:$0xff]
      %v705 = vld [vmem:[%s238 + $0xb0] sm:$0xff]
      %v706 = vld [vmem:[%s238 + $0xc0] sm:$0xff]
      %v707 = vld [vmem:[%s238 + $0xc8] sm:$0xff]
      %v708 = vld [vmem:[%s238 + $0xd8] sm:$0xff]
      %v709 = vld [vmem:[%s238 + $0xe0] sm:$0xff]
      %v710 = vld [vmem:[%s238 + $0xf0] sm:$0xff]
      %v711 = vld [vmem:[%s238 + $0xf8] sm:$0xff]
      %v712 = vld [vmem:[%s238 + $0x108] sm:$0xff]
      %v713 = vld [vmem:[%s238 + $0x110] sm:$0xff]
      %v714 = vld [vmem:[%s238 + $0x120] sm:$0xff]
      %v715 = vld [vmem:[%s238 + $0x128] sm:$0xff]
      %v716 = vld [vmem:[%s238 + $0x138] sm:$0xff]
      %v717 = vld [vmem:[%s238 + $0x140] sm:$0xff]
      %v718 = vld [vmem:[%s238 + $0x150] sm:$0xff]
      %v719 = vld [vmem:[%s238 + $0x158] sm:$0xff]
      %v720 = vld [vmem:[%s238 + $0x168] sm:$0xff]
      %v721 = vld [vmem:[%s238 + $0x170] sm:$0xff]
      %v722 = vpack.c.bf16 %v691, %v690
      %v723 = vpack.c.bf16 %v693, %v692
      %v724 = vpack.c.bf16 %v695, %v694
      %v725 = vpack.c.bf16 %v697, %v696
      %v726 = vpack.c.bf16 %v699, %v698
      %v727 = vpack.c.bf16 %v701, %v700
      %v728 = vpack.c.bf16 %v703, %v702
      %v729 = vpack.c.bf16 %v705, %v704
      %v730 = vpack.c.bf16 %v707, %v706
      %v731 = vpack.c.bf16 %v709, %v708
      %v732 = vpack.c.bf16 %v711, %v710
      %v733 = vpack.c.bf16 %v713, %v712
      %v734 = vpack.c.bf16 %v715, %v714
      %v735 = vpack.c.bf16 %v717, %v716
      %v736 = vpack.c.bf16 %v719, %v718
      %v737 = vpack.c.bf16 %v721, %v720
      %754 = vrot.lane.b32.xlu0 %v722, 6
      %v755 = vpop.permute.xlu0 %754
      %756 = vrot.lane.b32.xlu0 %v723, 6
      %v757 = vpop.permute.xlu0 %756
      %758 = vrot.lane.b32.xlu0 %v724, 6
      %v759 = vpop.permute.xlu0 %758
      %760 = vrot.lane.b32.xlu0 %v725, 6
      %v761 = vpop.permute.xlu0 %760
      %762 = vrot.lane.b32.xlu0 %v726, 6
      %v763 = vpop.permute.xlu0 %762
      %764 = vrot.lane.b32.xlu0 %v727, 6
      %v765 = vpop.permute.xlu0 %764
      %766 = vrot.lane.b32.xlu0 %v728, 6
      %v767 = vpop.permute.xlu0 %766
      %768 = vrot.lane.b32.xlu0 %v729, 6
      %v769 = vpop.permute.xlu0 %768
      %770 = vrot.lane.b32.xlu0 %v730, 6
      %v771 = vpop.permute.xlu0 %770
      %772 = vrot.lane.b32.xlu0 %v731, 6
      %v773 = vpop.permute.xlu0 %772
      %774 = vrot.lane.b32.xlu0 %v732, 6
      %v775 = vpop.permute.xlu0 %774
      %776 = vrot.lane.b32.xlu0 %v733, 6
      %v777 = vpop.permute.xlu0 %776
      %778 = vrot.lane.b32.xlu0 %v734, 6
      %v779 = vpop.permute.xlu0 %778
      %780 = vrot.lane.b32.xlu0 %v735, 6
      %v781 = vpop.permute.xlu0 %780
      %782 = vrot.lane.b32.xlu0 %v736, 6
      %v783 = vpop.permute.xlu0 %782
      %784 = vrot.lane.b32.xlu0 %v737, 6
      %v785 = vpop.permute.xlu0 %784
      %vm802 = vcmask 64560
      %803 = vst.msk [vmem:[#allocation3] sm:$0xff] %vm802, %v755
      %804 = vst.msk [vmem:[#allocation3 + $0x8] sm:$0xff] %vm802, %v757
      %805 = vst.msk [vmem:[#allocation3 + $0x10] sm:$0xff] %vm802, %v759
      %806 = vst.msk [vmem:[#allocation3 + $0x18] sm:$0xff] %vm802, %v761
      %807 = vst.msk [vmem:[#allocation3 + $0x20] sm:$0xff] %vm802, %v763
      %808 = vst.msk [vmem:[#allocation3 + $0x28] sm:$0xff] %vm802, %v765
      %809 = vst.msk [vmem:[#allocation3 + $0x30] sm:$0xff] %vm802, %v767
      %810 = vst.msk [vmem:[#allocation3 + $0x38] sm:$0xff] %vm802, %v769
      %811 = vst.msk [vmem:[#allocation3 + $0x40] sm:$0xff] %vm802, %v771
      %812 = vst.msk [vmem:[#allocation3 + $0x48] sm:$0xff] %vm802, %v773
      %813 = vst.msk [vmem:[#allocation3 + $0x50] sm:$0xff] %vm802, %v775
      %814 = vst.msk [vmem:[#allocation3 + $0x58] sm:$0xff] %vm802, %v777
      %815 = vst.msk [vmem:[#allocation3 + $0x60] sm:$0xff] %vm802, %v779
      %816 = vst.msk [vmem:[#allocation3 + $0x68] sm:$0xff] %vm802, %v781
      %817 = vst.msk [vmem:[#allocation3 + $0x70] sm:$0xff] %vm802, %v783
      %818 = vst.msk [vmem:[#allocation3 + $0x78] sm:$0xff] %vm802, %v785
      %v819 = vld [vmem:[%s238 + $0x1] sm:$0xff]
      %v820 = vld [vmem:[%s238 + $0x9] sm:$0xff]
      %v821 = vld [vmem:[%s238 + $0x19] sm:$0xff]
      %v822 = vld [vmem:[%s238 + $0x21] sm:$0xff]
      %v823 = vld [vmem:[%s238 + $0x31] sm:$0xff]
      %v824 = vld [vmem:[%s238 + $0x39] sm:$0xff]
      %v825 = vld [vmem:[%s238 + $0x49] sm:$0xff]
      %v826 = vld [vmem:[%s238 + $0x51] sm:$0xff]
      %v827 = vld [vmem:[%s238 + $0x61] sm:$0xff]
      %v828 = vld [vmem:[%s238 + $0x69] sm:$0xff]
      %v829 = vld [vmem:[%s238 + $0x79] sm:$0xff]
      %v830 = vld [vmem:[%s238 + $0x81] sm:$0xff]
      %v831 = vld [vmem:[%s238 + $0x91] sm:$0xff]
      %v832 = vld [vmem:[%s238 + $0x99] sm:$0xff]
      %v833 = vld [vmem:[%s238 + $0xa9] sm:$0xff]
      %v834 = vld [vmem:[%s238 + $0xb1] sm:$0xff]
      %v835 = vld [vmem:[%s238 + $0xc1] sm:$0xff]
      %v836 = vld [vmem:[%s238 + $0xc9] sm:$0xff]
      %v837 = vld [vmem:[%s238 + $0xd9] sm:$0xff]
      %v838 = vld [vmem:[%s238 + $0xe1] sm:$0xff]
      %v839 = vld [vmem:[%s238 + $0xf1] sm:$0xff]
      %v840 = vld [vmem:[%s238 + $0xf9] sm:$0xff]
      %v841 = vld [vmem:[%s238 + $0x109] sm:$0xff]
      %v842 = vld [vmem:[%s238 + $0x111] sm:$0xff]
      %v843 = vld [vmem:[%s238 + $0x121] sm:$0xff]
      %v844 = vld [vmem:[%s238 + $0x129] sm:$0xff]
      %v845 = vld [vmem:[%s238 + $0x139] sm:$0xff]
      %v846 = vld [vmem:[%s238 + $0x141] sm:$0xff]
      %v847 = vld [vmem:[%s238 + $0x151] sm:$0xff]
      %v848 = vld [vmem:[%s238 + $0x159] sm:$0xff]
      %v849 = vld [vmem:[%s238 + $0x169] sm:$0xff]
      %v850 = vld [vmem:[%s238 + $0x171] sm:$0xff]
      %v851 = vpack.c.bf16 %v820, %v819
      %v852 = vpack.c.bf16 %v822, %v821
      %v853 = vpack.c.bf16 %v824, %v823
      %v854 = vpack.c.bf16 %v826, %v825
      %v855 = vpack.c.bf16 %v828, %v827
      %v856 = vpack.c.bf16 %v830, %v829
      %v857 = vpack.c.bf16 %v832, %v831
      %v858 = vpack.c.bf16 %v834, %v833
      %v859 = vpack.c.bf16 %v836, %v835
      %v860 = vpack.c.bf16 %v838, %v837
      %v861 = vpack.c.bf16 %v840, %v839
      %v862 = vpack.c.bf16 %v842, %v841
      %v863 = vpack.c.bf16 %v844, %v843
      %v864 = vpack.c.bf16 %v846, %v845
      %v865 = vpack.c.bf16 %v848, %v847
      %v866 = vpack.c.bf16 %v850, %v849
      %883 = vrot.lane.b32.xlu0 %v851, 8
      %v884 = vpop.permute.xlu0 %883
      %885 = vrot.lane.b32.xlu0 %v852, 8
      %v886 = vpop.permute.xlu0 %885
      %887 = vrot.lane.b32.xlu0 %v853, 8
      %v888 = vpop.permute.xlu0 %887
      %889 = vrot.lane.b32.xlu0 %v854, 8
      %v890 = vpop.permute.xlu0 %889
      %891 = vrot.lane.b32.xlu0 %v855, 8
      %v892 = vpop.permute.xlu0 %891
      %893 = vrot.lane.b32.xlu0 %v856, 8
      %v894 = vpop.permute.xlu0 %893
      %895 = vrot.lane.b32.xlu0 %v857, 8
      %v896 = vpop.permute.xlu0 %895
      %897 = vrot.lane.b32.xlu0 %v858, 8
      %v898 = vpop.permute.xlu0 %897
      %899 = vrot.lane.b32.xlu0 %v859, 8
      %v900 = vpop.permute.xlu0 %899
      %901 = vrot.lane.b32.xlu0 %v860, 8
      %v902 = vpop.permute.xlu0 %901
      %903 = vrot.lane.b32.xlu0 %v861, 8
      %v904 = vpop.permute.xlu0 %903
      %905 = vrot.lane.b32.xlu0 %v862, 8
      %v906 = vpop.permute.xlu0 %905
      %907 = vrot.lane.b32.xlu0 %v863, 8
      %v908 = vpop.permute.xlu0 %907
      %909 = vrot.lane.b32.xlu0 %v864, 8
      %v910 = vpop.permute.xlu0 %909
      %911 = vrot.lane.b32.xlu0 %v865, 8
      %v912 = vpop.permute.xlu0 %911
      %913 = vrot.lane.b32.xlu0 %v866, 8
      %v914 = vpop.permute.xlu0 %913
      %vm931 = vcmask 80960
      %932 = vst.msk [vmem:[#allocation3] sm:$0xff] %vm931, %v884
      %933 = vst.msk [vmem:[#allocation3 + $0x8] sm:$0xff] %vm931, %v886
      %934 = vst.msk [vmem:[#allocation3 + $0x10] sm:$0xff] %vm931, %v888
      %935 = vst.msk [vmem:[#allocation3 + $0x18] sm:$0xff] %vm931, %v890
      %936 = vst.msk [vmem:[#allocation3 + $0x20] sm:$0xff] %vm931, %v892
      %937 = vst.msk [vmem:[#allocation3 + $0x28] sm:$0xff] %vm931, %v894
      %938 = vst.msk [vmem:[#allocation3 + $0x30] sm:$0xff] %vm931, %v896
      %939 = vst.msk [vmem:[#allocation3 + $0x38] sm:$0xff] %vm931, %v898
      %940 = vst.msk [vmem:[#allocation3 + $0x40] sm:$0xff] %vm931, %v900
      %941 = vst.msk [vmem:[#allocation3 + $0x48] sm:$0xff] %vm931, %v902
      %942 = vst.msk [vmem:[#allocation3 + $0x50] sm:$0xff] %vm931, %v904
      %943 = vst.msk [vmem:[#allocation3 + $0x58] sm:$0xff] %vm931, %v906
      %944 = vst.msk [vmem:[#allocation3 + $0x60] sm:$0xff] %vm931, %v908
      %945 = vst.msk [vmem:[#allocation3 + $0x68] sm:$0xff] %vm931, %v910
      %946 = vst.msk [vmem:[#allocation3 + $0x70] sm:$0xff] %vm931, %v912
      %947 = vst.msk [vmem:[#allocation3 + $0x78] sm:$0xff] %vm931, %v914
      %v948 = vld [vmem:[%s238 + $0x2] sm:$0xff]
      %v949 = vld [vmem:[%s238 + $0xa] sm:$0xff]
      %v950 = vld [vmem:[%s238 + $0x1a] sm:$0xff]
      %v951 = vld [vmem:[%s238 + $0x22] sm:$0xff]
      %v952 = vld [vmem:[%s238 + $0x32] sm:$0xff]
      %v953 = vld [vmem:[%s238 + $0x3a] sm:$0xff]
      %v954 = vld [vmem:[%s238 + $0x4a] sm:$0xff]
      %v955 = vld [vmem:[%s238 + $0x52] sm:$0xff]
      %v956 = vld [vmem:[%s238 + $0x62] sm:$0xff]
      %v957 = vld [vmem:[%s238 + $0x6a] sm:$0xff]
      %v958 = vld [vmem:[%s238 + $0x7a] sm:$0xff]
      %v959 = vld [vmem:[%s238 + $0x82] sm:$0xff]
      %v960 = vld [vmem:[%s238 + $0x92] sm:$0xff]
      %v961 = vld [vmem:[%s238 + $0x9a] sm:$0xff]
      %v962 = vld [vmem:[%s238 + $0xaa] sm:$0xff]
      %v963 = vld [vmem:[%s238 + $0xb2] sm:$0xff]
      %v964 = vld [vmem:[%s238 + $0xc2] sm:$0xff]
      %v965 = vld [vmem:[%s238 + $0xca] sm:$0xff]
      %v966 = vld [vmem:[%s238 + $0xda] sm:$0xff]
      %v967 = vld [vmem:[%s238 + $0xe2] sm:$0xff]
      %v968 = vld [vmem:[%s238 + $0xf2] sm:$0xff]
      %v969 = vld [vmem:[%s238 + $0xfa] sm:$0xff]
      %v970 = vld [vmem:[%s238 + $0x10a] sm:$0xff]
      %v971 = vld [vmem:[%s238 + $0x112] sm:$0xff]
      %v972 = vld [vmem:[%s238 + $0x122] sm:$0xff]
      %v973 = vld [vmem:[%s238 + $0x12a] sm:$0xff]
      %v974 = vld [vmem:[%s238 + $0x13a] sm:$0xff]
      %v975 = vld [vmem:[%s238 + $0x142] sm:$0xff]
      %v976 = vld [vmem:[%s238 + $0x152] sm:$0xff]
      %v977 = vld [vmem:[%s238 + $0x15a] sm:$0xff]
      %v978 = vld [vmem:[%s238 + $0x16a] sm:$0xff]
      %v979 = vld [vmem:[%s238 + $0x172] sm:$0xff]
      %v980 = vpack.c.bf16 %v949, %v948
      %v981 = vpack.c.bf16 %v951, %v950
      %v982 = vpack.c.bf16 %v953, %v952
      %v983 = vpack.c.bf16 %v955, %v954
      %v984 = vpack.c.bf16 %v957, %v956
      %v985 = vpack.c.bf16 %v959, %v958
      %v986 = vpack.c.bf16 %v961, %v960
      %v987 = vpack.c.bf16 %v963, %v962
      %v988 = vpack.c.bf16 %v965, %v964
      %v989 = vpack.c.bf16 %v967, %v966
      %v990 = vpack.c.bf16 %v969, %v968
      %v991 = vpack.c.bf16 %v971, %v970
      %v992 = vpack.c.bf16 %v973, %v972
      %v993 = vpack.c.bf16 %v975, %v974
      %v994 = vpack.c.bf16 %v977, %v976
      %v995 = vpack.c.bf16 %v979, %v978
      %1012 = vrot.lane.b32.xlu0 %v980, 10
      %v1013 = vpop.permute.xlu0 %1012
      %1014 = vrot.lane.b32.xlu0 %v981, 10
      %v1015 = vpop.permute.xlu0 %1014
      %1016 = vrot.lane.b32.xlu0 %v982, 10
      %v1017 = vpop.permute.xlu0 %1016
      %1018 = vrot.lane.b32.xlu0 %v983, 10
      %v1019 = vpop.permute.xlu0 %1018
      %1020 = vrot.lane.b32.xlu0 %v984, 10
      %v1021 = vpop.permute.xlu0 %1020
      %1022 = vrot.lane.b32.xlu0 %v985, 10
      %v1023 = vpop.permute.xlu0 %1022
      %1024 = vrot.lane.b32.xlu0 %v986, 10
      %v1025 = vpop.permute.xlu0 %1024
      %1026 = vrot.lane.b32.xlu0 %v987, 10
      %v1027 = vpop.permute.xlu0 %1026
      %1028 = vrot.lane.b32.xlu0 %v988, 10
      %v1029 = vpop.permute.xlu0 %1028
      %1030 = vrot.lane.b32.xlu0 %v989, 10
      %v1031 = vpop.permute.xlu0 %1030
      %1032 = vrot.lane.b32.xlu0 %v990, 10
      %v1033 = vpop.permute.xlu0 %1032
      %1034 = vrot.lane.b32.xlu0 %v991, 10
      %v1035 = vpop.permute.xlu0 %1034
      %1036 = vrot.lane.b32.xlu0 %v992, 10
      %v1037 = vpop.permute.xlu0 %1036
      %1038 = vrot.lane.b32.xlu0 %v993, 10
      %v1039 = vpop.permute.xlu0 %1038
      %1040 = vrot.lane.b32.xlu0 %v994, 10
      %v1041 = vpop.permute.xlu0 %1040
      %1042 = vrot.lane.b32.xlu0 %v995, 10
      %v1043 = vpop.permute.xlu0 %1042
      %vm1060 = vcmask 97360
      %1061 = vst.msk [vmem:[#allocation3] sm:$0xff] %vm1060, %v1013
      %1062 = vst.msk [vmem:[#allocation3 + $0x8] sm:$0xff] %vm1060, %v1015
      %1063 = vst.msk [vmem:[#allocation3 + $0x10] sm:$0xff] %vm1060, %v1017
      %1064 = vst.msk [vmem:[#allocation3 + $0x18] sm:$0xff] %vm1060, %v1019
      %1065 = vst.msk [vmem:[#allocation3 + $0x20] sm:$0xff] %vm1060, %v1021
      %1066 = vst.msk [vmem:[#allocation3 + $0x28] sm:$0xff] %vm1060, %v1023
      %1067 = vst.msk [vmem:[#allocation3 + $0x30] sm:$0xff] %vm1060, %v1025
      %1068 = vst.msk [vmem:[#allocation3 + $0x38] sm:$0xff] %vm1060, %v1027
      %1069 = vst.msk [vmem:[#allocation3 + $0x40] sm:$0xff] %vm1060, %v1029
      %1070 = vst.msk [vmem:[#allocation3 + $0x48] sm:$0xff] %vm1060, %v1031
      %1071 = vst.msk [vmem:[#allocation3 + $0x50] sm:$0xff] %vm1060, %v1033
      %1072 = vst.msk [vmem:[#allocation3 + $0x58] sm:$0xff] %vm1060, %v1035
      %1073 = vst.msk [vmem:[#allocation3 + $0x60] sm:$0xff] %vm1060, %v1037
      %1074 = vst.msk [vmem:[#allocation3 + $0x68] sm:$0xff] %vm1060, %v1039
      %1075 = vst.msk [vmem:[#allocation3 + $0x70] sm:$0xff] %vm1060, %v1041
      %1076 = vst.msk [vmem:[#allocation3 + $0x78] sm:$0xff] %vm1060, %v1043
      %s1077 = scalar_lea.vmem [#allocation2], 48
      %v1078 = vld [vmem:[%s1077] sm:$0xff]
      %v1079 = vld [vmem:[%s1077 + $0x8] sm:$0xff]
      %v1080 = vld [vmem:[%s1077 + $0x18] sm:$0xff]
      %v1081 = vld [vmem:[%s1077 + $0x20] sm:$0xff]
      %v1082 = vld [vmem:[%s1077 + $0x30] sm:$0xff]
      %v1083 = vld [vmem:[%s1077 + $0x38] sm:$0xff]
      %v1084 = vld [vmem:[%s1077 + $0x48] sm:$0xff]
      %v1085 = vld [vmem:[%s1077 + $0x50] sm:$0xff]
      %v1086 = vld [vmem:[%s1077 + $0x60] sm:$0xff]
      %v1087 = vld [vmem:[%s1077 + $0x68] sm:$0xff]
      %v1088 = vld [vmem:[%s1077 + $0x78] sm:$0xff]
      %v1089 = vld [vmem:[%s1077 + $0x80] sm:$0xff]
      %v1090 = vld [vmem:[%s1077 + $0x90] sm:$0xff]
      %v1091 = vld [vmem:[%s1077 + $0x98] sm:$0xff]
      %v1092 = vld [vmem:[%s1077 + $0xa8] sm:$0xff]
      %v1093 = vld [vmem:[%s1077 + $0xb0] sm:$0xff]
      %v1094 = vld [vmem:[%s1077 + $0xc0] sm:$0xff]
      %v1095 = vld [vmem:[%s1077 + $0xc8] sm:$0xff]
      %v1096 = vld [vmem:[%s1077 + $0xd8] sm:$0xff]
      %v1097 = vld [vmem:[%s1077 + $0xe0] sm:$0xff]
      %v1098 = vld [vmem:[%s1077 + $0xf0] sm:$0xff]
      %v1099 = vld [vmem:[%s1077 + $0xf8] sm:$0xff]
      %v1100 = vld [vmem:[%s1077 + $0x108] sm:$0xff]
      %v1101 = vld [vmem:[%s1077 + $0x110] sm:$0xff]
      %v1102 = vld [vmem:[%s1077 + $0x120] sm:$0xff]
      %v1103 = vld [vmem:[%s1077 + $0x128] sm:$0xff]
      %v1104 = vld [vmem:[%s1077 + $0x138] sm:$0xff]
      %v1105 = vld [vmem:[%s1077 + $0x140] sm:$0xff]
      %v1106 = vld [vmem:[%s1077 + $0x150] sm:$0xff]
      %v1107 = vld [vmem:[%s1077 + $0x158] sm:$0xff]
      %v1108 = vld [vmem:[%s1077 + $0x168] sm:$0xff]
      %v1109 = vld [vmem:[%s1077 + $0x170] sm:$0xff]
      %v1110 = vpack.c.bf16 %v1079, %v1078
      %v1111 = vpack.c.bf16 %v1081, %v1080
      %v1112 = vpack.c.bf16 %v1083, %v1082
      %v1113 = vpack.c.bf16 %v1085, %v1084
      %v1114 = vpack.c.bf16 %v1087, %v1086
      %v1115 = vpack.c.bf16 %v1089, %v1088
      %v1116 = vpack.c.bf16 %v1091, %v1090
      %v1117 = vpack.c.bf16 %v1093, %v1092
      %v1118 = vpack.c.bf16 %v1095, %v1094
      %v1119 = vpack.c.bf16 %v1097, %v1096
      %v1120 = vpack.c.bf16 %v1099, %v1098
      %v1121 = vpack.c.bf16 %v1101, %v1100
      %v1122 = vpack.c.bf16 %v1103, %v1102
      %v1123 = vpack.c.bf16 %v1105, %v1104
      %v1124 = vpack.c.bf16 %v1107, %v1106
      %v1125 = vpack.c.bf16 %v1109, %v1108
      %1142 = vrot.lane.b32.xlu0 %v1110, 12
      %v1143 = vpop.permute.xlu0 %1142
      %1144 = vrot.lane.b32.xlu0 %v1111, 12
      %v1145 = vpop.permute.xlu0 %1144
      %1146 = vrot.lane.b32.xlu0 %v1112, 12
      %v1147 = vpop.permute.xlu0 %1146
      %1148 = vrot.lane.b32.xlu0 %v1113, 12
      %v1149 = vpop.permute.xlu0 %1148
      %1150 = vrot.lane.b32.xlu0 %v1114, 12
      %v1151 = vpop.permute.xlu0 %1150
      %1152 = vrot.lane.b32.xlu0 %v1115, 12
      %v1153 = vpop.permute.xlu0 %1152
      %1154 = vrot.lane.b32.xlu0 %v1116, 12
      %v1155 = vpop.permute.xlu0 %1154
      %1156 = vrot.lane.b32.xlu0 %v1117, 12
      %v1157 = vpop.permute.xlu0 %1156
      %1158 = vrot.lane.b32.xlu0 %v1118, 12
      %v1159 = vpop.permute.xlu0 %1158
      %1160 = vrot.lane.b32.xlu0 %v1119, 12
      %v1161 = vpop.permute.xlu0 %1160
      %1162 = vrot.lane.b32.xlu0 %v1120, 12
      %v1163 = vpop.permute.xlu0 %1162
      %1164 = vrot.lane.b32.xlu0 %v1121, 12
      %v1165 = vpop.permute.xlu0 %1164
      %1166 = vrot.lane.b32.xlu0 %v1122, 12
      %v1167 = vpop.permute.xlu0 %1166
      %1168 = vrot.lane.b32.xlu0 %v1123, 12
      %v1169 = vpop.permute.xlu0 %1168
      %1170 = vrot.lane.b32.xlu0 %v1124, 12
      %v1171 = vpop.permute.xlu0 %1170
      %1172 = vrot.lane.b32.xlu0 %v1125, 12
      %v1173 = vpop.permute.xlu0 %1172
      %vm1190 = vcmask 113760
      %1191 = vst.msk [vmem:[#allocation3] sm:$0xff] %vm1190, %v1143
      %1192 = vst.msk [vmem:[#allocation3 + $0x8] sm:$0xff] %vm1190, %v1145
      %1193 = vst.msk [vmem:[#allocation3 + $0x10] sm:$0xff] %vm1190, %v1147
      %1194 = vst.msk [vmem:[#allocation3 + $0x18] sm:$0xff] %vm1190, %v1149
      %1195 = vst.msk [vmem:[#allocation3 + $0x20] sm:$0xff] %vm1190, %v1151
      %1196 = vst.msk [vmem:[#allocation3 + $0x28] sm:$0xff] %vm1190, %v1153
      %1197 = vst.msk [vmem:[#allocation3 + $0x30] sm:$0xff] %vm1190, %v1155
      %1198 = vst.msk [vmem:[#allocation3 + $0x38] sm:$0xff] %vm1190, %v1157
      %1199 = vst.msk [vmem:[#allocation3 + $0x40] sm:$0xff] %vm1190, %v1159
      %1200 = vst.msk [vmem:[#allocation3 + $0x48] sm:$0xff] %vm1190, %v1161
      %1201 = vst.msk [vmem:[#allocation3 + $0x50] sm:$0xff] %vm1190, %v1163
      %1202 = vst.msk [vmem:[#allocation3 + $0x58] sm:$0xff] %vm1190, %v1165
      %1203 = vst.msk [vmem:[#allocation3 + $0x60] sm:$0xff] %vm1190, %v1167
      %1204 = vst.msk [vmem:[#allocation3 + $0x68] sm:$0xff] %vm1190, %v1169
      %1205 = vst.msk [vmem:[#allocation3 + $0x70] sm:$0xff] %vm1190, %v1171
      %1206 = vst.msk [vmem:[#allocation3 + $0x78] sm:$0xff] %vm1190, %v1173
      %v1207 = vld [vmem:[%s1077 + $0x1] sm:$0xff]
      %v1208 = vld [vmem:[%s1077 + $0x9] sm:$0xff]
      %v1209 = vld [vmem:[%s1077 + $0x19] sm:$0xff]
      %v1210 = vld [vmem:[%s1077 + $0x21] sm:$0xff]
      %v1211 = vld [vmem:[%s1077 + $0x31] sm:$0xff]
      %v1212 = vld [vmem:[%s1077 + $0x39] sm:$0xff]
      %v1213 = vld [vmem:[%s1077 + $0x49] sm:$0xff]
      %v1214 = vld [vmem:[%s1077 + $0x51] sm:$0xff]
      %v1215 = vld [vmem:[%s1077 + $0x61] sm:$0xff]
      %v1216 = vld [vmem:[%s1077 + $0x69] sm:$0xff]
      %v1217 = vld [vmem:[%s1077 + $0x79] sm:$0xff]
      %v1218 = vld [vmem:[%s1077 + $0x81] sm:$0xff]
      %v1219 = vld [vmem:[%s1077 + $0x91] sm:$0xff]
      %v1220 = vld [vmem:[%s1077 + $0x99] sm:$0xff]
      %v1221 = vld [vmem:[%s1077 + $0xa9] sm:$0xff]
      %v1222 = vld [vmem:[%s1077 + $0xb1] sm:$0xff]
      %v1223 = vld [vmem:[%s1077 + $0xc1] sm:$0xff]
      %v1224 = vld [vmem:[%s1077 + $0xc9] sm:$0xff]
      %v1225 = vld [vmem:[%s1077 + $0xd9] sm:$0xff]
      %v1226 = vld [vmem:[%s1077 + $0xe1] sm:$0xff]
      %v1227 = vld [vmem:[%s1077 + $0xf1] sm:$0xff]
      %v1228 = vld [vmem:[%s1077 + $0xf9] sm:$0xff]
      %v1229 = vld [vmem:[%s1077 + $0x109] sm:$0xff]
      %v1230 = vld [vmem:[%s1077 + $0x111] sm:$0xff]
      %v1231 = vld [vmem:[%s1077 + $0x121] sm:$0xff]
      %v1232 = vld [vmem:[%s1077 + $0x129] sm:$0xff]
      %v1233 = vld [vmem:[%s1077 + $0x139] sm:$0xff]
      %v1234 = vld [vmem:[%s1077 + $0x141] sm:$0xff]
      %v1235 = vld [vmem:[%s1077 + $0x151] sm:$0xff]
      %v1236 = vld [vmem:[%s1077 + $0x159] sm:$0xff]
      %v1237 = vld [vmem:[%s1077 + $0x169] sm:$0xff]
      %v1238 = vld [vmem:[%s1077 + $0x171] sm:$0xff]
      %v1239 = vpack.c.bf16 %v1208, %v1207
      %v1240 = vpack.c.bf16 %v1210, %v1209
      %v1241 = vpack.c.bf16 %v1212, %v1211
      %v1242 = vpack.c.bf16 %v1214, %v1213
      %v1243 = vpack.c.bf16 %v1216, %v1215
      %v1244 = vpack.c.bf16 %v1218, %v1217
      %v1245 = vpack.c.bf16 %v1220, %v1219
      %v1246 = vpack.c.bf16 %v1222, %v1221
      %v1247 = vpack.c.bf16 %v1224, %v1223
      %v1248 = vpack.c.bf16 %v1226, %v1225
      %v1249 = vpack.c.bf16 %v1228, %v1227
      %v1250 = vpack.c.bf16 %v1230, %v1229
      %v1251 = vpack.c.bf16 %v1232, %v1231
      %v1252 = vpack.c.bf16 %v1234, %v1233
      %v1253 = vpack.c.bf16 %v1236, %v1235
      %v1254 = vpack.c.bf16 %v1238, %v1237
      %1271 = vrot.lane.b32.xlu0 %v1239, 14
      %v1272 = vpop.permute.xlu0 %1271
      %1273 = vrot.lane.b32.xlu0 %v1240, 14
      %v1274 = vpop.permute.xlu0 %1273
      %1275 = vrot.lane.b32.xlu0 %v1241, 14
      %v1276 = vpop.permute.xlu0 %1275
      %1277 = vrot.lane.b32.xlu0 %v1242, 14
      %v1278 = vpop.permute.xlu0 %1277
      %1279 = vrot.lane.b32.xlu0 %v1243, 14
      %v1280 = vpop.permute.xlu0 %1279
      %1281 = vrot.lane.b32.xlu0 %v1244, 14
      %v1282 = vpop.permute.xlu0 %1281
      %1283 = vrot.lane.b32.xlu0 %v1245, 14
      %v1284 = vpop.permute.xlu0 %1283
      %1285 = vrot.lane.b32.xlu0 %v1246, 14
      %v1286 = vpop.permute.xlu0 %1285
      %1287 = vrot.lane.b32.xlu0 %v1247, 14
      %v1288 = vpop.permute.xlu0 %1287
      %1289 = vrot.lane.b32.xlu0 %v1248, 14
      %v1290 = vpop.permute.xlu0 %1289
      %1291 = vrot.lane.b32.xlu0 %v1249, 14
      %v1292 = vpop.permute.xlu0 %1291
      %1293 = vrot.lane.b32.xlu0 %v1250, 14
      %v1294 = vpop.permute.xlu0 %1293
      %1295 = vrot.lane.b32.xlu0 %v1251, 14
      %v1296 = vpop.permute.xlu0 %1295
      %1297 = vrot.lane.b32.xlu0 %v1252, 14
      %v1298 = vpop.permute.xlu0 %1297
      %1299 = vrot.lane.b32.xlu0 %v1253, 14
      %v1300 = vpop.permute.xlu0 %1299
      %1301 = vrot.lane.b32.xlu0 %v1254, 14
      %v1302 = vpop.permute.xlu0 %1301
      %vm1319 = vcmask 130160
      %1320 = vst.msk [vmem:[#allocation3] sm:$0xff] %vm1319, %v1272
      %1321 = vst.msk [vmem:[#allocation3 + $0x8] sm:$0xff] %vm1319, %v1274
      %1322 = vst.msk [vmem:[#allocation3 + $0x10] sm:$0xff] %vm1319, %v1276
      %1323 = vst.msk [vmem:[#allocation3 + $0x18] sm:$0xff] %vm1319, %v1278
      %1324 = vst.msk [vmem:[#allocation3 + $0x20] sm:$0xff] %vm1319, %v1280
      %1325 = vst.msk [vmem:[#allocation3 + $0x28] sm:$0xff] %vm1319, %v1282
      %1326 = vst.msk [vmem:[#allocation3 + $0x30] sm:$0xff] %vm1319, %v1284
      %1327 = vst.msk [vmem:[#allocation3 + $0x38] sm:$0xff] %vm1319, %v1286
      %1328 = vst.msk [vmem:[#allocation3 + $0x40] sm:$0xff] %vm1319, %v1288
      %1329 = vst.msk [vmem:[#allocation3 + $0x48] sm:$0xff] %vm1319, %v1290
      %1330 = vst.msk [vmem:[#allocation3 + $0x50] sm:$0xff] %vm1319, %v1292
      %1331 = vst.msk [vmem:[#allocation3 + $0x58] sm:$0xff] %vm1319, %v1294
      %1332 = vst.msk [vmem:[#allocation3 + $0x60] sm:$0xff] %vm1319, %v1296
      %1333 = vst.msk [vmem:[#allocation3 + $0x68] sm:$0xff] %vm1319, %v1298
      %1334 = vst.msk [vmem:[#allocation3 + $0x70] sm:$0xff] %vm1319, %v1300
      %1335 = vst.msk [vmem:[#allocation3 + $0x78] sm:$0xff] %vm1319, %v1302
      %v1336 = vld [vmem:[%s1077 + $0x2] sm:$0xff]
      %v1337 = vld [vmem:[%s1077 + $0xa] sm:$0xff]
      %v1338 = vld [vmem:[%s1077 + $0x1a] sm:$0xff]
      %v1339 = vld [vmem:[%s1077 + $0x22] sm:$0xff]
      %v1340 = vld [vmem:[%s1077 + $0x32] sm:$0xff]
      %v1341 = vld [vmem:[%s1077 + $0x3a] sm:$0xff]
      %v1342 = vld [vmem:[%s1077 + $0x4a] sm:$0xff]
      %v1343 = vld [vmem:[%s1077 + $0x52] sm:$0xff]
      %v1344 = vld [vmem:[%s1077 + $0x62] sm:$0xff]
      %v1345 = vld [vmem:[%s1077 + $0x6a] sm:$0xff]
      %v1346 = vld [vmem:[%s1077 + $0x7a] sm:$0xff]
      %v1347 = vld [vmem:[%s1077 + $0x82] sm:$0xff]
      %v1348 = vld [vmem:[%s1077 + $0x92] sm:$0xff]
      %v1349 = vld [vmem:[%s1077 + $0x9a] sm:$0xff]
      %v1350 = vld [vmem:[%s1077 + $0xaa] sm:$0xff]
      %v1351 = vld [vmem:[%s1077 + $0xb2] sm:$0xff]
      %v1352 = vld [vmem:[%s1077 + $0xc2] sm:$0xff]
      %v1353 = vld [vmem:[%s1077 + $0xca] sm:$0xff]
      %v1354 = vld [vmem:[%s1077 + $0xda] sm:$0xff]
      %v1355 = vld [vmem:[%s1077 + $0xe2] sm:$0xff]
      %v1356 = vld [vmem:[%s1077 + $0xf2] sm:$0xff]
      %v1357 = vld [vmem:[%s1077 + $0xfa] sm:$0xff]
      %v1358 = vld [vmem:[%s1077 + $0x10a] sm:$0xff]
      %v1359 = vld [vmem:[%s1077 + $0x112] sm:$0xff]
      %v1360 = vld [vmem:[%s1077 + $0x122] sm:$0xff]
      %v1361 = vld [vmem:[%s1077 + $0x12a] sm:$0xff]
      %v1362 = vld [vmem:[%s1077 + $0x13a] sm:$0xff]
      %v1363 = vld [vmem:[%s1077 + $0x142] sm:$0xff]
      %v1364 = vld [vmem:[%s1077 + $0x152] sm:$0xff]
      %v1365 = vld [vmem:[%s1077 + $0x15a] sm:$0xff]
      %v1366 = vld [vmem:[%s1077 + $0x16a] sm:$0xff]
      %v1367 = vld [vmem:[%s1077 + $0x172] sm:$0xff]
      %v1368 = vpack.c.bf16 %v1337, %v1336
      %v1369 = vpack.c.bf16 %v1339, %v1338
      %v1370 = vpack.c.bf16 %v1341, %v1340
      %v1371 = vpack.c.bf16 %v1343, %v1342
      %v1372 = vpack.c.bf16 %v1345, %v1344
      %v1373 = vpack.c.bf16 %v1347, %v1346
      %v1374 = vpack.c.bf16 %v1349, %v1348
      %v1375 = vpack.c.bf16 %v1351, %v1350
      %v1376 = vpack.c.bf16 %v1353, %v1352
      %v1377 = vpack.c.bf16 %v1355, %v1354
      %v1378 = vpack.c.bf16 %v1357, %v1356
      %v1379 = vpack.c.bf16 %v1359, %v1358
      %v1380 = vpack.c.bf16 %v1361, %v1360
      %v1381 = vpack.c.bf16 %v1363, %v1362
      %v1382 = vpack.c.bf16 %v1365, %v1364
      %v1383 = vpack.c.bf16 %v1367, %v1366
      %1400 = vrot.lane.b32.xlu0 %v1368, 16
      %v1401 = vpop.permute.xlu0 %1400
      %1402 = vrot.lane.b32.xlu0 %v1369, 16
      %v1403 = vpop.permute.xlu0 %1402
      %1404 = vrot.lane.b32.xlu0 %v1370, 16
      %v1405 = vpop.permute.xlu0 %1404
      %1406 = vrot.lane.b32.xlu0 %v1371, 16
      %v1407 = vpop.permute.xlu0 %1406
      %1408 = vrot.lane.b32.xlu0 %v1372, 16
      %v1409 = vpop.permute.xlu0 %1408
      %1410 = vrot.lane.b32.xlu0 %v1373, 16
      %v1411 = vpop.permute.xlu0 %1410
      %1412 = vrot.lane.b32.xlu0 %v1374, 16
      %v1413 = vpop.permute.xlu0 %1412
      %1414 = vrot.lane.b32.xlu0 %v1375, 16
      %v1415 = vpop.permute.xlu0 %1414
      %1416 = vrot.lane.b32.xlu0 %v1376, 16
      %v1417 = vpop.permute.xlu0 %1416
      %1418 = vrot.lane.b32.xlu0 %v1377, 16
      %v1419 = vpop.permute.xlu0 %1418
      %1420 = vrot.lane.b32.xlu0 %v1378, 16
      %v1421 = vpop.permute.xlu0 %1420
      %1422 = vrot.lane.b32.xlu0 %v1379, 16
      %v1423 = vpop.permute.xlu0 %1422
      %1424 = vrot.lane.b32.xlu0 %v1380, 16
      %v1425 = vpop.permute.xlu0 %1424
      %1426 = vrot.lane.b32.xlu0 %v1381, 16
      %v1427 = vpop.permute.xlu0 %1426
      %1428 = vrot.lane.b32.xlu0 %v1382, 16
      %v1429 = vpop.permute.xlu0 %1428
      %1430 = vrot.lane.b32.xlu0 %v1383, 16
      %v1431 = vpop.permute.xlu0 %1430
      %vm1448 = vcmask 146560
      %1449 = vst.msk [vmem:[#allocation3] sm:$0xff] %vm1448, %v1401
      %1450 = vst.msk [vmem:[#allocation3 + $0x8] sm:$0xff] %vm1448, %v1403
      %1451 = vst.msk [vmem:[#allocation3 + $0x10] sm:$0xff] %vm1448, %v1405
      %1452 = vst.msk [vmem:[#allocation3 + $0x18] sm:$0xff] %vm1448, %v1407
      %1453 = vst.msk [vmem:[#allocation3 + $0x20] sm:$0xff] %vm1448, %v1409
      %1454 = vst.msk [vmem:[#allocation3 + $0x28] sm:$0xff] %vm1448, %v1411
      %1455 = vst.msk [vmem:[#allocation3 + $0x30] sm:$0xff] %vm1448, %v1413
      %1456 = vst.msk [vmem:[#allocation3 + $0x38] sm:$0xff] %vm1448, %v1415
      %1457 = vst.msk [vmem:[#allocation3 + $0x40] sm:$0xff] %vm1448, %v1417
      %1458 = vst.msk [vmem:[#allocation3 + $0x48] sm:$0xff] %vm1448, %v1419
      %1459 = vst.msk [vmem:[#allocation3 + $0x50] sm:$0xff] %vm1448, %v1421
      %1460 = vst.msk [vmem:[#allocation3 + $0x58] sm:$0xff] %vm1448, %v1423
      %1461 = vst.msk [vmem:[#allocation3 + $0x60] sm:$0xff] %vm1448, %v1425
      %1462 = vst.msk [vmem:[#allocation3 + $0x68] sm:$0xff] %vm1448, %v1427
      %1463 = vst.msk [vmem:[#allocation3 + $0x70] sm:$0xff] %vm1448, %v1429
      %1464 = vst.msk [vmem:[#allocation3 + $0x78] sm:$0xff] %vm1448, %v1431
      %v1465 = vld [vmem:[#allocation3] sm:$0xff]
      %v1466 = vld [vmem:[#allocation3 + $0x8] sm:$0xff]
      %v1467 = vld [vmem:[#allocation3 + $0x10] sm:$0xff]
      %v1468 = vld [vmem:[#allocation3 + $0x18] sm:$0xff]
      %v1469 = vld [vmem:[#allocation3 + $0x20] sm:$0xff]
      %v1470 = vld [vmem:[#allocation3 + $0x28] sm:$0xff]
      %v1471 = vld [vmem:[#allocation3 + $0x30] sm:$0xff]
      %v1472 = vld [vmem:[#allocation3 + $0x38] sm:$0xff]
      %v1473 = vld [vmem:[#allocation3 + $0x40] sm:$0xff]
      %v1474 = vld [vmem:[#allocation3 + $0x48] sm:$0xff]
      %v1475 = vld [vmem:[#allocation3 + $0x50] sm:$0xff]
      %v1476 = vld [vmem:[#allocation3 + $0x58] sm:$0xff]
      %v1477 = vld [vmem:[#allocation3 + $0x60] sm:$0xff]
      %v1478 = vld [vmem:[#allocation3 + $0x68] sm:$0xff]
      %v1479 = vld [vmem:[#allocation3 + $0x70] sm:$0xff]
      %v1480 = vld [vmem:[#allocation3 + $0x78] sm:$0xff]
      %v1481 = vld [vmem:[%s1] sm:$0xf]
      %v1482 = vld [vmem:[%s1 + $0x4] sm:$0xf]
      %v1483 = vld [vmem:[%s1 + $0x8] sm:$0x1]
      %v1484 = vld [vmem:[%s2] sm:$0x1]
      %v1486 = vlaneseq
      %v1487 = vshrl.u32 %v1486, 7
      %v1488 = vsub.s32 0, %v1487
      %v1489 = vrot.slane %v1484, %v1488
      %v1494 = vunpack.c.l.b16 %v1481
      %v1495 = vunpack.c.l.b16 %v1482
      %v1496 = vunpack.c.l.b16 %v1483
      %v1497 = vpack.c.b16 %v1495, %v1494
      %v1498 = vpack.c.b16 %v1496, %v1496
      %vm1500 = vcmask 146432
      %v1502 = vsel %vm1500, %v1465, 0
      %v1505 = vsel %vm1500, %v1466, 0
      %v1508 = vsel %vm1500, %v1467, 0
      %v1511 = vsel %vm1500, %v1468, 0
      %v1514 = vsel %vm1500, %v1469, 0
      %v1517 = vsel %vm1500, %v1470, 0
      %v1520 = vsel %vm1500, %v1471, 0
      %v1523 = vsel %vm1500, %v1472, 0
      %v1526 = vsel %vm1500, %v1473, 0
      %v1529 = vsel %vm1500, %v1474, 0
      %v1532 = vsel %vm1500, %v1475, 0
      %v1535 = vsel %vm1500, %v1476, 0
      %v1538 = vsel %vm1500, %v1477, 0
      %v1541 = vsel %vm1500, %v1478, 0
      %v1544 = vsel %vm1500, %v1479, 0
      %v1547 = vsel %vm1500, %v1480, 0
      %vm1549 = vcmask 1040384
      %v1551 = vsel %vm1549, %v1498, 0
      %1553 = vmatprep.subr.bf16.mxu0 0
      %1554 = vmatpush1.bf16.msra.mxu0 %v1497
      %1555 = vmatprep.subr.bf16.mxu0 0
      %1556 = vmatpush1.bf16.msra.mxu0 %v1551
      %1557 = vmatprep.subr.bf16.mxu0 0
      %1558 = vmatpush1.bf16.msra.mxu0 0
      %1559 = vmatprep.subr.bf16.mxu0 0
      %1560 = vmatpush1.bf16.msra.mxu0 0
      %1561 = vmatprep.subr.bf16.mxu0 0
      %1562 = vmatpush1.bf16.msra.mxu0 0
      %1563 = vmatprep.subr.bf16.mxu0 0
      %1564 = vmatpush1.bf16.msra.mxu0 0
      %1565 = vmatprep.subr.bf16.mxu0 0
      %1566 = vmatpush1.bf16.msra.mxu0 0
      %1567 = vmatprep.subr.bf16.mxu0 0
      %1568 = vmatpush1.bf16.msra.mxu0 0
      %1569 = vmatprep.subr.bf16.mxu0 0
      %1570 = vmatpush1.bf16.msra.mxu0 0
      %1571 = vmatprep.subr.bf16.mxu0 0
      %1572 = vmatpush1.bf16.msra.mxu0 0
      %1573 = vmatprep.subr.bf16.mxu0 0
      %1574 = vmatpush1.bf16.msra.mxu0 0
      %1575 = vmatprep.subr.bf16.mxu0 0
      %1576 = vmatpush1.bf16.msra.mxu0 0
      %1577 = vmatprep.subr.bf16.mxu0 0
      %1578 = vmatpush1.bf16.msra.mxu0 0
      %1579 = vmatprep.subr.bf16.mxu0 0
      %1580 = vmatpush1.bf16.msra.mxu0 0
      %1581 = vmatprep.subr.bf16.mxu0 0
      %1582 = vmatpush1.bf16.msra.mxu0 0
      %1583 = vmatprep.subr.bf16.mxu0 0
      %1584 = vmatpush1.bf16.msra.mxu0 0
      %1585 = vmatprep.mubr.bf16.mxu0 0
      %1586 = vmatmul.mubr.bf16.gmra.mrb[0].mxu0 %v1502
      %v1587 = vpop.f32.mrb[0].mxu0
      %v1588 = vadd.f32 %v1489, %v1587
      %v1589 = vpop.f32.mrb[0].mxu0
      %v1590 = vpop.f32.mrb[0].mxu0
      %v1591 = vadd.f32 %v1489, %v1590
      %v1592 = vpop.f32.mrb[0].mxu0
      %1593 = vmatprep.mubr.bf16.mxu0 0
      %1594 = vmatmul.mubr.bf16.gmra.mrb[0].mxu0 %v1505
      %v1595 = vpop.f32.mrb[0].mxu0
      %v1596 = vadd.f32 %v1489, %v1595
      %v1597 = vpop.f32.mrb[0].mxu0
      %v1598 = vpop.f32.mrb[0].mxu0
      %v1599 = vadd.f32 %v1489, %v1598
      %v1600 = vpop.f32.mrb[0].mxu0
      %1601 = vmatprep.mubr.bf16.mxu0 0
      %1602 = vmatmul.mubr.bf16.gmra.mrb[0].mxu0 %v1508
      %v1603 = vpop.f32.mrb[0].mxu0
      %v1604 = vadd.f32 %v1489, %v1603
      %v1605 = vpop.f32.mrb[0].mxu0
      %v1606 = vpop.f32.mrb[0].mxu0
      %v1607 = vadd.f32 %v1489, %v1606
      %v1608 = vpop.f32.mrb[0].mxu0
      %1609 = vmatprep.mubr.bf16.mxu0 0
      %1610 = vmatmul.mubr.bf16.gmra.mrb[0].mxu0 %v1511
      %v1611 = vpop.f32.mrb[0].mxu0
      %v1612 = vadd.f32 %v1489, %v1611
      %v1613 = vpop.f32.mrb[0].mxu0
      %v1614 = vpop.f32.mrb[0].mxu0
      %v1615 = vadd.f32 %v1489, %v1614
      %v1616 = vpop.f32.mrb[0].mxu0
      %1617 = vmatprep.mubr.bf16.mxu0 0
      %1618 = vmatmul.mubr.bf16.gmra.mrb[0].mxu0 %v1514
      %v1619 = vpop.f32.mrb[0].mxu0
      %v1620 = vadd.f32 %v1489, %v1619
      %v1621 = vpop.f32.mrb[0].mxu0
      %v1622 = vpop.f32.mrb[0].mxu0
      %v1623 = vadd.f32 %v1489, %v1622
      %v1624 = vpop.f32.mrb[0].mxu0
      %1625 = vmatprep.mubr.bf16.mxu0 0
      %1626 = vmatmul.mubr.bf16.gmra.mrb[0].mxu0 %v1517
      %v1627 = vpop.f32.mrb[0].mxu0
      %v1628 = vadd.f32 %v1489, %v1627
      %v1629 = vpop.f32.mrb[0].mxu0
      %v1630 = vpop.f32.mrb[0].mxu0
      %v1631 = vadd.f32 %v1489, %v1630
      %v1632 = vpop.f32.mrb[0].mxu0
      %1633 = vmatprep.mubr.bf16.mxu0 0
      %1634 = vmatmul.mubr.bf16.gmra.mrb[0].mxu0 %v1520
      %v1635 = vpop.f32.mrb[0].mxu0
      %v1636 = vadd.f32 %v1489, %v1635
      %v1637 = vpop.f32.mrb[0].mxu0
      %v1638 = vpop.f32.mrb[0].mxu0
      %v1639 = vadd.f32 %v1489, %v1638
      %v1640 = vpop.f32.mrb[0].mxu0
      %1641 = vmatprep.mubr.bf16.mxu0 0
      %1642 = vmatmul.mubr.bf16.gmra.mrb[0].mxu0 %v1523
      %v1643 = vpop.f32.mrb[0].mxu0
      %v1644 = vadd.f32 %v1489, %v1643
      %v1645 = vpop.f32.mrb[0].mxu0
      %v1646 = vpop.f32.mrb[0].mxu0
      %v1647 = vadd.f32 %v1489, %v1646
      %v1648 = vpop.f32.mrb[0].mxu0
      %1649 = vmatprep.mubr.bf16.mxu0 0
      %1650 = vmatmul.mubr.bf16.gmra.mrb[0].mxu0 %v1526
      %v1651 = vpop.f32.mrb[0].mxu0
      %v1652 = vadd.f32 %v1489, %v1651
      %v1653 = vpop.f32.mrb[0].mxu0
      %v1654 = vpop.f32.mrb[0].mxu0
      %v1655 = vadd.f32 %v1489, %v1654
      %v1656 = vpop.f32.mrb[0].mxu0
      %1657 = vmatprep.mubr.bf16.mxu0 0
      %1658 = vmatmul.mubr.bf16.gmra.mrb[0].mxu0 %v1529
      %v1659 = vpop.f32.mrb[0].mxu0
      %v1660 = vadd.f32 %v1489, %v1659
      %v1661 = vpop.f32.mrb[0].mxu0
      %v1662 = vpop.f32.mrb[0].mxu0
      %v1663 = vadd.f32 %v1489, %v1662
      %v1664 = vpop.f32.mrb[0].mxu0
      %1665 = vmatprep.mubr.bf16.mxu0 0
      %1666 = vmatmul.mubr.bf16.gmra.mrb[0].mxu0 %v1532
      %v1667 = vpop.f32.mrb[0].mxu0
      %v1668 = vadd.f32 %v1489, %v1667
      %v1669 = vpop.f32.mrb[0].mxu0
      %v1670 = vpop.f32.mrb[0].mxu0
      %v1671 = vadd.f32 %v1489, %v1670
      %v1672 = vpop.f32.mrb[0].mxu0
      %1673 = vmatprep.mubr.bf16.mxu0 0
      %1674 = vmatmul.mubr.bf16.gmra.mrb[0].mxu0 %v1535
      %v1675 = vpop.f32.mrb[0].mxu0
      %v1676 = vadd.f32 %v1489, %v1675
      %v1677 = vpop.f32.mrb[0].mxu0
      %v1678 = vpop.f32.mrb[0].mxu0
      %v1679 = vadd.f32 %v1489, %v1678
      %v1680 = vpop.f32.mrb[0].mxu0
      %1681 = vmatprep.mubr.bf16.mxu0 0
      %1682 = vmatmul.mubr.bf16.gmra.mrb[0].mxu0 %v1538
      %v1683 = vpop.f32.mrb[0].mxu0
      %v1684 = vadd.f32 %v1489, %v1683
      %v1685 = vpop.f32.mrb[0].mxu0
      %v1686 = vpop.f32.mrb[0].mxu0
      %v1687 = vadd.f32 %v1489, %v1686
      %v1688 = vpop.f32.mrb[0].mxu0
      %1689 = vmatprep.mubr.bf16.mxu0 0
      %1690 = vmatmul.mubr.bf16.gmra.mrb[0].mxu0 %v1541
      %v1691 = vpop.f32.mrb[0].mxu0
      %v1692 = vadd.f32 %v1489, %v1691
      %v1693 = vpop.f32.mrb[0].mxu0
      %v1694 = vpop.f32.mrb[0].mxu0
      %v1695 = vadd.f32 %v1489, %v1694
      %v1696 = vpop.f32.mrb[0].mxu0
      %1697 = vmatprep.mubr.bf16.mxu0 0
      %1698 = vmatmul.mubr.bf16.gmra.mrb[0].mxu0 %v1544
      %v1699 = vpop.f32.mrb[0].mxu0
      %v1700 = vadd.f32 %v1489, %v1699
      %v1701 = vpop.f32.mrb[0].mxu0
      %v1702 = vpop.f32.mrb[0].mxu0
      %v1703 = vadd.f32 %v1489, %v1702
      %v1704 = vpop.f32.mrb[0].mxu0
      %1705 = vmatprep.mubr.bf16.mxu0 0
      %1706 = vmatmul.mubr.bf16.gmra.mrb[0].mxu0 %v1547
      %v1707 = vpop.f32.mrb[0].mxu0
      %v1708 = vadd.f32 %v1489, %v1707
      %v1709 = vpop.f32.mrb[0].mxu0
      %v1710 = vpop.f32.mrb[0].mxu0
      %v1711 = vadd.f32 %v1489, %v1710
      %v1712 = vpop.f32.mrb[0].mxu0
      %1713 = vdwg.mxu0
      %v1714 = vsub.f32 0.0, %v1588
      %v1715 = vsub.f32 0.0, %v1591
      %v1716 = vsub.f32 0.0, %v1596
      %v1717 = vsub.f32 0.0, %v1599
      %v1718 = vsub.f32 0.0, %v1604
      %v1719 = vsub.f32 0.0, %v1607
      %v1720 = vsub.f32 0.0, %v1612
      %v1721 = vsub.f32 0.0, %v1615
      %v1722 = vsub.f32 0.0, %v1620
      %v1723 = vsub.f32 0.0, %v1623
      %v1724 = vsub.f32 0.0, %v1628
      %v1725 = vsub.f32 0.0, %v1631
      %v1726 = vsub.f32 0.0, %v1636
      %v1727 = vsub.f32 0.0, %v1639
      %v1728 = vsub.f32 0.0, %v1644
      %v1729 = vsub.f32 0.0, %v1647
      %v1730 = vsub.f32 0.0, %v1652
      %v1731 = vsub.f32 0.0, %v1655
      %v1732 = vsub.f32 0.0, %v1660
      %v1733 = vsub.f32 0.0, %v1663
      %v1734 = vsub.f32 0.0, %v1668
      %v1735 = vsub.f32 0.0, %v1671
      %v1736 = vsub.f32 0.0, %v1676
      %v1737 = vsub.f32 0.0, %v1679
      %v1738 = vsub.f32 0.0, %v1684
      %v1739 = vsub.f32 0.0, %v1687
      %v1740 = vsub.f32 0.0, %v1692
      %v1741 = vsub.f32 0.0, %v1695
      %v1742 = vsub.f32 0.0, %v1700
      %v1743 = vsub.f32 0.0, %v1703
      %v1744 = vsub.f32 0.0, %v1708
      %v1745 = vsub.f32 0.0, %v1711
      %v1746 = vmul.f32 %v1714, 1.442695
      %v1747 = vpow.pop %v1746
      %v1748 = vmul.f32 %v1715, 1.442695
      %v1749 = vpow.pop %v1748
      %v1750 = vmul.f32 %v1716, 1.442695
      %v1751 = vpow.pop %v1750
      %v1752 = vmul.f32 %v1717, 1.442695
      %v1753 = vpow.pop %v1752
      %v1754 = vmul.f32 %v1718, 1.442695
      %v1755 = vpow.pop %v1754
      %v1756 = vmul.f32 %v1719, 1.442695
      %v1757 = vpow.pop %v1756
      %v1758 = vmul.f32 %v1720, 1.442695
      %v1759 = vpow.pop %v1758
      %v1760 = vmul.f32 %v1721, 1.442695
      %v1761 = vpow.pop %v1760
      %v1762 = vmul.f32 %v1722, 1.442695
      %v1763 = vpow.pop %v1762
      %v1764 = vmul.f32 %v1723, 1.442695
      %v1765 = vpow.pop %v1764
      %v1766 = vmul.f32 %v1724, 1.442695
      %v1767 = vpow.pop %v1766
      %v1768 = vmul.f32 %v1725, 1.442695
      %v1769 = vpow.pop %v1768
      %v1770 = vmul.f32 %v1726, 1.442695
      %v1771 = vpow.pop %v1770
      %v1772 = vmul.f32 %v1727, 1.442695
      %v1773 = vpow.pop %v1772
      %v1774 = vmul.f32 %v1728, 1.442695
      %v1775 = vpow.pop %v1774
      %v1776 = vmul.f32 %v1729, 1.442695
      %v1777 = vpow.pop %v1776
      %v1778 = vmul.f32 %v1730, 1.442695
      %v1779 = vpow.pop %v1778
      %v1780 = vmul.f32 %v1731, 1.442695
      %v1781 = vpow.pop %v1780
      %v1782 = vmul.f32 %v1732, 1.442695
      %v1783 = vpow.pop %v1782
      %v1784 = vmul.f32 %v1733, 1.442695
      %v1785 = vpow.pop %v1784
      %v1786 = vmul.f32 %v1734, 1.442695
      %v1787 = vpow.pop %v1786
      %v1788 = vmul.f32 %v1735, 1.442695
      %v1789 = vpow.pop %v1788
      %v1790 = vmul.f32 %v1736, 1.442695
      %v1791 = vpow.pop %v1790
      %v1792 = vmul.f32 %v1737, 1.442695
      %v1793 = vpow.pop %v1792
      %v1794 = vmul.f32 %v1738, 1.442695
      %v1795 = vpow.pop %v1794
      %v1796 = vmul.f32 %v1739, 1.442695
      %v1797 = vpow.pop %v1796
      %v1798 = vmul.f32 %v1740, 1.442695
      %v1799 = vpow.pop %v1798
      %v1800 = vmul.f32 %v1741, 1.442695
      %v1801 = vpow.pop %v1800
      %v1802 = vmul.f32 %v1742, 1.442695
      %v1803 = vpow.pop %v1802
      %v1804 = vmul.f32 %v1743, 1.442695
      %v1805 = vpow.pop %v1804
      %v1806 = vmul.f32 %v1744, 1.442695
      %v1807 = vpow.pop %v1806
      %v1808 = vmul.f32 %v1745, 1.442695
      %v1809 = vpow.pop %v1808
      %v1810 = vadd.f32 %v1747, 1.0
      %v1811 = vadd.f32 %v1749, 1.0
      %v1812 = vadd.f32 %v1751, 1.0
      %v1813 = vadd.f32 %v1753, 1.0
      %v1814 = vadd.f32 %v1755, 1.0
      %v1815 = vadd.f32 %v1757, 1.0
      %v1816 = vadd.f32 %v1759, 1.0
      %v1817 = vadd.f32 %v1761, 1.0
      %v1818 = vadd.f32 %v1763, 1.0
      %v1819 = vadd.f32 %v1765, 1.0
      %v1820 = vadd.f32 %v1767, 1.0
      %v1821 = vadd.f32 %v1769, 1.0
      %v1822 = vadd.f32 %v1771, 1.0
      %v1823 = vadd.f32 %v1773, 1.0
      %v1824 = vadd.f32 %v1775, 1.0
      %v1825 = vadd.f32 %v1777, 1.0
      %v1826 = vadd.f32 %v1779, 1.0
      %v1827 = vadd.f32 %v1781, 1.0
      %v1828 = vadd.f32 %v1783, 1.0
      %v1829 = vadd.f32 %v1785, 1.0
      %v1830 = vadd.f32 %v1787, 1.0
      %v1831 = vadd.f32 %v1789, 1.0
      %v1832 = vadd.f32 %v1791, 1.0
      %v1833 = vadd.f32 %v1793, 1.0
      %v1834 = vadd.f32 %v1795, 1.0
      %v1835 = vadd.f32 %v1797, 1.0
      %v1836 = vadd.f32 %v1799, 1.0
      %v1837 = vadd.f32 %v1801, 1.0
      %v1838 = vadd.f32 %v1803, 1.0
      %v1839 = vadd.f32 %v1805, 1.0
      %v1840 = vadd.f32 %v1807, 1.0
      %v1841 = vadd.f32 %v1809, 1.0
      %v1842 = vrcp.pop %v1810
      %v1843 = vrcp.pop %v1811
      %v1844 = vrcp.pop %v1812
      %v1845 = vrcp.pop %v1813
      %v1846 = vrcp.pop %v1814
      %v1847 = vrcp.pop %v1815
      %v1848 = vrcp.pop %v1816
      %v1849 = vrcp.pop %v1817
      %v1850 = vrcp.pop %v1818
      %v1851 = vrcp.pop %v1819
      %v1852 = vrcp.pop %v1820
      %v1853 = vrcp.pop %v1821
      %v1854 = vrcp.pop %v1822
      %v1855 = vrcp.pop %v1823
      %v1856 = vrcp.pop %v1824
      %v1857 = vrcp.pop %v1825
      %v1858 = vrcp.pop %v1826
      %v1859 = vrcp.pop %v1827
      %v1860 = vrcp.pop %v1828
      %v1861 = vrcp.pop %v1829
      %v1862 = vrcp.pop %v1830
      %v1863 = vrcp.pop %v1831
      %v1864 = vrcp.pop %v1832
      %v1865 = vrcp.pop %v1833
      %v1866 = vrcp.pop %v1834
      %v1867 = vrcp.pop %v1835
      %v1868 = vrcp.pop %v1836
      %v1869 = vrcp.pop %v1837
      %v1870 = vrcp.pop %v1838
      %v1871 = vrcp.pop %v1839
      %v1872 = vrcp.pop %v1840
      %v1873 = vrcp.pop %v1841
      %v1874 = vmul.f32 %v1588, %v1842
      %v1875 = vmul.f32 %v1591, %v1843
      %v1876 = vmul.f32 %v1596, %v1844
      %v1877 = vmul.f32 %v1599, %v1845
      %v1878 = vmul.f32 %v1604, %v1846
      %v1879 = vmul.f32 %v1607, %v1847
      %v1880 = vmul.f32 %v1612, %v1848
      %v1881 = vmul.f32 %v1615, %v1849
      %v1882 = vmul.f32 %v1620, %v1850
      %v1883 = vmul.f32 %v1623, %v1851
      %v1884 = vmul.f32 %v1628, %v1852
      %v1885 = vmul.f32 %v1631, %v1853
      %v1886 = vmul.f32 %v1636, %v1854
      %v1887 = vmul.f32 %v1639, %v1855
      %v1888 = vmul.f32 %v1644, %v1856
      %v1889 = vmul.f32 %v1647, %v1857
      %v1890 = vmul.f32 %v1652, %v1858
      %v1891 = vmul.f32 %v1655, %v1859
      %v1892 = vmul.f32 %v1660, %v1860
      %v1893 = vmul.f32 %v1663, %v1861
      %v1894 = vmul.f32 %v1668, %v1862
      %v1895 = vmul.f32 %v1671, %v1863
      %v1896 = vmul.f32 %v1676, %v1864
      %v1897 = vmul.f32 %v1679, %v1865
      %v1898 = vmul.f32 %v1684, %v1866
      %v1899 = vmul.f32 %v1687, %v1867
      %v1900 = vmul.f32 %v1692, %v1868
      %v1901 = vmul.f32 %v1695, %v1869
      %v1902 = vmul.f32 %v1700, %v1870
      %v1903 = vmul.f32 %v1703, %v1871
      %v1904 = vmul.f32 %v1708, %v1872
      %v1905 = vmul.f32 %v1711, %v1873
      %1906 = vst.msk [vmem:[%s238 + $0x1] sm:$0xff] %vm229, %v1874
      %1907 = vst.msk [vmem:[%s238 + $0x9] sm:$0xff] %vm229, %v1875
      %1908 = vst.msk [vmem:[%s238 + $0x19] sm:$0xff] %vm229, %v1876
      %1909 = vst.msk [vmem:[%s238 + $0x21] sm:$0xff] %vm229, %v1877
      %1910 = vst.msk [vmem:[%s238 + $0x31] sm:$0xff] %vm229, %v1878
      %1911 = vst.msk [vmem:[%s238 + $0x39] sm:$0xff] %vm229, %v1879
      %1912 = vst.msk [vmem:[%s238 + $0x49] sm:$0xff] %vm229, %v1880
      %1913 = vst.msk [vmem:[%s238 + $0x51] sm:$0xff] %vm229, %v1881
      %1914 = vst.msk [vmem:[%s238 + $0x61] sm:$0xff] %vm229, %v1882
      %1915 = vst.msk [vmem:[%s238 + $0x69] sm:$0xff] %vm229, %v1883
      %1916 = vst.msk [vmem:[%s238 + $0x79] sm:$0xff] %vm229, %v1884
      %1917 = vst.msk [vmem:[%s238 + $0x81] sm:$0xff] %vm229, %v1885
      %1918 = vst.msk [vmem:[%s238 + $0x91] sm:$0xff] %vm229, %v1886
      %1919 = vst.msk [vmem:[%s238 + $0x99] sm:$0xff] %vm229, %v1887
      %1920 = vst.msk [vmem:[%s238 + $0xa9] sm:$0xff] %vm229, %v1888
      %1921 = vst.msk [vmem:[%s238 + $0xb1] sm:$0xff] %vm229, %v1889
      %1922 = vst.msk [vmem:[%s238 + $0xc1] sm:$0xff] %vm229, %v1890
      %1923 = vst.msk [vmem:[%s238 + $0xc9] sm:$0xff] %vm229, %v1891
      %1924 = vst.msk [vmem:[%s238 + $0xd9] sm:$0xff] %vm229, %v1892
      %1925 = vst.msk [vmem:[%s238 + $0xe1] sm:$0xff] %vm229, %v1893
      %1926 = vst.msk [vmem:[%s238 + $0xf1] sm:$0xff] %vm229, %v1894
      %1927 = vst.msk [vmem:[%s238 + $0xf9] sm:$0xff] %vm229, %v1895
      %1928 = vst.msk [vmem:[%s238 + $0x109] sm:$0xff] %vm229, %v1896
      %1929 = vst.msk [vmem:[%s238 + $0x111] sm:$0xff] %vm229, %v1897
      %1930 = vst.msk [vmem:[%s238 + $0x121] sm:$0xff] %vm229, %v1898
      %1931 = vst.msk [vmem:[%s238 + $0x129] sm:$0xff] %vm229, %v1899
      %1932 = vst.msk [vmem:[%s238 + $0x139] sm:$0xff] %vm229, %v1900
      %1933 = vst.msk [vmem:[%s238 + $0x141] sm:$0xff] %vm229, %v1901
      %1934 = vst.msk [vmem:[%s238 + $0x151] sm:$0xff] %vm229, %v1902
      %1935 = vst.msk [vmem:[%s238 + $0x159] sm:$0xff] %vm229, %v1903
      %1936 = vst.msk [vmem:[%s238 + $0x169] sm:$0xff] %vm229, %v1904
      %1937 = vst.msk [vmem:[%s238 + $0x171] sm:$0xff] %vm229, %v1905
      %v1938 = vld [vmem:[#allocation2] sm:$0xff]
      %v1939 = vld [vmem:[#allocation2 + $0x8] sm:$0xff]
      %v1940 = vld [vmem:[#allocation2 + $0x18] sm:$0xff]
      %v1941 = vld [vmem:[#allocation2 + $0x20] sm:$0xff]
      %v1942 = vld [vmem:[#allocation2 + $0x30] sm:$0xff]
      %v1943 = vld [vmem:[#allocation2 + $0x38] sm:$0xff]
      %v1944 = vld [vmem:[#allocation2 + $0x48] sm:$0xff]
      %v1945 = vld [vmem:[#allocation2 + $0x50] sm:$0xff]
      %v1946 = vld [vmem:[#allocation2 + $0x60] sm:$0xff]
      %v1947 = vld [vmem:[#allocation2 + $0x68] sm:$0xff]
      %v1948 = vld [vmem:[#allocation2 + $0x78] sm:$0xff]
      %v1949 = vld [vmem:[#allocation2 + $0x80] sm:$0xff]
      %v1950 = vld [vmem:[#allocation2 + $0x90] sm:$0xff]
      %v1951 = vld [vmem:[#allocation2 + $0x98] sm:$0xff]
      %v1952 = vld [vmem:[#allocation2 + $0xa8] sm:$0xff]
      %v1953 = vld [vmem:[#allocation2 + $0xb0] sm:$0xff]
      %v1954 = vld [vmem:[#allocation2 + $0xc0] sm:$0xff]
      %v1955 = vld [vmem:[#allocation2 + $0xc8] sm:$0xff]
      %v1956 = vld [vmem:[#allocation2 + $0xd8] sm:$0xff]
      %v1957 = vld [vmem:[#allocation2 + $0xe0] sm:$0xff]
      %v1958 = vld [vmem:[#allocation2 + $0xf0] sm:$0xff]
      %v1959 = vld [vmem:[#allocation2 + $0xf8] sm:$0xff]
      %v1960 = vld [vmem:[#allocation2 + $0x108] sm:$0xff]
      %v1961 = vld [vmem:[#allocation2 + $0x110] sm:$0xff]
      %v1962 = vld [vmem:[#allocation2 + $0x120] sm:$0xff]
      %v1963 = vld [vmem:[#allocation2 + $0x128] sm:$0xff]
      %v1964 = vld [vmem:[#allocation2 + $0x138] sm:$0xff]
      %v1965 = vld [vmem:[#allocation2 + $0x140] sm:$0xff]
      %v1966 = vld [vmem:[#allocation2 + $0x150] sm:$0xff]
      %v1967 = vld [vmem:[#allocation2 + $0x158] sm:$0xff]
      %v1968 = vld [vmem:[#allocation2 + $0x168] sm:$0xff]
      %v1969 = vld [vmem:[#allocation2 + $0x170] sm:$0xff]
      %v1970 = vpack.c.bf16 %v1939, %v1938
      %v1971 = vpack.c.bf16 %v1941, %v1940
      %v1972 = vpack.c.bf16 %v1943, %v1942
      %v1973 = vpack.c.bf16 %v1945, %v1944
      %v1974 = vpack.c.bf16 %v1947, %v1946
      %v1975 = vpack.c.bf16 %v1949, %v1948
      %v1976 = vpack.c.bf16 %v1951, %v1950
      %v1977 = vpack.c.bf16 %v1953, %v1952
      %v1978 = vpack.c.bf16 %v1955, %v1954
      %v1979 = vpack.c.bf16 %v1957, %v1956
      %v1980 = vpack.c.bf16 %v1959, %v1958
      %v1981 = vpack.c.bf16 %v1961, %v1960
      %v1982 = vpack.c.bf16 %v1963, %v1962
      %v1983 = vpack.c.bf16 %v1965, %v1964
      %v1984 = vpack.c.bf16 %v1967, %v1966
      %v1985 = vpack.c.bf16 %v1969, %v1968
      %1986 = vst.msk [vmem:[#allocation3] sm:$0xff] %vm229, %v1970
      %1987 = vst.msk [vmem:[#allocation3 + $0x8] sm:$0xff] %vm229, %v1971
      %1988 = vst.msk [vmem:[#allocation3 + $0x10] sm:$0xff] %vm229, %v1972
      %1989 = vst.msk [vmem:[#allocation3 + $0x18] sm:$0xff] %vm229, %v1973
      %1990 = vst.msk [vmem:[#allocation3 + $0x20] sm:$0xff] %vm229, %v1974
      %1991 = vst.msk [vmem:[#allocation3 + $0x28] sm:$0xff] %vm229, %v1975
      %1992 = vst.msk [vmem:[#allocation3 + $0x30] sm:$0xff] %vm229, %v1976
      %1993 = vst.msk [vmem:[#allocation3 + $0x38] sm:$0xff] %vm229, %v1977
      %1994 = vst.msk [vmem:[#allocation3 + $0x40] sm:$0xff] %vm229, %v1978
      %1995 = vst.msk [vmem:[#allocation3 + $0x48] sm:$0xff] %vm229, %v1979
      %1996 = vst.msk [vmem:[#allocation3 + $0x50] sm:$0xff] %vm229, %v1980
      %1997 = vst.msk [vmem:[#allocation3 + $0x58] sm:$0xff] %vm229, %v1981
      %1998 = vst.msk [vmem:[#allocation3 + $0x60] sm:$0xff] %vm229, %v1982
      %1999 = vst.msk [vmem:[#allocation3 + $0x68] sm:$0xff] %vm229, %v1983
      %2000 = vst.msk [vmem:[#allocation3 + $0x70] sm:$0xff] %vm229, %v1984
      %2001 = vst.msk [vmem:[#allocation3 + $0x78] sm:$0xff] %vm229, %v1985
      %v2002 = vld [vmem:[#allocation2 + $0x1] sm:$0xff]
      %v2003 = vld [vmem:[#allocation2 + $0x9] sm:$0xff]
      %v2004 = vld [vmem:[#allocation2 + $0x19] sm:$0xff]
      %v2005 = vld [vmem:[#allocation2 + $0x21] sm:$0xff]
      %v2006 = vld [vmem:[#allocation2 + $0x31] sm:$0xff]
      %v2007 = vld [vmem:[#allocation2 + $0x39] sm:$0xff]
      %v2008 = vld [vmem:[#allocation2 + $0x49] sm:$0xff]
      %v2009 = vld [vmem:[#allocation2 + $0x51] sm:$0xff]
      %v2010 = vld [vmem:[#allocation2 + $0x61] sm:$0xff]
      %v2011 = vld [vmem:[#allocation2 + $0x69] sm:$0xff]
      %v2012 = vld [vmem:[#allocation2 + $0x79] sm:$0xff]
      %v2013 = vld [vmem:[#allocation2 + $0x81] sm:$0xff]
      %v2014 = vld [vmem:[#allocation2 + $0x91] sm:$0xff]
      %v2015 = vld [vmem:[#allocation2 + $0x99] sm:$0xff]
      %v2016 = vld [vmem:[#allocation2 + $0xa9] sm:$0xff]
      %v2017 = vld [vmem:[#allocation2 + $0xb1] sm:$0xff]
      %v2018 = vld [vmem:[#allocation2 + $0xc1] sm:$0xff]
      %v2019 = vld [vmem:[#allocation2 + $0xc9] sm:$0xff]
      %v2020 = vld [vmem:[#allocation2 + $0xd9] sm:$0xff]
      %v2021 = vld [vmem:[#allocation2 + $0xe1] sm:$0xff]
      %v2022 = vld [vmem:[#allocation2 + $0xf1] sm:$0xff]
      %v2023 = vld [vmem:[#allocation2 + $0xf9] sm:$0xff]
      %v2024 = vld [vmem:[#allocation2 + $0x109] sm:$0xff]
      %v2025 = vld [vmem:[#allocation2 + $0x111] sm:$0xff]
      %v2026 = vld [vmem:[#allocation2 + $0x121] sm:$0xff]
      %v2027 = vld [vmem:[#allocation2 + $0x129] sm:$0xff]
      %v2028 = vld [vmem:[#allocation2 + $0x139] sm:$0xff]
      %v2029 = vld [vmem:[#allocation2 + $0x141] sm:$0xff]
      %v2030 = vld [vmem:[#allocation2 + $0x151] sm:$0xff]
      %v2031 = vld [vmem:[#allocation2 + $0x159] sm:$0xff]
      %v2032 = vld [vmem:[#allocation2 + $0x169] sm:$0xff]
      %v2033 = vld [vmem:[#allocation2 + $0x171] sm:$0xff]
      %v2034 = vpack.c.bf16 %v2003, %v2002
      %v2035 = vpack.c.bf16 %v2005, %v2004
      %v2036 = vpack.c.bf16 %v2007, %v2006
      %v2037 = vpack.c.bf16 %v2009, %v2008
      %v2038 = vpack.c.bf16 %v2011, %v2010
      %v2039 = vpack.c.bf16 %v2013, %v2012
      %v2040 = vpack.c.bf16 %v2015, %v2014
      %v2041 = vpack.c.bf16 %v2017, %v2016
      %v2042 = vpack.c.bf16 %v2019, %v2018
      %v2043 = vpack.c.bf16 %v2021, %v2020
      %v2044 = vpack.c.bf16 %v2023, %v2022
      %v2045 = vpack.c.bf16 %v2025, %v2024
      %v2046 = vpack.c.bf16 %v2027, %v2026
      %v2047 = vpack.c.bf16 %v2029, %v2028
      %v2048 = vpack.c.bf16 %v2031, %v2030
      %v2049 = vpack.c.bf16 %v2033, %v2032
      %2066 = vrot.lane.b32.xlu0 %v2034, 2
      %v2067 = vpop.permute.xlu0 %2066
      %2068 = vrot.lane.b32.xlu0 %v2035, 2
      %v2069 = vpop.permute.xlu0 %2068
      %2070 = vrot.lane.b32.xlu0 %v2036, 2
      %v2071 = vpop.permute.xlu0 %2070
      %2072 = vrot.lane.b32.xlu0 %v2037, 2
      %v2073 = vpop.permute.xlu0 %2072
      %2074 = vrot.lane.b32.xlu0 %v2038, 2
      %v2075 = vpop.permute.xlu0 %2074
      %2076 = vrot.lane.b32.xlu0 %v2039, 2
      %v2077 = vpop.permute.xlu0 %2076
      %2078 = vrot.lane.b32.xlu0 %v2040, 2
      %v2079 = vpop.permute.xlu0 %2078
      %2080 = vrot.lane.b32.xlu0 %v2041, 2
      %v2081 = vpop.permute.xlu0 %2080
      %2082 = vrot.lane.b32.xlu0 %v2042, 2
      %v2083 = vpop.permute.xlu0 %2082
      %2084 = vrot.lane.b32.xlu0 %v2043, 2
      %v2085 = vpop.permute.xlu0 %2084
      %2086 = vrot.lane.b32.xlu0 %v2044, 2
      %v2087 = vpop.permute.xlu0 %2086
      %2088 = vrot.lane.b32.xlu0 %v2045, 2
      %v2089 = vpop.permute.xlu0 %2088
      %2090 = vrot.lane.b32.xlu0 %v2046, 2
      %v2091 = vpop.permute.xlu0 %2090
      %2092 = vrot.lane.b32.xlu0 %v2047, 2
      %v2093 = vpop.permute.xlu0 %2092
      %2094 = vrot.lane.b32.xlu0 %v2048, 2
      %v2095 = vpop.permute.xlu0 %2094
      %2096 = vrot.lane.b32.xlu0 %v2049, 2
      %v2097 = vpop.permute.xlu0 %2096
      %2114 = vst.msk [vmem:[#allocation3] sm:$0xff] %vm544, %v2067
      %2115 = vst.msk [vmem:[#allocation3 + $0x8] sm:$0xff] %vm544, %v2069
      %2116 = vst.msk [vmem:[#allocation3 + $0x10] sm:$0xff] %vm544, %v2071
      %2117 = vst.msk [vmem:[#allocation3 + $0x18] sm:$0xff] %vm544, %v2073
      %2118 = vst.msk [vmem:[#allocation3 + $0x20] sm:$0xff] %vm544, %v2075
      %2119 = vst.msk [vmem:[#allocation3 + $0x28] sm:$0xff] %vm544, %v2077
      %2120 = vst.msk [vmem:[#allocation3 + $0x30] sm:$0xff] %vm544, %v2079
      %2121 = vst.msk [vmem:[#allocation3 + $0x38] sm:$0xff] %vm544, %v2081
      %2122 = vst.msk [vmem:[#allocation3 + $0x40] sm:$0xff] %vm544, %v2083
      %2123 = vst.msk [vmem:[#allocation3 + $0x48] sm:$0xff] %vm544, %v2085
      %2124 = vst.msk [vmem:[#allocation3 + $0x50] sm:$0xff] %vm544, %v2087
      %2125 = vst.msk [vmem:[#allocation3 + $0x58] sm:$0xff] %vm544, %v2089
      %2126 = vst.msk [vmem:[#allocation3 + $0x60] sm:$0xff] %vm544, %v2091
      %2127 = vst.msk [vmem:[#allocation3 + $0x68] sm:$0xff] %vm544, %v2093
      %2128 = vst.msk [vmem:[#allocation3 + $0x70] sm:$0xff] %vm544, %v2095
      %2129 = vst.msk [vmem:[#allocation3 + $0x78] sm:$0xff] %vm544, %v2097
      %v2130 = vld [vmem:[#allocation2 + $0x2] sm:$0xff]
      %v2131 = vld [vmem:[#allocation2 + $0xa] sm:$0xff]
      %v2132 = vld [vmem:[#allocation2 + $0x1a] sm:$0xff]
      %v2133 = vld [vmem:[#allocation2 + $0x22] sm:$0xff]
      %v2134 = vld [vmem:[#allocation2 + $0x32] sm:$0xff]
      %v2135 = vld [vmem:[#allocation2 + $0x3a] sm:$0xff]
      %v2136 = vld [vmem:[#allocation2 + $0x4a] sm:$0xff]
      %v2137 = vld [vmem:[#allocation2 + $0x52] sm:$0xff]
      %v2138 = vld [vmem:[#allocation2 + $0x62] sm:$0xff]
      %v2139 = vld [vmem:[#allocation2 + $0x6a] sm:$0xff]
      %v2140 = vld [vmem:[#allocation2 + $0x7a] sm:$0xff]
      %v2141 = vld [vmem:[#allocation2 + $0x82] sm:$0xff]
      %v2142 = vld [vmem:[#allocation2 + $0x92] sm:$0xff]
      %v2143 = vld [vmem:[#allocation2 + $0x9a] sm:$0xff]
      %v2144 = vld [vmem:[#allocation2 + $0xaa] sm:$0xff]
      %v2145 = vld [vmem:[#allocation2 + $0xb2] sm:$0xff]
      %v2146 = vld [vmem:[#allocation2 + $0xc2] sm:$0xff]
      %v2147 = vld [vmem:[#allocation2 + $0xca] sm:$0xff]
      %v2148 = vld [vmem:[#allocation2 + $0xda] sm:$0xff]
      %v2149 = vld [vmem:[#allocation2 + $0xe2] sm:$0xff]
      %v2150 = vld [vmem:[#allocation2 + $0xf2] sm:$0xff]
      %v2151 = vld [vmem:[#allocation2 + $0xfa] sm:$0xff]
      %v2152 = vld [vmem:[#allocation2 + $0x10a] sm:$0xff]
      %v2153 = vld [vmem:[#allocation2 + $0x112] sm:$0xff]
      %v2154 = vld [vmem:[#allocation2 + $0x122] sm:$0xff]
      %v2155 = vld [vmem:[#allocation2 + $0x12a] sm:$0xff]
      %v2156 = vld [vmem:[#allocation2 + $0x13a] sm:$0xff]
      %v2157 = vld [vmem:[#allocation2 + $0x142] sm:$0xff]
      %v2158 = vld [vmem:[#allocation2 + $0x152] sm:$0xff]
      %v2159 = vld [vmem:[#allocation2 + $0x15a] sm:$0xff]
      %v2160 = vld [vmem:[#allocation2 + $0x16a] sm:$0xff]
      %v2161 = vld [vmem:[#allocation2 + $0x172] sm:$0xff]
      %v2162 = vpack.c.bf16 %v2131, %v2130
      %v2163 = vpack.c.bf16 %v2133, %v2132
      %v2164 = vpack.c.bf16 %v2135, %v2134
      %v2165 = vpack.c.bf16 %v2137, %v2136
      %v2166 = vpack.c.bf16 %v2139, %v2138
      %v2167 = vpack.c.bf16 %v2141, %v2140
      %v2168 = vpack.c.bf16 %v2143, %v2142
      %v2169 = vpack.c.bf16 %v2145, %v2144
      %v2170 = vpack.c.bf16 %v2147, %v2146
      %v2171 = vpack.c.bf16 %v2149, %v2148
      %v2172 = vpack.c.bf16 %v2151, %v2150
      %v2173 = vpack.c.bf16 %v2153, %v2152
      %v2174 = vpack.c.bf16 %v2155, %v2154
      %v2175 = vpack.c.bf16 %v2157, %v2156
      %v2176 = vpack.c.bf16 %v2159, %v2158
      %v2177 = vpack.c.bf16 %v2161, %v2160
      %2194 = vrot.lane.b32.xlu0 %v2162, 4
      %v2195 = vpop.permute.xlu0 %2194
      %2196 = vrot.lane.b32.xlu0 %v2163, 4
      %v2197 = vpop.permute.xlu0 %2196
      %2198 = vrot.lane.b32.xlu0 %v2164, 4
      %v2199 = vpop.permute.xlu0 %2198
      %2200 = vrot.lane.b32.xlu0 %v2165, 4
      %v2201 = vpop.permute.xlu0 %2200
      %2202 = vrot.lane.b32.xlu0 %v2166, 4
      %v2203 = vpop.permute.xlu0 %2202
      %2204 = vrot.lane.b32.xlu0 %v2167, 4
      %v2205 = vpop.permute.xlu0 %2204
      %2206 = vrot.lane.b32.xlu0 %v2168, 4
      %v2207 = vpop.permute.xlu0 %2206
      %2208 = vrot.lane.b32.xlu0 %v2169, 4
      %v2209 = vpop.permute.xlu0 %2208
      %2210 = vrot.lane.b32.xlu0 %v2170, 4
      %v2211 = vpop.permute.xlu0 %2210
      %2212 = vrot.lane.b32.xlu0 %v2171, 4
      %v2213 = vpop.permute.xlu0 %2212
      %2214 = vrot.lane.b32.xlu0 %v2172, 4
      %v2215 = vpop.permute.xlu0 %2214
      %2216 = vrot.lane.b32.xlu0 %v2173, 4
      %v2217 = vpop.permute.xlu0 %2216
      %2218 = vrot.lane.b32.xlu0 %v2174, 4
      %v2219 = vpop.permute.xlu0 %2218
      %2220 = vrot.lane.b32.xlu0 %v2175, 4
      %v2221 = vpop.permute.xlu0 %2220
      %2222 = vrot.lane.b32.xlu0 %v2176, 4
      %v2223 = vpop.permute.xlu0 %2222
      %2224 = vrot.lane.b32.xlu0 %v2177, 4
      %v2225 = vpop.permute.xlu0 %2224
      %2242 = vst.msk [vmem:[#allocation3] sm:$0xff] %vm673, %v2195
      %2243 = vst.msk [vmem:[#allocation3 + $0x8] sm:$0xff] %vm673, %v2197
      %2244 = vst.msk [vmem:[#allocation3 + $0x10] sm:$0xff] %vm673, %v2199
      %2245 = vst.msk [vmem:[#allocation3 + $0x18] sm:$0xff] %vm673, %v2201
      %2246 = vst.msk [vmem:[#allocation3 + $0x20] sm:$0xff] %vm673, %v2203
      %2247 = vst.msk [vmem:[#allocation3 + $0x28] sm:$0xff] %vm673, %v2205
      %2248 = vst.msk [vmem:[#allocation3 + $0x30] sm:$0xff] %vm673, %v2207
      %2249 = vst.msk [vmem:[#allocation3 + $0x38] sm:$0xff] %vm673, %v2209
      %2250 = vst.msk [vmem:[#allocation3 + $0x40] sm:$0xff] %vm673, %v2211
      %2251 = vst.msk [vmem:[#allocation3 + $0x48] sm:$0xff] %vm673, %v2213
      %2252 = vst.msk [vmem:[#allocation3 + $0x50] sm:$0xff] %vm673, %v2215
      %2253 = vst.msk [vmem:[#allocation3 + $0x58] sm:$0xff] %vm673, %v2217
      %2254 = vst.msk [vmem:[#allocation3 + $0x60] sm:$0xff] %vm673, %v2219
      %2255 = vst.msk [vmem:[#allocation3 + $0x68] sm:$0xff] %vm673, %v2221
      %2256 = vst.msk [vmem:[#allocation3 + $0x70] sm:$0xff] %vm673, %v2223
      %2257 = vst.msk [vmem:[#allocation3 + $0x78] sm:$0xff] %vm673, %v2225
      %v2258 = vld [vmem:[%s238] sm:$0xff]
      %v2259 = vld [vmem:[%s238 + $0x8] sm:$0xff]
      %v2260 = vld [vmem:[%s238 + $0x18] sm:$0xff]
      %v2261 = vld [vmem:[%s238 + $0x20] sm:$0xff]
      %v2262 = vld [vmem:[%s238 + $0x30] sm:$0xff]
      %v2263 = vld [vmem:[%s238 + $0x38] sm:$0xff]
      %v2264 = vld [vmem:[%s238 + $0x48] sm:$0xff]
      %v2265 = vld [vmem:[%s238 + $0x50] sm:$0xff]
      %v2266 = vld [vmem:[%s238 + $0x60] sm:$0xff]
      %v2267 = vld [vmem:[%s238 + $0x68] sm:$0xff]
      %v2268 = vld [vmem:[%s238 + $0x78] sm:$0xff]
      %v2269 = vld [vmem:[%s238 + $0x80] sm:$0xff]
      %v2270 = vld [vmem:[%s238 + $0x90] sm:$0xff]
      %v2271 = vld [vmem:[%s238 + $0x98] sm:$0xff]
      %v2272 = vld [vmem:[%s238 + $0xa8] sm:$0xff]
      %v2273 = vld [vmem:[%s238 + $0xb0] sm:$0xff]
      %v2274 = vld [vmem:[%s238 + $0xc0] sm:$0xff]
      %v2275 = vld [vmem:[%s238 + $0xc8] sm:$0xff]
      %v2276 = vld [vmem:[%s238 + $0xd8] sm:$0xff]
      %v2277 = vld [vmem:[%s238 + $0xe0] sm:$0xff]
      %v2278 = vld [vmem:[%s238 + $0xf0] sm:$0xff]
      %v2279 = vld [vmem:[%s238 + $0xf8] sm:$0xff]
      %v2280 = vld [vmem:[%s238 + $0x108] sm:$0xff]
      %v2281 = vld [vmem:[%s238 + $0x110] sm:$0xff]
      %v2282 = vld [vmem:[%s238 + $0x120] sm:$0xff]
      %v2283 = vld [vmem:[%s238 + $0x128] sm:$0xff]
      %v2284 = vld [vmem:[%s238 + $0x138] sm:$0xff]
      %v2285 = vld [vmem:[%s238 + $0x140] sm:$0xff]
      %v2286 = vld [vmem:[%s238 + $0x150] sm:$0xff]
      %v2287 = vld [vmem:[%s238 + $0x158] sm:$0xff]
      %v2288 = vld [vmem:[%s238 + $0x168] sm:$0xff]
      %v2289 = vld [vmem:[%s238 + $0x170] sm:$0xff]
      %v2290 = vpack.c.bf16 %v2259, %v2258
      %v2291 = vpack.c.bf16 %v2261, %v2260
      %v2292 = vpack.c.bf16 %v2263, %v2262
      %v2293 = vpack.c.bf16 %v2265, %v2264
      %v2294 = vpack.c.bf16 %v2267, %v2266
      %v2295 = vpack.c.bf16 %v2269, %v2268
      %v2296 = vpack.c.bf16 %v2271, %v2270
      %v2297 = vpack.c.bf16 %v2273, %v2272
      %v2298 = vpack.c.bf16 %v2275, %v2274
      %v2299 = vpack.c.bf16 %v2277, %v2276
      %v2300 = vpack.c.bf16 %v2279, %v2278
      %v2301 = vpack.c.bf16 %v2281, %v2280
      %v2302 = vpack.c.bf16 %v2283, %v2282
      %v2303 = vpack.c.bf16 %v2285, %v2284
      %v2304 = vpack.c.bf16 %v2287, %v2286
      %v2305 = vpack.c.bf16 %v2289, %v2288
      %2322 = vrot.lane.b32.xlu0 %v2290, 6
      %v2323 = vpop.permute.xlu0 %2322
      %2324 = vrot.lane.b32.xlu0 %v2291, 6
      %v2325 = vpop.permute.xlu0 %2324
      %2326 = vrot.lane.b32.xlu0 %v2292, 6
      %v2327 = vpop.permute.xlu0 %2326
      %2328 = vrot.lane.b32.xlu0 %v2293, 6
      %v2329 = vpop.permute.xlu0 %2328
      %2330 = vrot.lane.b32.xlu0 %v2294, 6
      %v2331 = vpop.permute.xlu0 %2330
      %2332 = vrot.lane.b32.xlu0 %v2295, 6
      %v2333 = vpop.permute.xlu0 %2332
      %2334 = vrot.lane.b32.xlu0 %v2296, 6
      %v2335 = vpop.permute.xlu0 %2334
      %2336 = vrot.lane.b32.xlu0 %v2297, 6
      %v2337 = vpop.permute.xlu0 %2336
      %2338 = vrot.lane.b32.xlu0 %v2298, 6
      %v2339 = vpop.permute.xlu0 %2338
      %2340 = vrot.lane.b32.xlu0 %v2299, 6
      %v2341 = vpop.permute.xlu0 %2340
      %2342 = vrot.lane.b32.xlu0 %v2300, 6
      %v2343 = vpop.permute.xlu0 %2342
      %2344 = vrot.lane.b32.xlu0 %v2301, 6
      %v2345 = vpop.permute.xlu0 %2344
      %2346 = vrot.lane.b32.xlu0 %v2302, 6
      %v2347 = vpop.permute.xlu0 %2346
      %2348 = vrot.lane.b32.xlu0 %v2303, 6
      %v2349 = vpop.permute.xlu0 %2348
      %2350 = vrot.lane.b32.xlu0 %v2304, 6
      %v2351 = vpop.permute.xlu0 %2350
      %2352 = vrot.lane.b32.xlu0 %v2305, 6
      %v2353 = vpop.permute.xlu0 %2352
      %2370 = vst.msk [vmem:[#allocation3] sm:$0xff] %vm802, %v2323
      %2371 = vst.msk [vmem:[#allocation3 + $0x8] sm:$0xff] %vm802, %v2325
      %2372 = vst.msk [vmem:[#allocation3 + $0x10] sm:$0xff] %vm802, %v2327
      %2373 = vst.msk [vmem:[#allocation3 + $0x18] sm:$0xff] %vm802, %v2329
      %2374 = vst.msk [vmem:[#allocation3 + $0x20] sm:$0xff] %vm802, %v2331
      %2375 = vst.msk [vmem:[#allocation3 + $0x28] sm:$0xff] %vm802, %v2333
      %2376 = vst.msk [vmem:[#allocation3 + $0x30] sm:$0xff] %vm802, %v2335
      %2377 = vst.msk [vmem:[#allocation3 + $0x38] sm:$0xff] %vm802, %v2337
      %2378 = vst.msk [vmem:[#allocation3 + $0x40] sm:$0xff] %vm802, %v2339
      %2379 = vst.msk [vmem:[#allocation3 + $0x48] sm:$0xff] %vm802, %v2341
      %2380 = vst.msk [vmem:[#allocation3 + $0x50] sm:$0xff] %vm802, %v2343
      %2381 = vst.msk [vmem:[#allocation3 + $0x58] sm:$0xff] %vm802, %v2345
      %2382 = vst.msk [vmem:[#allocation3 + $0x60] sm:$0xff] %vm802, %v2347
      %2383 = vst.msk [vmem:[#allocation3 + $0x68] sm:$0xff] %vm802, %v2349
      %2384 = vst.msk [vmem:[#allocation3 + $0x70] sm:$0xff] %vm802, %v2351
      %2385 = vst.msk [vmem:[#allocation3 + $0x78] sm:$0xff] %vm802, %v2353
      %v2386 = vld [vmem:[%s238 + $0x1] sm:$0xff]
      %v2387 = vld [vmem:[%s238 + $0x9] sm:$0xff]
      %v2388 = vld [vmem:[%s238 + $0x19] sm:$0xff]
      %v2389 = vld [vmem:[%s238 + $0x21] sm:$0xff]
      %v2390 = vld [vmem:[%s238 + $0x31] sm:$0xff]
      %v2391 = vld [vmem:[%s238 + $0x39] sm:$0xff]
      %v2392 = vld [vmem:[%s238 + $0x49] sm:$0xff]
      %v2393 = vld [vmem:[%s238 + $0x51] sm:$0xff]
      %v2394 = vld [vmem:[%s238 + $0x61] sm:$0xff]
      %v2395 = vld [vmem:[%s238 + $0x69] sm:$0xff]
      %v2396 = vld [vmem:[%s238 + $0x79] sm:$0xff]
      %v2397 = vld [vmem:[%s238 + $0x81] sm:$0xff]
      %v2398 = vld [vmem:[%s238 + $0x91] sm:$0xff]
      %v2399 = vld [vmem:[%s238 + $0x99] sm:$0xff]
      %v2400 = vld [vmem:[%s238 + $0xa9] sm:$0xff]
      %v2401 = vld [vmem:[%s238 + $0xb1] sm:$0xff]
      %v2402 = vld [vmem:[%s238 + $0xc1] sm:$0xff]
      %v2403 = vld [vmem:[%s238 + $0xc9] sm:$0xff]
      %v2404 = vld [vmem:[%s238 + $0xd9] sm:$0xff]
      %v2405 = vld [vmem:[%s238 + $0xe1] sm:$0xff]
      %v2406 = vld [vmem:[%s238 + $0xf1] sm:$0xff]
      %v2407 = vld [vmem:[%s238 + $0xf9] sm:$0xff]
      %v2408 = vld [vmem:[%s238 + $0x109] sm:$0xff]
      %v2409 = vld [vmem:[%s238 + $0x111] sm:$0xff]
      %v2410 = vld [vmem:[%s238 + $0x121] sm:$0xff]
      %v2411 = vld [vmem:[%s238 + $0x129] sm:$0xff]
      %v2412 = vld [vmem:[%s238 + $0x139] sm:$0xff]
      %v2413 = vld [vmem:[%s238 + $0x141] sm:$0xff]
      %v2414 = vld [vmem:[%s238 + $0x151] sm:$0xff]
      %v2415 = vld [vmem:[%s238 + $0x159] sm:$0xff]
      %v2416 = vld [vmem:[%s238 + $0x169] sm:$0xff]
      %v2417 = vld [vmem:[%s238 + $0x171] sm:$0xff]
      %v2418 = vpack.c.bf16 %v2387, %v2386
      %v2419 = vpack.c.bf16 %v2389, %v2388
      %v2420 = vpack.c.bf16 %v2391, %v2390
      %v2421 = vpack.c.bf16 %v2393, %v2392
      %v2422 = vpack.c.bf16 %v2395, %v2394
      %v2423 = vpack.c.bf16 %v2397, %v2396
      %v2424 = vpack.c.bf16 %v2399, %v2398
      %v2425 = vpack.c.bf16 %v2401, %v2400
      %v2426 = vpack.c.bf16 %v2403, %v2402
      %v2427 = vpack.c.bf16 %v2405, %v2404
      %v2428 = vpack.c.bf16 %v2407, %v2406
      %v2429 = vpack.c.bf16 %v2409, %v2408
      %v2430 = vpack.c.bf16 %v2411, %v2410
      %v2431 = vpack.c.bf16 %v2413, %v2412
      %v2432 = vpack.c.bf16 %v2415, %v2414
      %v2433 = vpack.c.bf16 %v2417, %v2416
      %2450 = vrot.lane.b32.xlu0 %v2418, 8
      %v2451 = vpop.permute.xlu0 %2450
      %2452 = vrot.lane.b32.xlu0 %v2419, 8
      %v2453 = vpop.permute.xlu0 %2452
      %2454 = vrot.lane.b32.xlu0 %v2420, 8
      %v2455 = vpop.permute.xlu0 %2454
      %2456 = vrot.lane.b32.xlu0 %v2421, 8
      %v2457 = vpop.permute.xlu0 %2456
      %2458 = vrot.lane.b32.xlu0 %v2422, 8
      %v2459 = vpop.permute.xlu0 %2458
      %2460 = vrot.lane.b32.xlu0 %v2423, 8
      %v2461 = vpop.permute.xlu0 %2460
      %2462 = vrot.lane.b32.xlu0 %v2424, 8
      %v2463 = vpop.permute.xlu0 %2462
      %2464 = vrot.lane.b32.xlu0 %v2425, 8
      %v2465 = vpop.permute.xlu0 %2464
      %2466 = vrot.lane.b32.xlu0 %v2426, 8
      %v2467 = vpop.permute.xlu0 %2466
      %2468 = vrot.lane.b32.xlu0 %v2427, 8
      %v2469 = vpop.permute.xlu0 %2468
      %2470 = vrot.lane.b32.xlu0 %v2428, 8
      %v2471 = vpop.permute.xlu0 %2470
      %2472 = vrot.lane.b32.xlu0 %v2429, 8
      %v2473 = vpop.permute.xlu0 %2472
      %2474 = vrot.lane.b32.xlu0 %v2430, 8
      %v2475 = vpop.permute.xlu0 %2474
      %2476 = vrot.lane.b32.xlu0 %v2431, 8
      %v2477 = vpop.permute.xlu0 %2476
      %2478 = vrot.lane.b32.xlu0 %v2432, 8
      %v2479 = vpop.permute.xlu0 %2478
      %2480 = vrot.lane.b32.xlu0 %v2433, 8
      %v2481 = vpop.permute.xlu0 %2480
      %2498 = vst.msk [vmem:[#allocation3] sm:$0xff] %vm931, %v2451
      %2499 = vst.msk [vmem:[#allocation3 + $0x8] sm:$0xff] %vm931, %v2453
      %2500 = vst.msk [vmem:[#allocation3 + $0x10] sm:$0xff] %vm931, %v2455
      %2501 = vst.msk [vmem:[#allocation3 + $0x18] sm:$0xff] %vm931, %v2457
      %2502 = vst.msk [vmem:[#allocation3 + $0x20] sm:$0xff] %vm931, %v2459
      %2503 = vst.msk [vmem:[#allocation3 + $0x28] sm:$0xff] %vm931, %v2461
      %2504 = vst.msk [vmem:[#allocation3 + $0x30] sm:$0xff] %vm931, %v2463
      %2505 = vst.msk [vmem:[#allocation3 + $0x38] sm:$0xff] %vm931, %v2465
      %2506 = vst.msk [vmem:[#allocation3 + $0x40] sm:$0xff] %vm931, %v2467
      %2507 = vst.msk [vmem:[#allocation3 + $0x48] sm:$0xff] %vm931, %v2469
      %2508 = vst.msk [vmem:[#allocation3 + $0x50] sm:$0xff] %vm931, %v2471
      %2509 = vst.msk [vmem:[#allocation3 + $0x58] sm:$0xff] %vm931, %v2473
      %2510 = vst.msk [vmem:[#allocation3 + $0x60] sm:$0xff] %vm931, %v2475
      %2511 = vst.msk [vmem:[#allocation3 + $0x68] sm:$0xff] %vm931, %v2477
      %2512 = vst.msk [vmem:[#allocation3 + $0x70] sm:$0xff] %vm931, %v2479
      %2513 = vst.msk [vmem:[#allocation3 + $0x78] sm:$0xff] %vm931, %v2481
      %v2514 = vld [vmem:[%s238 + $0x2] sm:$0xff]
      %v2515 = vld [vmem:[%s238 + $0xa] sm:$0xff]
      %v2516 = vld [vmem:[%s238 + $0x1a] sm:$0xff]
      %v2517 = vld [vmem:[%s238 + $0x22] sm:$0xff]
      %v2518 = vld [vmem:[%s238 + $0x32] sm:$0xff]
      %v2519 = vld [vmem:[%s238 + $0x3a] sm:$0xff]
      %v2520 = vld [vmem:[%s238 + $0x4a] sm:$0xff]
      %v2521 = vld [vmem:[%s238 + $0x52] sm:$0xff]
      %v2522 = vld [vmem:[%s238 + $0x62] sm:$0xff]
      %v2523 = vld [vmem:[%s238 + $0x6a] sm:$0xff]
      %v2524 = vld [vmem:[%s238 + $0x7a] sm:$0xff]
      %v2525 = vld [vmem:[%s238 + $0x82] sm:$0xff]
      %v2526 = vld [vmem:[%s238 + $0x92] sm:$0xff]
      %v2527 = vld [vmem:[%s238 + $0x9a] sm:$0xff]
      %v2528 = vld [vmem:[%s238 + $0xaa] sm:$0xff]
      %v2529 = vld [vmem:[%s238 + $0xb2] sm:$0xff]
      %v2530 = vld [vmem:[%s238 + $0xc2] sm:$0xff]
      %v2531 = vld [vmem:[%s238 + $0xca] sm:$0xff]
      %v2532 = vld [vmem:[%s238 + $0xda] sm:$0xff]
      %v2533 = vld [vmem:[%s238 + $0xe2] sm:$0xff]
      %v2534 = vld [vmem:[%s238 + $0xf2] sm:$0xff]
      %v2535 = vld [vmem:[%s238 + $0xfa] sm:$0xff]
      %v2536 = vld [vmem:[%s238 + $0x10a] sm:$0xff]
      %v2537 = vld [vmem:[%s238 + $0x112] sm:$0xff]
      %v2538 = vld [vmem:[%s238 + $0x122] sm:$0xff]
      %v2539 = vld [vmem:[%s238 + $0x12a] sm:$0xff]
      %v2540 = vld [vmem:[%s238 + $0x13a] sm:$0xff]
      %v2541 = vld [vmem:[%s238 + $0x142] sm:$0xff]
      %v2542 = vld [vmem:[%s238 + $0x152] sm:$0xff]
      %v2543 = vld [vmem:[%s238 + $0x15a] sm:$0xff]
      %v2544 = vld [vmem:[%s238 + $0x16a] sm:$0xff]
      %v2545 = vld [vmem:[%s238 + $0x172] sm:$0xff]
      %v2546 = vpack.c.bf16 %v2515, %v2514
      %v2547 = vpack.c.bf16 %v2517, %v2516
      %v2548 = vpack.c.bf16 %v2519, %v2518
      %v2549 = vpack.c.bf16 %v2521, %v2520
      %v2550 = vpack.c.bf16 %v2523, %v2522
      %v2551 = vpack.c.bf16 %v2525, %v2524
      %v2552 = vpack.c.bf16 %v2527, %v2526
      %v2553 = vpack.c.bf16 %v2529, %v2528
      %v2554 = vpack.c.bf16 %v2531, %v2530
      %v2555 = vpack.c.bf16 %v2533, %v2532
      %v2556 = vpack.c.bf16 %v2535, %v2534
      %v2557 = vpack.c.bf16 %v2537, %v2536
      %v2558 = vpack.c.bf16 %v2539, %v2538
      %v2559 = vpack.c.bf16 %v2541, %v2540
      %v2560 = vpack.c.bf16 %v2543, %v2542
      %v2561 = vpack.c.bf16 %v2545, %v2544
      %2578 = vrot.lane.b32.xlu0 %v2546, 10
      %v2579 = vpop.permute.xlu0 %2578
      %2580 = vrot.lane.b32.xlu0 %v2547, 10
      %v2581 = vpop.permute.xlu0 %2580
      %2582 = vrot.lane.b32.xlu0 %v2548, 10
      %v2583 = vpop.permute.xlu0 %2582
      %2584 = vrot.lane.b32.xlu0 %v2549, 10
      %v2585 = vpop.permute.xlu0 %2584
      %2586 = vrot.lane.b32.xlu0 %v2550, 10
      %v2587 = vpop.permute.xlu0 %2586
      %2588 = vrot.lane.b32.xlu0 %v2551, 10
      %v2589 = vpop.permute.xlu0 %2588
      %2590 = vrot.lane.b32.xlu0 %v2552, 10
      %v2591 = vpop.permute.xlu0 %2590
      %2592 = vrot.lane.b32.xlu0 %v2553, 10
      %v2593 = vpop.permute.xlu0 %2592
      %2594 = vrot.lane.b32.xlu0 %v2554, 10
      %v2595 = vpop.permute.xlu0 %2594
      %2596 = vrot.lane.b32.xlu0 %v2555, 10
      %v2597 = vpop.permute.xlu0 %2596
      %2598 = vrot.lane.b32.xlu0 %v2556, 10
      %v2599 = vpop.permute.xlu0 %2598
      %2600 = vrot.lane.b32.xlu0 %v2557, 10
      %v2601 = vpop.permute.xlu0 %2600
      %2602 = vrot.lane.b32.xlu0 %v2558, 10
      %v2603 = vpop.permute.xlu0 %2602
      %2604 = vrot.lane.b32.xlu0 %v2559, 10
      %v2605 = vpop.permute.xlu0 %2604
      %2606 = vrot.lane.b32.xlu0 %v2560, 10
      %v2607 = vpop.permute.xlu0 %2606
      %2608 = vrot.lane.b32.xlu0 %v2561, 10
      %v2609 = vpop.permute.xlu0 %2608
      %2626 = vst.msk [vmem:[#allocation3] sm:$0xff] %vm1060, %v2579
      %2627 = vst.msk [vmem:[#allocation3 + $0x8] sm:$0xff] %vm1060, %v2581
      %2628 = vst.msk [vmem:[#allocation3 + $0x10] sm:$0xff] %vm1060, %v2583
      %2629 = vst.msk [vmem:[#allocation3 + $0x18] sm:$0xff] %vm1060, %v2585
      %2630 = vst.msk [vmem:[#allocation3 + $0x20] sm:$0xff] %vm1060, %v2587
      %2631 = vst.msk [vmem:[#allocation3 + $0x28] sm:$0xff] %vm1060, %v2589
      %2632 = vst.msk [vmem:[#allocation3 + $0x30] sm:$0xff] %vm1060, %v2591
      %2633 = vst.msk [vmem:[#allocation3 + $0x38] sm:$0xff] %vm1060, %v2593
      %2634 = vst.msk [vmem:[#allocation3 + $0x40] sm:$0xff] %vm1060, %v2595
      %2635 = vst.msk [vmem:[#allocation3 + $0x48] sm:$0xff] %vm1060, %v2597
      %2636 = vst.msk [vmem:[#allocation3 + $0x50] sm:$0xff] %vm1060, %v2599
      %2637 = vst.msk [vmem:[#allocation3 + $0x58] sm:$0xff] %vm1060, %v2601
      %2638 = vst.msk [vmem:[#allocation3 + $0x60] sm:$0xff] %vm1060, %v2603
      %2639 = vst.msk [vmem:[#allocation3 + $0x68] sm:$0xff] %vm1060, %v2605
      %2640 = vst.msk [vmem:[#allocation3 + $0x70] sm:$0xff] %vm1060, %v2607
      %2641 = vst.msk [vmem:[#allocation3 + $0x78] sm:$0xff] %vm1060, %v2609
      %v2642 = vld [vmem:[%s1077] sm:$0xff]
      %v2643 = vld [vmem:[%s1077 + $0x8] sm:$0xff]
      %v2644 = vld [vmem:[%s1077 + $0x18] sm:$0xff]
      %v2645 = vld [vmem:[%s1077 + $0x20] sm:$0xff]
      %v2646 = vld [vmem:[%s1077 + $0x30] sm:$0xff]
      %v2647 = vld [vmem:[%s1077 + $0x38] sm:$0xff]
      %v2648 = vld [vmem:[%s1077 + $0x48] sm:$0xff]
      %v2649 = vld [vmem:[%s1077 + $0x50] sm:$0xff]
      %v2650 = vld [vmem:[%s1077 + $0x60] sm:$0xff]
      %v2651 = vld [vmem:[%s1077 + $0x68] sm:$0xff]
      %v2652 = vld [vmem:[%s1077 + $0x78] sm:$0xff]
      %v2653 = vld [vmem:[%s1077 + $0x80] sm:$0xff]
      %v2654 = vld [vmem:[%s1077 + $0x90] sm:$0xff]
      %v2655 = vld [vmem:[%s1077 + $0x98] sm:$0xff]
      %v2656 = vld [vmem:[%s1077 + $0xa8] sm:$0xff]
      %v2657 = vld [vmem:[%s1077 + $0xb0] sm:$0xff]
      %v2658 = vld [vmem:[%s1077 + $0xc0] sm:$0xff]
      %v2659 = vld [vmem:[%s1077 + $0xc8] sm:$0xff]
      %v2660 = vld [vmem:[%s1077 + $0xd8] sm:$0xff]
      %v2661 = vld [vmem:[%s1077 + $0xe0] sm:$0xff]
      %v2662 = vld [vmem:[%s1077 + $0xf0] sm:$0xff]
      %v2663 = vld [vmem:[%s1077 + $0xf8] sm:$0xff]
      %v2664 = vld [vmem:[%s1077 + $0x108] sm:$0xff]
      %v2665 = vld [vmem:[%s1077 + $0x110] sm:$0xff]
      %v2666 = vld [vmem:[%s1077 + $0x120] sm:$0xff]
      %v2667 = vld [vmem:[%s1077 + $0x128] sm:$0xff]
      %v2668 = vld [vmem:[%s1077 + $0x138] sm:$0xff]
      %v2669 = vld [vmem:[%s1077 + $0x140] sm:$0xff]
      %v2670 = vld [vmem:[%s1077 + $0x150] sm:$0xff]
      %v2671 = vld [vmem:[%s1077 + $0x158] sm:$0xff]
      %v2672 = vld [vmem:[%s1077 + $0x168] sm:$0xff]
      %v2673 = vld [vmem:[%s1077 + $0x170] sm:$0xff]
      %v2674 = vpack.c.bf16 %v2643, %v2642
      %v2675 = vpack.c.bf16 %v2645, %v2644
      %v2676 = vpack.c.bf16 %v2647, %v2646
      %v2677 = vpack.c.bf16 %v2649, %v2648
      %v2678 = vpack.c.bf16 %v2651, %v2650
      %v2679 = vpack.c.bf16 %v2653, %v2652
      %v2680 = vpack.c.bf16 %v2655, %v2654
      %v2681 = vpack.c.bf16 %v2657, %v2656
      %v2682 = vpack.c.bf16 %v2659, %v2658
      %v2683 = vpack.c.bf16 %v2661, %v2660
      %v2684 = vpack.c.bf16 %v2663, %v2662
      %v2685 = vpack.c.bf16 %v2665, %v2664
      %v2686 = vpack.c.bf16 %v2667, %v2666
      %v2687 = vpack.c.bf16 %v2669, %v2668
      %v2688 = vpack.c.bf16 %v2671, %v2670
      %v2689 = vpack.c.bf16 %v2673, %v2672
      %2706 = vrot.lane.b32.xlu0 %v2674, 12
      %v2707 = vpop.permute.xlu0 %2706
      %2708 = vrot.lane.b32.xlu0 %v2675, 12
      %v2709 = vpop.permute.xlu0 %2708
      %2710 = vrot.lane.b32.xlu0 %v2676, 12
      %v2711 = vpop.permute.xlu0 %2710
      %2712 = vrot.lane.b32.xlu0 %v2677, 12
      %v2713 = vpop.permute.xlu0 %2712
      %2714 = vrot.lane.b32.xlu0 %v2678, 12
      %v2715 = vpop.permute.xlu0 %2714
      %2716 = vrot.lane.b32.xlu0 %v2679, 12
      %v2717 = vpop.permute.xlu0 %2716
      %2718 = vrot.lane.b32.xlu0 %v2680, 12
      %v2719 = vpop.permute.xlu0 %2718
      %2720 = vrot.lane.b32.xlu0 %v2681, 12
      %v2721 = vpop.permute.xlu0 %2720
      %2722 = vrot.lane.b32.xlu0 %v2682, 12
      %v2723 = vpop.permute.xlu0 %2722
      %2724 = vrot.lane.b32.xlu0 %v2683, 12
      %v2725 = vpop.permute.xlu0 %2724
      %2726 = vrot.lane.b32.xlu0 %v2684, 12
      %v2727 = vpop.permute.xlu0 %2726
      %2728 = vrot.lane.b32.xlu0 %v2685, 12
      %v2729 = vpop.permute.xlu0 %2728
      %2730 = vrot.lane.b32.xlu0 %v2686, 12
      %v2731 = vpop.permute.xlu0 %2730
      %2732 = vrot.lane.b32.xlu0 %v2687, 12
      %v2733 = vpop.permute.xlu0 %2732
      %2734 = vrot.lane.b32.xlu0 %v2688, 12
      %v2735 = vpop.permute.xlu0 %2734
      %2736 = vrot.lane.b32.xlu0 %v2689, 12
      %v2737 = vpop.permute.xlu0 %2736
      %2754 = vst.msk [vmem:[#allocation3] sm:$0xff] %vm1190, %v2707
      %2755 = vst.msk [vmem:[#allocation3 + $0x8] sm:$0xff] %vm1190, %v2709
      %2756 = vst.msk [vmem:[#allocation3 + $0x10] sm:$0xff] %vm1190, %v2711
      %2757 = vst.msk [vmem:[#allocation3 + $0x18] sm:$0xff] %vm1190, %v2713
      %2758 = vst.msk [vmem:[#allocation3 + $0x20] sm:$0xff] %vm1190, %v2715
      %2759 = vst.msk [vmem:[#allocation3 + $0x28] sm:$0xff] %vm1190, %v2717
      %2760 = vst.msk [vmem:[#allocation3 + $0x30] sm:$0xff] %vm1190, %v2719
      %2761 = vst.msk [vmem:[#allocation3 + $0x38] sm:$0xff] %vm1190, %v2721
      %2762 = vst.msk [vmem:[#allocation3 + $0x40] sm:$0xff] %vm1190, %v2723
      %2763 = vst.msk [vmem:[#allocation3 + $0x48] sm:$0xff] %vm1190, %v2725
      %2764 = vst.msk [vmem:[#allocation3 + $0x50] sm:$0xff] %vm1190, %v2727
      %2765 = vst.msk [vmem:[#allocation3 + $0x58] sm:$0xff] %vm1190, %v2729
      %2766 = vst.msk [vmem:[#allocation3 + $0x60] sm:$0xff] %vm1190, %v2731
      %2767 = vst.msk [vmem:[#allocation3 + $0x68] sm:$0xff] %vm1190, %v2733
      %2768 = vst.msk [vmem:[#allocation3 + $0x70] sm:$0xff] %vm1190, %v2735
      %2769 = vst.msk [vmem:[#allocation3 + $0x78] sm:$0xff] %vm1190, %v2737
      %v2770 = vld [vmem:[%s1077 + $0x1] sm:$0xff]
      %v2771 = vld [vmem:[%s1077 + $0x9] sm:$0xff]
      %v2772 = vld [vmem:[%s1077 + $0x19] sm:$0xff]
      %v2773 = vld [vmem:[%s1077 + $0x21] sm:$0xff]
      %v2774 = vld [vmem:[%s1077 + $0x31] sm:$0xff]
      %v2775 = vld [vmem:[%s1077 + $0x39] sm:$0xff]
      %v2776 = vld [vmem:[%s1077 + $0x49] sm:$0xff]
      %v2777 = vld [vmem:[%s1077 + $0x51] sm:$0xff]
      %v2778 = vld [vmem:[%s1077 + $0x61] sm:$0xff]
      %v2779 = vld [vmem:[%s1077 + $0x69] sm:$0xff]
      %v2780 = vld [vmem:[%s1077 + $0x79] sm:$0xff]
      %v2781 = vld [vmem:[%s1077 + $0x81] sm:$0xff]
      %v2782 = vld [vmem:[%s1077 + $0x91] sm:$0xff]
      %v2783 = vld [vmem:[%s1077 + $0x99] sm:$0xff]
      %v2784 = vld [vmem:[%s1077 + $0xa9] sm:$0xff]
      %v2785 = vld [vmem:[%s1077 + $0xb1] sm:$0xff]
      %v2786 = vld [vmem:[%s1077 + $0xc1] sm:$0xff]
      %v2787 = vld [vmem:[%s1077 + $0xc9] sm:$0xff]
      %v2788 = vld [vmem:[%s1077 + $0xd9] sm:$0xff]
      %v2789 = vld [vmem:[%s1077 + $0xe1] sm:$0xff]
      %v2790 = vld [vmem:[%s1077 + $0xf1] sm:$0xff]
      %v2791 = vld [vmem:[%s1077 + $0xf9] sm:$0xff]
      %v2792 = vld [vmem:[%s1077 + $0x109] sm:$0xff]
      %v2793 = vld [vmem:[%s1077 + $0x111] sm:$0xff]
      %v2794 = vld [vmem:[%s1077 + $0x121] sm:$0xff]
      %v2795 = vld [vmem:[%s1077 + $0x129] sm:$0xff]
      %v2796 = vld [vmem:[%s1077 + $0x139] sm:$0xff]
      %v2797 = vld [vmem:[%s1077 + $0x141] sm:$0xff]
      %v2798 = vld [vmem:[%s1077 + $0x151] sm:$0xff]
      %v2799 = vld [vmem:[%s1077 + $0x159] sm:$0xff]
      %v2800 = vld [vmem:[%s1077 + $0x169] sm:$0xff]
      %v2801 = vld [vmem:[%s1077 + $0x171] sm:$0xff]
      %v2802 = vpack.c.bf16 %v2771, %v2770
      %v2803 = vpack.c.bf16 %v2773, %v2772
      %v2804 = vpack.c.bf16 %v2775, %v2774
      %v2805 = vpack.c.bf16 %v2777, %v2776
      %v2806 = vpack.c.bf16 %v2779, %v2778
      %v2807 = vpack.c.bf16 %v2781, %v2780
      %v2808 = vpack.c.bf16 %v2783, %v2782
      %v2809 = vpack.c.bf16 %v2785, %v2784
      %v2810 = vpack.c.bf16 %v2787, %v2786
      %v2811 = vpack.c.bf16 %v2789, %v2788
      %v2812 = vpack.c.bf16 %v2791, %v2790
      %v2813 = vpack.c.bf16 %v2793, %v2792
      %v2814 = vpack.c.bf16 %v2795, %v2794
      %v2815 = vpack.c.bf16 %v2797, %v2796
      %v2816 = vpack.c.bf16 %v2799, %v2798
      %v2817 = vpack.c.bf16 %v2801, %v2800
      %2834 = vrot.lane.b32.xlu0 %v2802, 14
      %v2835 = vpop.permute.xlu0 %2834
      %2836 = vrot.lane.b32.xlu0 %v2803, 14
      %v2837 = vpop.permute.xlu0 %2836
      %2838 = vrot.lane.b32.xlu0 %v2804, 14
      %v2839 = vpop.permute.xlu0 %2838
      %2840 = vrot.lane.b32.xlu0 %v2805, 14
      %v2841 = vpop.permute.xlu0 %2840
      %2842 = vrot.lane.b32.xlu0 %v2806, 14
      %v2843 = vpop.permute.xlu0 %2842
      %2844 = vrot.lane.b32.xlu0 %v2807, 14
      %v2845 = vpop.permute.xlu0 %2844
      %2846 = vrot.lane.b32.xlu0 %v2808, 14
      %v2847 = vpop.permute.xlu0 %2846
      %2848 = vrot.lane.b32.xlu0 %v2809, 14
      %v2849 = vpop.permute.xlu0 %2848
      %2850 = vrot.lane.b32.xlu0 %v2810, 14
      %v2851 = vpop.permute.xlu0 %2850
      %2852 = vrot.lane.b32.xlu0 %v2811, 14
      %v2853 = vpop.permute.xlu0 %2852
      %2854 = vrot.lane.b32.xlu0 %v2812, 14
      %v2855 = vpop.permute.xlu0 %2854
      %2856 = vrot.lane.b32.xlu0 %v2813, 14
      %v2857 = vpop.permute.xlu0 %2856
      %2858 = vrot.lane.b32.xlu0 %v2814, 14
      %v2859 = vpop.permute.xlu0 %2858
      %2860 = vrot.lane.b32.xlu0 %v2815, 14
      %v2861 = vpop.permute.xlu0 %2860
      %2862 = vrot.lane.b32.xlu0 %v2816, 14
      %v2863 = vpop.permute.xlu0 %2862
      %2864 = vrot.lane.b32.xlu0 %v2817, 14
      %v2865 = vpop.permute.xlu0 %2864
      %2882 = vst.msk [vmem:[#allocation3] sm:$0xff] %vm1319, %v2835
      %2883 = vst.msk [vmem:[#allocation3 + $0x8] sm:$0xff] %vm1319, %v2837
      %2884 = vst.msk [vmem:[#allocation3 + $0x10] sm:$0xff] %vm1319, %v2839
      %2885 = vst.msk [vmem:[#allocation3 + $0x18] sm:$0xff] %vm1319, %v2841
      %2886 = vst.msk [vmem:[#allocation3 + $0x20] sm:$0xff] %vm1319, %v2843
      %2887 = vst.msk [vmem:[#allocation3 + $0x28] sm:$0xff] %vm1319, %v2845
      %2888 = vst.msk [vmem:[#allocation3 + $0x30] sm:$0xff] %vm1319, %v2847
      %2889 = vst.msk [vmem:[#allocation3 + $0x38] sm:$0xff] %vm1319, %v2849
      %2890 = vst.msk [vmem:[#allocation3 + $0x40] sm:$0xff] %vm1319, %v2851
      %2891 = vst.msk [vmem:[#allocation3 + $0x48] sm:$0xff] %vm1319, %v2853
      %2892 = vst.msk [vmem:[#allocation3 + $0x50] sm:$0xff] %vm1319, %v2855
      %2893 = vst.msk [vmem:[#allocation3 + $0x58] sm:$0xff] %vm1319, %v2857
      %2894 = vst.msk [vmem:[#allocation3 + $0x60] sm:$0xff] %vm1319, %v2859
      %2895 = vst.msk [vmem:[#allocation3 + $0x68] sm:$0xff] %vm1319, %v2861
      %2896 = vst.msk [vmem:[#allocation3 + $0x70] sm:$0xff] %vm1319, %v2863
      %2897 = vst.msk [vmem:[#allocation3 + $0x78] sm:$0xff] %vm1319, %v2865
      %v2898 = vld [vmem:[%s1077 + $0x2] sm:$0xff]
      %v2899 = vld [vmem:[%s1077 + $0xa] sm:$0xff]
      %v2900 = vld [vmem:[%s1077 + $0x1a] sm:$0xff]
      %v2901 = vld [vmem:[%s1077 + $0x22] sm:$0xff]
      %v2902 = vld [vmem:[%s1077 + $0x32] sm:$0xff]
      %v2903 = vld [vmem:[%s1077 + $0x3a] sm:$0xff]
      %v2904 = vld [vmem:[%s1077 + $0x4a] sm:$0xff]
      %v2905 = vld [vmem:[%s1077 + $0x52] sm:$0xff]
      %v2906 = vld [vmem:[%s1077 + $0x62] sm:$0xff]
      %v2907 = vld [vmem:[%s1077 + $0x6a] sm:$0xff]
      %v2908 = vld [vmem:[%s1077 + $0x7a] sm:$0xff]
      %v2909 = vld [vmem:[%s1077 + $0x82] sm:$0xff]
      %v2910 = vld [vmem:[%s1077 + $0x92] sm:$0xff]
      %v2911 = vld [vmem:[%s1077 + $0x9a] sm:$0xff]
      %v2912 = vld [vmem:[%s1077 + $0xaa] sm:$0xff]
      %v2913 = vld [vmem:[%s1077 + $0xb2] sm:$0xff]
      %v2914 = vld [vmem:[%s1077 + $0xc2] sm:$0xff]
      %v2915 = vld [vmem:[%s1077 + $0xca] sm:$0xff]
      %v2916 = vld [vmem:[%s1077 + $0xda] sm:$0xff]
      %v2917 = vld [vmem:[%s1077 + $0xe2] sm:$0xff]
      %v2918 = vld [vmem:[%s1077 + $0xf2] sm:$0xff]
      %v2919 = vld [vmem:[%s1077 + $0xfa] sm:$0xff]
      %v2920 = vld [vmem:[%s1077 + $0x10a] sm:$0xff]
      %v2921 = vld [vmem:[%s1077 + $0x112] sm:$0xff]
      %v2922 = vld [vmem:[%s1077 + $0x122] sm:$0xff]
      %v2923 = vld [vmem:[%s1077 + $0x12a] sm:$0xff]
      %v2924 = vld [vmem:[%s1077 + $0x13a] sm:$0xff]
      %v2925 = vld [vmem:[%s1077 + $0x142] sm:$0xff]
      %v2926 = vld [vmem:[%s1077 + $0x152] sm:$0xff]
      %v2927 = vld [vmem:[%s1077 + $0x15a] sm:$0xff]
      %v2928 = vld [vmem:[%s1077 + $0x16a] sm:$0xff]
      %v2929 = vld [vmem:[%s1077 + $0x172] sm:$0xff]
      %v2930 = vpack.c.bf16 %v2899, %v2898
      %v2931 = vpack.c.bf16 %v2901, %v2900
      %v2932 = vpack.c.bf16 %v2903, %v2902
      %v2933 = vpack.c.bf16 %v2905, %v2904
      %v2934 = vpack.c.bf16 %v2907, %v2906
      %v2935 = vpack.c.bf16 %v2909, %v2908
      %v2936 = vpack.c.bf16 %v2911, %v2910
      %v2937 = vpack.c.bf16 %v2913, %v2912
      %v2938 = vpack.c.bf16 %v2915, %v2914
      %v2939 = vpack.c.bf16 %v2917, %v2916
      %v2940 = vpack.c.bf16 %v2919, %v2918
      %v2941 = vpack.c.bf16 %v2921, %v2920
      %v2942 = vpack.c.bf16 %v2923, %v2922
      %v2943 = vpack.c.bf16 %v2925, %v2924
      %v2944 = vpack.c.bf16 %v2927, %v2926
      %v2945 = vpack.c.bf16 %v2929, %v2928
      %2962 = vrot.lane.b32.xlu0 %v2930, 16
      %v2963 = vpop.permute.xlu0 %2962
      %2964 = vrot.lane.b32.xlu0 %v2931, 16
      %v2965 = vpop.permute.xlu0 %2964
      %2966 = vrot.lane.b32.xlu0 %v2932, 16
      %v2967 = vpop.permute.xlu0 %2966
      %2968 = vrot.lane.b32.xlu0 %v2933, 16
      %v2969 = vpop.permute.xlu0 %2968
      %2970 = vrot.lane.b32.xlu0 %v2934, 16
      %v2971 = vpop.permute.xlu0 %2970
      %2972 = vrot.lane.b32.xlu0 %v2935, 16
      %v2973 = vpop.permute.xlu0 %2972
      %2974 = vrot.lane.b32.xlu0 %v2936, 16
      %v2975 = vpop.permute.xlu0 %2974
      %2976 = vrot.lane.b32.xlu0 %v2937, 16
      %v2977 = vpop.permute.xlu0 %2976
      %2978 = vrot.lane.b32.xlu0 %v2938, 16
      %v2979 = vpop.permute.xlu0 %2978
      %2980 = vrot.lane.b32.xlu0 %v2939, 16
      %v2981 = vpop.permute.xlu0 %2980
      %2982 = vrot.lane.b32.xlu0 %v2940, 16
      %v2983 = vpop.permute.xlu0 %2982
      %2984 = vrot.lane.b32.xlu0 %v2941, 16
      %v2985 = vpop.permute.xlu0 %2984
      %2986 = vrot.lane.b32.xlu0 %v2942, 16
      %v2987 = vpop.permute.xlu0 %2986
      %2988 = vrot.lane.b32.xlu0 %v2943, 16
      %v2989 = vpop.permute.xlu0 %2988
      %2990 = vrot.lane.b32.xlu0 %v2944, 16
      %v2991 = vpop.permute.xlu0 %2990
      %2992 = vrot.lane.b32.xlu0 %v2945, 16
      %v2993 = vpop.permute.xlu0 %2992
      %3010 = vst.msk [vmem:[#allocation3] sm:$0xff] %vm1448, %v2963
      %3011 = vst.msk [vmem:[#allocation3 + $0x8] sm:$0xff] %vm1448, %v2965
      %3012 = vst.msk [vmem:[#allocation3 + $0x10] sm:$0xff] %vm1448, %v2967
      %3013 = vst.msk [vmem:[#allocation3 + $0x18] sm:$0xff] %vm1448, %v2969
      %3014 = vst.msk [vmem:[#allocation3 + $0x20] sm:$0xff] %vm1448, %v2971
      %3015 = vst.msk [vmem:[#allocation3 + $0x28] sm:$0xff] %vm1448, %v2973
      %3016 = vst.msk [vmem:[#allocation3 + $0x30] sm:$0xff] %vm1448, %v2975
      %3017 = vst.msk [vmem:[#allocation3 + $0x38] sm:$0xff] %vm1448, %v2977
      %3018 = vst.msk [vmem:[#allocation3 + $0x40] sm:$0xff] %vm1448, %v2979
      %3019 = vst.msk [vmem:[#allocation3 + $0x48] sm:$0xff] %vm1448, %v2981
      %3020 = vst.msk [vmem:[#allocation3 + $0x50] sm:$0xff] %vm1448, %v2983
      %3021 = vst.msk [vmem:[#allocation3 + $0x58] sm:$0xff] %vm1448, %v2985
      %3022 = vst.msk [vmem:[#allocation3 + $0x60] sm:$0xff] %vm1448, %v2987
      %3023 = vst.msk [vmem:[#allocation3 + $0x68] sm:$0xff] %vm1448, %v2989
      %3024 = vst.msk [vmem:[#allocation3 + $0x70] sm:$0xff] %vm1448, %v2991
      %3025 = vst.msk [vmem:[#allocation3 + $0x78] sm:$0xff] %vm1448, %v2993
      %v3026 = vld [vmem:[#allocation3] sm:$0xff]
      %v3027 = vld [vmem:[#allocation3 + $0x8] sm:$0xff]
      %v3028 = vld [vmem:[#allocation3 + $0x10] sm:$0xff]
      %v3029 = vld [vmem:[#allocation3 + $0x18] sm:$0xff]
      %v3030 = vld [vmem:[#allocation3 + $0x20] sm:$0xff]
      %v3031 = vld [vmem:[#allocation3 + $0x28] sm:$0xff]
      %v3032 = vld [vmem:[#allocation3 + $0x30] sm:$0xff]
      %v3033 = vld [vmem:[#allocation3 + $0x38] sm:$0xff]
      %v3034 = vld [vmem:[#allocation3 + $0x40] sm:$0xff]
      %v3035 = vld [vmem:[#allocation3 + $0x48] sm:$0xff]
      %v3036 = vld [vmem:[#allocation3 + $0x50] sm:$0xff]
      %v3037 = vld [vmem:[#allocation3 + $0x58] sm:$0xff]
      %v3038 = vld [vmem:[#allocation3 + $0x60] sm:$0xff]
      %v3039 = vld [vmem:[#allocation3 + $0x68] sm:$0xff]
      %v3040 = vld [vmem:[#allocation3 + $0x70] sm:$0xff]
      %v3041 = vld [vmem:[#allocation3 + $0x78] sm:$0xff]
      %v3042 = vld [vmem:[%s3] sm:$0xf]
      %v3043 = vld [vmem:[%s3 + $0x4] sm:$0xf]
      %v3044 = vld [vmem:[%s3 + $0x8] sm:$0x1]
      %v3045 = vld [vmem:[%s4] sm:$0x1]
      %v3047 = vlaneseq
      %v3048 = vshrl.u32 %v3047, 7
      %v3049 = vsub.s32 0, %v3048
      %v3050 = vrot.slane %v3045, %v3049
      %v3055 = vunpack.c.l.b16 %v3042
      %v3056 = vunpack.c.l.b16 %v3043
      %v3057 = vunpack.c.l.b16 %v3044
      %v3058 = vpack.c.b16 %v3056, %v3055
      %v3059 = vpack.c.b16 %v3057, %v3057
      %v3062 = vsel %vm1500, %v3026, 0
      %v3065 = vsel %vm1500, %v3027, 0
      %v3068 = vsel %vm1500, %v3028, 0
      %v3071 = vsel %vm1500, %v3029, 0
      %v3074 = vsel %vm1500, %v3030, 0
      %v3077 = vsel %vm1500, %v3031, 0
      %v3080 = vsel %vm1500, %v3032, 0
      %v3083 = vsel %vm1500, %v3033, 0
      %v3086 = vsel %vm1500, %v3034, 0
      %v3089 = vsel %vm1500, %v3035, 0
      %v3092 = vsel %vm1500, %v3036, 0
      %v3095 = vsel %vm1500, %v3037, 0
      %v3098 = vsel %vm1500, %v3038, 0
      %v3101 = vsel %vm1500, %v3039, 0
      %v3104 = vsel %vm1500, %v3040, 0
      %v3107 = vsel %vm1500, %v3041, 0
      %v3110 = vsel %vm1549, %v3059, 0
      %3112 = vmatprep.subr.bf16.mxu0 0
      %3113 = vmatpush1.bf16.msra.mxu0 %v3058
      %3114 = vmatprep.subr.bf16.mxu0 0
      %3115 = vmatpush1.bf16.msra.mxu0 %v3110
      %3116 = vmatprep.subr.bf16.mxu0 0
      %3117 = vmatpush1.bf16.msra.mxu0 0
      %3118 = vmatprep.subr.bf16.mxu0 0
      %3119 = vmatpush1.bf16.msra.mxu0 0
      %3120 = vmatprep.subr.bf16.mxu0 0
      %3121 = vmatpush1.bf16.msra.mxu0 0
      %3122 = vmatprep.subr.bf16.mxu0 0
      %3123 = vmatpush1.bf16.msra.mxu0 0
      %3124 = vmatprep.subr.bf16.mxu0 0
      %3125 = vmatpush1.bf16.msra.mxu0 0
      %3126 = vmatprep.subr.bf16.mxu0 0
      %3127 = vmatpush1.bf16.msra.mxu0 0
      %3128 = vmatprep.subr.bf16.mxu0 0
      %3129 = vmatpush1.bf16.msra.mxu0 0
      %3130 = vmatprep.subr.bf16.mxu0 0
      %3131 = vmatpush1.bf16.msra.mxu0 0
      %3132 = vmatprep.subr.bf16.mxu0 0
      %3133 = vmatpush1.bf16.msra.mxu0 0
      %3134 = vmatprep.subr.bf16.mxu0 0
      %3135 = vmatpush1.bf16.msra.mxu0 0
      %3136 = vmatprep.subr.bf16.mxu0 0
      %3137 = vmatpush1.bf16.msra.mxu0 0
      %3138 = vmatprep.subr.bf16.mxu0 0
      %3139 = vmatpush1.bf16.msra.mxu0 0
      %3140 = vmatprep.subr.bf16.mxu0 0
      %3141 = vmatpush1.bf16.msra.mxu0 0
      %3142 = vmatprep.subr.bf16.mxu0 0
      %3143 = vmatpush1.bf16.msra.mxu0 0
      %3144 = vmatprep.mubr.bf16.mxu0 0
      %3145 = vmatmul.mubr.bf16.gmra.mrb[0].mxu0 %v3062
      %v3146 = vpop.f32.mrb[0].mxu0
      %v3147 = vadd.f32 %v3050, %v3146
      %v3148 = vpop.f32.mrb[0].mxu0
      %v3149 = vpop.f32.mrb[0].mxu0
      %v3150 = vadd.f32 %v3050, %v3149
      %v3151 = vpop.f32.mrb[0].mxu0
      %3152 = vmatprep.mubr.bf16.mxu0 0
      %3153 = vmatmul.mubr.bf16.gmra.mrb[0].mxu0 %v3065
      %v3154 = vpop.f32.mrb[0].mxu0
      %v3155 = vadd.f32 %v3050, %v3154
      %v3156 = vpop.f32.mrb[0].mxu0
      %v3157 = vpop.f32.mrb[0].mxu0
      %v3158 = vadd.f32 %v3050, %v3157
      %v3159 = vpop.f32.mrb[0].mxu0
      %3160 = vmatprep.mubr.bf16.mxu0 0
      %3161 = vmatmul.mubr.bf16.gmra.mrb[0].mxu0 %v3068
      %v3162 = vpop.f32.mrb[0].mxu0
      %v3163 = vadd.f32 %v3050, %v3162
      %v3164 = vpop.f32.mrb[0].mxu0
      %v3165 = vpop.f32.mrb[0].mxu0
      %v3166 = vadd.f32 %v3050, %v3165
      %v3167 = vpop.f32.mrb[0].mxu0
      %3168 = vmatprep.mubr.bf16.mxu0 0
      %3169 = vmatmul.mubr.bf16.gmra.mrb[0].mxu0 %v3071
      %v3170 = vpop.f32.mrb[0].mxu0
      %v3171 = vadd.f32 %v3050, %v3170
      %v3172 = vpop.f32.mrb[0].mxu0
      %v3173 = vpop.f32.mrb[0].mxu0
      %v3174 = vadd.f32 %v3050, %v3173
      %v3175 = vpop.f32.mrb[0].mxu0
      %3176 = vmatprep.mubr.bf16.mxu0 0
      %3177 = vmatmul.mubr.bf16.gmra.mrb[0].mxu0 %v3074
      %v3178 = vpop.f32.mrb[0].mxu0
      %v3179 = vadd.f32 %v3050, %v3178
      %v3180 = vpop.f32.mrb[0].mxu0
      %v3181 = vpop.f32.mrb[0].mxu0
      %v3182 = vadd.f32 %v3050, %v3181
      %v3183 = vpop.f32.mrb[0].mxu0
      %3184 = vmatprep.mubr.bf16.mxu0 0
      %3185 = vmatmul.mubr.bf16.gmra.mrb[0].mxu0 %v3077
      %v3186 = vpop.f32.mrb[0].mxu0
      %v3187 = vadd.f32 %v3050, %v3186
      %v3188 = vpop.f32.mrb[0].mxu0
      %v3189 = vpop.f32.mrb[0].mxu0
      %v3190 = vadd.f32 %v3050, %v3189
      %v3191 = vpop.f32.mrb[0].mxu0
      %3192 = vmatprep.mubr.bf16.mxu0 0
      %3193 = vmatmul.mubr.bf16.gmra.mrb[0].mxu0 %v3080
      %v3194 = vpop.f32.mrb[0].mxu0
      %v3195 = vadd.f32 %v3050, %v3194
      %v3196 = vpop.f32.mrb[0].mxu0
      %v3197 = vpop.f32.mrb[0].mxu0
      %v3198 = vadd.f32 %v3050, %v3197
      %v3199 = vpop.f32.mrb[0].mxu0
      %3200 = vmatprep.mubr.bf16.mxu0 0
      %3201 = vmatmul.mubr.bf16.gmra.mrb[0].mxu0 %v3083
      %v3202 = vpop.f32.mrb[0].mxu0
      %v3203 = vadd.f32 %v3050, %v3202
      %v3204 = vpop.f32.mrb[0].mxu0
      %v3205 = vpop.f32.mrb[0].mxu0
      %v3206 = vadd.f32 %v3050, %v3205
      %v3207 = vpop.f32.mrb[0].mxu0
      %3208 = vmatprep.mubr.bf16.mxu0 0
      %3209 = vmatmul.mubr.bf16.gmra.mrb[0].mxu0 %v3086
      %v3210 = vpop.f32.mrb[0].mxu0
      %v3211 = vadd.f32 %v3050, %v3210
      %v3212 = vpop.f32.mrb[0].mxu0
      %v3213 = vpop.f32.mrb[0].mxu0
      %v3214 = vadd.f32 %v3050, %v3213
      %v3215 = vpop.f32.mrb[0].mxu0
      %3216 = vmatprep.mubr.bf16.mxu0 0
      %3217 = vmatmul.mubr.bf16.gmra.mrb[0].mxu0 %v3089
      %v3218 = vpop.f32.mrb[0].mxu0
      %v3219 = vadd.f32 %v3050, %v3218
      %v3220 = vpop.f32.mrb[0].mxu0
      %v3221 = vpop.f32.mrb[0].mxu0
      %v3222 = vadd.f32 %v3050, %v3221
      %v3223 = vpop.f32.mrb[0].mxu0
      %3224 = vmatprep.mubr.bf16.mxu0 0
      %3225 = vmatmul.mubr.bf16.gmra.mrb[0].mxu0 %v3092
      %v3226 = vpop.f32.mrb[0].mxu0
      %v3227 = vadd.f32 %v3050, %v3226
      %v3228 = vpop.f32.mrb[0].mxu0
      %v3229 = vpop.f32.mrb[0].mxu0
      %v3230 = vadd.f32 %v3050, %v3229
      %v3231 = vpop.f32.mrb[0].mxu0
      %3232 = vmatprep.mubr.bf16.mxu0 0
      %3233 = vmatmul.mubr.bf16.gmra.mrb[0].mxu0 %v3095
      %v3234 = vpop.f32.mrb[0].mxu0
      %v3235 = vadd.f32 %v3050, %v3234
      %v3236 = vpop.f32.mrb[0].mxu0
      %v3237 = vpop.f32.mrb[0].mxu0
      %v3238 = vadd.f32 %v3050, %v3237
      %v3239 = vpop.f32.mrb[0].mxu0
      %3240 = vmatprep.mubr.bf16.mxu0 0
      %3241 = vmatmul.mubr.bf16.gmra.mrb[0].mxu0 %v3098
      %v3242 = vpop.f32.mrb[0].mxu0
      %v3243 = vadd.f32 %v3050, %v3242
      %v3244 = vpop.f32.mrb[0].mxu0
      %v3245 = vpop.f32.mrb[0].mxu0
      %v3246 = vadd.f32 %v3050, %v3245
      %v3247 = vpop.f32.mrb[0].mxu0
      %3248 = vmatprep.mubr.bf16.mxu0 0
      %3249 = vmatmul.mubr.bf16.gmra.mrb[0].mxu0 %v3101
      %v3250 = vpop.f32.mrb[0].mxu0
      %v3251 = vadd.f32 %v3050, %v3250
      %v3252 = vpop.f32.mrb[0].mxu0
      %v3253 = vpop.f32.mrb[0].mxu0
      %v3254 = vadd.f32 %v3050, %v3253
      %v3255 = vpop.f32.mrb[0].mxu0
      %3256 = vmatprep.mubr.bf16.mxu0 0
      %3257 = vmatmul.mubr.bf16.gmra.mrb[0].mxu0 %v3104
      %v3258 = vpop.f32.mrb[0].mxu0
      %v3259 = vadd.f32 %v3050, %v3258
      %v3260 = vpop.f32.mrb[0].mxu0
      %v3261 = vpop.f32.mrb[0].mxu0
      %v3262 = vadd.f32 %v3050, %v3261
      %v3263 = vpop.f32.mrb[0].mxu0
      %3264 = vmatprep.mubr.bf16.mxu0 0
      %3265 = vmatmul.mubr.bf16.gmra.mrb[0].mxu0 %v3107
      %v3266 = vpop.f32.mrb[0].mxu0
      %v3267 = vadd.f32 %v3050, %v3266
      %v3268 = vpop.f32.mrb[0].mxu0
      %v3269 = vpop.f32.mrb[0].mxu0
      %v3270 = vadd.f32 %v3050, %v3269
      %v3271 = vpop.f32.mrb[0].mxu0
      %3272 = vdwg.mxu0
      %v3273 = vsub.f32 0.0, %v3147
      %v3274 = vsub.f32 0.0, %v3150
      %v3275 = vsub.f32 0.0, %v3155
      %v3276 = vsub.f32 0.0, %v3158
      %v3277 = vsub.f32 0.0, %v3163
      %v3278 = vsub.f32 0.0, %v3166
      %v3279 = vsub.f32 0.0, %v3171
      %v3280 = vsub.f32 0.0, %v3174
      %v3281 = vsub.f32 0.0, %v3179
      %v3282 = vsub.f32 0.0, %v3182
      %v3283 = vsub.f32 0.0, %v3187
      %v3284 = vsub.f32 0.0, %v3190
      %v3285 = vsub.f32 0.0, %v3195
      %v3286 = vsub.f32 0.0, %v3198
      %v3287 = vsub.f32 0.0, %v3203
      %v3288 = vsub.f32 0.0, %v3206
      %v3289 = vsub.f32 0.0, %v3211
      %v3290 = vsub.f32 0.0, %v3214
      %v3291 = vsub.f32 0.0, %v3219
      %v3292 = vsub.f32 0.0, %v3222
      %v3293 = vsub.f32 0.0, %v3227
      %v3294 = vsub.f32 0.0, %v3230
      %v3295 = vsub.f32 0.0, %v3235
      %v3296 = vsub.f32 0.0, %v3238
      %v3297 = vsub.f32 0.0, %v3243
      %v3298 = vsub.f32 0.0, %v3246
      %v3299 = vsub.f32 0.0, %v3251
      %v3300 = vsub.f32 0.0, %v3254
      %v3301 = vsub.f32 0.0, %v3259
      %v3302 = vsub.f32 0.0, %v3262
      %v3303 = vsub.f32 0.0, %v3267
      %v3304 = vsub.f32 0.0, %v3270
      %v3305 = vmul.f32 %v3273, 1.442695
      %v3306 = vpow.pop %v3305
      %v3307 = vmul.f32 %v3274, 1.442695
      %v3308 = vpow.pop %v3307
      %v3309 = vmul.f32 %v3275, 1.442695
      %v3310 = vpow.pop %v3309
      %v3311 = vmul.f32 %v3276, 1.442695
      %v3312 = vpow.pop %v3311
      %v3313 = vmul.f32 %v3277, 1.442695
      %v3314 = vpow.pop %v3313
      %v3315 = vmul.f32 %v3278, 1.442695
      %v3316 = vpow.pop %v3315
      %v3317 = vmul.f32 %v3279, 1.442695
      %v3318 = vpow.pop %v3317
      %v3319 = vmul.f32 %v3280, 1.442695
      %v3320 = vpow.pop %v3319
      %v3321 = vmul.f32 %v3281, 1.442695
      %v3322 = vpow.pop %v3321
      %v3323 = vmul.f32 %v3282, 1.442695
      %v3324 = vpow.pop %v3323
      %v3325 = vmul.f32 %v3283, 1.442695
      %v3326 = vpow.pop %v3325
      %v3327 = vmul.f32 %v3284, 1.442695
      %v3328 = vpow.pop %v3327
      %v3329 = vmul.f32 %v3285, 1.442695
      %v3330 = vpow.pop %v3329
      %v3331 = vmul.f32 %v3286, 1.442695
      %v3332 = vpow.pop %v3331
      %v3333 = vmul.f32 %v3287, 1.442695
      %v3334 = vpow.pop %v3333
      %v3335 = vmul.f32 %v3288, 1.442695
      %v3336 = vpow.pop %v3335
      %v3337 = vmul.f32 %v3289, 1.442695
      %v3338 = vpow.pop %v3337
      %v3339 = vmul.f32 %v3290, 1.442695
      %v3340 = vpow.pop %v3339
      %v3341 = vmul.f32 %v3291, 1.442695
      %v3342 = vpow.pop %v3341
      %v3343 = vmul.f32 %v3292, 1.442695
      %v3344 = vpow.pop %v3343
      %v3345 = vmul.f32 %v3293, 1.442695
      %v3346 = vpow.pop %v3345
      %v3347 = vmul.f32 %v3294, 1.442695
      %v3348 = vpow.pop %v3347
      %v3349 = vmul.f32 %v3295, 1.442695
      %v3350 = vpow.pop %v3349
      %v3351 = vmul.f32 %v3296, 1.442695
      %v3352 = vpow.pop %v3351
      %v3353 = vmul.f32 %v3297, 1.442695
      %v3354 = vpow.pop %v3353
      %v3355 = vmul.f32 %v3298, 1.442695
      %v3356 = vpow.pop %v3355
      %v3357 = vmul.f32 %v3299, 1.442695
      %v3358 = vpow.pop %v3357
      %v3359 = vmul.f32 %v3300, 1.442695
      %v3360 = vpow.pop %v3359
      %v3361 = vmul.f32 %v3301, 1.442695
      %v3362 = vpow.pop %v3361
      %v3363 = vmul.f32 %v3302, 1.442695
      %v3364 = vpow.pop %v3363
      %v3365 = vmul.f32 %v3303, 1.442695
      %v3366 = vpow.pop %v3365
      %v3367 = vmul.f32 %v3304, 1.442695
      %v3368 = vpow.pop %v3367
      %v3369 = vadd.f32 %v3306, 1.0
      %v3370 = vadd.f32 %v3308, 1.0
      %v3371 = vadd.f32 %v3310, 1.0
      %v3372 = vadd.f32 %v3312, 1.0
      %v3373 = vadd.f32 %v3314, 1.0
      %v3374 = vadd.f32 %v3316, 1.0
      %v3375 = vadd.f32 %v3318, 1.0
      %v3376 = vadd.f32 %v3320, 1.0
      %v3377 = vadd.f32 %v3322, 1.0
      %v3378 = vadd.f32 %v3324, 1.0
      %v3379 = vadd.f32 %v3326, 1.0
      %v3380 = vadd.f32 %v3328, 1.0
      %v3381 = vadd.f32 %v3330, 1.0
      %v3382 = vadd.f32 %v3332, 1.0
      %v3383 = vadd.f32 %v3334, 1.0
      %v3384 = vadd.f32 %v3336, 1.0
      %v3385 = vadd.f32 %v3338, 1.0
      %v3386 = vadd.f32 %v3340, 1.0
      %v3387 = vadd.f32 %v3342, 1.0
      %v3388 = vadd.f32 %v3344, 1.0
      %v3389 = vadd.f32 %v3346, 1.0
      %v3390 = vadd.f32 %v3348, 1.0
      %v3391 = vadd.f32 %v3350, 1.0
      %v3392 = vadd.f32 %v3352, 1.0
      %v3393 = vadd.f32 %v3354, 1.0
      %v3394 = vadd.f32 %v3356, 1.0
      %v3395 = vadd.f32 %v3358, 1.0
      %v3396 = vadd.f32 %v3360, 1.0
      %v3397 = vadd.f32 %v3362, 1.0
      %v3398 = vadd.f32 %v3364, 1.0
      %v3399 = vadd.f32 %v3366, 1.0
      %v3400 = vadd.f32 %v3368, 1.0
      %v3401 = vrcp.pop %v3369
      %v3402 = vrcp.pop %v3370
      %v3403 = vrcp.pop %v3371
      %v3404 = vrcp.pop %v3372
      %v3405 = vrcp.pop %v3373
      %v3406 = vrcp.pop %v3374
      %v3407 = vrcp.pop %v3375
      %v3408 = vrcp.pop %v3376
      %v3409 = vrcp.pop %v3377
      %v3410 = vrcp.pop %v3378
      %v3411 = vrcp.pop %v3379
      %v3412 = vrcp.pop %v3380
      %v3413 = vrcp.pop %v3381
      %v3414 = vrcp.pop %v3382
      %v3415 = vrcp.pop %v3383
      %v3416 = vrcp.pop %v3384
      %v3417 = vrcp.pop %v3385
      %v3418 = vrcp.pop %v3386
      %v3419 = vrcp.pop %v3387
      %v3420 = vrcp.pop %v3388
      %v3421 = vrcp.pop %v3389
      %v3422 = vrcp.pop %v3390
      %v3423 = vrcp.pop %v3391
      %v3424 = vrcp.pop %v3392
      %v3425 = vrcp.pop %v3393
      %v3426 = vrcp.pop %v3394
      %v3427 = vrcp.pop %v3395
      %v3428 = vrcp.pop %v3396
      %v3429 = vrcp.pop %v3397
      %v3430 = vrcp.pop %v3398
      %v3431 = vrcp.pop %v3399
      %v3432 = vrcp.pop %v3400
      %v3433 = vmul.f32 %v3147, %v3401
      %v3434 = vmul.f32 %v3150, %v3402
      %v3435 = vmul.f32 %v3155, %v3403
      %v3436 = vmul.f32 %v3158, %v3404
      %v3437 = vmul.f32 %v3163, %v3405
      %v3438 = vmul.f32 %v3166, %v3406
      %v3439 = vmul.f32 %v3171, %v3407
      %v3440 = vmul.f32 %v3174, %v3408
      %v3441 = vmul.f32 %v3179, %v3409
      %v3442 = vmul.f32 %v3182, %v3410
      %v3443 = vmul.f32 %v3187, %v3411
      %v3444 = vmul.f32 %v3190, %v3412
      %v3445 = vmul.f32 %v3195, %v3413
      %v3446 = vmul.f32 %v3198, %v3414
      %v3447 = vmul.f32 %v3203, %v3415
      %v3448 = vmul.f32 %v3206, %v3416
      %v3449 = vmul.f32 %v3211, %v3417
      %v3450 = vmul.f32 %v3214, %v3418
      %v3451 = vmul.f32 %v3219, %v3419
      %v3452 = vmul.f32 %v3222, %v3420
      %v3453 = vmul.f32 %v3227, %v3421
      %v3454 = vmul.f32 %v3230, %v3422
      %v3455 = vmul.f32 %v3235, %v3423
      %v3456 = vmul.f32 %v3238, %v3424
      %v3457 = vmul.f32 %v3243, %v3425
      %v3458 = vmul.f32 %v3246, %v3426
      %v3459 = vmul.f32 %v3251, %v3427
      %v3460 = vmul.f32 %v3254, %v3428
      %v3461 = vmul.f32 %v3259, %v3429
      %v3462 = vmul.f32 %v3262, %v3430
      %v3463 = vmul.f32 %v3267, %v3431
      %v3464 = vmul.f32 %v3270, %v3432
      %v3465 = vld [vmem:[%s220] sm:$0xf]
      %v3466 = vld [vmem:[%s220 + $0x4] sm:$0xf]
      %v3467 = vld [vmem:[%s220 + $0x8] sm:$0xf]
      %v3468 = vld [vmem:[%s220 + $0xc] sm:$0xf]
      %v3469 = vld [vmem:[%s220 + $0x10] sm:$0xf]
      %v3470 = vld [vmem:[%s220 + $0x14] sm:$0xf]
      %v3471 = vld [vmem:[%s220 + $0x18] sm:$0xf]
      %v3472 = vld [vmem:[%s220 + $0x1c] sm:$0xf]
      %v3473 = vld [vmem:[%s220 + $0x20] sm:$0xf]
      %v3474 = vld [vmem:[%s220 + $0x24] sm:$0xf]
      %v3475 = vld [vmem:[%s220 + $0x28] sm:$0xf]
      %v3476 = vld [vmem:[%s220 + $0x2c] sm:$0xf]
      %v3477 = vld [vmem:[%s220 + $0x30] sm:$0xf]
      %v3478 = vld [vmem:[%s220 + $0x34] sm:$0xf]
      %v3479 = vld [vmem:[%s220 + $0x38] sm:$0xf]
      %v3480 = vld [vmem:[%s220 + $0x3c] sm:$0xf]
      %v3481 = vld [vmem:[%s220 + $0x40] sm:$0xf]
      %v3482 = vld [vmem:[%s220 + $0x44] sm:$0xf]
      %v3483 = vld [vmem:[%s220 + $0x48] sm:$0xf]
      %v3484 = vld [vmem:[%s220 + $0x4c] sm:$0xf]
      %v3485 = vld [vmem:[%s220 + $0x50] sm:$0xf]
      %v3486 = vld [vmem:[%s220 + $0x54] sm:$0xf]
      %v3487 = vld [vmem:[%s220 + $0x58] sm:$0xf]
      %v3488 = vld [vmem:[%s220 + $0x5c] sm:$0xf]
      %v3489 = vld [vmem:[%s220 + $0x60] sm:$0xf]
      %v3490 = vld [vmem:[%s220 + $0x64] sm:$0xf]
      %v3491 = vld [vmem:[%s220 + $0x68] sm:$0xf]
      %v3492 = vld [vmem:[%s220 + $0x6c] sm:$0xf]
      %v3493 = vld [vmem:[%s220 + $0x70] sm:$0xf]
      %v3494 = vld [vmem:[%s220 + $0x74] sm:$0xf]
      %v3495 = vld [vmem:[%s220 + $0x78] sm:$0xf]
      %v3496 = vld [vmem:[%s220 + $0x7c] sm:$0xf]
      %v3497 = vunpack.c.l.bf16 %v3465
      %v3498 = vunpack.c.l.bf16 %v3466
      %v3499 = vunpack.c.l.bf16 %v3467
      %v3500 = vunpack.c.l.bf16 %v3468
      %v3501 = vunpack.c.l.bf16 %v3469
      %v3502 = vunpack.c.l.bf16 %v3470
      %v3503 = vunpack.c.l.bf16 %v3471
      %v3504 = vunpack.c.l.bf16 %v3472
      %v3505 = vunpack.c.l.bf16 %v3473
      %v3506 = vunpack.c.l.bf16 %v3474
      %v3507 = vunpack.c.l.bf16 %v3475
      %v3508 = vunpack.c.l.bf16 %v3476
      %v3509 = vunpack.c.l.bf16 %v3477
      %v3510 = vunpack.c.l.bf16 %v3478
      %v3511 = vunpack.c.l.bf16 %v3479
      %v3512 = vunpack.c.l.bf16 %v3480
      %v3513 = vunpack.c.l.bf16 %v3481
      %v3514 = vunpack.c.l.bf16 %v3482
      %v3515 = vunpack.c.l.bf16 %v3483
      %v3516 = vunpack.c.l.bf16 %v3484
      %v3517 = vunpack.c.l.bf16 %v3485
      %v3518 = vunpack.c.l.bf16 %v3486
      %v3519 = vunpack.c.l.bf16 %v3487
      %v3520 = vunpack.c.l.bf16 %v3488
      %v3521 = vunpack.c.l.bf16 %v3489
      %v3522 = vunpack.c.l.bf16 %v3490
      %v3523 = vunpack.c.l.bf16 %v3491
      %v3524 = vunpack.c.l.bf16 %v3492
      %v3525 = vunpack.c.l.bf16 %v3493
      %v3526 = vunpack.c.l.bf16 %v3494
      %v3527 = vunpack.c.l.bf16 %v3495
      %v3528 = vunpack.c.l.bf16 %v3496
      %v3529 = vadd.f32 %v3433, %v3497
      %v3530 = vadd.f32 %v3434, %v3498
      %v3531 = vadd.f32 %v3435, %v3499
      %v3532 = vadd.f32 %v3436, %v3500
      %v3533 = vadd.f32 %v3437, %v3501
      %v3534 = vadd.f32 %v3438, %v3502
      %v3535 = vadd.f32 %v3439, %v3503
      %v3536 = vadd.f32 %v3440, %v3504
      %v3537 = vadd.f32 %v3441, %v3505
      %v3538 = vadd.f32 %v3442, %v3506
      %v3539 = vadd.f32 %v3443, %v3507
      %v3540 = vadd.f32 %v3444, %v3508
      %v3541 = vadd.f32 %v3445, %v3509
      %v3542 = vadd.f32 %v3446, %v3510
      %v3543 = vadd.f32 %v3447, %v3511
      %v3544 = vadd.f32 %v3448, %v3512
      %v3545 = vadd.f32 %v3449, %v3513
      %v3546 = vadd.f32 %v3450, %v3514
      %v3547 = vadd.f32 %v3451, %v3515
      %v3548 = vadd.f32 %v3452, %v3516
      %v3549 = vadd.f32 %v3453, %v3517
      %v3550 = vadd.f32 %v3454, %v3518
      %v3551 = vadd.f32 %v3455, %v3519
      %v3552 = vadd.f32 %v3456, %v3520
      %v3553 = vadd.f32 %v3457, %v3521
      %v3554 = vadd.f32 %v3458, %v3522
      %v3555 = vadd.f32 %v3459, %v3523
      %v3556 = vadd.f32 %v3460, %v3524
      %v3557 = vadd.f32 %v3461, %v3525
      %v3558 = vadd.f32 %v3462, %v3526
      %v3559 = vadd.f32 %v3463, %v3527
      %v3560 = vadd.f32 %v3464, %v3528
      %v3561 = vpack.c.bf16 %v3530, %v3529
      %v3562 = vpack.c.bf16 %v3532, %v3531
      %v3563 = vpack.c.bf16 %v3534, %v3533
      %v3564 = vpack.c.bf16 %v3536, %v3535
      %v3565 = vpack.c.bf16 %v3538, %v3537
      %v3566 = vpack.c.bf16 %v3540, %v3539
      %v3567 = vpack.c.bf16 %v3542, %v3541
      %v3568 = vpack.c.bf16 %v3544, %v3543
      %v3569 = vpack.c.bf16 %v3546, %v3545
      %v3570 = vpack.c.bf16 %v3548, %v3547
      %v3571 = vpack.c.bf16 %v3550, %v3549
      %v3572 = vpack.c.bf16 %v3552, %v3551
      %v3573 = vpack.c.bf16 %v3554, %v3553
      %v3574 = vpack.c.bf16 %v3556, %v3555
      %v3575 = vpack.c.bf16 %v3558, %v3557
      %v3576 = vpack.c.bf16 %v3560, %v3559
      %v3593 = vunpack.c.l.b16 %v3561
      %v3594 = vunpack.c.h.b16 %v3561
      %v3595 = vunpack.c.l.b16 %v3562
      %v3596 = vunpack.c.h.b16 %v3562
      %v3597 = vunpack.c.l.b16 %v3563
      %v3598 = vunpack.c.h.b16 %v3563
      %v3599 = vunpack.c.l.b16 %v3564
      %v3600 = vunpack.c.h.b16 %v3564
      %v3601 = vunpack.c.l.b16 %v3565
      %v3602 = vunpack.c.h.b16 %v3565
      %v3603 = vunpack.c.l.b16 %v3566
      %v3604 = vunpack.c.h.b16 %v3566
      %v3605 = vunpack.c.l.b16 %v3567
      %v3606 = vunpack.c.h.b16 %v3567
      %v3607 = vunpack.c.l.b16 %v3568
      %v3608 = vunpack.c.h.b16 %v3568
      %v3609 = vunpack.c.l.b16 %v3569
      %v3610 = vunpack.c.h.b16 %v3569
      %v3611 = vunpack.c.l.b16 %v3570
      %v3612 = vunpack.c.h.b16 %v3570
      %v3613 = vunpack.c.l.b16 %v3571
      %v3614 = vunpack.c.h.b16 %v3571
      %v3615 = vunpack.c.l.b16 %v3572
      %v3616 = vunpack.c.h.b16 %v3572
      %v3617 = vunpack.c.l.b16 %v3573
      %v3618 = vunpack.c.h.b16 %v3573
      %v3619 = vunpack.c.l.b16 %v3574
      %v3620 = vunpack.c.h.b16 %v3574
      %v3621 = vunpack.c.l.b16 %v3575
      %v3622 = vunpack.c.h.b16 %v3575
      %v3623 = vunpack.c.l.b16 %v3576
      %v3624 = vunpack.c.h.b16 %v3576
      %v3625 = vpack.c.b16 %v3593, %v3593
      %v3626 = vpack.c.b16 %v3594, %v3594
      %v3627 = vpack.c.b16 %v3595, %v3595
      %v3628 = vpack.c.b16 %v3596, %v3596
      %v3629 = vpack.c.b16 %v3597, %v3597
      %v3630 = vpack.c.b16 %v3598, %v3598
      %v3631 = vpack.c.b16 %v3599, %v3599
      %v3632 = vpack.c.b16 %v3600, %v3600
      %v3633 = vpack.c.b16 %v3601, %v3601
      %v3634 = vpack.c.b16 %v3602, %v3602
      %v3635 = vpack.c.b16 %v3603, %v3603
      %v3636 = vpack.c.b16 %v3604, %v3604
      %v3637 = vpack.c.b16 %v3605, %v3605
      %v3638 = vpack.c.b16 %v3606, %v3606
      %v3639 = vpack.c.b16 %v3607, %v3607
      %v3640 = vpack.c.b16 %v3608, %v3608
      %v3641 = vpack.c.b16 %v3609, %v3609
      %v3642 = vpack.c.b16 %v3610, %v3610
      %v3643 = vpack.c.b16 %v3611, %v3611
      %v3644 = vpack.c.b16 %v3612, %v3612
      %v3645 = vpack.c.b16 %v3613, %v3613
      %v3646 = vpack.c.b16 %v3614, %v3614
      %v3647 = vpack.c.b16 %v3615, %v3615
      %v3648 = vpack.c.b16 %v3616, %v3616
      %v3649 = vpack.c.b16 %v3617, %v3617
      %v3650 = vpack.c.b16 %v3618, %v3618
      %v3651 = vpack.c.b16 %v3619, %v3619
      %v3652 = vpack.c.b16 %v3620, %v3620
      %v3653 = vpack.c.b16 %v3621, %v3621
      %v3654 = vpack.c.b16 %v3622, %v3622
      %v3655 = vpack.c.b16 %v3623, %v3623
      %v3656 = vpack.c.b16 %v3624, %v3624
      %vm3689 = vcmask 11264
      %3690 = vst.msk [vmem:[%s226] sm:$0xf] %vm3689, %v3625
      %3691 = vst.msk [vmem:[%s226 + $0x4] sm:$0xf] %vm3689, %v3626
      %3692 = vst.msk [vmem:[%s226 + $0x8] sm:$0xf] %vm3689, %v3627
      %3693 = vst.msk [vmem:[%s226 + $0xc] sm:$0xf] %vm3689, %v3628
      %3694 = vst.msk [vmem:[%s226 + $0x10] sm:$0xf] %vm3689, %v3629
      %3695 = vst.msk [vmem:[%s226 + $0x14] sm:$0xf] %vm3689, %v3630
      %3696 = vst.msk [vmem:[%s226 + $0x18] sm:$0xf] %vm3689, %v3631
      %3697 = vst.msk [vmem:[%s226 + $0x1c] sm:$0xf] %vm3689, %v3632
      %3698 = vst.msk [vmem:[%s226 + $0x20] sm:$0xf] %vm3689, %v3633
      %3699 = vst.msk [vmem:[%s226 + $0x24] sm:$0xf] %vm3689, %v3634
      %3700 = vst.msk [vmem:[%s226 + $0x28] sm:$0xf] %vm3689, %v3635
      %3701 = vst.msk [vmem:[%s226 + $0x2c] sm:$0xf] %vm3689, %v3636
      %3702 = vst.msk [vmem:[%s226 + $0x30] sm:$0xf] %vm3689, %v3637
      %3703 = vst.msk [vmem:[%s226 + $0x34] sm:$0xf] %vm3689, %v3638
      %3704 = vst.msk [vmem:[%s226 + $0x38] sm:$0xf] %vm3689, %v3639
      %3705 = vst.msk [vmem:[%s226 + $0x3c] sm:$0xf] %vm3689, %v3640
      %3706 = vst.msk [vmem:[%s226 + $0x40] sm:$0xf] %vm3689, %v3641
      %3707 = vst.msk [vmem:[%s226 + $0x44] sm:$0xf] %vm3689, %v3642
      %3708 = vst.msk [vmem:[%s226 + $0x48] sm:$0xf] %vm3689, %v3643
      %3709 = vst.msk [vmem:[%s226 + $0x4c] sm:$0xf] %vm3689, %v3644
      %3710 = vst.msk [vmem:[%s226 + $0x50] sm:$0xf] %vm3689, %v3645
      %3711 = vst.msk [vmem:[%s226 + $0x54] sm:$0xf] %vm3689, %v3646
      %3712 = vst.msk [vmem:[%s226 + $0x58] sm:$0xf] %vm3689, %v3647
      %3713 = vst.msk [vmem:[%s226 + $0x5c] sm:$0xf] %vm3689, %v3648
      %3714 = vst.msk [vmem:[%s226 + $0x60] sm:$0xf] %vm3689, %v3649
      %3715 = vst.msk [vmem:[%s226 + $0x64] sm:$0xf] %vm3689, %v3650
      %3716 = vst.msk [vmem:[%s226 + $0x68] sm:$0xf] %vm3689, %v3651
      %3717 = vst.msk [vmem:[%s226 + $0x6c] sm:$0xf] %vm3689, %v3652
      %3718 = vst.msk [vmem:[%s226 + $0x70] sm:$0xf] %vm3689, %v3653
      %3719 = vst.msk [vmem:[%s226 + $0x74] sm:$0xf] %vm3689, %v3654
      %3720 = vst.msk [vmem:[%s226 + $0x78] sm:$0xf] %vm3689, %v3655
      %3721 = vst.msk [vmem:[%s226 + $0x7c] sm:$0xf] %vm3689, %v3656
      %s3722 = smul.u32 32, %s16
      %p3723 = scmp.lt.s32.totalorder %s3722, 63
      %s3724 = scalar_select %p3723, %s3722, 63
      %s3725 = smul.addr %s3724, 4
      %s3726 = scalar_lea.vmem %s5, %s3725
      // Predicated region
      $region41: #{c2_forward.4} parent=39 // pred_check
        %p3727 = pneg %p144
      $region42: #{c2_forward.4} parent=39 // pred_check_branch
        %3729 = sbr.rel (%p3727) target = $region44
      $region43: #{c2_forward.4} parent=39 // pred_region
        %s3730 = smul.u32 32, %s16
      $region44: #{c2_forward.4} parent=39 // pred_fallthru
        _
    $region40: #{c2_forward.4} parent=5 // pred_fallthru
      _
    %p3731 = scmp.le.s32.totalorder 2, %s11
    // Predicated region
    $region45: #{c2_forward.4} parent=5 // pred_check
      %p3732 = pneg %p3731
    $region46: #{c2_forward.4} parent=5 // pred_check_branch
      %3734 = sbr.rel (%p3732) target = $region48
    $region47: #{c2_forward.4} parent=5 // pred_region
      %s3735 = ssub.s32 %s11, 2
      // Predicated region
      $region49: #{c2_forward.4} parent=47 // pred_check
        %p3736 = pneg %p150
      $region50: #{c2_forward.4} parent=47 // pred_check_branch
        %3738 = sbr.rel (%p3736) target = $region52
      $region51: #{c2_forward.4} parent=47 // pred_region
        %s3739 = smul.u32 32, %s17
        %p3740 = scmp.lt.s32.totalorder %s3739, 63
        %s3741 = scalar_select %p3740, %s3739, 63
        %s3742 = smul.addr %s3741, 4
        %s3743 = scalar_lea.vmem %s5, %s3742
      $region52: #{c2_forward.4} parent=47 // pred_fallthru
        _
    $region48: #{c2_forward.4} parent=5 // pred_fallthru
      _
  $region6: #{c2_forward.4} parent=0 // loop_footer
    %s15 = sadd.s32 1, %s11
  $region7: #{c2_forward.4} parent=0 // loop_footer_branch
    %10 = sbr.rel target = $region3
  $region8: #{c2_forward.4} parent=0 // loop_exit
    _

</llo_original>
